<compile_context>
chip_gen: v7x
topology: tpu7x:2x2x1
jax: 0.10.0
libtpu: 0.0.40
codegen_flags: <defaults>
</compile_context>

<pallas_src>
import functools

import numpy as np
import jax
import jax.numpy as jnp
from jax.experimental import pallas as pl
from jax.experimental.pallas import tpu as pltpu


# ----------------------------------------------------------------------------
# Pallas kernels
# ----------------------------------------------------------------------------
def _attn_kernel(bid_ref,                      # scalar-prefetch (used by index_maps)
                 x_ref, g1_ref, b1_ref, wqkv_ref, bqkv_ref,
                 bias_ref, wproj_ref, bproj_ref,
                 o_ref, *, heads):
    """One batch of attention windows (all sharing one bias/mask table row):
    LayerNorm -> fused QKV -> head-batched biased softmax attention ->
    head-batched output projection.  Matmul operands bf16 / f32 accumulate;
    LayerNorm, bias add and softmax math stay f32 (v5e has no bf16 VPU)."""
    del bid_ref
    wb, N, C = x_ref.shape
    D = C // heads
    scale = 1.0 / float(np.sqrt(D))

    # ---- LayerNorm (f32 math) ----------------------------------------------
    x = x_ref[...].astype(jnp.float32).reshape(wb * N, C)
    mu = jnp.mean(x, axis=-1, keepdims=True)
    var = jnp.mean(jnp.square(x - mu), axis=-1, keepdims=True)
    xn = (x - mu) * jax.lax.rsqrt(var + 1e-5)
    xn = xn * g1_ref[...].astype(jnp.float32) + b1_ref[...].astype(jnp.float32)

    # ---- fused QKV: ONE (wb*N, C) x (C, 3C) bf16 matmul, bias in f32,
    #      then a single downcast of the whole qkv tensor to bf16 -------------
    qkv = jnp.dot(xn.astype(jnp.bfloat16), wqkv_ref[...],
                  preferred_element_type=jnp.float32)
    qkv = qkv + bqkv_ref[...].astype(jnp.float32)
    qkv = qkv.reshape(wb, N, 3 * C).astype(jnp.bfloat16)

    # ---- head split (one relayout of qkv) + head batching -------------------
    q = jnp.stack([qkv[:, :, h * D:(h + 1) * D] for h in range(heads)], axis=0)
    k = jnp.stack([qkv[:, :, C + h * D:C + (h + 1) * D] for h in range(heads)], axis=0)
    v = jnp.stack([qkv[:, :, 2 * C + h * D:2 * C + (h + 1) * D] for h in range(heads)], axis=0)
    q = q.reshape(heads * wb, N, D)
    k = k.reshape(heads * wb, N, D)
    v = v.reshape(heads * wb, N, D)

    # scores: single dot_general batched over (heads * wb) windows
    s = jnp.einsum('bnd,bmd->bnm', q, k,
                   preferred_element_type=jnp.float32) * scale       # (heads*wb,N,N)

    # precombined earth-bias + shift-mask for this window type (bf16 table,
    # upcast once; broadcast over the wb windows of the batch)
    s = s.reshape(heads, wb, N, N) + bias_ref[0][:, None, :, :].astype(jnp.float32)

    # ---- softmax (f32, EUP reciprocal) --------------------------------------
    s = s - jnp.max(s, axis=-1, keepdims=True)
    p = jnp.exp(s)
    p = p * pl.reciprocal(jnp.sum(p, axis=-1, keepdims=True), approx=True)
    p = p.astype(jnp.bfloat16).reshape(heads * wb, N, N)

    # PV: single batched dot_general
    o = jnp.einsum('bnm,bmd->bnd', p, v,
                   preferred_element_type=jnp.float32)                # (heads*wb,N,D)

    # ---- output projection: one head-batched dot + head-sum -----------------
    # (== concat-over-heads @ Wproj).
    # TODO(synk): folding this into a literal single K=C matmul needs a
    # lane-dim concat / minor transpose of the D-wide per-head outputs, which
    # Mosaic relayout support makes risky at small D; math is identical here.
    o = o.reshape(heads, wb * N, D).astype(jnp.bfloat16)
    y = jnp.einsum('hmd,hdc->hmc', o, wproj_ref[...],
                   preferred_element_type=jnp.float32)                # (heads,wb*N,C)
    y = jnp.sum(y, axis=0) + bproj_ref[...].astype(jnp.float32)

    # TODO(synk): hidden_dim (32 toy / 192 Pangu) is not a multiple of 128 so
    # this store is a masked vst; pad the lane dim to 128/256 in production
    # (matters most on v5e with its single store slot).
    o_ref[...] = y.reshape(wb, N, C).astype(o_ref.dtype)


def _mlp_kernel(sc_ref, att_ref, g2_ref, b2_ref,
                w1_ref, b1_ref, w2_ref, b2b_ref, o_ref):
    """Fused: x = shortcut + attn_out ; out = x + MLP(LayerNorm(x))."""
    x = sc_ref[...].astype(jnp.float32) + att_ref[...].astype(jnp.float32)

    mu = jnp.mean(x, axis=-1, keepdims=True)
    var = jnp.mean(jnp.square(x - mu), axis=-1, keepdims=True)
    xn = (x - mu) * jax.lax.rsqrt(var + 1e-5)
    xn = xn * g2_ref[...].astype(jnp.float32) + b2_ref[...].astype(jnp.float32)

    h = jnp.dot(xn.astype(jnp.bfloat16), w1_ref[...],
                preferred_element_type=jnp.float32) + b1_ref[...].astype(jnp.float32)
    # TODO(synk): PyTorch nn.GELU default is exact-erf; tanh approximation used here.
    h = jax.nn.gelu(h, approximate=True)
    y = jnp.dot(h.astype(jnp.bfloat16), w2_ref[...],
                preferred_element_type=jnp.float32) + b2b_ref[...].astype(jnp.float32)

    o_ref[...] = (x + y).astype(o_ref.dtype)


# ----------------------------------------------------------------------------
# VMEM sizing helpers (derived, generation-conservative limits)
# ----------------------------------------------------------------------------
def _attn_vmem_bytes(wb, N, C, heads):
    D = C // heads
    blk = 2 * 2 * (wb * N * C * 2)                                   # in + out blocks (bf16, dbl-buf)
    blk += 2 * heads * N * N * 2                                     # bias table block
    blk += 2 * 2 * (C * 3 * C + heads * D * C) + 4 * (7 * C)         # weights / small biases
    tmp = wb * N * 3 * C * (4 + 2)                                   # qkv f32 + bf16
    tmp += 3 * heads * wb * N * D * 2                                # q, k, v
    tmp += heads * wb * N * N * (4 + 4 + 2)                          # scores / probs
    tmp += heads * wb * N * D * (4 + 2)                              # context
    tmp += heads * wb * N * C * 4 + 2 * wb * N * C * 4               # projection slabs
    return blk + tmp


def _mlp_vmem_bytes(tm, C, Hd):
    blk = 2 * tm * C * (4 + 2 + 4)                                   # shortcut + attn + out (dbl-buf)
    blk += 2 * 2 * (C * Hd + Hd * C) + 4 * (4 * C + Hd)
    tmp = 3 * tm * C * 4 + tm * Hd * (4 + 2)
    return blk + tmp


def _vmem_limit(per_step_bytes):
    # Working set + headroom for Mosaic internal scratch / pipelining, capped
    # well below v7x's 64 MiB physical VMEM.
    return int(min(max(2 * per_step_bytes + (4 << 20), 16 << 20), 32 << 20))


def _largest_divisor_at_most(n, cap):
    d = max(1, min(cap, n))
    while n % d != 0:
        d -= 1
    return d


def _pick_wb(group, n_win, heads, N, C, budget=24 << 20):
    """Window batch per grid step: as large as the (v7x-sized) VMEM budget
    allows, dividing the per-type group, with >= 2 grid steps (2 TCs)."""
    wb = _largest_divisor_at_most(group, min(group, 64))
    while wb > 1 and _attn_vmem_bytes(wb, N, C, heads) > budget:
        wb = _largest_divisor_at_most(group, wb - 1)
    while wb > 1 and (n_win // wb) < 2:
        wb = _largest_divisor_at_most(group, wb - 1)
    return wb


# ----------------------------------------------------------------------------
# Pallas wrappers
# ----------------------------------------------------------------------------
def attention_windows(bias_ids, xw, g1, b1, wqkv, bqkv, bias_tab, wproj_hdc,
                      bproj, *, heads, wb):
    n_win, N, C = xw.shape
    D = C // heads
    assert n_win % wb == 0
    n_batches = n_win // wb
    kernel = functools.partial(_attn_kernel, heads=heads)
    return pl.pallas_call(
        kernel,
        out_shape=jax.ShapeDtypeStruct((n_win, N, C), jnp.bfloat16),
        grid_spec=pltpu.PrefetchScalarGridSpec(
            num_scalar_prefetch=1,                 # bias_ids -> SMEM
            grid=(n_batches,),
            in_specs=[
                pl.BlockSpec((wb, N, C), lambda i, bid: (i, 0, 0)),            # x windows (bf16)
                pl.BlockSpec((1, C), lambda i, bid: (0, 0)),                   # ln1 gamma
                pl.BlockSpec((1, C), lambda i, bid: (0, 0)),                   # ln1 beta
                pl.BlockSpec((C, 3 * C), lambda i, bid: (0, 0)),               # Wqkv (bf16)
                pl.BlockSpec((1, 3 * C), lambda i, bid: (0, 0)),               # bqkv
                pl.BlockSpec((1, heads, N, N),
                             lambda i, bid: (bid[i], 0, 0, 0)),                # combined bias+mask
                pl.BlockSpec((heads, D, C), lambda i, bid: (0, 0, 0)),         # Wproj (heads,D,C)
                pl.BlockSpec((1, C), lambda i, bid: (0, 0)),                   # bproj
            ],
            out_specs=pl.BlockSpec((wb, N, C), lambda i, bid: (i, 0, 0)),
        ),
        compiler_params=pltpu.CompilerParams(
            dimension_semantics=("parallel",),
            vmem_limit_bytes=_vmem_limit(_attn_vmem_bytes(wb, N, C, heads))),
    )(bias_ids, xw, g1, b1, wqkv, bqkv, bias_tab, wproj_hdc, bproj)


def mlp_fused(shortcut, attn_out, g2, b2, w1, b1, w2, b2b, *, tm):
    M, C = shortcut.shape
    Hd = w1.shape[1]
    assert M % tm == 0
    return pl.pallas_call(
        _mlp_kernel,
        out_shape=jax.ShapeDtypeStruct((M, C), jnp.float32),
        grid_spec=pltpu.PrefetchScalarGridSpec(
            num_scalar_prefetch=0,
            grid=(M // tm,),
            in_specs=[
                pl.BlockSpec((tm, C), lambda i: (i, 0)),       # shortcut (f32 residual)
                pl.BlockSpec((tm, C), lambda i: (i, 0)),       # attention out (bf16)
                pl.BlockSpec((1, C), lambda i: (0, 0)),
                pl.BlockSpec((1, C), lambda i: (0, 0)),
                pl.BlockSpec((C, Hd), lambda i: (0, 0)),       # w1 (bf16)
                pl.BlockSpec((1, Hd), lambda i: (0, 0)),
                pl.BlockSpec((Hd, C), lambda i: (0, 0)),       # w2 (bf16)
                pl.BlockSpec((1, C), lambda i: (0, 0)),
            ],
            out_specs=pl.BlockSpec((tm, C), lambda i: (i, 0)),
        ),
        compiler_params=pltpu.CompilerParams(
            dimension_semantics=("parallel",),
            vmem_limit_bytes=_vmem_limit(_mlp_vmem_bytes(tm, C, Hd))),
    )(shortcut, attn_out, g2, b2, w1, b1, w2, b2b)


# ----------------------------------------------------------------------------
# Plain-JAX glue: fused (cyclic shift + type-major window partition) gathers,
# shifted-window mask per window type
# ----------------------------------------------------------------------------
def _partition_indices(B, Z, H, W, wz, wh, ww, roll):
    """Static flat gather indices fusing the (optional) cyclic shift with the
    TYPE-major window partition (window order: Zw, Hw, B, Ww) in one pass,
    plus the inverse permutation for window-reverse + inverse shift."""
    sz, sh, sw = (wz // 2, wh // 2, ww // 2) if roll else (0, 0, 0)
    Zw, Hw, Ww = Z // wz, H // wh, W // ww
    zw, hw, b, wwi, dz, dh, dw = np.meshgrid(
        np.arange(Zw), np.arange(Hw), np.arange(B), np.arange(Ww),
        np.arange(wz), np.arange(wh), np.arange(ww), indexing="ij")
    z = (zw * wz + dz + sz) % Z
    h = (hw * wh + dh + sh) % H
    w = (wwi * ww + dw + sw) % W
    idx = (((b * Z + z) * H + h) * W + w).reshape(-1).astype(np.int32)
    inv = np.empty_like(idx)
    inv[idx] = np.arange(idx.size, dtype=np.int32)
    return jnp.asarray(idx), jnp.asarray(inv)


def compute_shift_mask_types(Z, H, wz, wh, ww):
    """Swin-style mask per window TYPE (Zw*Hw, N, N); longitude is periodic so
    the mask does not depend on the longitude window."""
    sz, sh = wz // 2, wh // 2
    img = np.zeros((Z, H), dtype=np.float32)
    z_sl = (slice(0, Z - wz), slice(Z - wz, Z - sz), slice(Z - sz, Z))
    h_sl = (slice(0, H - wh), slice(H - wh, H - sh), slice(H - sh, H))
    cnt = 0
    for zs in z_sl:
        for hs in h_sl:
            img[zs, hs] = cnt
            cnt += 1
    Zw, Hw = Z // wz, H // wh
    m = img.reshape(Zw, wz, Hw, wh).transpose(0, 2, 1, 3).reshape(Zw * Hw, wz * wh)
    m = np.repeat(m, ww, axis=1)                 # token order (wz, wh, ww)
    diff = m[:, :, None] - m[:, None, :]
    return np.where(diff != 0, -10000.0, 0.0).astype(np.float32)


# ----------------------------------------------------------------------------
# One EarthSpecificBlock and the EarthSpecificLayer forward (base-class loop)
# ----------------------------------------------------------------------------
def earth_block(x, p, *, Z, H, W, heads, wz, wh, ww, roll):
    B, L, C = x.shape
    assert L == Z * H * W
    N = wz * wh * ww
    Zw, Hw, Ww = Z // wz, H // wh, W // ww
    n_types = Zw * Hw
    group = B * Ww                              # windows per type (type-major order)
    n_win = n_types * group

    shortcut = x.reshape(B * L, C)              # residual stream stays f32

    # cyclic shift + window partition fused into one bf16 gather
    part_idx, inv_idx = _partition_indices(B, Z, H, W, wz, wh, ww, roll)
    x_bf = x.astype(jnp.bfloat16).reshape(B * L, C)
    # TODO(synk): for production, fold this gather into the kernel's BlockSpec
    # index_maps / manual DMA instead of an XLA gather pass.
    xw = jnp.take(x_bf, part_idx, axis=0).reshape(n_win, N, C)

    wb = _pick_wb(group, n_win, heads, N, C)
    n_batches = n_win // wb
    batch_type = (np.arange(n_batches) * wb) // group          # type per window batch

    # Precombined earth-bias (+ shift mask when rolled) per window type: one
    # bf16 table, one scalar-prefetch id per grid step (consecutive batches of
    # the same type re-use the resident block).
    if roll:
        mask_tab = jnp.asarray(compute_shift_mask_types(Z, H, wz, wh, ww),
                               jnp.bfloat16)                    # (n_types, N, N)
        lat_of_type = np.arange(n_types) % Hw
        bias_tab = p["earth_bias"][lat_of_type] + mask_tab[:, None, :, :]
        bias_ids = jnp.asarray(batch_type, jnp.int32)
    else:
        bias_tab = p["earth_bias"]                              # (Hw, heads, N, N)
        bias_ids = jnp.asarray(batch_type % Hw, jnp.int32)

    # TODO(synk): real Pangu builds the earth bias from a compressed parameter
    # table indexed by relative coords; we learn the (n_lat, heads, N, N) bias
    # directly (same forward semantics).
    D = C // heads
    attn_w = attention_windows(
        bias_ids, xw,
        p["ln1_g"], p["ln1_b"],
        p["wqkv"], p["bqkv"],
        bias_tab, p["wproj"].reshape(heads, D, C), p["bproj"],
        heads=heads, wb=wb)

    # window reverse + inverse cyclic shift fused into one bf16 gather
    attn_out = jnp.take(attn_w.reshape(n_win * N, C), inv_idx, axis=0)

    M = B * L
    tm = _largest_divisor_at_most(M, 512)
    if M // tm < 2:                             # keep >= 2 steps for v7x's 2 TCs
        tm = _largest_divisor_at_most(M, max(1, M // 2))
    y = mlp_fused(shortcut, attn_out,
                  p["ln2_g"], p["ln2_b"],
                  p["w1"], p["b1"], p["w2"], p["b2"], tm=tm)
    return y.reshape(B, L, C)


@functools.partial(jax.jit, static_argnums=(2, 3, 4),
                   static_argnames=("heads", "wz", "wh", "ww"))
def earth_specific_layer(x, params, n_patch_vert, n_patch_lat, n_patch_lon,
                         *, heads, wz, wh, ww):
    """Forward of EarthSpecificLayerBase: depth blocks, roll on odd layers.
    (torch.utils.checkpoint / empty_cache do not change forward values.)"""
    for i, p in enumerate(params):
        roll = (i % 2 == 1)
        x = earth_block(x, p, Z=n_patch_vert, H=n_patch_lat, W=n_patch_lon,
                        heads=heads, wz=wz, wh=wh, ww=ww, roll=roll)
    return x


# ----------------------------------------------------------------------------
# Deterministic synthetic parameters (matmul weights / bias tables pre-cast bf16)
# ----------------------------------------------------------------------------
def init_params(key, depth, dim, heads, n_lat_win, N):
    params = []
    for i in range(depth):
        k = jax.random.fold_in(key, i)
        ks = jax.random.split(k, 8)
        s = 0.02
        p = dict(
            ln1_g=jnp.ones((1, dim), jnp.float32),
            ln1_b=jnp.zeros((1, dim), jnp.float32),
            wqkv=(s * jax.random.normal(ks[0], (dim, 3 * dim), jnp.float32)
                  ).astype(jnp.bfloat16),
            bqkv=jnp.zeros((1, 3 * dim), jnp.float32),
            earth_bias=(s * jax.random.normal(ks[1], (n_lat_win, heads, N, N),
                                              jnp.float32)).astype(jnp.bfloat16),
            wproj=(s * jax.random.normal(ks[2], (dim, dim), jnp.float32)
                   ).astype(jnp.bfloat16),
            bproj=jnp.zeros((1, dim), jnp.float32),
            ln2_g=jnp.ones((1, dim), jnp.float32),
            ln2_b=jnp.zeros((1, dim), jnp.float32),
            w1=(s * jax.random.normal(ks[3], (dim, 4 * dim), jnp.float32)
                ).astype(jnp.bfloat16),
            b1=jnp.zeros((1, 4 * dim), jnp.float32),
            w2=(s * jax.random.normal(ks[4], (4 * dim, dim), jnp.float32)
                ).astype(jnp.bfloat16),
            b2=jnp.zeros((1, dim), jnp.float32),
        )
        params.append(p)
    return params


# ----------------------------------------------------------------------------
if __name__ == "__main__":
    key = jax.random.PRNGKey(0)

    # Small but representative shapes.
    depth = 2                    # layer 0: no roll, layer 1: rolled windows
    dim = 32                     # hidden_dim
    heads = 4
    n_patch_vert, n_patch_lat, n_patch_lon = 4, 8, 8
    wz, wh, ww = 2, 4, 4         # window sizes (divide the patch grid exactly)
    # TODO(synk): padding of the patch grid to window multiples (Pangu pads)
    # is omitted; shapes here are chosen divisible by the window size.
    N = wz * wh * ww
    B = 2
    L = n_patch_vert * n_patch_lat * n_patch_lon

    kx, kp = jax.random.split(key)
    x = jax.random.normal(kx, (B, L, dim), jnp.float32)
    params = init_params(kp, depth, dim, heads, n_lat_win=n_patch_lat // wh, N=N)

    y = earth_specific_layer(x, params, n_patch_vert, n_patch_lat, n_patch_lon,
                             heads=heads, wz=wz, wh=wh, ww=ww)
    y = jax.block_until_ready(y)
    assert y.shape == (B, L, dim) and y.dtype == jnp.float32
    print("KERNEL_OK")
</pallas_src>

<mosaic_0001>
module attributes {stable_mosaic.version = 11 : i64} {
  func.func @_attn_kernel(%arg0: i32, %arg1: memref<4xi32, #tpu.memory_space<smem>>, %arg2: memref<4x32x32xbf16, #tpu.memory_space<vmem>>, %arg3: memref<1x32xf32, #tpu.memory_space<vmem>>, %arg4: memref<1x32xf32, #tpu.memory_space<vmem>>, %arg5: memref<32x96xbf16, #tpu.memory_space<vmem>>, %arg6: memref<1x96xf32, #tpu.memory_space<vmem>>, %arg7: memref<1x4x32x32xbf16, #tpu.memory_space<vmem>>, %arg8: memref<4x8x32xbf16, #tpu.memory_space<vmem>>, %arg9: memref<1x32xf32, #tpu.memory_space<vmem>>, %arg10: memref<4x32x32xbf16, #tpu.memory_space<vmem>>) attributes {dimension_semantics = [#tpu.dimension_semantics<parallel>], iteration_bounds = array<i64: 4>, scalar_prefetch = 1 : i64, scratch_operands = 0 : i64, tpu.core_type = #tpu.core_type<tc>, window_params = [{transform_indices = @transform_0, window_bounds = array<i64: 4, 32, 32>}, {pipeline_mode = #tpu.pipeline_mode<synchronous>, transform_indices = @transform_1, window_bounds = array<i64: 1, 32>}, {pipeline_mode = #tpu.pipeline_mode<synchronous>, transform_indices = @transform_2, window_bounds = array<i64: 1, 32>}, {pipeline_mode = #tpu.pipeline_mode<synchronous>, transform_indices = @transform_3, window_bounds = array<i64: 32, 96>}, {pipeline_mode = #tpu.pipeline_mode<synchronous>, transform_indices = @transform_4, window_bounds = array<i64: 1, 96>}, {transform_indices = @transform_5, window_bounds = array<i64: 1, 4, 32, 32>}, {pipeline_mode = #tpu.pipeline_mode<synchronous>, transform_indices = @transform_6, window_bounds = array<i64: 4, 8, 32>}, {pipeline_mode = #tpu.pipeline_mode<synchronous>, transform_indices = @transform_7, window_bounds = array<i64: 1, 32>}, {transform_indices = @transform_8, window_bounds = array<i64: 4, 32, 32>}]} {
    %c0 = arith.constant 0 : index
    %c0_0 = arith.constant 0 : index
    %c0_1 = arith.constant 0 : index
    %0 = vector.load %arg2[%c0, %c0_0, %c0_1] : memref<4x32x32xbf16, #tpu.memory_space<vmem>>, vector<4x32x32xbf16>
    %1 = arith.extf %0 : vector<4x32x32xbf16> to vector<4x32x32xf32>
    %2 = vector.shape_cast %1 : vector<4x32x32xf32> to vector<128x32xf32>
    %cst = arith.constant dense<0.000000e+00> : vector<128xf32>
    %3 = vector.multi_reduction <add>, %2, %cst [1] : vector<128x32xf32> to vector<128xf32>
    %4 = vector.shape_cast %3 : vector<128xf32> to vector<128x1xf32>
    %cst_2 = arith.constant 3.200000e+01 : f32
    %5 = vector.broadcast %cst_2 : f32 to vector<128x1xf32>
    %6 = arith.divf %4, %5 : vector<128x1xf32>
    %7 = vector.broadcast %6 : vector<128x1xf32> to vector<128x32xf32>
    %8 = arith.subf %2, %7 : vector<128x32xf32>
    %9 = arith.mulf %8, %8 : vector<128x32xf32>
    %cst_3 = arith.constant dense<0.000000e+00> : vector<128xf32>
    %10 = vector.multi_reduction <add>, %9, %cst_3 [1] : vector<128x32xf32> to vector<128xf32>
    %11 = vector.shape_cast %10 : vector<128xf32> to vector<128x1xf32>
    %cst_4 = arith.constant 3.200000e+01 : f32
    %12 = vector.broadcast %cst_4 : f32 to vector<128x1xf32>
    %13 = arith.divf %11, %12 : vector<128x1xf32>
    %14 = vector.broadcast %6 : vector<128x1xf32> to vector<128x32xf32>
    %15 = arith.subf %2, %14 : vector<128x32xf32>
    %cst_5 = arith.constant 9.99999974E-6 : f32
    %16 = vector.broadcast %cst_5 : f32 to vector<128x1xf32>
    %17 = arith.addf %13, %16 : vector<128x1xf32>
    %18 = math.rsqrt %17 : vector<128x1xf32>
    %19 = vector.broadcast %18 : vector<128x1xf32> to vector<128x32xf32>
    %20 = arith.mulf %15, %19 : vector<128x32xf32>
    %c0_6 = arith.constant 0 : index
    %c0_7 = arith.constant 0 : index
    %21 = vector.load %arg3[%c0_6, %c0_7] : memref<1x32xf32, #tpu.memory_space<vmem>>, vector<1x32xf32>
    %22 = vector.broadcast %21 : vector<1x32xf32> to vector<128x32xf32>
    %23 = arith.mulf %20, %22 : vector<128x32xf32>
    %c0_8 = arith.constant 0 : index
    %c0_9 = arith.constant 0 : index
    %24 = vector.load %arg4[%c0_8, %c0_9] : memref<1x32xf32, #tpu.memory_space<vmem>>, vector<1x32xf32>
    %25 = vector.broadcast %24 : vector<1x32xf32> to vector<128x32xf32>
    %26 = arith.addf %23, %25 : vector<128x32xf32>
    %27 = arith.truncf %26 : vector<128x32xf32> to vector<128x32xbf16>
    %c0_10 = arith.constant 0 : index
    %c0_11 = arith.constant 0 : index
    %28 = vector.load %arg5[%c0_10, %c0_11] : memref<32x96xbf16, #tpu.memory_space<vmem>>, vector<32x96xbf16>
    %cst_12 = arith.constant dense<0.000000e+00> : vector<128x96xf32>
    %29 = tpu.matmul %27, %28, %cst_12 {dimension_numbers = #tpu.dot_dimension_numbers<[1], [0], [0], [1], [0, 0, 1, 1], [], []>} : vector<128x32xbf16>, vector<32x96xbf16>, vector<128x96xf32> -> vector<128x96xf32>
    %c0_13 = arith.constant 0 : index
    %c0_14 = arith.constant 0 : index
    %30 = vector.load %arg6[%c0_13, %c0_14] : memref<1x96xf32, #tpu.memory_space<vmem>>, vector<1x96xf32>
    %31 = vector.broadcast %30 : vector<1x96xf32> to vector<128x96xf32>
    %32 = arith.addf %29, %31 : vector<128x96xf32>
    %33 = vector.shape_cast %32 : vector<128x96xf32> to vector<4x32x96xf32>
    %34 = arith.truncf %33 : vector<4x32x96xf32> to vector<4x32x96xbf16>
    %35 = vector.extract_strided_slice %34 {offsets = [0, 0, 0], sizes = [4, 32, 8], strides = [1, 1, 1]} : vector<4x32x96xbf16> to vector<4x32x8xbf16>
    %36 = vector.extract_strided_slice %34 {offsets = [0, 0, 8], sizes = [4, 32, 8], strides = [1, 1, 1]} : vector<4x32x96xbf16> to vector<4x32x8xbf16>
    %37 = vector.extract_strided_slice %34 {offsets = [0, 0, 16], sizes = [4, 32, 8], strides = [1, 1, 1]} : vector<4x32x96xbf16> to vector<4x32x8xbf16>
    %38 = vector.extract_strided_slice %34 {offsets = [0, 0, 24], sizes = [4, 32, 8], strides = [1, 1, 1]} : vector<4x32x96xbf16> to vector<4x32x8xbf16>
    %39 = vector.shape_cast %35 : vector<4x32x8xbf16> to vector<1x4x32x8xbf16>
    %40 = vector.shape_cast %36 : vector<4x32x8xbf16> to vector<1x4x32x8xbf16>
    %41 = vector.shape_cast %37 : vector<4x32x8xbf16> to vector<1x4x32x8xbf16>
    %42 = vector.shape_cast %38 : vector<4x32x8xbf16> to vector<1x4x32x8xbf16>
    %43 = tpu.concatenate %39, %40, %41, %42 in 0 : vector<1x4x32x8xbf16>, vector<1x4x32x8xbf16>, vector<1x4x32x8xbf16>, vector<1x4x32x8xbf16> -> vector<4x4x32x8xbf16>
    %44 = vector.extract_strided_slice %34 {offsets = [0, 0, 32], sizes = [4, 32, 8], strides = [1, 1, 1]} : vector<4x32x96xbf16> to vector<4x32x8xbf16>
    %45 = vector.extract_strided_slice %34 {offsets = [0, 0, 40], sizes = [4, 32, 8], strides = [1, 1, 1]} : vector<4x32x96xbf16> to vector<4x32x8xbf16>
    %46 = vector.extract_strided_slice %34 {offsets = [0, 0, 48], sizes = [4, 32, 8], strides = [1, 1, 1]} : vector<4x32x96xbf16> to vector<4x32x8xbf16>
    %47 = vector.extract_strided_slice %34 {offsets = [0, 0, 56], sizes = [4, 32, 8], strides = [1, 1, 1]} : vector<4x32x96xbf16> to vector<4x32x8xbf16>
    %48 = vector.shape_cast %44 : vector<4x32x8xbf16> to vector<1x4x32x8xbf16>
    %49 = vector.shape_cast %45 : vector<4x32x8xbf16> to vector<1x4x32x8xbf16>
    %50 = vector.shape_cast %46 : vector<4x32x8xbf16> to vector<1x4x32x8xbf16>
    %51 = vector.shape_cast %47 : vector<4x32x8xbf16> to vector<1x4x32x8xbf16>
    %52 = tpu.concatenate %48, %49, %50, %51 in 0 : vector<1x4x32x8xbf16>, vector<1x4x32x8xbf16>, vector<1x4x32x8xbf16>, vector<1x4x32x8xbf16> -> vector<4x4x32x8xbf16>
    %53 = vector.extract_strided_slice %34 {offsets = [0, 0, 64], sizes = [4, 32, 8], strides = [1, 1, 1]} : vector<4x32x96xbf16> to vector<4x32x8xbf16>
    %54 = vector.extract_strided_slice %34 {offsets = [0, 0, 72], sizes = [4, 32, 8], strides = [1, 1, 1]} : vector<4x32x96xbf16> to vector<4x32x8xbf16>
    %55 = vector.extract_strided_slice %34 {offsets = [0, 0, 80], sizes = [4, 32, 8], strides = [1, 1, 1]} : vector<4x32x96xbf16> to vector<4x32x8xbf16>
    %56 = vector.extract_strided_slice %34 {offsets = [0, 0, 88], sizes = [4, 32, 8], strides = [1, 1, 1]} : vector<4x32x96xbf16> to vector<4x32x8xbf16>
    %57 = vector.shape_cast %53 : vector<4x32x8xbf16> to vector<1x4x32x8xbf16>
    %58 = vector.shape_cast %54 : vector<4x32x8xbf16> to vector<1x4x32x8xbf16>
    %59 = vector.shape_cast %55 : vector<4x32x8xbf16> to vector<1x4x32x8xbf16>
    %60 = vector.shape_cast %56 : vector<4x32x8xbf16> to vector<1x4x32x8xbf16>
    %61 = tpu.concatenate %57, %58, %59, %60 in 0 : vector<1x4x32x8xbf16>, vector<1x4x32x8xbf16>, vector<1x4x32x8xbf16>, vector<1x4x32x8xbf16> -> vector<4x4x32x8xbf16>
    %62 = vector.shape_cast %43 : vector<4x4x32x8xbf16> to vector<16x32x8xbf16>
    %63 = vector.shape_cast %52 : vector<4x4x32x8xbf16> to vector<16x32x8xbf16>
    %64 = vector.shape_cast %61 : vector<4x4x32x8xbf16> to vector<16x32x8xbf16>
    "tpu.trace_start"() <{level = 10 : i32, message = "bnd,bmd->bnm"}> : () -> ()
    %cst_15 = arith.constant dense<0.000000e+00> : vector<16x32x32xf32>
    %65 = tpu.matmul %62, %63, %cst_15 {dimension_numbers = #tpu.dot_dimension_numbers<[2], [2], [1], [1], [0, 0, 0, 1, 1, 1], [0], [0]>} : vector<16x32x8xbf16>, vector<16x32x8xbf16>, vector<16x32x32xf32> -> vector<16x32x32xf32>
    "tpu.trace_stop"() : () -> ()
    %cst_16 = arith.constant 0.353553385 : f32
    %66 = vector.broadcast %cst_16 : f32 to vector<16x32x32xf32>
    %67 = arith.mulf %65, %66 : vector<16x32x32xf32>
    %68 = vector.shape_cast %67 : vector<16x32x32xf32> to vector<4x4x32x32xf32>
    %c0_17 = arith.constant 0 : index
    %c0_18 = arith.constant 0 : index
    %c0_19 = arith.constant 0 : index
    %c0_20 = arith.constant 0 : index
    %69 = vector.load %arg7[%c0_17, %c0_18, %c0_19, %c0_20] : memref<1x4x32x32xbf16, #tpu.memory_space<vmem>>, vector<1x4x32x32xbf16>
    %70 = vector.shape_cast %69 : vector<1x4x32x32xbf16> to vector<4x32x32xbf16>
    %71 = vector.shape_cast %70 : vector<4x32x32xbf16> to vector<4x1x32x32xbf16>
    %72 = arith.extf %71 : vector<4x1x32x32xbf16> to vector<4x1x32x32xf32>
    %73 = vector.broadcast %72 : vector<4x1x32x32xf32> to vector<4x4x32x32xf32>
    %74 = arith.addf %68, %73 : vector<4x4x32x32xf32>
    %cst_21 = arith.constant dense<0xFF800000> : vector<4x4x32xf32>
    %75 = vector.multi_reduction <maximumf>, %74, %cst_21 [3] : vector<4x4x32x32xf32> to vector<4x4x32xf32>
    %76 = vector.shape_cast %75 : vector<4x4x32xf32> to vector<4x4x32x1xf32>
    %77 = vector.broadcast %76 : vector<4x4x32x1xf32> to vector<4x4x32x32xf32>
    %78 = arith.subf %74, %77 : vector<4x4x32x32xf32>
    %79 = math.exp %78 : vector<4x4x32x32xf32>
    %cst_22 = arith.constant dense<0.000000e+00> : vector<4x4x32xf32>
    %80 = vector.multi_reduction <add>, %79, %cst_22 [3] : vector<4x4x32x32xf32> to vector<4x4x32xf32>
    %81 = vector.shape_cast %80 : vector<4x4x32xf32> to vector<4x4x32x1xf32>
    %82 = tpu.reciprocal %81 {approx = true} : vector<4x4x32x1xf32> -> vector<4x4x32x1xf32>
    %83 = vector.broadcast %82 : vector<4x4x32x1xf32> to vector<4x4x32x32xf32>
    %84 = arith.mulf %79, %83 : vector<4x4x32x32xf32>
    %85 = arith.truncf %84 : vector<4x4x32x32xf32> to vector<4x4x32x32xbf16>
    %86 = vector.shape_cast %85 : vector<4x4x32x32xbf16> to vector<16x32x32xbf16>
    "tpu.trace_start"() <{level = 10 : i32, message = "bnm,bmd->bnd"}> : () -> ()
    %cst_23 = arith.constant dense<0.000000e+00> : vector<16x32x8xf32>
    %87 = tpu.matmul %86, %64, %cst_23 {dimension_numbers = #tpu.dot_dimension_numbers<[2], [1], [1], [2], [0, 0, 0, 1, 1, 2], [0], [0]>} : vector<16x32x32xbf16>, vector<16x32x8xbf16>, vector<16x32x8xf32> -> vector<16x32x8xf32>
    "tpu.trace_stop"() : () -> ()
    %88 = vector.shape_cast %87 : vector<16x32x8xf32> to vector<4x128x8xf32>
    %89 = arith.truncf %88 : vector<4x128x8xf32> to vector<4x128x8xbf16>
    %c0_24 = arith.constant 0 : index
    %c0_25 = arith.constant 0 : index
    %c0_26 = arith.constant 0 : index
    %90 = vector.load %arg8[%c0_24, %c0_25, %c0_26] : memref<4x8x32xbf16, #tpu.memory_space<vmem>>, vector<4x8x32xbf16>
    "tpu.trace_start"() <{level = 10 : i32, message = "hmd,hdc->hmc"}> : () -> ()
    %cst_27 = arith.constant dense<0.000000e+00> : vector<4x128x32xf32>
    %91 = tpu.matmul %89, %90, %cst_27 {dimension_numbers = #tpu.dot_dimension_numbers<[2], [1], [1], [2], [0, 0, 0, 1, 1, 2], [0], [0]>} : vector<4x128x8xbf16>, vector<4x8x32xbf16>, vector<4x128x32xf32> -> vector<4x128x32xf32>
    "tpu.trace_stop"() : () -> ()
    %cst_28 = arith.constant dense<0.000000e+00> : vector<128x32xf32>
    %92 = vector.multi_reduction <add>, %91, %cst_28 [0] : vector<4x128x32xf32> to vector<128x32xf32>
    %c0_29 = arith.constant 0 : index
    %c0_30 = arith.constant 0 : index
    %93 = vector.load %arg9[%c0_29, %c0_30] : memref<1x32xf32, #tpu.memory_space<vmem>>, vector<1x32xf32>
    %94 = vector.broadcast %93 : vector<1x32xf32> to vector<128x32xf32>
    %95 = arith.addf %92, %94 : vector<128x32xf32>
    %96 = vector.shape_cast %95 : vector<128x32xf32> to vector<4x32x32xf32>
    %97 = arith.truncf %96 : vector<4x32x32xf32> to vector<4x32x32xbf16>
    %c0_31 = arith.constant 0 : index
    %c0_32 = arith.constant 0 : index
    %c0_33 = arith.constant 0 : index
    %98 = vector.load %arg10[%c0_31, %c0_32, %c0_33] : memref<4x32x32xbf16, #tpu.memory_space<vmem>>, vector<4x32x32xbf16>
    tpu.vector_store %arg10[%c0_31, %c0_32, %c0_33], %97 {strides = array<i32>} : memref<4x32x32xbf16, #tpu.memory_space<vmem>>, vector<4x32x32xbf16>,
    return
  }
  func.func @transform_0(%arg0: i32, %arg1: memref<4xi32, #tpu.memory_space<smem>>) -> (i32, i32, i32) {
    %c0_i32 = arith.constant 0 : i32
    %c0_i32_0 = arith.constant 0 : i32
    %c0_i32_1 = arith.constant 0 : i32
    return %arg0, %c0_i32, %c0_i32_0 : i32, i32, i32
  }
  func.func @transform_1(%arg0: i32, %arg1: memref<4xi32, #tpu.memory_space<smem>>) -> (i32, i32) {
    %c0_i32 = arith.constant 0 : i32
    %c0_i32_0 = arith.constant 0 : i32
    %c0_i32_1 = arith.constant 0 : i32
    return %c0_i32, %c0_i32_0 : i32, i32
  }
  func.func @transform_2(%arg0: i32, %arg1: memref<4xi32, #tpu.memory_space<smem>>) -> (i32, i32) {
    %c0_i32 = arith.constant 0 : i32
    %c0_i32_0 = arith.constant 0 : i32
    %c0_i32_1 = arith.constant 0 : i32
    return %c0_i32, %c0_i32_0 : i32, i32
  }
  func.func @transform_3(%arg0: i32, %arg1: memref<4xi32, #tpu.memory_space<smem>>) -> (i32, i32) {
    %c0_i32 = arith.constant 0 : i32
    %c0_i32_0 = arith.constant 0 : i32
    %c0_i32_1 = arith.constant 0 : i32
    return %c0_i32, %c0_i32_0 : i32, i32
  }
  func.func @transform_4(%arg0: i32, %arg1: memref<4xi32, #tpu.memory_space<smem>>) -> (i32, i32) {
    %c0_i32 = arith.constant 0 : i32
    %c0_i32_0 = arith.constant 0 : i32
    %c0_i32_1 = arith.constant 0 : i32
    return %c0_i32, %c0_i32_0 : i32, i32
  }
  func.func @transform_5(%arg0: i32, %arg1: memref<4xi32, #tpu.memory_space<smem>>) -> (i32, i32, i32, i32) {
    %0 = arith.index_cast %arg0 : i32 to index
    %1 = memref.load %arg1[%0] : memref<4xi32, #tpu.memory_space<smem>>
    %c0_i32 = arith.constant 0 : i32
    %c0_i32_0 = arith.constant 0 : i32
    %c0_i32_1 = arith.constant 0 : i32
    %c0_i32_2 = arith.constant 0 : i32
    return %1, %c0_i32, %c0_i32_0, %c0_i32_1 : i32, i32, i32, i32
  }
  func.func @transform_6(%arg0: i32, %arg1: memref<4xi32, #tpu.memory_space<smem>>) -> (i32, i32, i32) {
    %c0_i32 = arith.constant 0 : i32
    %c0_i32_0 = arith.constant 0 : i32
    %c0_i32_1 = arith.constant 0 : i32
    %c0_i32_2 = arith.constant 0 : i32
    return %c0_i32, %c0_i32_0, %c0_i32_1 : i32, i32, i32
  }
  func.func @transform_7(%arg0: i32, %arg1: memref<4xi32, #tpu.memory_space<smem>>) -> (i32, i32) {
    %c0_i32 = arith.constant 0 : i32
    %c0_i32_0 = arith.constant 0 : i32
    %c0_i32_1 = arith.constant 0 : i32
    return %c0_i32, %c0_i32_0 : i32, i32
  }
  func.func @transform_8(%arg0: i32, %arg1: memref<4xi32, #tpu.memory_space<smem>>) -> (i32, i32, i32) {
    %c0_i32 = arith.constant 0 : i32
    %c0_i32_0 = arith.constant 0 : i32
    %c0_i32_1 = arith.constant 0 : i32
    return %arg0, %c0_i32, %c0_i32_0 : i32, i32, i32
  }
}

module attributes {stable_mosaic.version = 11 : i64} {
  func.func @_mlp_kernel(%arg0: i32, %arg1: memref<256x32xf32, #tpu.memory_space<vmem>>, %arg2: memref<256x32xbf16, #tpu.memory_space<vmem>>, %arg3: memref<1x32xf32, #tpu.memory_space<vmem>>, %arg4: memref<1x32xf32, #tpu.memory_space<vmem>>, %arg5: memref<32x128xbf16, #tpu.memory_space<vmem>>, %arg6: memref<1x128xf32, #tpu.memory_space<vmem>>, %arg7: memref<128x32xbf16, #tpu.memory_space<vmem>>, %arg8: memref<1x32xf32, #tpu.memory_space<vmem>>, %arg9: memref<256x32xf32, #tpu.memory_space<vmem>>) attributes {dimension_semantics = [#tpu.dimension_semantics<parallel>], iteration_bounds = array<i64: 2>, scalar_prefetch = 0 : i64, scratch_operands = 0 : i64, tpu.core_type = #tpu.core_type<tc>, window_params = [{transform_indices = @transform_0, window_bounds = array<i64: 256, 32>}, {transform_indices = @transform_1, window_bounds = array<i64: 256, 32>}, {pipeline_mode = #tpu.pipeline_mode<synchronous>, transform_indices = @transform_2, window_bounds = array<i64: 1, 32>}, {pipeline_mode = #tpu.pipeline_mode<synchronous>, transform_indices = @transform_3, window_bounds = array<i64: 1, 32>}, {pipeline_mode = #tpu.pipeline_mode<synchronous>, transform_indices = @transform_4, window_bounds = array<i64: 32, 128>}, {pipeline_mode = #tpu.pipeline_mode<synchronous>, transform_indices = @transform_5, window_bounds = array<i64: 1, 128>}, {pipeline_mode = #tpu.pipeline_mode<synchronous>, transform_indices = @transform_6, window_bounds = array<i64: 128, 32>}, {pipeline_mode = #tpu.pipeline_mode<synchronous>, transform_indices = @transform_7, window_bounds = array<i64: 1, 32>}, {transform_indices = @transform_8, window_bounds = array<i64: 256, 32>}]} {
    %c0 = arith.constant 0 : index
    %c0_0 = arith.constant 0 : index
    %0 = vector.load %arg1[%c0, %c0_0] : memref<256x32xf32, #tpu.memory_space<vmem>>, vector<256x32xf32>
    %c0_1 = arith.constant 0 : index
    %c0_2 = arith.constant 0 : index
    %1 = vector.load %arg2[%c0_1, %c0_2] : memref<256x32xbf16, #tpu.memory_space<vmem>>, vector<256x32xbf16>
    %2 = arith.extf %1 : vector<256x32xbf16> to vector<256x32xf32>
    %3 = arith.addf %0, %2 : vector<256x32xf32>
    %cst = arith.constant dense<0.000000e+00> : vector<256xf32>
    %4 = vector.multi_reduction <add>, %3, %cst [1] : vector<256x32xf32> to vector<256xf32>
    %5 = vector.shape_cast %4 : vector<256xf32> to vector<256x1xf32>
    %cst_3 = arith.constant 3.200000e+01 : f32
    %6 = vector.broadcast %cst_3 : f32 to vector<256x1xf32>
    %7 = arith.divf %5, %6 : vector<256x1xf32>
    %8 = vector.broadcast %7 : vector<256x1xf32> to vector<256x32xf32>
    %9 = arith.subf %3, %8 : vector<256x32xf32>
    %10 = arith.mulf %9, %9 : vector<256x32xf32>
    %cst_4 = arith.constant dense<0.000000e+00> : vector<256xf32>
    %11 = vector.multi_reduction <add>, %10, %cst_4 [1] : vector<256x32xf32> to vector<256xf32>
    %12 = vector.shape_cast %11 : vector<256xf32> to vector<256x1xf32>
    %cst_5 = arith.constant 3.200000e+01 : f32
    %13 = vector.broadcast %cst_5 : f32 to vector<256x1xf32>
    %14 = arith.divf %12, %13 : vector<256x1xf32>
    %15 = vector.broadcast %7 : vector<256x1xf32> to vector<256x32xf32>
    %16 = arith.subf %3, %15 : vector<256x32xf32>
    %cst_6 = arith.constant 9.99999974E-6 : f32
    %17 = vector.broadcast %cst_6 : f32 to vector<256x1xf32>
    %18 = arith.addf %14, %17 : vector<256x1xf32>
    %19 = math.rsqrt %18 : vector<256x1xf32>
    %20 = vector.broadcast %19 : vector<256x1xf32> to vector<256x32xf32>
    %21 = arith.mulf %16, %20 : vector<256x32xf32>
    %c0_7 = arith.constant 0 : index
    %c0_8 = arith.constant 0 : index
    %22 = vector.load %arg3[%c0_7, %c0_8] : memref<1x32xf32, #tpu.memory_space<vmem>>, vector<1x32xf32>
    %23 = vector.broadcast %22 : vector<1x32xf32> to vector<256x32xf32>
    %24 = arith.mulf %21, %23 : vector<256x32xf32>
    %c0_9 = arith.constant 0 : index
    %c0_10 = arith.constant 0 : index
    %25 = vector.load %arg4[%c0_9, %c0_10] : memref<1x32xf32, #tpu.memory_space<vmem>>, vector<1x32xf32>
    %26 = vector.broadcast %25 : vector<1x32xf32> to vector<256x32xf32>
    %27 = arith.addf %24, %26 : vector<256x32xf32>
    %28 = arith.truncf %27 : vector<256x32xf32> to vector<256x32xbf16>
    %c0_11 = arith.constant 0 : index
    %c0_12 = arith.constant 0 : index
    %29 = vector.load %arg5[%c0_11, %c0_12] : memref<32x128xbf16, #tpu.memory_space<vmem>>, vector<32x128xbf16>
    %cst_13 = arith.constant dense<0.000000e+00> : vector<256x128xf32>
    %30 = tpu.matmul %28, %29, %cst_13 {dimension_numbers = #tpu.dot_dimension_numbers<[1], [0], [0], [1], [0, 0, 1, 1], [], []>} : vector<256x32xbf16>, vector<32x128xbf16>, vector<256x128xf32> -> vector<256x128xf32>
    %c0_14 = arith.constant 0 : index
    %c0_15 = arith.constant 0 : index
    %31 = vector.load %arg6[%c0_14, %c0_15] : memref<1x128xf32, #tpu.memory_space<vmem>>, vector<1x128xf32>
    %32 = vector.broadcast %31 : vector<1x128xf32> to vector<256x128xf32>
    %33 = arith.addf %30, %32 : vector<256x128xf32>
    %34 = arith.mulf %33, %33 : vector<256x128xf32>
    %35 = arith.mulf %33, %34 : vector<256x128xf32>
    %cst_16 = arith.constant 4.471500e-02 : f32
    %36 = vector.broadcast %cst_16 : f32 to vector<256x128xf32>
    %37 = arith.mulf %36, %35 : vector<256x128xf32>
    %38 = arith.addf %33, %37 : vector<256x128xf32>
    %cst_17 = arith.constant 0.797884583 : f32
    %39 = vector.broadcast %cst_17 : f32 to vector<256x128xf32>
    %40 = arith.mulf %39, %38 : vector<256x128xf32>
    %41 = math.tanh %40 : vector<256x128xf32>
    %cst_18 = arith.constant 1.000000e+00 : f32
    %42 = vector.broadcast %cst_18 : f32 to vector<256x128xf32>
    %43 = arith.addf %42, %41 : vector<256x128xf32>
    %cst_19 = arith.constant 5.000000e-01 : f32
    %44 = vector.broadcast %cst_19 : f32 to vector<256x128xf32>
    %45 = arith.mulf %44, %43 : vector<256x128xf32>
    %46 = arith.mulf %33, %45 : vector<256x128xf32>
    %47 = arith.truncf %46 : vector<256x128xf32> to vector<256x128xbf16>
    %c0_20 = arith.constant 0 : index
    %c0_21 = arith.constant 0 : index
    %48 = vector.load %arg7[%c0_20, %c0_21] : memref<128x32xbf16, #tpu.memory_space<vmem>>, vector<128x32xbf16>
    %cst_22 = arith.constant dense<0.000000e+00> : vector<256x32xf32>
    %49 = tpu.matmul %47, %48, %cst_22 {dimension_numbers = #tpu.dot_dimension_numbers<[1], [0], [0], [1], [0, 0, 1, 1], [], []>} : vector<256x128xbf16>, vector<128x32xbf16>, vector<256x32xf32> -> vector<256x32xf32>
    %c0_23 = arith.constant 0 : index
    %c0_24 = arith.constant 0 : index
    %50 = vector.load %arg8[%c0_23, %c0_24] : memref<1x32xf32, #tpu.memory_space<vmem>>, vector<1x32xf32>
    %51 = vector.broadcast %50 : vector<1x32xf32> to vector<256x32xf32>
    %52 = arith.addf %49, %51 : vector<256x32xf32>
    %53 = arith.addf %3, %52 : vector<256x32xf32>
    %c0_25 = arith.constant 0 : index
    %c0_26 = arith.constant 0 : index
    %54 = vector.load %arg9[%c0_25, %c0_26] : memref<256x32xf32, #tpu.memory_space<vmem>>, vector<256x32xf32>
    tpu.vector_store %arg9[%c0_25, %c0_26], %53 {strides = array<i32>} : memref<256x32xf32, #tpu.memory_space<vmem>>, vector<256x32xf32>,
    return
  }
  func.func @transform_0(%arg0: i32) -> (i32, i32) {
    %c0_i32 = arith.constant 0 : i32
    %c0_i32_0 = arith.constant 0 : i32
    return %arg0, %c0_i32 : i32, i32
  }
  func.func @transform_1(%arg0: i32) -> (i32, i32) {
    %c0_i32 = arith.constant 0 : i32
    %c0_i32_0 = arith.constant 0 : i32
    return %arg0, %c0_i32 : i32, i32
  }
  func.func @transform_2(%arg0: i32) -> (i32, i32) {
    %c0_i32 = arith.constant 0 : i32
    %c0_i32_0 = arith.constant 0 : i32
    %c0_i32_1 = arith.constant 0 : i32
    return %c0_i32, %c0_i32_0 : i32, i32
  }
  func.func @transform_3(%arg0: i32) -> (i32, i32) {
    %c0_i32 = arith.constant 0 : i32
    %c0_i32_0 = arith.constant 0 : i32
    %c0_i32_1 = arith.constant 0 : i32
    return %c0_i32, %c0_i32_0 : i32, i32
  }
  func.func @transform_4(%arg0: i32) -> (i32, i32) {
    %c0_i32 = arith.constant 0 : i32
    %c0_i32_0 = arith.constant 0 : i32
    %c0_i32_1 = arith.constant 0 : i32
    return %c0_i32, %c0_i32_0 : i32, i32
  }
  func.func @transform_5(%arg0: i32) -> (i32, i32) {
    %c0_i32 = arith.constant 0 : i32
    %c0_i32_0 = arith.constant 0 : i32
    %c0_i32_1 = arith.constant 0 : i32
    return %c0_i32, %c0_i32_0 : i32, i32
  }
  func.func @transform_6(%arg0: i32) -> (i32, i32) {
    %c0_i32 = arith.constant 0 : i32
    %c0_i32_0 = arith.constant 0 : i32
    %c0_i32_1 = arith.constant 0 : i32
    return %c0_i32, %c0_i32_0 : i32, i32
  }
  func.func @transform_7(%arg0: i32) -> (i32, i32) {
    %c0_i32 = arith.constant 0 : i32
    %c0_i32_0 = arith.constant 0 : i32
    %c0_i32_1 = arith.constant 0 : i32
    return %c0_i32, %c0_i32_0 : i32, i32
  }
  func.func @transform_8(%arg0: i32) -> (i32, i32) {
    %c0_i32 = arith.constant 0 : i32
    %c0_i32_0 = arith.constant 0 : i32
    return %arg0, %c0_i32 : i32, i32
  }
}

module attributes {stable_mosaic.version = 11 : i64} {
  func.func @_attn_kernel(%arg0: i32, %arg1: memref<4xi32, #tpu.memory_space<smem>>, %arg2: memref<4x32x32xbf16, #tpu.memory_space<vmem>>, %arg3: memref<1x32xf32, #tpu.memory_space<vmem>>, %arg4: memref<1x32xf32, #tpu.memory_space<vmem>>, %arg5: memref<32x96xbf16, #tpu.memory_space<vmem>>, %arg6: memref<1x96xf32, #tpu.memory_space<vmem>>, %arg7: memref<1x4x32x32xbf16, #tpu.memory_space<vmem>>, %arg8: memref<4x8x32xbf16, #tpu.memory_space<vmem>>, %arg9: memref<1x32xf32, #tpu.memory_space<vmem>>, %arg10: memref<4x32x32xbf16, #tpu.memory_space<vmem>>) attributes {dimension_semantics = [#tpu.dimension_semantics<parallel>], iteration_bounds = array<i64: 4>, scalar_prefetch = 1 : i64, scratch_operands = 0 : i64, tpu.core_type = #tpu.core_type<tc>, window_params = [{transform_indices = @transform_0, window_bounds = array<i64: 4, 32, 32>}, {pipeline_mode = #tpu.pipeline_mode<synchronous>, transform_indices = @transform_1, window_bounds = array<i64: 1, 32>}, {pipeline_mode = #tpu.pipeline_mode<synchronous>, transform_indices = @transform_2, window_bounds = array<i64: 1, 32>}, {pipeline_mode = #tpu.pipeline_mode<synchronous>, transform_indices = @transform_3, window_bounds = array<i64: 32, 96>}, {pipeline_mode = #tpu.pipeline_mode<synchronous>, transform_indices = @transform_4, window_bounds = array<i64: 1, 96>}, {transform_indices = @transform_5, window_bounds = array<i64: 1, 4, 32, 32>}, {pipeline_mode = #tpu.pipeline_mode<synchronous>, transform_indices = @transform_6, window_bounds = array<i64: 4, 8, 32>}, {pipeline_mode = #tpu.pipeline_mode<synchronous>, transform_indices = @transform_7, window_bounds = array<i64: 1, 32>}, {transform_indices = @transform_8, window_bounds = array<i64: 4, 32, 32>}]} {
    %c0 = arith.constant 0 : index
    %c0_0 = arith.constant 0 : index
    %c0_1 = arith.constant 0 : index
    %0 = vector.load %arg2[%c0, %c0_0, %c0_1] : memref<4x32x32xbf16, #tpu.memory_space<vmem>>, vector<4x32x32xbf16>
    %1 = arith.extf %0 : vector<4x32x32xbf16> to vector<4x32x32xf32>
    %2 = vector.shape_cast %1 : vector<4x32x32xf32> to vector<128x32xf32>
    %cst = arith.constant dense<0.000000e+00> : vector<128xf32>
    %3 = vector.multi_reduction <add>, %2, %cst [1] : vector<128x32xf32> to vector<128xf32>
    %4 = vector.shape_cast %3 : vector<128xf32> to vector<128x1xf32>
    %cst_2 = arith.constant 3.200000e+01 : f32
    %5 = vector.broadcast %cst_2 : f32 to vector<128x1xf32>
    %6 = arith.divf %4, %5 : vector<128x1xf32>
    %7 = vector.broadcast %6 : vector<128x1xf32> to vector<128x32xf32>
    %8 = arith.subf %2, %7 : vector<128x32xf32>
    %9 = arith.mulf %8, %8 : vector<128x32xf32>
    %cst_3 = arith.constant dense<0.000000e+00> : vector<128xf32>
    %10 = vector.multi_reduction <add>, %9, %cst_3 [1] : vector<128x32xf32> to vector<128xf32>
    %11 = vector.shape_cast %10 : vector<128xf32> to vector<128x1xf32>
    %cst_4 = arith.constant 3.200000e+01 : f32
    %12 = vector.broadcast %cst_4 : f32 to vector<128x1xf32>
    %13 = arith.divf %11, %12 : vector<128x1xf32>
    %14 = vector.broadcast %6 : vector<128x1xf32> to vector<128x32xf32>
    %15 = arith.subf %2, %14 : vector<128x32xf32>
    %cst_5 = arith.constant 9.99999974E-6 : f32
    %16 = vector.broadcast %cst_5 : f32 to vector<128x1xf32>
    %17 = arith.addf %13, %16 : vector<128x1xf32>
    %18 = math.rsqrt %17 : vector<128x1xf32>
    %19 = vector.broadcast %18 : vector<128x1xf32> to vector<128x32xf32>
    %20 = arith.mulf %15, %19 : vector<128x32xf32>
    %c0_6 = arith.constant 0 : index
    %c0_7 = arith.constant 0 : index
    %21 = vector.load %arg3[%c0_6, %c0_7] : memref<1x32xf32, #tpu.memory_space<vmem>>, vector<1x32xf32>
    %22 = vector.broadcast %21 : vector<1x32xf32> to vector<128x32xf32>
    %23 = arith.mulf %20, %22 : vector<128x32xf32>
    %c0_8 = arith.constant 0 : index
    %c0_9 = arith.constant 0 : index
    %24 = vector.load %arg4[%c0_8, %c0_9] : memref<1x32xf32, #tpu.memory_space<vmem>>, vector<1x32xf32>
    %25 = vector.broadcast %24 : vector<1x32xf32> to vector<128x32xf32>
    %26 = arith.addf %23, %25 : vector<128x32xf32>
    %27 = arith.truncf %26 : vector<128x32xf32> to vector<128x32xbf16>
    %c0_10 = arith.constant 0 : index
    %c0_11 = arith.constant 0 : index
    %28 = vector.load %arg5[%c0_10, %c0_11] : memref<32x96xbf16, #tpu.memory_space<vmem>>, vector<32x96xbf16>
    %cst_12 = arith.constant dense<0.000000e+00> : vector<128x96xf32>
    %29 = tpu.matmul %27, %28, %cst_12 {dimension_numbers = #tpu.dot_dimension_numbers<[1], [0], [0], [1], [0, 0, 1, 1], [], []>} : vector<128x32xbf16>, vector<32x96xbf16>, vector<128x96xf32> -> vector<128x96xf32>
    %c0_13 = arith.constant 0 : index
    %c0_14 = arith.constant 0 : index
    %30 = vector.load %arg6[%c0_13, %c0_14] : memref<1x96xf32, #tpu.memory_space<vmem>>, vector<1x96xf32>
    %31 = vector.broadcast %30 : vector<1x96xf32> to vector<128x96xf32>
    %32 = arith.addf %29, %31 : vector<128x96xf32>
    %33 = vector.shape_cast %32 : vector<128x96xf32> to vector<4x32x96xf32>
    %34 = arith.truncf %33 : vector<4x32x96xf32> to vector<4x32x96xbf16>
    %35 = vector.extract_strided_slice %34 {offsets = [0, 0, 0], sizes = [4, 32, 8], strides = [1, 1, 1]} : vector<4x32x96xbf16> to vector<4x32x8xbf16>
    %36 = vector.extract_strided_slice %34 {offsets = [0, 0, 8], sizes = [4, 32, 8], strides = [1, 1, 1]} : vector<4x32x96xbf16> to vector<4x32x8xbf16>
    %37 = vector.extract_strided_slice %34 {offsets = [0, 0, 16], sizes = [4, 32, 8], strides = [1, 1, 1]} : vector<4x32x96xbf16> to vector<4x32x8xbf16>
    %38 = vector.extract_strided_slice %34 {offsets = [0, 0, 24], sizes = [4, 32, 8], strides = [1, 1, 1]} : vector<4x32x96xbf16> to vector<4x32x8xbf16>
    %39 = vector.shape_cast %35 : vector<4x32x8xbf16> to vector<1x4x32x8xbf16>
    %40 = vector.shape_cast %36 : vector<4x32x8xbf16> to vector<1x4x32x8xbf16>
    %41 = vector.shape_cast %37 : vector<4x32x8xbf16> to vector<1x4x32x8xbf16>
    %42 = vector.shape_cast %38 : vector<4x32x8xbf16> to vector<1x4x32x8xbf16>
    %43 = tpu.concatenate %39, %40, %41, %42 in 0 : vector<1x4x32x8xbf16>, vector<1x4x32x8xbf16>, vector<1x4x32x8xbf16>, vector<1x4x32x8xbf16> -> vector<4x4x32x8xbf16>
    %44 = vector.extract_strided_slice %34 {offsets = [0, 0, 32], sizes = [4, 32, 8], strides = [1, 1, 1]} : vector<4x32x96xbf16> to vector<4x32x8xbf16>
    %45 = vector.extract_strided_slice %34 {offsets = [0, 0, 40], sizes = [4, 32, 8], strides = [1, 1, 1]} : vector<4x32x96xbf16> to vector<4x32x8xbf16>
    %46 = vector.extract_strided_slice %34 {offsets = [0, 0, 48], sizes = [4, 32, 8], strides = [1, 1, 1]} : vector<4x32x96xbf16> to vector<4x32x8xbf16>
    %47 = vector.extract_strided_slice %34 {offsets = [0, 0, 56], sizes = [4, 32, 8], strides = [1, 1, 1]} : vector<4x32x96xbf16> to vector<4x32x8xbf16>
    %48 = vector.shape_cast %44 : vector<4x32x8xbf16> to vector<1x4x32x8xbf16>
    %49 = vector.shape_cast %45 : vector<4x32x8xbf16> to vector<1x4x32x8xbf16>
    %50 = vector.shape_cast %46 : vector<4x32x8xbf16> to vector<1x4x32x8xbf16>
    %51 = vector.shape_cast %47 : vector<4x32x8xbf16> to vector<1x4x32x8xbf16>
    %52 = tpu.concatenate %48, %49, %50, %51 in 0 : vector<1x4x32x8xbf16>, vector<1x4x32x8xbf16>, vector<1x4x32x8xbf16>, vector<1x4x32x8xbf16> -> vector<4x4x32x8xbf16>
    %53 = vector.extract_strided_slice %34 {offsets = [0, 0, 64], sizes = [4, 32, 8], strides = [1, 1, 1]} : vector<4x32x96xbf16> to vector<4x32x8xbf16>
    %54 = vector.extract_strided_slice %34 {offsets = [0, 0, 72], sizes = [4, 32, 8], strides = [1, 1, 1]} : vector<4x32x96xbf16> to vector<4x32x8xbf16>
    %55 = vector.extract_strided_slice %34 {offsets = [0, 0, 80], sizes = [4, 32, 8], strides = [1, 1, 1]} : vector<4x32x96xbf16> to vector<4x32x8xbf16>
    %56 = vector.extract_strided_slice %34 {offsets = [0, 0, 88], sizes = [4, 32, 8], strides = [1, 1, 1]} : vector<4x32x96xbf16> to vector<4x32x8xbf16>
    %57 = vector.shape_cast %53 : vector<4x32x8xbf16> to vector<1x4x32x8xbf16>
    %58 = vector.shape_cast %54 : vector<4x32x8xbf16> to vector<1x4x32x8xbf16>
    %59 = vector.shape_cast %55 : vector<4x32x8xbf16> to vector<1x4x32x8xbf16>
    %60 = vector.shape_cast %56 : vector<4x32x8xbf16> to vector<1x4x32x8xbf16>
    %61 = tpu.concatenate %57, %58, %59, %60 in 0 : vector<1x4x32x8xbf16>, vector<1x4x32x8xbf16>, vector<1x4x32x8xbf16>, vector<1x4x32x8xbf16> -> vector<4x4x32x8xbf16>
    %62 = vector.shape_cast %43 : vector<4x4x32x8xbf16> to vector<16x32x8xbf16>
    %63 = vector.shape_cast %52 : vector<4x4x32x8xbf16> to vector<16x32x8xbf16>
    %64 = vector.shape_cast %61 : vector<4x4x32x8xbf16> to vector<16x32x8xbf16>
    "tpu.trace_start"() <{level = 10 : i32, message = "bnd,bmd->bnm"}> : () -> ()
    %cst_15 = arith.constant dense<0.000000e+00> : vector<16x32x32xf32>
    %65 = tpu.matmul %62, %63, %cst_15 {dimension_numbers = #tpu.dot_dimension_numbers<[2], [2], [1], [1], [0, 0, 0, 1, 1, 1], [0], [0]>} : vector<16x32x8xbf16>, vector<16x32x8xbf16>, vector<16x32x32xf32> -> vector<16x32x32xf32>
    "tpu.trace_stop"() : () -> ()
    %cst_16 = arith.constant 0.353553385 : f32
    %66 = vector.broadcast %cst_16 : f32 to vector<16x32x32xf32>
    %67 = arith.mulf %65, %66 : vector<16x32x32xf32>
    %68 = vector.shape_cast %67 : vector<16x32x32xf32> to vector<4x4x32x32xf32>
    %c0_17 = arith.constant 0 : index
    %c0_18 = arith.constant 0 : index
    %c0_19 = arith.constant 0 : index
    %c0_20 = arith.constant 0 : index
    %69 = vector.load %arg7[%c0_17, %c0_18, %c0_19, %c0_20] : memref<1x4x32x32xbf16, #tpu.memory_space<vmem>>, vector<1x4x32x32xbf16>
    %70 = vector.shape_cast %69 : vector<1x4x32x32xbf16> to vector<4x32x32xbf16>
    %71 = vector.shape_cast %70 : vector<4x32x32xbf16> to vector<4x1x32x32xbf16>
    %72 = arith.extf %71 : vector<4x1x32x32xbf16> to vector<4x1x32x32xf32>
    %73 = vector.broadcast %72 : vector<4x1x32x32xf32> to vector<4x4x32x32xf32>
    %74 = arith.addf %68, %73 : vector<4x4x32x32xf32>
    %cst_21 = arith.constant dense<0xFF800000> : vector<4x4x32xf32>
    %75 = vector.multi_reduction <maximumf>, %74, %cst_21 [3] : vector<4x4x32x32xf32> to vector<4x4x32xf32>
    %76 = vector.shape_cast %75 : vector<4x4x32xf32> to vector<4x4x32x1xf32>
    %77 = vector.broadcast %76 : vector<4x4x32x1xf32> to vector<4x4x32x32xf32>
    %78 = arith.subf %74, %77 : vector<4x4x32x32xf32>
    %79 = math.exp %78 : vector<4x4x32x32xf32>
    %cst_22 = arith.constant dense<0.000000e+00> : vector<4x4x32xf32>
    %80 = vector.multi_reduction <add>, %79, %cst_22 [3] : vector<4x4x32x32xf32> to vector<4x4x32xf32>
    %81 = vector.shape_cast %80 : vector<4x4x32xf32> to vector<4x4x32x1xf32>
    %82 = tpu.reciprocal %81 {approx = true} : vector<4x4x32x1xf32> -> vector<4x4x32x1xf32>
    %83 = vector.broadcast %82 : vector<4x4x32x1xf32> to vector<4x4x32x32xf32>
    %84 = arith.mulf %79, %83 : vector<4x4x32x32xf32>
    %85 = arith.truncf %84 : vector<4x4x32x32xf32> to vector<4x4x32x32xbf16>
    %86 = vector.shape_cast %85 : vector<4x4x32x32xbf16> to vector<16x32x32xbf16>
    "tpu.trace_start"() <{level = 10 : i32, message = "bnm,bmd->bnd"}> : () -> ()
    %cst_23 = arith.constant dense<0.000000e+00> : vector<16x32x8xf32>
    %87 = tpu.matmul %86, %64, %cst_23 {dimension_numbers = #tpu.dot_dimension_numbers<[2], [1], [1], [2], [0, 0, 0, 1, 1, 2], [0], [0]>} : vector<16x32x32xbf16>, vector<16x32x8xbf16>, vector<16x32x8xf32> -> vector<16x32x8xf32>
    "tpu.trace_stop"() : () -> ()
    %88 = vector.shape_cast %87 : vector<16x32x8xf32> to vector<4x128x8xf32>
    %89 = arith.truncf %88 : vector<4x128x8xf32> to vector<4x128x8xbf16>
    %c0_24 = arith.constant 0 : index
    %c0_25 = arith.constant 0 : index
    %c0_26 = arith.constant 0 : index
    %90 = vector.load %arg8[%c0_24, %c0_25, %c0_26] : memref<4x8x32xbf16, #tpu.memory_space<vmem>>, vector<4x8x32xbf16>
    "tpu.trace_start"() <{level = 10 : i32, message = "hmd,hdc->hmc"}> : () -> ()
    %cst_27 = arith.constant dense<0.000000e+00> : vector<4x128x32xf32>
    %91 = tpu.matmul %89, %90, %cst_27 {dimension_numbers = #tpu.dot_dimension_numbers<[2], [1], [1], [2], [0, 0, 0, 1, 1, 2], [0], [0]>} : vector<4x128x8xbf16>, vector<4x8x32xbf16>, vector<4x128x32xf32> -> vector<4x128x32xf32>
    "tpu.trace_stop"() : () -> ()
    %cst_28 = arith.constant dense<0.000000e+00> : vector<128x32xf32>
    %92 = vector.multi_reduction <add>, %91, %cst_28 [0] : vector<4x128x32xf32> to vector<128x32xf32>
    %c0_29 = arith.constant 0 : index
    %c0_30 = arith.constant 0 : index
    %93 = vector.load %arg9[%c0_29, %c0_30] : memref<1x32xf32, #tpu.memory_space<vmem>>, vector<1x32xf32>
    %94 = vector.broadcast %93 : vector<1x32xf32> to vector<128x32xf32>
    %95 = arith.addf %92, %94 : vector<128x32xf32>
    %96 = vector.shape_cast %95 : vector<128x32xf32> to vector<4x32x32xf32>
    %97 = arith.truncf %96 : vector<4x32x32xf32> to vector<4x32x32xbf16>
    %c0_31 = arith.constant 0 : index
    %c0_32 = arith.constant 0 : index
    %c0_33 = arith.constant 0 : index
    %98 = vector.load %arg10[%c0_31, %c0_32, %c0_33] : memref<4x32x32xbf16, #tpu.memory_space<vmem>>, vector<4x32x32xbf16>
    tpu.vector_store %arg10[%c0_31, %c0_32, %c0_33], %97 {strides = array<i32>} : memref<4x32x32xbf16, #tpu.memory_space<vmem>>, vector<4x32x32xbf16>,
    return
  }
  func.func @transform_0(%arg0: i32, %arg1: memref<4xi32, #tpu.memory_space<smem>>) -> (i32, i32, i32) {
    %c0_i32 = arith.constant 0 : i32
    %c0_i32_0 = arith.constant 0 : i32
    %c0_i32_1 = arith.constant 0 : i32
    return %arg0, %c0_i32, %c0_i32_0 : i32, i32, i32
  }
  func.func @transform_1(%arg0: i32, %arg1: memref<4xi32, #tpu.memory_space<smem>>) -> (i32, i32) {
    %c0_i32 = arith.constant 0 : i32
    %c0_i32_0 = arith.constant 0 : i32
    %c0_i32_1 = arith.constant 0 : i32
    return %c0_i32, %c0_i32_0 : i32, i32
  }
  func.func @transform_2(%arg0: i32, %arg1: memref<4xi32, #tpu.memory_space<smem>>) -> (i32, i32) {
    %c0_i32 = arith.constant 0 : i32
    %c0_i32_0 = arith.constant 0 : i32
    %c0_i32_1 = arith.constant 0 : i32
    return %c0_i32, %c0_i32_0 : i32, i32
  }
  func.func @transform_3(%arg0: i32, %arg1: memref<4xi32, #tpu.memory_space<smem>>) -> (i32, i32) {
    %c0_i32 = arith.constant 0 : i32
    %c0_i32_0 = arith.constant 0 : i32
    %c0_i32_1 = arith.constant 0 : i32
    return %c0_i32, %c0_i32_0 : i32, i32
  }
  func.func @transform_4(%arg0: i32, %arg1: memref<4xi32, #tpu.memory_space<smem>>) -> (i32, i32) {
    %c0_i32 = arith.constant 0 : i32
    %c0_i32_0 = arith.constant 0 : i32
    %c0_i32_1 = arith.constant 0 : i32
    return %c0_i32, %c0_i32_0 : i32, i32
  }
  func.func @transform_5(%arg0: i32, %arg1: memref<4xi32, #tpu.memory_space<smem>>) -> (i32, i32, i32, i32) {
    %0 = arith.index_cast %arg0 : i32 to index
    %1 = memref.load %arg1[%0] : memref<4xi32, #tpu.memory_space<smem>>
    %c0_i32 = arith.constant 0 : i32
    %c0_i32_0 = arith.constant 0 : i32
    %c0_i32_1 = arith.constant 0 : i32
    %c0_i32_2 = arith.constant 0 : i32
    return %1, %c0_i32, %c0_i32_0, %c0_i32_1 : i32, i32, i32, i32
  }
  func.func @transform_6(%arg0: i32, %arg1: memref<4xi32, #tpu.memory_space<smem>>) -> (i32, i32, i32) {
    %c0_i32 = arith.constant 0 : i32
    %c0_i32_0 = arith.constant 0 : i32
    %c0_i32_1 = arith.constant 0 : i32
    %c0_i32_2 = arith.constant 0 : i32
    return %c0_i32, %c0_i32_0, %c0_i32_1 : i32, i32, i32
  }
  func.func @transform_7(%arg0: i32, %arg1: memref<4xi32, #tpu.memory_space<smem>>) -> (i32, i32) {
    %c0_i32 = arith.constant 0 : i32
    %c0_i32_0 = arith.constant 0 : i32
    %c0_i32_1 = arith.constant 0 : i32
    return %c0_i32, %c0_i32_0 : i32, i32
  }
  func.func @transform_8(%arg0: i32, %arg1: memref<4xi32, #tpu.memory_space<smem>>) -> (i32, i32, i32) {
    %c0_i32 = arith.constant 0 : i32
    %c0_i32_0 = arith.constant 0 : i32
    %c0_i32_1 = arith.constant 0 : i32
    return %arg0, %c0_i32, %c0_i32_0 : i32, i32, i32
  }
}

</mosaic_0001>

<llo_original>
// kernel: earth_specific_layer.5
$region0: #{earth_specific_layer.5}
  #allocation0 [shape = 'u32[]', space=smem, size = 0x4, offset = 0x4, fixed_abs, tag = 'smem constant byte address 0x4 - core index']
  #allocation1 [shape = 'u32[144,128]{1,0:T(1,128)}', space=vmem, size = 0x12000, scoped, tag = 'internal scratch']
  %s0 = inlined_call_operand.vmem [shape: f32[512,32], index: 0, kind: input, shape index: {}]
  %s1 = inlined_call_operand.vmem [shape: bf16[512,32], index: 1, kind: input, shape index: {}]
  %s2 = inlined_call_operand.vmem [shape: f32[1,32], index: 2, kind: input, shape index: {}]
  %s3 = inlined_call_operand.vmem [shape: f32[1,32], index: 3, kind: input, shape index: {}]
  %s4 = inlined_call_operand.vmem [shape: bf16[32,128], index: 4, kind: input, shape index: {}]
  %s5 = inlined_call_operand.vmem [shape: f32[1,128], index: 5, kind: input, shape index: {}]
  %s6 = inlined_call_operand.vmem [shape: bf16[128,32], index: 6, kind: input, shape index: {}]
  %s7 = inlined_call_operand.vmem [shape: f32[1,32], index: 7, kind: input, shape index: {}]
  %s8 = inlined_call_operand.vmem [shape: f32[512,32], index: 8, kind: output, shape index: {}]
  %s9 = sld [smem:[#allocation0]]
  $region65: #{earth_specific_layer.5} parent=0
    _
  %s11 = ssub.s32 1, %s9
  %s12 = scalar_select 0, %s11, %s9
  loop: start=0, step=1, limit=4
  $region2: #{earth_specific_layer.5} parent=0 // loop_pre_header
    _
  $region3: #{earth_specific_layer.5} parent=0 // loop_header
    %s14 = sphi 0, %s18
    %p15 = scmp.ge.s32.totalorder %s14, 4
    %s24 = sphi 0, %s26
    %s27 = sphi 0, %s24
    %s28 = sphi 0, %s27
    %s44 = sphi 0, %s28
    %s50 = sphi 0, %s52
    %s53 = sphi 0, %s50
    %s54 = sphi 0, %s53
    %s70 = sphi 0, %s54
    %s74 = sphi 0, %s74
    %s76 = sphi 0, %s74
    %s77 = sphi 0, %s76
    %s91 = sphi 0, %s77
    %s95 = sphi 0, %s95
    %s97 = sphi 0, %s95
    %s98 = sphi 0, %s97
    %s112 = sphi 0, %s98
    %s116 = sphi 0, %s116
    %s118 = sphi 0, %s116
    %s119 = sphi 0, %s118
    %s133 = sphi 0, %s119
    %s137 = sphi 0, %s137
    %s139 = sphi 0, %s137
    %s140 = sphi 0, %s139
    %s154 = sphi 0, %s140
    %s158 = sphi 0, %s158
    %s160 = sphi 0, %s158
    %s161 = sphi 0, %s160
    %s175 = sphi 0, %s161
    %s179 = sphi 0, %s179
    %s181 = sphi 0, %s179
    %s182 = sphi 0, %s181
    %s196 = sphi 0, %s182
    %s202 = sphi 0, %s204
    %s205 = sphi 0, %s202
    %s206 = sphi 0, %s205
    %s222 = sphi 0, %s206
  $region4: #{earth_specific_layer.5} parent=0 // loop_header_branch
    %17 = sbr.rel (%p15) target = $region8
  $region5: #{earth_specific_layer.5} parent=0 // loop_body
    %s19 = ssub.s32 %s14, 1
    %s20 = ssub.s32 %s14, 2
    %s21 = sadd.s32 %s14, 1
    %s22 = ssub.s32 %s14, %s21
    %p23 = scmp.eq.s32.totalorder %s22, 0
    %s25 = sadd.s32 %s24, 1
    %s26 = scalar_select %p23, %s24, %s25
    %p29 = pneg %p23
    %p30 = scmp.eq.s32.totalorder %s14, 1
    %p31 = por %p29, %p30
    %p32 = scmp.ne.s32.totalorder %s24, %s27
    %p33 = scmp.eq.s32.totalorder %s14, 0
    %p34 = por %p32, %p33
    %p35 = scmp.ne.s32.totalorder %s24, %s27
    %p36 = scmp.eq.s32.totalorder %s19, 1
    %p37 = por %p35, %p36
    %p38 = scmp.ne.s32.totalorder %s27, %s28
    %p39 = scmp.eq.s32.totalorder %s19, 0
    %p40 = por %p38, %p39
    %p41 = scmp.ne.s32.totalorder %s27, %s28
    %p42 = scmp.eq.s32.totalorder %s20, 1
    %p43 = por %p41, %p42
    %p45 = scmp.ne.s32.totalorder %s28, %s44
    %p46 = scmp.eq.s32.totalorder %s20, 0
    %p47 = por %p45, %p46
    %s48 = ssub.s32 %s14, %s21
    %p49 = scmp.eq.s32.totalorder %s48, 0
    %s51 = sadd.s32 %s50, 1
    %s52 = scalar_select %p49, %s50, %s51
    %p55 = pneg %p49
    %p56 = scmp.eq.s32.totalorder %s14, 1
    %p57 = por %p55, %p56
    %p58 = scmp.ne.s32.totalorder %s50, %s53
    %p59 = scmp.eq.s32.totalorder %s14, 0
    %p60 = por %p58, %p59
    %p61 = scmp.ne.s32.totalorder %s50, %s53
    %p62 = scmp.eq.s32.totalorder %s19, 1
    %p63 = por %p61, %p62
    %p64 = scmp.ne.s32.totalorder %s53, %s54
    %p65 = scmp.eq.s32.totalorder %s19, 0
    %p66 = por %p64, %p65
    %p67 = scmp.ne.s32.totalorder %s53, %s54
    %p68 = scmp.eq.s32.totalorder %s20, 1
    %p69 = por %p67, %p68
    %p71 = scmp.ne.s32.totalorder %s54, %s70
    %p72 = scmp.eq.s32.totalorder %s20, 0
    %p73 = por %p71, %p72
    %s75 = sadd.s32 %s74, 1
    %p78 = scmp.eq.s32.totalorder %s14, 1
    %p79 = scmp.ne.s32.totalorder %s74, %s76
    %p80 = scmp.eq.s32.totalorder %s14, 0
    %p81 = por %p79, %p80
    %p82 = scmp.ne.s32.totalorder %s74, %s76
    %p83 = scmp.eq.s32.totalorder %s19, 1
    %p84 = por %p82, %p83
    %p85 = scmp.ne.s32.totalorder %s76, %s77
    %p86 = scmp.eq.s32.totalorder %s19, 0
    %p87 = por %p85, %p86
    %p88 = scmp.ne.s32.totalorder %s76, %s77
    %p89 = scmp.eq.s32.totalorder %s20, 1
    %p90 = por %p88, %p89
    %p92 = scmp.ne.s32.totalorder %s77, %s91
    %p93 = scmp.eq.s32.totalorder %s20, 0
    %p94 = por %p92, %p93
    %s96 = sadd.s32 %s95, 1
    %p99 = scmp.eq.s32.totalorder %s14, 1
    %p100 = scmp.ne.s32.totalorder %s95, %s97
    %p101 = scmp.eq.s32.totalorder %s14, 0
    %p102 = por %p100, %p101
    %p103 = scmp.ne.s32.totalorder %s95, %s97
    %p104 = scmp.eq.s32.totalorder %s19, 1
    %p105 = por %p103, %p104
    %p106 = scmp.ne.s32.totalorder %s97, %s98
    %p107 = scmp.eq.s32.totalorder %s19, 0
    %p108 = por %p106, %p107
    %p109 = scmp.ne.s32.totalorder %s97, %s98
    %p110 = scmp.eq.s32.totalorder %s20, 1
    %p111 = por %p109, %p110
    %p113 = scmp.ne.s32.totalorder %s98, %s112
    %p114 = scmp.eq.s32.totalorder %s20, 0
    %p115 = por %p113, %p114
    %s117 = sadd.s32 %s116, 1
    %p120 = scmp.eq.s32.totalorder %s14, 1
    %p121 = scmp.ne.s32.totalorder %s116, %s118
    %p122 = scmp.eq.s32.totalorder %s14, 0
    %p123 = por %p121, %p122
    %p124 = scmp.ne.s32.totalorder %s116, %s118
    %p125 = scmp.eq.s32.totalorder %s19, 1
    %p126 = por %p124, %p125
    %p127 = scmp.ne.s32.totalorder %s118, %s119
    %p128 = scmp.eq.s32.totalorder %s19, 0
    %p129 = por %p127, %p128
    %p130 = scmp.ne.s32.totalorder %s118, %s119
    %p131 = scmp.eq.s32.totalorder %s20, 1
    %p132 = por %p130, %p131
    %p134 = scmp.ne.s32.totalorder %s119, %s133
    %p135 = scmp.eq.s32.totalorder %s20, 0
    %p136 = por %p134, %p135
    %s138 = sadd.s32 %s137, 1
    %p141 = scmp.eq.s32.totalorder %s14, 1
    %p142 = scmp.ne.s32.totalorder %s137, %s139
    %p143 = scmp.eq.s32.totalorder %s14, 0
    %p144 = por %p142, %p143
    %p145 = scmp.ne.s32.totalorder %s137, %s139
    %p146 = scmp.eq.s32.totalorder %s19, 1
    %p147 = por %p145, %p146
    %p148 = scmp.ne.s32.totalorder %s139, %s140
    %p149 = scmp.eq.s32.totalorder %s19, 0
    %p150 = por %p148, %p149
    %p151 = scmp.ne.s32.totalorder %s139, %s140
    %p152 = scmp.eq.s32.totalorder %s20, 1
    %p153 = por %p151, %p152
    %p155 = scmp.ne.s32.totalorder %s140, %s154
    %p156 = scmp.eq.s32.totalorder %s20, 0
    %p157 = por %p155, %p156
    %s159 = sadd.s32 %s158, 1
    %p162 = scmp.eq.s32.totalorder %s14, 1
    %p163 = scmp.ne.s32.totalorder %s158, %s160
    %p164 = scmp.eq.s32.totalorder %s14, 0
    %p165 = por %p163, %p164
    %p166 = scmp.ne.s32.totalorder %s158, %s160
    %p167 = scmp.eq.s32.totalorder %s19, 1
    %p168 = por %p166, %p167
    %p169 = scmp.ne.s32.totalorder %s160, %s161
    %p170 = scmp.eq.s32.totalorder %s19, 0
    %p171 = por %p169, %p170
    %p172 = scmp.ne.s32.totalorder %s160, %s161
    %p173 = scmp.eq.s32.totalorder %s20, 1
    %p174 = por %p172, %p173
    %p176 = scmp.ne.s32.totalorder %s161, %s175
    %p177 = scmp.eq.s32.totalorder %s20, 0
    %p178 = por %p176, %p177
    %s180 = sadd.s32 %s179, 1
    %p183 = scmp.eq.s32.totalorder %s14, 1
    %p184 = scmp.ne.s32.totalorder %s179, %s181
    %p185 = scmp.eq.s32.totalorder %s14, 0
    %p186 = por %p184, %p185
    %p187 = scmp.ne.s32.totalorder %s179, %s181
    %p188 = scmp.eq.s32.totalorder %s19, 1
    %p189 = por %p187, %p188
    %p190 = scmp.ne.s32.totalorder %s181, %s182
    %p191 = scmp.eq.s32.totalorder %s19, 0
    %p192 = por %p190, %p191
    %p193 = scmp.ne.s32.totalorder %s181, %s182
    %p194 = scmp.eq.s32.totalorder %s20, 1
    %p195 = por %p193, %p194
    %p197 = scmp.ne.s32.totalorder %s182, %s196
    %p198 = scmp.eq.s32.totalorder %s20, 0
    %p199 = por %p197, %p198
    %s200 = ssub.s32 %s14, %s21
    %p201 = scmp.eq.s32.totalorder %s200, 0
    %s203 = sadd.s32 %s202, 1
    %s204 = scalar_select %p201, %s202, %s203
    %p207 = pneg %p201
    %p208 = scmp.eq.s32.totalorder %s14, 1
    %p209 = por %p207, %p208
    %p210 = scmp.ne.s32.totalorder %s202, %s205
    %p211 = scmp.eq.s32.totalorder %s14, 0
    %p212 = por %p210, %p211
    %p213 = scmp.ne.s32.totalorder %s202, %s205
    %p214 = scmp.eq.s32.totalorder %s19, 1
    %p215 = por %p213, %p214
    %p216 = scmp.ne.s32.totalorder %s205, %s206
    %p217 = scmp.eq.s32.totalorder %s19, 0
    %p218 = por %p216, %p217
    %p219 = scmp.ne.s32.totalorder %s205, %s206
    %p220 = scmp.eq.s32.totalorder %s20, 1
    %p221 = por %p219, %p220
    %p223 = scmp.ne.s32.totalorder %s206, %s222
    %p224 = scmp.eq.s32.totalorder %s20, 0
    %p225 = por %p223, %p224
    %p226 = scmp.le.s32.totalorder 1, %s14
    %p227 = scmp.lt.s32.totalorder %s14, 3
    %p228 = pnand %p226, %p227
    %p229 = pneg %p228
    // Predicated region
    $region9: #{earth_specific_layer.5} parent=5 // pred_check
      _
    $region10: #{earth_specific_layer.5} parent=5 // pred_check_branch
      %231 = sbr.rel (%p228) target = $region12
    $region11: #{earth_specific_layer.5} parent=5 // pred_region
      %s232 = ssub.s32 %s14, 1
      // Predicated region
      $region13: #{earth_specific_layer.5} parent=11 // pred_check
        %p233 = pneg %p87
      $region14: #{earth_specific_layer.5} parent=11 // pred_check_branch
        %235 = sbr.rel (%p233) target = $region16
      $region15: #{earth_specific_layer.5} parent=11 // pred_region
        _
      $region16: #{earth_specific_layer.5} parent=11 // pred_fallthru
        _
      // Predicated region
      $region17: #{earth_specific_layer.5} parent=11 // pred_check
        %p236 = pneg %p108
      $region18: #{earth_specific_layer.5} parent=11 // pred_check_branch
        %238 = sbr.rel (%p236) target = $region20
      $region19: #{earth_specific_layer.5} parent=11 // pred_region
        _
      $region20: #{earth_specific_layer.5} parent=11 // pred_fallthru
        _
      // Predicated region
      $region21: #{earth_specific_layer.5} parent=11 // pred_check
        %p239 = pneg %p129
      $region22: #{earth_specific_layer.5} parent=11 // pred_check_branch
        %241 = sbr.rel (%p239) target = $region24
      $region23: #{earth_specific_layer.5} parent=11 // pred_region
        _
      $region24: #{earth_specific_layer.5} parent=11 // pred_fallthru
        _
      // Predicated region
      $region25: #{earth_specific_layer.5} parent=11 // pred_check
        %p242 = pneg %p150
      $region26: #{earth_specific_layer.5} parent=11 // pred_check_branch
        %244 = sbr.rel (%p242) target = $region28
      $region27: #{earth_specific_layer.5} parent=11 // pred_region
        _
      $region28: #{earth_specific_layer.5} parent=11 // pred_fallthru
        _
      // Predicated region
      $region29: #{earth_specific_layer.5} parent=11 // pred_check
        %p245 = pneg %p171
      $region30: #{earth_specific_layer.5} parent=11 // pred_check_branch
        %247 = sbr.rel (%p245) target = $region32
      $region31: #{earth_specific_layer.5} parent=11 // pred_region
        _
      $region32: #{earth_specific_layer.5} parent=11 // pred_fallthru
        _
      // Predicated region
      $region33: #{earth_specific_layer.5} parent=11 // pred_check
        %p248 = pneg %p192
      $region34: #{earth_specific_layer.5} parent=11 // pred_check_branch
        %250 = sbr.rel (%p248) target = $region36
      $region35: #{earth_specific_layer.5} parent=11 // pred_region
        _
      $region36: #{earth_specific_layer.5} parent=11 // pred_fallthru
        _
    $region12: #{earth_specific_layer.5} parent=5 // pred_fallthru
      _
    %p251 = scmp.lt.s32.totalorder %s14, 2
    // Predicated region
    $region37: #{earth_specific_layer.5} parent=5 // pred_check
      %p252 = pneg %p251
    $region38: #{earth_specific_layer.5} parent=5 // pred_check_branch
      %254 = sbr.rel (%p252) target = $region40
    $region39: #{earth_specific_layer.5} parent=5 // pred_region
      // Predicated region
      $region41: #{earth_specific_layer.5} parent=39 // pred_check
        %p255 = pneg %p34
      $region42: #{earth_specific_layer.5} parent=39 // pred_check_branch
        %257 = sbr.rel (%p255) target = $region44
      $region43: #{earth_specific_layer.5} parent=39 // pred_region
        %s258 = smul.u32 32, %s14
        %p259 = scmp.lt.s32.totalorder %s258, 63
        %s260 = scalar_select %p259, %s258, 63
        %s261 = smul.addr %s260, 8
        %s262 = scalar_lea.vmem %s0, %s261
        %s263 = smul.u32 32, %s14
      $region44: #{earth_specific_layer.5} parent=39 // pred_fallthru
        _
      // Predicated region
      $region45: #{earth_specific_layer.5} parent=39 // pred_check
        %p264 = pneg %p60
      $region46: #{earth_specific_layer.5} parent=39 // pred_check_branch
        %266 = sbr.rel (%p264) target = $region48
      $region47: #{earth_specific_layer.5} parent=39 // pred_region
        %s267 = smul.u32 32, %s14
        %p268 = scmp.lt.s32.totalorder %s267, 63
        %s269 = scalar_select %p268, %s267, 63
        %s270 = smul.addr %s269, 4
        %s271 = scalar_lea.vmem %s1, %s270
        %s272 = smul.u32 32, %s14
      $region48: #{earth_specific_layer.5} parent=39 // pred_fallthru
        _
    $region40: #{earth_specific_layer.5} parent=5 // pred_fallthru
      _
    %p273 = scmp.le.s32.totalorder 1, %s14
    %p274 = scmp.lt.s32.totalorder %s14, 3
    %p275 = pnand %p273, %p274
    %p276 = pneg %p275
    // Predicated region
    $region49: #{earth_specific_layer.5} parent=5 // pred_check
      _
    $region50: #{earth_specific_layer.5} parent=5 // pred_check_branch
      %278 = sbr.rel (%p275) target = $region52
    $region51: #{earth_specific_layer.5} parent=5 // pred_region
      %s279 = ssub.s32 %s14, 1
      %s280 = smul.u32 32, %s19
      %p281 = scmp.lt.s32.totalorder %s280, 63
      %s282 = scalar_select %p281, %s280, 63
      %s283 = smul.addr %s282, 8
      %s284 = scalar_lea.vmem %s0, %s283
      %p285 = pneg %p40
      %p286 = pneg %p37
      %s287 = smul.u32 32, %s19
      %p288 = scmp.lt.s32.totalorder %s287, 63
      %s289 = scalar_select %p288, %s287, 63
      %s290 = smul.addr %s289, 4
      %s291 = scalar_lea.vmem %s1, %s290
      %p292 = pneg %p66
      %p293 = pneg %p63
      %p294 = pneg %p87
      %p295 = pneg %p84
      %p296 = pneg %p108
      %p297 = pneg %p105
      %p298 = pneg %p129
      %p299 = pneg %p126
      %p300 = pneg %p150
      %p301 = pneg %p147
      %p302 = pneg %p171
      %p303 = pneg %p168
      %p304 = pneg %p192
      %p305 = pneg %p189
      %p306 = pneg %p218
      %p307 = pneg %p215
      %s308 = smul.u32 32, %s19
      %p309 = scmp.lt.s32.totalorder %s308, 63
      %s310 = scalar_select %p309, %s308, 63
      %s311 = smul.addr %s310, 8
      %s312 = scalar_lea.vmem %s8, %s311
      %s313 = smul.u32 32, %s19
      %p314 = scmp.lt.s32.totalorder %s313, 63
      %s315 = scalar_select %p314, %s313, 63
      %s316 = smul.addr %s315, 8
      %s317 = scalar_lea.vmem %s0, %s316
      %s318 = smul.u32 32, %s19
      %s319 = smul.u32 32, %s19
      %p320 = scmp.lt.s32.totalorder %s319, 63
      %s321 = scalar_select %p320, %s319, 63
      %s322 = smul.addr %s321, 4
      %s323 = scalar_lea.vmem %s1, %s322
      %s324 = smul.u32 32, %s19
      %s325 = smul.u32 32, %s19
      %p326 = scmp.lt.s32.totalorder %s325, 63
      %s327 = scalar_select %p326, %s325, 63
      %s328 = smul.addr %s327, 8
      %s329 = scalar_lea.vmem %s8, %s328
      %s330 = smul.u32 32, %s19
      %v332 = vld [vmem:[%s317] sm:$0xff]
      %v333 = vld [vmem:[%s317 + $0x8] sm:$0xff]
      %v334 = vld [vmem:[%s317 + $0x10] sm:$0xff]
      %v335 = vld [vmem:[%s317 + $0x18] sm:$0xff]
      %v336 = vld [vmem:[%s317 + $0x20] sm:$0xff]
      %v337 = vld [vmem:[%s317 + $0x28] sm:$0xff]
      %v338 = vld [vmem:[%s317 + $0x30] sm:$0xff]
      %v339 = vld [vmem:[%s317 + $0x38] sm:$0xff]
      %v340 = vld [vmem:[%s317 + $0x40] sm:$0xff]
      %v341 = vld [vmem:[%s317 + $0x48] sm:$0xff]
      %v342 = vld [vmem:[%s317 + $0x50] sm:$0xff]
      %v343 = vld [vmem:[%s317 + $0x58] sm:$0xff]
      %v344 = vld [vmem:[%s317 + $0x60] sm:$0xff]
      %v345 = vld [vmem:[%s317 + $0x68] sm:$0xff]
      %v346 = vld [vmem:[%s317 + $0x70] sm:$0xff]
      %v347 = vld [vmem:[%s317 + $0x78] sm:$0xff]
      %v348 = vld [vmem:[%s317 + $0x80] sm:$0xff]
      %v349 = vld [vmem:[%s317 + $0x88] sm:$0xff]
      %v350 = vld [vmem:[%s317 + $0x90] sm:$0xff]
      %v351 = vld [vmem:[%s317 + $0x98] sm:$0xff]
      %v352 = vld [vmem:[%s317 + $0xa0] sm:$0xff]
      %v353 = vld [vmem:[%s317 + $0xa8] sm:$0xff]
      %v354 = vld [vmem:[%s317 + $0xb0] sm:$0xff]
      %v355 = vld [vmem:[%s317 + $0xb8] sm:$0xff]
      %v356 = vld [vmem:[%s317 + $0xc0] sm:$0xff]
      %v357 = vld [vmem:[%s317 + $0xc8] sm:$0xff]
      %v358 = vld [vmem:[%s317 + $0xd0] sm:$0xff]
      %v359 = vld [vmem:[%s317 + $0xd8] sm:$0xff]
      %v360 = vld [vmem:[%s317 + $0xe0] sm:$0xff]
      %v361 = vld [vmem:[%s317 + $0xe8] sm:$0xff]
      %v362 = vld [vmem:[%s317 + $0xf0] sm:$0xff]
      %v363 = vld [vmem:[%s317 + $0xf8] sm:$0xff]
      %v364 = vld [vmem:[%s323] sm:$0xf]
      %v365 = vld [vmem:[%s323 + $0x4] sm:$0xf]
      %v366 = vld [vmem:[%s323 + $0x8] sm:$0xf]
      %v367 = vld [vmem:[%s323 + $0xc] sm:$0xf]
      %v368 = vld [vmem:[%s323 + $0x10] sm:$0xf]
      %v369 = vld [vmem:[%s323 + $0x14] sm:$0xf]
      %v370 = vld [vmem:[%s323 + $0x18] sm:$0xf]
      %v371 = vld [vmem:[%s323 + $0x1c] sm:$0xf]
      %v372 = vld [vmem:[%s323 + $0x20] sm:$0xf]
      %v373 = vld [vmem:[%s323 + $0x24] sm:$0xf]
      %v374 = vld [vmem:[%s323 + $0x28] sm:$0xf]
      %v375 = vld [vmem:[%s323 + $0x2c] sm:$0xf]
      %v376 = vld [vmem:[%s323 + $0x30] sm:$0xf]
      %v377 = vld [vmem:[%s323 + $0x34] sm:$0xf]
      %v378 = vld [vmem:[%s323 + $0x38] sm:$0xf]
      %v379 = vld [vmem:[%s323 + $0x3c] sm:$0xf]
      %v380 = vld [vmem:[%s323 + $0x40] sm:$0xf]
      %v381 = vld [vmem:[%s323 + $0x44] sm:$0xf]
      %v382 = vld [vmem:[%s323 + $0x48] sm:$0xf]
      %v383 = vld [vmem:[%s323 + $0x4c] sm:$0xf]
      %v384 = vld [vmem:[%s323 + $0x50] sm:$0xf]
      %v385 = vld [vmem:[%s323 + $0x54] sm:$0xf]
      %v386 = vld [vmem:[%s323 + $0x58] sm:$0xf]
      %v387 = vld [vmem:[%s323 + $0x5c] sm:$0xf]
      %v388 = vld [vmem:[%s323 + $0x60] sm:$0xf]
      %v389 = vld [vmem:[%s323 + $0x64] sm:$0xf]
      %v390 = vld [vmem:[%s323 + $0x68] sm:$0xf]
      %v391 = vld [vmem:[%s323 + $0x6c] sm:$0xf]
      %v392 = vld [vmem:[%s323 + $0x70] sm:$0xf]
      %v393 = vld [vmem:[%s323 + $0x74] sm:$0xf]
      %v394 = vld [vmem:[%s323 + $0x78] sm:$0xf]
      %v395 = vld [vmem:[%s323 + $0x7c] sm:$0xf]
      %v396 = vunpack.c.l.bf16 %v364
      %v397 = vunpack.c.l.bf16 %v365
      %v398 = vunpack.c.l.bf16 %v366
      %v399 = vunpack.c.l.bf16 %v367
      %v400 = vunpack.c.l.bf16 %v368
      %v401 = vunpack.c.l.bf16 %v369
      %v402 = vunpack.c.l.bf16 %v370
      %v403 = vunpack.c.l.bf16 %v371
      %v404 = vunpack.c.l.bf16 %v372
      %v405 = vunpack.c.l.bf16 %v373
      %v406 = vunpack.c.l.bf16 %v374
      %v407 = vunpack.c.l.bf16 %v375
      %v408 = vunpack.c.l.bf16 %v376
      %v409 = vunpack.c.l.bf16 %v377
      %v410 = vunpack.c.l.bf16 %v378
      %v411 = vunpack.c.l.bf16 %v379
      %v412 = vunpack.c.l.bf16 %v380
      %v413 = vunpack.c.l.bf16 %v381
      %v414 = vunpack.c.l.bf16 %v382
      %v415 = vunpack.c.l.bf16 %v383
      %v416 = vunpack.c.l.bf16 %v384
      %v417 = vunpack.c.l.bf16 %v385
      %v418 = vunpack.c.l.bf16 %v386
      %v419 = vunpack.c.l.bf16 %v387
      %v420 = vunpack.c.l.bf16 %v388
      %v421 = vunpack.c.l.bf16 %v389
      %v422 = vunpack.c.l.bf16 %v390
      %v423 = vunpack.c.l.bf16 %v391
      %v424 = vunpack.c.l.bf16 %v392
      %v425 = vunpack.c.l.bf16 %v393
      %v426 = vunpack.c.l.bf16 %v394
      %v427 = vunpack.c.l.bf16 %v395
      %v428 = vadd.f32 %v332, %v396
      %v429 = vadd.f32 %v333, %v397
      %v430 = vadd.f32 %v334, %v398
      %v431 = vadd.f32 %v335, %v399
      %v432 = vadd.f32 %v336, %v400
      %v433 = vadd.f32 %v337, %v401
      %v434 = vadd.f32 %v338, %v402
      %v435 = vadd.f32 %v339, %v403
      %v436 = vadd.f32 %v340, %v404
      %v437 = vadd.f32 %v341, %v405
      %v438 = vadd.f32 %v342, %v406
      %v439 = vadd.f32 %v343, %v407
      %v440 = vadd.f32 %v344, %v408
      %v441 = vadd.f32 %v345, %v409
      %v442 = vadd.f32 %v346, %v410
      %v443 = vadd.f32 %v347, %v411
      %v444 = vadd.f32 %v348, %v412
      %v445 = vadd.f32 %v349, %v413
      %v446 = vadd.f32 %v350, %v414
      %v447 = vadd.f32 %v351, %v415
      %v448 = vadd.f32 %v352, %v416
      %v449 = vadd.f32 %v353, %v417
      %v450 = vadd.f32 %v354, %v418
      %v451 = vadd.f32 %v355, %v419
      %v452 = vadd.f32 %v356, %v420
      %v453 = vadd.f32 %v357, %v421
      %v454 = vadd.f32 %v358, %v422
      %v455 = vadd.f32 %v359, %v423
      %v456 = vadd.f32 %v360, %v424
      %v457 = vadd.f32 %v361, %v425
      %v458 = vadd.f32 %v362, %v426
      %v459 = vadd.f32 %v363, %v427
      %vm460 = vcmask 261120
      %v461 = vsel %vm460, %v428, 0.0
      %462 = vadd.xlane.f32.xlu0 %v461
      %v463 = vpop.xlane.xlu0 %462
      %v464 = vsel %vm460, %v429, 0.0
      %465 = vadd.xlane.f32.xlu0 %v464
      %v466 = vpop.xlane.xlu0 %465
      %v467 = vsel %vm460, %v430, 0.0
      %468 = vadd.xlane.f32.xlu0 %v467
      %v469 = vpop.xlane.xlu0 %468
      %v470 = vsel %vm460, %v431, 0.0
      %471 = vadd.xlane.f32.xlu0 %v470
      %v472 = vpop.xlane.xlu0 %471
      %v473 = vsel %vm460, %v432, 0.0
      %474 = vadd.xlane.f32.xlu0 %v473
      %v475 = vpop.xlane.xlu0 %474
      %v476 = vsel %vm460, %v433, 0.0
      %477 = vadd.xlane.f32.xlu0 %v476
      %v478 = vpop.xlane.xlu0 %477
      %v479 = vsel %vm460, %v434, 0.0
      %480 = vadd.xlane.f32.xlu0 %v479
      %v481 = vpop.xlane.xlu0 %480
      %v482 = vsel %vm460, %v435, 0.0
      %483 = vadd.xlane.f32.xlu0 %v482
      %v484 = vpop.xlane.xlu0 %483
      %v485 = vsel %vm460, %v436, 0.0
      %486 = vadd.xlane.f32.xlu0 %v485
      %v487 = vpop.xlane.xlu0 %486
      %v488 = vsel %vm460, %v437, 0.0
      %489 = vadd.xlane.f32.xlu0 %v488
      %v490 = vpop.xlane.xlu0 %489
      %v491 = vsel %vm460, %v438, 0.0
      %492 = vadd.xlane.f32.xlu0 %v491
      %v493 = vpop.xlane.xlu0 %492
      %v494 = vsel %vm460, %v439, 0.0
      %495 = vadd.xlane.f32.xlu0 %v494
      %v496 = vpop.xlane.xlu0 %495
      %v497 = vsel %vm460, %v440, 0.0
      %498 = vadd.xlane.f32.xlu0 %v497
      %v499 = vpop.xlane.xlu0 %498
      %v500 = vsel %vm460, %v441, 0.0
      %501 = vadd.xlane.f32.xlu0 %v500
      %v502 = vpop.xlane.xlu0 %501
      %v503 = vsel %vm460, %v442, 0.0
      %504 = vadd.xlane.f32.xlu0 %v503
      %v505 = vpop.xlane.xlu0 %504
      %v506 = vsel %vm460, %v443, 0.0
      %507 = vadd.xlane.f32.xlu0 %v506
      %v508 = vpop.xlane.xlu0 %507
      %v509 = vsel %vm460, %v444, 0.0
      %510 = vadd.xlane.f32.xlu0 %v509
      %v511 = vpop.xlane.xlu0 %510
      %v512 = vsel %vm460, %v445, 0.0
      %513 = vadd.xlane.f32.xlu0 %v512
      %v514 = vpop.xlane.xlu0 %513
      %v515 = vsel %vm460, %v446, 0.0
      %516 = vadd.xlane.f32.xlu0 %v515
      %v517 = vpop.xlane.xlu0 %516
      %v518 = vsel %vm460, %v447, 0.0
      %519 = vadd.xlane.f32.xlu0 %v518
      %v520 = vpop.xlane.xlu0 %519
      %v521 = vsel %vm460, %v448, 0.0
      %522 = vadd.xlane.f32.xlu0 %v521
      %v523 = vpop.xlane.xlu0 %522
      %v524 = vsel %vm460, %v449, 0.0
      %525 = vadd.xlane.f32.xlu0 %v524
      %v526 = vpop.xlane.xlu0 %525
      %v527 = vsel %vm460, %v450, 0.0
      %528 = vadd.xlane.f32.xlu0 %v527
      %v529 = vpop.xlane.xlu0 %528
      %v530 = vsel %vm460, %v451, 0.0
      %531 = vadd.xlane.f32.xlu0 %v530
      %v532 = vpop.xlane.xlu0 %531
      %v533 = vsel %vm460, %v452, 0.0
      %534 = vadd.xlane.f32.xlu0 %v533
      %v535 = vpop.xlane.xlu0 %534
      %v536 = vsel %vm460, %v453, 0.0
      %537 = vadd.xlane.f32.xlu0 %v536
      %v538 = vpop.xlane.xlu0 %537
      %v539 = vsel %vm460, %v454, 0.0
      %540 = vadd.xlane.f32.xlu0 %v539
      %v541 = vpop.xlane.xlu0 %540
      %v542 = vsel %vm460, %v455, 0.0
      %543 = vadd.xlane.f32.xlu0 %v542
      %v544 = vpop.xlane.xlu0 %543
      %v545 = vsel %vm460, %v456, 0.0
      %546 = vadd.xlane.f32.xlu0 %v545
      %v547 = vpop.xlane.xlu0 %546
      %v548 = vsel %vm460, %v457, 0.0
      %549 = vadd.xlane.f32.xlu0 %v548
      %v550 = vpop.xlane.xlu0 %549
      %v551 = vsel %vm460, %v458, 0.0
      %552 = vadd.xlane.f32.xlu0 %v551
      %v553 = vpop.xlane.xlu0 %552
      %v554 = vsel %vm460, %v459, 0.0
      %555 = vadd.xlane.f32.xlu0 %v554
      %v556 = vpop.xlane.xlu0 %555
      %v557 = vrcp.pop 32.0
      %v558 = vmul.f32 %v463, %v557
      %v559 = vmul.f32 %v466, %v557
      %v560 = vmul.f32 %v469, %v557
      %v561 = vmul.f32 %v472, %v557
      %v562 = vmul.f32 %v475, %v557
      %v563 = vmul.f32 %v478, %v557
      %v564 = vmul.f32 %v481, %v557
      %v565 = vmul.f32 %v484, %v557
      %v566 = vmul.f32 %v487, %v557
      %v567 = vmul.f32 %v490, %v557
      %v568 = vmul.f32 %v493, %v557
      %v569 = vmul.f32 %v496, %v557
      %v570 = vmul.f32 %v499, %v557
      %v571 = vmul.f32 %v502, %v557
      %v572 = vmul.f32 %v505, %v557
      %v573 = vmul.f32 %v508, %v557
      %v574 = vmul.f32 %v511, %v557
      %v575 = vmul.f32 %v514, %v557
      %v576 = vmul.f32 %v517, %v557
      %v577 = vmul.f32 %v520, %v557
      %v578 = vmul.f32 %v523, %v557
      %v579 = vmul.f32 %v526, %v557
      %v580 = vmul.f32 %v529, %v557
      %v581 = vmul.f32 %v532, %v557
      %v582 = vmul.f32 %v535, %v557
      %v583 = vmul.f32 %v538, %v557
      %v584 = vmul.f32 %v541, %v557
      %v585 = vmul.f32 %v544, %v557
      %v586 = vmul.f32 %v547, %v557
      %v587 = vmul.f32 %v550, %v557
      %v588 = vmul.f32 %v553, %v557
      %v589 = vmul.f32 %v556, %v557
      %v590 = vsub.f32 %v428, %v558
      %v591 = vsub.f32 %v429, %v559
      %v592 = vsub.f32 %v430, %v560
      %v593 = vsub.f32 %v431, %v561
      %v594 = vsub.f32 %v432, %v562
      %v595 = vsub.f32 %v433, %v563
      %v596 = vsub.f32 %v434, %v564
      %v597 = vsub.f32 %v435, %v565
      %v598 = vsub.f32 %v436, %v566
      %v599 = vsub.f32 %v437, %v567
      %v600 = vsub.f32 %v438, %v568
      %v601 = vsub.f32 %v439, %v569
      %v602 = vsub.f32 %v440, %v570
      %v603 = vsub.f32 %v441, %v571
      %v604 = vsub.f32 %v442, %v572
      %v605 = vsub.f32 %v443, %v573
      %v606 = vsub.f32 %v444, %v574
      %v607 = vsub.f32 %v445, %v575
      %v608 = vsub.f32 %v446, %v576
      %v609 = vsub.f32 %v447, %v577
      %v610 = vsub.f32 %v448, %v578
      %v611 = vsub.f32 %v449, %v579
      %v612 = vsub.f32 %v450, %v580
      %v613 = vsub.f32 %v451, %v581
      %v614 = vsub.f32 %v452, %v582
      %v615 = vsub.f32 %v453, %v583
      %v616 = vsub.f32 %v454, %v584
      %v617 = vsub.f32 %v455, %v585
      %v618 = vsub.f32 %v456, %v586
      %v619 = vsub.f32 %v457, %v587
      %v620 = vsub.f32 %v458, %v588
      %v621 = vsub.f32 %v459, %v589
      %v622 = vmul.f32 %v590, %v590
      %v623 = vmul.f32 %v591, %v591
      %v624 = vmul.f32 %v592, %v592
      %v625 = vmul.f32 %v593, %v593
      %v626 = vmul.f32 %v594, %v594
      %v627 = vmul.f32 %v595, %v595
      %v628 = vmul.f32 %v596, %v596
      %v629 = vmul.f32 %v597, %v597
      %v630 = vmul.f32 %v598, %v598
      %v631 = vmul.f32 %v599, %v599
      %v632 = vmul.f32 %v600, %v600
      %v633 = vmul.f32 %v601, %v601
      %v634 = vmul.f32 %v602, %v602
      %v635 = vmul.f32 %v603, %v603
      %v636 = vmul.f32 %v604, %v604
      %v637 = vmul.f32 %v605, %v605
      %v638 = vmul.f32 %v606, %v606
      %v639 = vmul.f32 %v607, %v607
      %v640 = vmul.f32 %v608, %v608
      %v641 = vmul.f32 %v609, %v609
      %v642 = vmul.f32 %v610, %v610
      %v643 = vmul.f32 %v611, %v611
      %v644 = vmul.f32 %v612, %v612
      %v645 = vmul.f32 %v613, %v613
      %v646 = vmul.f32 %v614, %v614
      %v647 = vmul.f32 %v615, %v615
      %v648 = vmul.f32 %v616, %v616
      %v649 = vmul.f32 %v617, %v617
      %v650 = vmul.f32 %v618, %v618
      %v651 = vmul.f32 %v619, %v619
      %v652 = vmul.f32 %v620, %v620
      %v653 = vmul.f32 %v621, %v621
      %v654 = vsel %vm460, %v622, 0.0
      %655 = vadd.xlane.f32.xlu0 %v654
      %v656 = vpop.xlane.xlu0 %655
      %v657 = vsel %vm460, %v623, 0.0
      %658 = vadd.xlane.f32.xlu0 %v657
      %v659 = vpop.xlane.xlu0 %658
      %v660 = vsel %vm460, %v624, 0.0
      %661 = vadd.xlane.f32.xlu0 %v660
      %v662 = vpop.xlane.xlu0 %661
      %v663 = vsel %vm460, %v625, 0.0
      %664 = vadd.xlane.f32.xlu0 %v663
      %v665 = vpop.xlane.xlu0 %664
      %v666 = vsel %vm460, %v626, 0.0
      %667 = vadd.xlane.f32.xlu0 %v666
      %v668 = vpop.xlane.xlu0 %667
      %v669 = vsel %vm460, %v627, 0.0
      %670 = vadd.xlane.f32.xlu0 %v669
      %v671 = vpop.xlane.xlu0 %670
      %v672 = vsel %vm460, %v628, 0.0
      %673 = vadd.xlane.f32.xlu0 %v672
      %v674 = vpop.xlane.xlu0 %673
      %v675 = vsel %vm460, %v629, 0.0
      %676 = vadd.xlane.f32.xlu0 %v675
      %v677 = vpop.xlane.xlu0 %676
      %v678 = vsel %vm460, %v630, 0.0
      %679 = vadd.xlane.f32.xlu0 %v678
      %v680 = vpop.xlane.xlu0 %679
      %v681 = vsel %vm460, %v631, 0.0
      %682 = vadd.xlane.f32.xlu0 %v681
      %v683 = vpop.xlane.xlu0 %682
      %v684 = vsel %vm460, %v632, 0.0
      %685 = vadd.xlane.f32.xlu0 %v684
      %v686 = vpop.xlane.xlu0 %685
      %v687 = vsel %vm460, %v633, 0.0
      %688 = vadd.xlane.f32.xlu0 %v687
      %v689 = vpop.xlane.xlu0 %688
      %v690 = vsel %vm460, %v634, 0.0
      %691 = vadd.xlane.f32.xlu0 %v690
      %v692 = vpop.xlane.xlu0 %691
      %v693 = vsel %vm460, %v635, 0.0
      %694 = vadd.xlane.f32.xlu0 %v693
      %v695 = vpop.xlane.xlu0 %694
      %v696 = vsel %vm460, %v636, 0.0
      %697 = vadd.xlane.f32.xlu0 %v696
      %v698 = vpop.xlane.xlu0 %697
      %v699 = vsel %vm460, %v637, 0.0
      %700 = vadd.xlane.f32.xlu0 %v699
      %v701 = vpop.xlane.xlu0 %700
      %v702 = vsel %vm460, %v638, 0.0
      %703 = vadd.xlane.f32.xlu0 %v702
      %v704 = vpop.xlane.xlu0 %703
      %v705 = vsel %vm460, %v639, 0.0
      %706 = vadd.xlane.f32.xlu0 %v705
      %v707 = vpop.xlane.xlu0 %706
      %v708 = vsel %vm460, %v640, 0.0
      %709 = vadd.xlane.f32.xlu0 %v708
      %v710 = vpop.xlane.xlu0 %709
      %v711 = vsel %vm460, %v641, 0.0
      %712 = vadd.xlane.f32.xlu0 %v711
      %v713 = vpop.xlane.xlu0 %712
      %v714 = vsel %vm460, %v642, 0.0
      %715 = vadd.xlane.f32.xlu0 %v714
      %v716 = vpop.xlane.xlu0 %715
      %v717 = vsel %vm460, %v643, 0.0
      %718 = vadd.xlane.f32.xlu0 %v717
      %v719 = vpop.xlane.xlu0 %718
      %v720 = vsel %vm460, %v644, 0.0
      %721 = vadd.xlane.f32.xlu0 %v720
      %v722 = vpop.xlane.xlu0 %721
      %v723 = vsel %vm460, %v645, 0.0
      %724 = vadd.xlane.f32.xlu0 %v723
      %v725 = vpop.xlane.xlu0 %724
      %v726 = vsel %vm460, %v646, 0.0
      %727 = vadd.xlane.f32.xlu0 %v726
      %v728 = vpop.xlane.xlu0 %727
      %v729 = vsel %vm460, %v647, 0.0
      %730 = vadd.xlane.f32.xlu0 %v729
      %v731 = vpop.xlane.xlu0 %730
      %v732 = vsel %vm460, %v648, 0.0
      %733 = vadd.xlane.f32.xlu0 %v732
      %v734 = vpop.xlane.xlu0 %733
      %v735 = vsel %vm460, %v649, 0.0
      %736 = vadd.xlane.f32.xlu0 %v735
      %v737 = vpop.xlane.xlu0 %736
      %v738 = vsel %vm460, %v650, 0.0
      %739 = vadd.xlane.f32.xlu0 %v738
      %v740 = vpop.xlane.xlu0 %739
      %v741 = vsel %vm460, %v651, 0.0
      %742 = vadd.xlane.f32.xlu0 %v741
      %v743 = vpop.xlane.xlu0 %742
      %v744 = vsel %vm460, %v652, 0.0
      %745 = vadd.xlane.f32.xlu0 %v744
      %v746 = vpop.xlane.xlu0 %745
      %v747 = vsel %vm460, %v653, 0.0
      %748 = vadd.xlane.f32.xlu0 %v747
      %v749 = vpop.xlane.xlu0 %748
      %v750 = vmul.f32 %v656, %v557
      %v751 = vmul.f32 %v659, %v557
      %v752 = vmul.f32 %v662, %v557
      %v753 = vmul.f32 %v665, %v557
      %v754 = vmul.f32 %v668, %v557
      %v755 = vmul.f32 %v671, %v557
      %v756 = vmul.f32 %v674, %v557
      %v757 = vmul.f32 %v677, %v557
      %v758 = vmul.f32 %v680, %v557
      %v759 = vmul.f32 %v683, %v557
      %v760 = vmul.f32 %v686, %v557
      %v761 = vmul.f32 %v689, %v557
      %v762 = vmul.f32 %v692, %v557
      %v763 = vmul.f32 %v695, %v557
      %v764 = vmul.f32 %v698, %v557
      %v765 = vmul.f32 %v701, %v557
      %v766 = vmul.f32 %v704, %v557
      %v767 = vmul.f32 %v707, %v557
      %v768 = vmul.f32 %v710, %v557
      %v769 = vmul.f32 %v713, %v557
      %v770 = vmul.f32 %v716, %v557
      %v771 = vmul.f32 %v719, %v557
      %v772 = vmul.f32 %v722, %v557
      %v773 = vmul.f32 %v725, %v557
      %v774 = vmul.f32 %v728, %v557
      %v775 = vmul.f32 %v731, %v557
      %v776 = vmul.f32 %v734, %v557
      %v777 = vmul.f32 %v737, %v557
      %v778 = vmul.f32 %v740, %v557
      %v779 = vmul.f32 %v743, %v557
      %v780 = vmul.f32 %v746, %v557
      %v781 = vmul.f32 %v749, %v557
      %v782 = vadd.f32 %v750, 1e-05
      %v783 = vadd.f32 %v751, 1e-05
      %v784 = vadd.f32 %v752, 1e-05
      %v785 = vadd.f32 %v753, 1e-05
      %v786 = vadd.f32 %v754, 1e-05
      %v787 = vadd.f32 %v755, 1e-05
      %v788 = vadd.f32 %v756, 1e-05
      %v789 = vadd.f32 %v757, 1e-05
      %v790 = vadd.f32 %v758, 1e-05
      %v791 = vadd.f32 %v759, 1e-05
      %v792 = vadd.f32 %v760, 1e-05
      %v793 = vadd.f32 %v761, 1e-05
      %v794 = vadd.f32 %v762, 1e-05
      %v795 = vadd.f32 %v763, 1e-05
      %v796 = vadd.f32 %v764, 1e-05
      %v797 = vadd.f32 %v765, 1e-05
      %v798 = vadd.f32 %v766, 1e-05
      %v799 = vadd.f32 %v767, 1e-05
      %v800 = vadd.f32 %v768, 1e-05
      %v801 = vadd.f32 %v769, 1e-05
      %v802 = vadd.f32 %v770, 1e-05
      %v803 = vadd.f32 %v771, 1e-05
      %v804 = vadd.f32 %v772, 1e-05
      %v805 = vadd.f32 %v773, 1e-05
      %v806 = vadd.f32 %v774, 1e-05
      %v807 = vadd.f32 %v775, 1e-05
      %v808 = vadd.f32 %v776, 1e-05
      %v809 = vadd.f32 %v777, 1e-05
      %v810 = vadd.f32 %v778, 1e-05
      %v811 = vadd.f32 %v779, 1e-05
      %v812 = vadd.f32 %v780, 1e-05
      %v813 = vadd.f32 %v781, 1e-05
      %v814 = vrsqrt.pop %v782
      %v815 = vrsqrt.pop %v783
      %v816 = vrsqrt.pop %v784
      %v817 = vrsqrt.pop %v785
      %v818 = vrsqrt.pop %v786
      %v819 = vrsqrt.pop %v787
      %v820 = vrsqrt.pop %v788
      %v821 = vrsqrt.pop %v789
      %v822 = vrsqrt.pop %v790
      %v823 = vrsqrt.pop %v791
      %v824 = vrsqrt.pop %v792
      %v825 = vrsqrt.pop %v793
      %v826 = vrsqrt.pop %v794
      %v827 = vrsqrt.pop %v795
      %v828 = vrsqrt.pop %v796
      %v829 = vrsqrt.pop %v797
      %v830 = vrsqrt.pop %v798
      %v831 = vrsqrt.pop %v799
      %v832 = vrsqrt.pop %v800
      %v833 = vrsqrt.pop %v801
      %v834 = vrsqrt.pop %v802
      %v835 = vrsqrt.pop %v803
      %v836 = vrsqrt.pop %v804
      %v837 = vrsqrt.pop %v805
      %v838 = vrsqrt.pop %v806
      %v839 = vrsqrt.pop %v807
      %v840 = vrsqrt.pop %v808
      %v841 = vrsqrt.pop %v809
      %v842 = vrsqrt.pop %v810
      %v843 = vrsqrt.pop %v811
      %v844 = vrsqrt.pop %v812
      %v845 = vrsqrt.pop %v813
      %v846 = vmul.f32 %v590, %v814
      %v847 = vmul.f32 %v591, %v815
      %v848 = vmul.f32 %v592, %v816
      %v849 = vmul.f32 %v593, %v817
      %v850 = vmul.f32 %v594, %v818
      %v851 = vmul.f32 %v595, %v819
      %v852 = vmul.f32 %v596, %v820
      %v853 = vmul.f32 %v597, %v821
      %v854 = vmul.f32 %v598, %v822
      %v855 = vmul.f32 %v599, %v823
      %v856 = vmul.f32 %v600, %v824
      %v857 = vmul.f32 %v601, %v825
      %v858 = vmul.f32 %v602, %v826
      %v859 = vmul.f32 %v603, %v827
      %v860 = vmul.f32 %v604, %v828
      %v861 = vmul.f32 %v605, %v829
      %v862 = vmul.f32 %v606, %v830
      %v863 = vmul.f32 %v607, %v831
      %v864 = vmul.f32 %v608, %v832
      %v865 = vmul.f32 %v609, %v833
      %v866 = vmul.f32 %v610, %v834
      %v867 = vmul.f32 %v611, %v835
      %v868 = vmul.f32 %v612, %v836
      %v869 = vmul.f32 %v613, %v837
      %v870 = vmul.f32 %v614, %v838
      %v871 = vmul.f32 %v615, %v839
      %v872 = vmul.f32 %v616, %v840
      %v873 = vmul.f32 %v617, %v841
      %v874 = vmul.f32 %v618, %v842
      %v875 = vmul.f32 %v619, %v843
      %v876 = vmul.f32 %v620, %v844
      %v877 = vmul.f32 %v621, %v845
      %v878 = vld [vmem:[%s2] sm:$0x1]
      %v880 = vlaneseq
      %v881 = vshrl.u32 %v880, 7
      %v882 = vsub.s32 0, %v881
      %v883 = vrot.slane %v878, %v882
      %v885 = vmul.f32 %v846, %v883
      %v886 = vmul.f32 %v847, %v883
      %v887 = vmul.f32 %v848, %v883
      %v888 = vmul.f32 %v849, %v883
      %v889 = vmul.f32 %v850, %v883
      %v890 = vmul.f32 %v851, %v883
      %v891 = vmul.f32 %v852, %v883
      %v892 = vmul.f32 %v853, %v883
      %v893 = vmul.f32 %v854, %v883
      %v894 = vmul.f32 %v855, %v883
      %v895 = vmul.f32 %v856, %v883
      %v896 = vmul.f32 %v857, %v883
      %v897 = vmul.f32 %v858, %v883
      %v898 = vmul.f32 %v859, %v883
      %v899 = vmul.f32 %v860, %v883
      %v900 = vmul.f32 %v861, %v883
      %v901 = vmul.f32 %v862, %v883
      %v902 = vmul.f32 %v863, %v883
      %v903 = vmul.f32 %v864, %v883
      %v904 = vmul.f32 %v865, %v883
      %v905 = vmul.f32 %v866, %v883
      %v906 = vmul.f32 %v867, %v883
      %v907 = vmul.f32 %v868, %v883
      %v908 = vmul.f32 %v869, %v883
      %v909 = vmul.f32 %v870, %v883
      %v910 = vmul.f32 %v871, %v883
      %v911 = vmul.f32 %v872, %v883
      %v912 = vmul.f32 %v873, %v883
      %v913 = vmul.f32 %v874, %v883
      %v914 = vmul.f32 %v875, %v883
      %v915 = vmul.f32 %v876, %v883
      %v916 = vmul.f32 %v877, %v883
      %v917 = vld [vmem:[%s3] sm:$0x1]
      %v919 = vlaneseq
      %v920 = vshrl.u32 %v919, 7
      %v921 = vsub.s32 0, %v920
      %v922 = vrot.slane %v917, %v921
      %v924 = vadd.f32 %v885, %v922
      %v925 = vadd.f32 %v886, %v922
      %v926 = vadd.f32 %v887, %v922
      %v927 = vadd.f32 %v888, %v922
      %v928 = vadd.f32 %v889, %v922
      %v929 = vadd.f32 %v890, %v922
      %v930 = vadd.f32 %v891, %v922
      %v931 = vadd.f32 %v892, %v922
      %v932 = vadd.f32 %v893, %v922
      %v933 = vadd.f32 %v894, %v922
      %v934 = vadd.f32 %v895, %v922
      %v935 = vadd.f32 %v896, %v922
      %v936 = vadd.f32 %v897, %v922
      %v937 = vadd.f32 %v898, %v922
      %v938 = vadd.f32 %v899, %v922
      %v939 = vadd.f32 %v900, %v922
      %v940 = vadd.f32 %v901, %v922
      %v941 = vadd.f32 %v902, %v922
      %v942 = vadd.f32 %v903, %v922
      %v943 = vadd.f32 %v904, %v922
      %v944 = vadd.f32 %v905, %v922
      %v945 = vadd.f32 %v906, %v922
      %v946 = vadd.f32 %v907, %v922
      %v947 = vadd.f32 %v908, %v922
      %v948 = vadd.f32 %v909, %v922
      %v949 = vadd.f32 %v910, %v922
      %v950 = vadd.f32 %v911, %v922
      %v951 = vadd.f32 %v912, %v922
      %v952 = vadd.f32 %v913, %v922
      %v953 = vadd.f32 %v914, %v922
      %v954 = vadd.f32 %v915, %v922
      %v955 = vadd.f32 %v916, %v922
      %v956 = vpack.c.bf16 %v925, %v924
      %v957 = vpack.c.bf16 %v927, %v926
      %v958 = vpack.c.bf16 %v929, %v928
      %v959 = vpack.c.bf16 %v931, %v930
      %v960 = vpack.c.bf16 %v933, %v932
      %v961 = vpack.c.bf16 %v935, %v934
      %v962 = vpack.c.bf16 %v937, %v936
      %v963 = vpack.c.bf16 %v939, %v938
      %v964 = vpack.c.bf16 %v941, %v940
      %v965 = vpack.c.bf16 %v943, %v942
      %v966 = vpack.c.bf16 %v945, %v944
      %v967 = vpack.c.bf16 %v947, %v946
      %v968 = vpack.c.bf16 %v949, %v948
      %v969 = vpack.c.bf16 %v951, %v950
      %v970 = vpack.c.bf16 %v953, %v952
      %v971 = vpack.c.bf16 %v955, %v954
      %v972 = vld [vmem:[%s4] sm:$0xf]
      %v973 = vld [vmem:[%s4 + $0x4] sm:$0xf]
      %v974 = vld [vmem:[%s4 + $0x8] sm:$0xf]
      %v975 = vld [vmem:[%s4 + $0xc] sm:$0xf]
      %v976 = vld [vmem:[%s5] sm:$0x1]
      %v978 = vlaneseq
      %v979 = vshrl.u32 %v978, 7
      %v980 = vsub.s32 0, %v979
      %v981 = vrot.slane %v976, %v980
      %v987 = vunpack.c.l.b16 %v972
      %v988 = vunpack.c.l.b16 %v973
      %v989 = vunpack.c.l.b16 %v974
      %v990 = vunpack.c.l.b16 %v975
      %v991 = vpack.c.b16 %v988, %v987
      %v992 = vpack.c.b16 %v990, %v989
      %v996 = vsel %vm460, %v956, 0
      %v999 = vsel %vm460, %v957, 0
      %v1002 = vsel %vm460, %v958, 0
      %v1005 = vsel %vm460, %v959, 0
      %v1008 = vsel %vm460, %v960, 0
      %v1011 = vsel %vm460, %v961, 0
      %v1014 = vsel %vm460, %v962, 0
      %v1017 = vsel %vm460, %v963, 0
      %v1020 = vsel %vm460, %v964, 0
      %v1023 = vsel %vm460, %v965, 0
      %v1026 = vsel %vm460, %v966, 0
      %v1029 = vsel %vm460, %v967, 0
      %v1032 = vsel %vm460, %v968, 0
      %v1035 = vsel %vm460, %v969, 0
      %v1038 = vsel %vm460, %v970, 0
      %v1041 = vsel %vm460, %v971, 0
      %1043 = vmatprep.subr.bf16.mxu0 0
      %1044 = vmatpush1.bf16.msra.mxu0 %v991
      %1045 = vmatprep.subr.bf16.mxu0 0
      %1046 = vmatpush1.bf16.msra.mxu0 %v992
      %1047 = vmatprep.subr.bf16.mxu0 0
      %1048 = vmatpush1.bf16.msra.mxu0 0
      %1049 = vmatprep.subr.bf16.mxu0 0
      %1050 = vmatpush1.bf16.msra.mxu0 0
      %1051 = vmatprep.subr.bf16.mxu0 0
      %1052 = vmatpush1.bf16.msra.mxu0 0
      %1053 = vmatprep.subr.bf16.mxu0 0
      %1054 = vmatpush1.bf16.msra.mxu0 0
      %1055 = vmatprep.subr.bf16.mxu0 0
      %1056 = vmatpush1.bf16.msra.mxu0 0
      %1057 = vmatprep.subr.bf16.mxu0 0
      %1058 = vmatpush1.bf16.msra.mxu0 0
      %1059 = vmatprep.subr.bf16.mxu0 0
      %1060 = vmatpush1.bf16.msra.mxu0 0
      %1061 = vmatprep.subr.bf16.mxu0 0
      %1062 = vmatpush1.bf16.msra.mxu0 0
      %1063 = vmatprep.subr.bf16.mxu0 0
      %1064 = vmatpush1.bf16.msra.mxu0 0
      %1065 = vmatprep.subr.bf16.mxu0 0
      %1066 = vmatpush1.bf16.msra.mxu0 0
      %1067 = vmatprep.subr.bf16.mxu0 0
      %1068 = vmatpush1.bf16.msra.mxu0 0
      %1069 = vmatprep.subr.bf16.mxu0 0
      %1070 = vmatpush1.bf16.msra.mxu0 0
      %1071 = vmatprep.subr.bf16.mxu0 0
      %1072 = vmatpush1.bf16.msra.mxu0 0
      %1073 = vmatprep.subr.bf16.mxu0 0
      %1074 = vmatpush1.bf16.msra.mxu0 0
      %1075 = vmatprep.mubr.bf16.mxu0 0
      %1076 = vmatmul.mubr.bf16.gmra.mrb[0].mxu0 %v996
      %v1077 = vpop.f32.mrb[0].mxu0
      %v1078 = vadd.f32 %v981, %v1077
      %v1079 = vpop.f32.mrb[0].mxu0
      %v1080 = vpop.f32.mrb[0].mxu0
      %v1081 = vadd.f32 %v981, %v1080
      %v1082 = vpop.f32.mrb[0].mxu0
      %1083 = vmatprep.mubr.bf16.mxu0 0
      %1084 = vmatmul.mubr.bf16.gmra.mrb[0].mxu0 %v999
      %v1085 = vpop.f32.mrb[0].mxu0
      %v1086 = vadd.f32 %v981, %v1085
      %v1087 = vpop.f32.mrb[0].mxu0
      %v1088 = vpop.f32.mrb[0].mxu0
      %v1089 = vadd.f32 %v981, %v1088
      %v1090 = vpop.f32.mrb[0].mxu0
      %1091 = vmatprep.mubr.bf16.mxu0 0
      %1092 = vmatmul.mubr.bf16.gmra.mrb[0].mxu0 %v1002
      %v1093 = vpop.f32.mrb[0].mxu0
      %v1094 = vadd.f32 %v981, %v1093
      %v1095 = vpop.f32.mrb[0].mxu0
      %v1096 = vpop.f32.mrb[0].mxu0
      %v1097 = vadd.f32 %v981, %v1096
      %v1098 = vpop.f32.mrb[0].mxu0
      %1099 = vmatprep.mubr.bf16.mxu0 0
      %1100 = vmatmul.mubr.bf16.gmra.mrb[0].mxu0 %v1005
      %v1101 = vpop.f32.mrb[0].mxu0
      %v1102 = vadd.f32 %v981, %v1101
      %v1103 = vpop.f32.mrb[0].mxu0
      %v1104 = vpop.f32.mrb[0].mxu0
      %v1105 = vadd.f32 %v981, %v1104
      %v1106 = vpop.f32.mrb[0].mxu0
      %1107 = vmatprep.mubr.bf16.mxu0 0
      %1108 = vmatmul.mubr.bf16.gmra.mrb[0].mxu0 %v1008
      %v1109 = vpop.f32.mrb[0].mxu0
      %v1110 = vadd.f32 %v981, %v1109
      %v1111 = vpop.f32.mrb[0].mxu0
      %v1112 = vpop.f32.mrb[0].mxu0
      %v1113 = vadd.f32 %v981, %v1112
      %v1114 = vpop.f32.mrb[0].mxu0
      %1115 = vmatprep.mubr.bf16.mxu0 0
      %1116 = vmatmul.mubr.bf16.gmra.mrb[0].mxu0 %v1011
      %v1117 = vpop.f32.mrb[0].mxu0
      %v1118 = vadd.f32 %v981, %v1117
      %v1119 = vpop.f32.mrb[0].mxu0
      %v1120 = vpop.f32.mrb[0].mxu0
      %v1121 = vadd.f32 %v981, %v1120
      %v1122 = vpop.f32.mrb[0].mxu0
      %1123 = vmatprep.mubr.bf16.mxu0 0
      %1124 = vmatmul.mubr.bf16.gmra.mrb[0].mxu0 %v1014
      %v1125 = vpop.f32.mrb[0].mxu0
      %v1126 = vadd.f32 %v981, %v1125
      %v1127 = vpop.f32.mrb[0].mxu0
      %v1128 = vpop.f32.mrb[0].mxu0
      %v1129 = vadd.f32 %v981, %v1128
      %v1130 = vpop.f32.mrb[0].mxu0
      %1131 = vmatprep.mubr.bf16.mxu0 0
      %1132 = vmatmul.mubr.bf16.gmra.mrb[0].mxu0 %v1017
      %v1133 = vpop.f32.mrb[0].mxu0
      %v1134 = vadd.f32 %v981, %v1133
      %v1135 = vpop.f32.mrb[0].mxu0
      %v1136 = vpop.f32.mrb[0].mxu0
      %v1137 = vadd.f32 %v981, %v1136
      %v1138 = vpop.f32.mrb[0].mxu0
      %1139 = vmatprep.mubr.bf16.mxu0 0
      %1140 = vmatmul.mubr.bf16.gmra.mrb[0].mxu0 %v1020
      %v1141 = vpop.f32.mrb[0].mxu0
      %v1142 = vadd.f32 %v981, %v1141
      %v1143 = vpop.f32.mrb[0].mxu0
      %v1144 = vpop.f32.mrb[0].mxu0
      %v1145 = vadd.f32 %v981, %v1144
      %v1146 = vpop.f32.mrb[0].mxu0
      %1147 = vmatprep.mubr.bf16.mxu0 0
      %1148 = vmatmul.mubr.bf16.gmra.mrb[0].mxu0 %v1023
      %v1149 = vpop.f32.mrb[0].mxu0
      %v1150 = vadd.f32 %v981, %v1149
      %v1151 = vpop.f32.mrb[0].mxu0
      %v1152 = vpop.f32.mrb[0].mxu0
      %v1153 = vadd.f32 %v981, %v1152
      %v1154 = vpop.f32.mrb[0].mxu0
      %1155 = vmatprep.mubr.bf16.mxu0 0
      %1156 = vmatmul.mubr.bf16.gmra.mrb[0].mxu0 %v1026
      %v1157 = vpop.f32.mrb[0].mxu0
      %v1158 = vadd.f32 %v981, %v1157
      %v1159 = vpop.f32.mrb[0].mxu0
      %v1160 = vpop.f32.mrb[0].mxu0
      %v1161 = vadd.f32 %v981, %v1160
      %v1162 = vpop.f32.mrb[0].mxu0
      %1163 = vmatprep.mubr.bf16.mxu0 0
      %1164 = vmatmul.mubr.bf16.gmra.mrb[0].mxu0 %v1029
      %v1165 = vpop.f32.mrb[0].mxu0
      %v1166 = vadd.f32 %v981, %v1165
      %v1167 = vpop.f32.mrb[0].mxu0
      %v1168 = vpop.f32.mrb[0].mxu0
      %v1169 = vadd.f32 %v981, %v1168
      %v1170 = vpop.f32.mrb[0].mxu0
      %1171 = vmatprep.mubr.bf16.mxu0 0
      %1172 = vmatmul.mubr.bf16.gmra.mrb[0].mxu0 %v1032
      %v1173 = vpop.f32.mrb[0].mxu0
      %v1174 = vadd.f32 %v981, %v1173
      %v1175 = vpop.f32.mrb[0].mxu0
      %v1176 = vpop.f32.mrb[0].mxu0
      %v1177 = vadd.f32 %v981, %v1176
      %v1178 = vpop.f32.mrb[0].mxu0
      %1179 = vmatprep.mubr.bf16.mxu0 0
      %1180 = vmatmul.mubr.bf16.gmra.mrb[0].mxu0 %v1035
      %v1181 = vpop.f32.mrb[0].mxu0
      %v1182 = vadd.f32 %v981, %v1181
      %v1183 = vpop.f32.mrb[0].mxu0
      %v1184 = vpop.f32.mrb[0].mxu0
      %v1185 = vadd.f32 %v981, %v1184
      %v1186 = vpop.f32.mrb[0].mxu0
      %1187 = vmatprep.mubr.bf16.mxu0 0
      %1188 = vmatmul.mubr.bf16.gmra.mrb[0].mxu0 %v1038
      %v1189 = vpop.f32.mrb[0].mxu0
      %v1190 = vadd.f32 %v981, %v1189
      %v1191 = vpop.f32.mrb[0].mxu0
      %v1192 = vpop.f32.mrb[0].mxu0
      %v1193 = vadd.f32 %v981, %v1192
      %v1194 = vpop.f32.mrb[0].mxu0
      %1195 = vmatprep.mubr.bf16.mxu0 0
      %1196 = vmatmul.mubr.bf16.gmra.mrb[0].mxu0 %v1041
      %v1197 = vpop.f32.mrb[0].mxu0
      %v1198 = vadd.f32 %v981, %v1197
      %v1199 = vpop.f32.mrb[0].mxu0
      %v1200 = vpop.f32.mrb[0].mxu0
      %v1201 = vadd.f32 %v981, %v1200
      %v1202 = vpop.f32.mrb[0].mxu0
      %1203 = vdwg.mxu0
      %v1204 = vmul.f32 %v1078, %v1078
      %v1205 = vmul.f32 %v1081, %v1081
      %v1206 = vmul.f32 %v1086, %v1086
      %v1207 = vmul.f32 %v1089, %v1089
      %v1208 = vmul.f32 %v1094, %v1094
      %v1209 = vmul.f32 %v1097, %v1097
      %v1210 = vmul.f32 %v1102, %v1102
      %v1211 = vmul.f32 %v1105, %v1105
      %v1212 = vmul.f32 %v1110, %v1110
      %v1213 = vmul.f32 %v1113, %v1113
      %v1214 = vmul.f32 %v1118, %v1118
      %v1215 = vmul.f32 %v1121, %v1121
      %v1216 = vmul.f32 %v1126, %v1126
      %v1217 = vmul.f32 %v1129, %v1129
      %v1218 = vmul.f32 %v1134, %v1134
      %v1219 = vmul.f32 %v1137, %v1137
      %v1220 = vmul.f32 %v1142, %v1142
      %v1221 = vmul.f32 %v1145, %v1145
      %v1222 = vmul.f32 %v1150, %v1150
      %v1223 = vmul.f32 %v1153, %v1153
      %v1224 = vmul.f32 %v1158, %v1158
      %v1225 = vmul.f32 %v1161, %v1161
      %v1226 = vmul.f32 %v1166, %v1166
      %v1227 = vmul.f32 %v1169, %v1169
      %v1228 = vmul.f32 %v1174, %v1174
      %v1229 = vmul.f32 %v1177, %v1177
      %v1230 = vmul.f32 %v1182, %v1182
      %v1231 = vmul.f32 %v1185, %v1185
      %v1232 = vmul.f32 %v1190, %v1190
      %v1233 = vmul.f32 %v1193, %v1193
      %v1234 = vmul.f32 %v1198, %v1198
      %v1235 = vmul.f32 %v1201, %v1201
      %v1236 = vmul.f32 %v1078, %v1204
      %v1237 = vmul.f32 %v1081, %v1205
      %v1238 = vmul.f32 %v1086, %v1206
      %v1239 = vmul.f32 %v1089, %v1207
      %v1240 = vmul.f32 %v1094, %v1208
      %v1241 = vmul.f32 %v1097, %v1209
      %v1242 = vmul.f32 %v1102, %v1210
      %v1243 = vmul.f32 %v1105, %v1211
      %v1244 = vmul.f32 %v1110, %v1212
      %v1245 = vmul.f32 %v1113, %v1213
      %v1246 = vmul.f32 %v1118, %v1214
      %v1247 = vmul.f32 %v1121, %v1215
      %v1248 = vmul.f32 %v1126, %v1216
      %v1249 = vmul.f32 %v1129, %v1217
      %v1250 = vmul.f32 %v1134, %v1218
      %v1251 = vmul.f32 %v1137, %v1219
      %v1252 = vmul.f32 %v1142, %v1220
      %v1253 = vmul.f32 %v1145, %v1221
      %v1254 = vmul.f32 %v1150, %v1222
      %v1255 = vmul.f32 %v1153, %v1223
      %v1256 = vmul.f32 %v1158, %v1224
      %v1257 = vmul.f32 %v1161, %v1225
      %v1258 = vmul.f32 %v1166, %v1226
      %v1259 = vmul.f32 %v1169, %v1227
      %v1260 = vmul.f32 %v1174, %v1228
      %v1261 = vmul.f32 %v1177, %v1229
      %v1262 = vmul.f32 %v1182, %v1230
      %v1263 = vmul.f32 %v1185, %v1231
      %v1264 = vmul.f32 %v1190, %v1232
      %v1265 = vmul.f32 %v1193, %v1233
      %v1266 = vmul.f32 %v1198, %v1234
      %v1267 = vmul.f32 %v1201, %v1235
      %v1268 = vmul.f32 %v1236, 0.044715
      %v1269 = vmul.f32 %v1237, 0.044715
      %v1270 = vmul.f32 %v1238, 0.044715
      %v1271 = vmul.f32 %v1239, 0.044715
      %v1272 = vmul.f32 %v1240, 0.044715
      %v1273 = vmul.f32 %v1241, 0.044715
      %v1274 = vmul.f32 %v1242, 0.044715
      %v1275 = vmul.f32 %v1243, 0.044715
      %v1276 = vmul.f32 %v1244, 0.044715
      %v1277 = vmul.f32 %v1245, 0.044715
      %v1278 = vmul.f32 %v1246, 0.044715
      %v1279 = vmul.f32 %v1247, 0.044715
      %v1280 = vmul.f32 %v1248, 0.044715
      %v1281 = vmul.f32 %v1249, 0.044715
      %v1282 = vmul.f32 %v1250, 0.044715
      %v1283 = vmul.f32 %v1251, 0.044715
      %v1284 = vmul.f32 %v1252, 0.044715
      %v1285 = vmul.f32 %v1253, 0.044715
      %v1286 = vmul.f32 %v1254, 0.044715
      %v1287 = vmul.f32 %v1255, 0.044715
      %v1288 = vmul.f32 %v1256, 0.044715
      %v1289 = vmul.f32 %v1257, 0.044715
      %v1290 = vmul.f32 %v1258, 0.044715
      %v1291 = vmul.f32 %v1259, 0.044715
      %v1292 = vmul.f32 %v1260, 0.044715
      %v1293 = vmul.f32 %v1261, 0.044715
      %v1294 = vmul.f32 %v1262, 0.044715
      %v1295 = vmul.f32 %v1263, 0.044715
      %v1296 = vmul.f32 %v1264, 0.044715
      %v1297 = vmul.f32 %v1265, 0.044715
      %v1298 = vmul.f32 %v1266, 0.044715
      %v1299 = vmul.f32 %v1267, 0.044715
      %v1300 = vadd.f32 %v1078, %v1268
      %v1301 = vadd.f32 %v1081, %v1269
      %v1302 = vadd.f32 %v1086, %v1270
      %v1303 = vadd.f32 %v1089, %v1271
      %v1304 = vadd.f32 %v1094, %v1272
      %v1305 = vadd.f32 %v1097, %v1273
      %v1306 = vadd.f32 %v1102, %v1274
      %v1307 = vadd.f32 %v1105, %v1275
      %v1308 = vadd.f32 %v1110, %v1276
      %v1309 = vadd.f32 %v1113, %v1277
      %v1310 = vadd.f32 %v1118, %v1278
      %v1311 = vadd.f32 %v1121, %v1279
      %v1312 = vadd.f32 %v1126, %v1280
      %v1313 = vadd.f32 %v1129, %v1281
      %v1314 = vadd.f32 %v1134, %v1282
      %v1315 = vadd.f32 %v1137, %v1283
      %v1316 = vadd.f32 %v1142, %v1284
      %v1317 = vadd.f32 %v1145, %v1285
      %v1318 = vadd.f32 %v1150, %v1286
      %v1319 = vadd.f32 %v1153, %v1287
      %v1320 = vadd.f32 %v1158, %v1288
      %v1321 = vadd.f32 %v1161, %v1289
      %v1322 = vadd.f32 %v1166, %v1290
      %v1323 = vadd.f32 %v1169, %v1291
      %v1324 = vadd.f32 %v1174, %v1292
      %v1325 = vadd.f32 %v1177, %v1293
      %v1326 = vadd.f32 %v1182, %v1294
      %v1327 = vadd.f32 %v1185, %v1295
      %v1328 = vadd.f32 %v1190, %v1296
      %v1329 = vadd.f32 %v1193, %v1297
      %v1330 = vadd.f32 %v1198, %v1298
      %v1331 = vadd.f32 %v1201, %v1299
      %v1332 = vmul.f32 %v1300, 0.7978846
      %v1333 = vmul.f32 %v1301, 0.7978846
      %v1334 = vmul.f32 %v1302, 0.7978846
      %v1335 = vmul.f32 %v1303, 0.7978846
      %v1336 = vmul.f32 %v1304, 0.7978846
      %v1337 = vmul.f32 %v1305, 0.7978846
      %v1338 = vmul.f32 %v1306, 0.7978846
      %v1339 = vmul.f32 %v1307, 0.7978846
      %v1340 = vmul.f32 %v1308, 0.7978846
      %v1341 = vmul.f32 %v1309, 0.7978846
      %v1342 = vmul.f32 %v1310, 0.7978846
      %v1343 = vmul.f32 %v1311, 0.7978846
      %v1344 = vmul.f32 %v1312, 0.7978846
      %v1345 = vmul.f32 %v1313, 0.7978846
      %v1346 = vmul.f32 %v1314, 0.7978846
      %v1347 = vmul.f32 %v1315, 0.7978846
      %v1348 = vmul.f32 %v1316, 0.7978846
      %v1349 = vmul.f32 %v1317, 0.7978846
      %v1350 = vmul.f32 %v1318, 0.7978846
      %v1351 = vmul.f32 %v1319, 0.7978846
      %v1352 = vmul.f32 %v1320, 0.7978846
      %v1353 = vmul.f32 %v1321, 0.7978846
      %v1354 = vmul.f32 %v1322, 0.7978846
      %v1355 = vmul.f32 %v1323, 0.7978846
      %v1356 = vmul.f32 %v1324, 0.7978846
      %v1357 = vmul.f32 %v1325, 0.7978846
      %v1358 = vmul.f32 %v1326, 0.7978846
      %v1359 = vmul.f32 %v1327, 0.7978846
      %v1360 = vmul.f32 %v1328, 0.7978846
      %v1361 = vmul.f32 %v1329, 0.7978846
      %v1362 = vmul.f32 %v1330, 0.7978846
      %v1363 = vmul.f32 %v1331, 0.7978846
      %v1364 = vtanh.pop %v1332
      %v1365 = vtanh.pop %v1333
      %v1366 = vtanh.pop %v1334
      %v1367 = vtanh.pop %v1335
      %v1368 = vtanh.pop %v1336
      %v1369 = vtanh.pop %v1337
      %v1370 = vtanh.pop %v1338
      %v1371 = vtanh.pop %v1339
      %v1372 = vtanh.pop %v1340
      %v1373 = vtanh.pop %v1341
      %v1374 = vtanh.pop %v1342
      %v1375 = vtanh.pop %v1343
      %v1376 = vtanh.pop %v1344
      %v1377 = vtanh.pop %v1345
      %v1378 = vtanh.pop %v1346
      %v1379 = vtanh.pop %v1347
      %v1380 = vtanh.pop %v1348
      %v1381 = vtanh.pop %v1349
      %v1382 = vtanh.pop %v1350
      %v1383 = vtanh.pop %v1351
      %v1384 = vtanh.pop %v1352
      %v1385 = vtanh.pop %v1353
      %v1386 = vtanh.pop %v1354
      %v1387 = vtanh.pop %v1355
      %v1388 = vtanh.pop %v1356
      %v1389 = vtanh.pop %v1357
      %v1390 = vtanh.pop %v1358
      %v1391 = vtanh.pop %v1359
      %v1392 = vtanh.pop %v1360
      %v1393 = vtanh.pop %v1361
      %v1394 = vtanh.pop %v1362
      %v1395 = vtanh.pop %v1363
      %v1396 = vadd.f32 %v1364, 1.0
      %v1397 = vadd.f32 %v1365, 1.0
      %v1398 = vadd.f32 %v1366, 1.0
      %v1399 = vadd.f32 %v1367, 1.0
      %v1400 = vadd.f32 %v1368, 1.0
      %v1401 = vadd.f32 %v1369, 1.0
      %v1402 = vadd.f32 %v1370, 1.0
      %v1403 = vadd.f32 %v1371, 1.0
      %v1404 = vadd.f32 %v1372, 1.0
      %v1405 = vadd.f32 %v1373, 1.0
      %v1406 = vadd.f32 %v1374, 1.0
      %v1407 = vadd.f32 %v1375, 1.0
      %v1408 = vadd.f32 %v1376, 1.0
      %v1409 = vadd.f32 %v1377, 1.0
      %v1410 = vadd.f32 %v1378, 1.0
      %v1411 = vadd.f32 %v1379, 1.0
      %v1412 = vadd.f32 %v1380, 1.0
      %v1413 = vadd.f32 %v1381, 1.0
      %v1414 = vadd.f32 %v1382, 1.0
      %v1415 = vadd.f32 %v1383, 1.0
      %v1416 = vadd.f32 %v1384, 1.0
      %v1417 = vadd.f32 %v1385, 1.0
      %v1418 = vadd.f32 %v1386, 1.0
      %v1419 = vadd.f32 %v1387, 1.0
      %v1420 = vadd.f32 %v1388, 1.0
      %v1421 = vadd.f32 %v1389, 1.0
      %v1422 = vadd.f32 %v1390, 1.0
      %v1423 = vadd.f32 %v1391, 1.0
      %v1424 = vadd.f32 %v1392, 1.0
      %v1425 = vadd.f32 %v1393, 1.0
      %v1426 = vadd.f32 %v1394, 1.0
      %v1427 = vadd.f32 %v1395, 1.0
      %v1428 = vmul.f32 %v1396, 0.5
      %v1429 = vmul.f32 %v1397, 0.5
      %v1430 = vmul.f32 %v1398, 0.5
      %v1431 = vmul.f32 %v1399, 0.5
      %v1432 = vmul.f32 %v1400, 0.5
      %v1433 = vmul.f32 %v1401, 0.5
      %v1434 = vmul.f32 %v1402, 0.5
      %v1435 = vmul.f32 %v1403, 0.5
      %v1436 = vmul.f32 %v1404, 0.5
      %v1437 = vmul.f32 %v1405, 0.5
      %v1438 = vmul.f32 %v1406, 0.5
      %v1439 = vmul.f32 %v1407, 0.5
      %v1440 = vmul.f32 %v1408, 0.5
      %v1441 = vmul.f32 %v1409, 0.5
      %v1442 = vmul.f32 %v1410, 0.5
      %v1443 = vmul.f32 %v1411, 0.5
      %v1444 = vmul.f32 %v1412, 0.5
      %v1445 = vmul.f32 %v1413, 0.5
      %v1446 = vmul.f32 %v1414, 0.5
      %v1447 = vmul.f32 %v1415, 0.5
      %v1448 = vmul.f32 %v1416, 0.5
      %v1449 = vmul.f32 %v1417, 0.5
      %v1450 = vmul.f32 %v1418, 0.5
      %v1451 = vmul.f32 %v1419, 0.5
      %v1452 = vmul.f32 %v1420, 0.5
      %v1453 = vmul.f32 %v1421, 0.5
      %v1454 = vmul.f32 %v1422, 0.5
      %v1455 = vmul.f32 %v1423, 0.5
      %v1456 = vmul.f32 %v1424, 0.5
      %v1457 = vmul.f32 %v1425, 0.5
      %v1458 = vmul.f32 %v1426, 0.5
      %v1459 = vmul.f32 %v1427, 0.5
      %v1460 = vmul.f32 %v1078, %v1428
      %v1461 = vmul.f32 %v1081, %v1429
      %v1462 = vmul.f32 %v1086, %v1430
      %v1463 = vmul.f32 %v1089, %v1431
      %v1464 = vmul.f32 %v1094, %v1432
      %v1465 = vmul.f32 %v1097, %v1433
      %v1466 = vmul.f32 %v1102, %v1434
      %v1467 = vmul.f32 %v1105, %v1435
      %v1468 = vmul.f32 %v1110, %v1436
      %v1469 = vmul.f32 %v1113, %v1437
      %v1470 = vmul.f32 %v1118, %v1438
      %v1471 = vmul.f32 %v1121, %v1439
      %v1472 = vmul.f32 %v1126, %v1440
      %v1473 = vmul.f32 %v1129, %v1441
      %v1474 = vmul.f32 %v1134, %v1442
      %v1475 = vmul.f32 %v1137, %v1443
      %v1476 = vmul.f32 %v1142, %v1444
      %v1477 = vmul.f32 %v1145, %v1445
      %v1478 = vmul.f32 %v1150, %v1446
      %v1479 = vmul.f32 %v1153, %v1447
      %v1480 = vmul.f32 %v1158, %v1448
      %v1481 = vmul.f32 %v1161, %v1449
      %v1482 = vmul.f32 %v1166, %v1450
      %v1483 = vmul.f32 %v1169, %v1451
      %v1484 = vmul.f32 %v1174, %v1452
      %v1485 = vmul.f32 %v1177, %v1453
      %v1486 = vmul.f32 %v1182, %v1454
      %v1487 = vmul.f32 %v1185, %v1455
      %v1488 = vmul.f32 %v1190, %v1456
      %v1489 = vmul.f32 %v1193, %v1457
      %v1490 = vmul.f32 %v1198, %v1458
      %v1491 = vmul.f32 %v1201, %v1459
      %v1492 = vpack.c.bf16 %v1461, %v1460
      %v1493 = vpack.c.bf16 %v1463, %v1462
      %v1494 = vpack.c.bf16 %v1465, %v1464
      %v1495 = vpack.c.bf16 %v1467, %v1466
      %v1496 = vpack.c.bf16 %v1469, %v1468
      %v1497 = vpack.c.bf16 %v1471, %v1470
      %v1498 = vpack.c.bf16 %v1473, %v1472
      %v1499 = vpack.c.bf16 %v1475, %v1474
      %v1500 = vpack.c.bf16 %v1477, %v1476
      %v1501 = vpack.c.bf16 %v1479, %v1478
      %v1502 = vpack.c.bf16 %v1481, %v1480
      %v1503 = vpack.c.bf16 %v1483, %v1482
      %v1504 = vpack.c.bf16 %v1485, %v1484
      %v1505 = vpack.c.bf16 %v1487, %v1486
      %v1506 = vpack.c.bf16 %v1489, %v1488
      %v1507 = vpack.c.bf16 %v1491, %v1490
      %v1508 = vld [vmem:[%s6] sm:$0xf]
      %v1509 = vld [vmem:[%s6 + $0x4] sm:$0xf]
      %v1510 = vld [vmem:[%s6 + $0x8] sm:$0xf]
      %v1511 = vld [vmem:[%s6 + $0xc] sm:$0xf]
      %v1512 = vld [vmem:[%s6 + $0x10] sm:$0xf]
      %v1513 = vld [vmem:[%s6 + $0x14] sm:$0xf]
      %v1514 = vld [vmem:[%s6 + $0x18] sm:$0xf]
      %v1515 = vld [vmem:[%s6 + $0x1c] sm:$0xf]
      %v1516 = vld [vmem:[%s6 + $0x20] sm:$0xf]
      %v1517 = vld [vmem:[%s6 + $0x24] sm:$0xf]
      %v1518 = vld [vmem:[%s6 + $0x28] sm:$0xf]
      %v1519 = vld [vmem:[%s6 + $0x2c] sm:$0xf]
      %v1520 = vld [vmem:[%s6 + $0x30] sm:$0xf]
      %v1521 = vld [vmem:[%s6 + $0x34] sm:$0xf]
      %v1522 = vld [vmem:[%s6 + $0x38] sm:$0xf]
      %v1523 = vld [vmem:[%s6 + $0x3c] sm:$0xf]
      %v1524 = vld [vmem:[%s7] sm:$0x1]
      %v1526 = vlaneseq
      %v1527 = vshrl.u32 %v1526, 7
      %v1528 = vsub.s32 0, %v1527
      %v1529 = vrot.slane %v1524, %v1528
      %v1547 = vunpack.c.l.b16 %v1508
      %v1548 = vunpack.c.l.b16 %v1509
      %v1549 = vunpack.c.l.b16 %v1510
      %v1550 = vunpack.c.l.b16 %v1511
      %v1551 = vunpack.c.l.b16 %v1512
      %v1552 = vunpack.c.l.b16 %v1513
      %v1553 = vunpack.c.l.b16 %v1514
      %v1554 = vunpack.c.l.b16 %v1515
      %v1555 = vunpack.c.l.b16 %v1516
      %v1556 = vunpack.c.l.b16 %v1517
      %v1557 = vunpack.c.l.b16 %v1518
      %v1558 = vunpack.c.l.b16 %v1519
      %v1559 = vunpack.c.l.b16 %v1520
      %v1560 = vunpack.c.l.b16 %v1521
      %v1561 = vunpack.c.l.b16 %v1522
      %v1562 = vunpack.c.l.b16 %v1523
      %v1563 = vpack.c.b16 %v1548, %v1547
      %v1564 = vpack.c.b16 %v1550, %v1549
      %v1565 = vpack.c.b16 %v1552, %v1551
      %v1566 = vpack.c.b16 %v1554, %v1553
      %v1567 = vpack.c.b16 %v1556, %v1555
      %v1568 = vpack.c.b16 %v1558, %v1557
      %v1569 = vpack.c.b16 %v1560, %v1559
      %v1570 = vpack.c.b16 %v1562, %v1561
      %1579 = vmatprep.subr.bf16.mxu0 0
      %1580 = vmatpush1.bf16.msra.mxu0 %v1563
      %1581 = vmatprep.subr.bf16.mxu0 0
      %1582 = vmatpush1.bf16.msra.mxu0 %v1564
      %1583 = vmatprep.subr.bf16.mxu0 0
      %1584 = vmatpush1.bf16.msra.mxu0 %v1565
      %1585 = vmatprep.subr.bf16.mxu0 0
      %1586 = vmatpush1.bf16.msra.mxu0 %v1566
      %1587 = vmatprep.subr.bf16.mxu0 0
      %1588 = vmatpush1.bf16.msra.mxu0 %v1567
      %1589 = vmatprep.subr.bf16.mxu0 0
      %1590 = vmatpush1.bf16.msra.mxu0 %v1568
      %1591 = vmatprep.subr.bf16.mxu0 0
      %1592 = vmatpush1.bf16.msra.mxu0 %v1569
      %1593 = vmatprep.subr.bf16.mxu0 0
      %1594 = vmatpush1.bf16.msra.mxu0 %v1570
      %1595 = vmatprep.subr.bf16.mxu0 0
      %1596 = vmatpush1.bf16.msra.mxu0 0
      %1597 = vmatprep.subr.bf16.mxu0 0
      %1598 = vmatpush1.bf16.msra.mxu0 0
      %1599 = vmatprep.subr.bf16.mxu0 0
      %1600 = vmatpush1.bf16.msra.mxu0 0
      %1601 = vmatprep.subr.bf16.mxu0 0
      %1602 = vmatpush1.bf16.msra.mxu0 0
      %1603 = vmatprep.subr.bf16.mxu0 0
      %1604 = vmatpush1.bf16.msra.mxu0 0
      %1605 = vmatprep.subr.bf16.mxu0 0
      %1606 = vmatpush1.bf16.msra.mxu0 0
      %1607 = vmatprep.subr.bf16.mxu0 0
      %1608 = vmatpush1.bf16.msra.mxu0 0
      %1609 = vmatprep.subr.bf16.mxu0 0
      %1610 = vmatpush1.bf16.msra.mxu0 0
      %1611 = vmatprep.mubr.bf16.mxu0 0
      %1612 = vmatmul.mubr.bf16.gmra.mrb[0].mxu0 %v1492
      %v1613 = vpop.f32.mrb[0].mxu0
      %v1614 = vadd.f32 %v1529, %v1613
      %v1615 = vpop.f32.mrb[0].mxu0
      %v1616 = vpop.f32.mrb[0].mxu0
      %v1617 = vadd.f32 %v1529, %v1616
      %v1618 = vpop.f32.mrb[0].mxu0
      %1619 = vmatprep.mubr.bf16.mxu0 0
      %1620 = vmatmul.mubr.bf16.gmra.mrb[0].mxu0 %v1493
      %v1621 = vpop.f32.mrb[0].mxu0
      %v1622 = vadd.f32 %v1529, %v1621
      %v1623 = vpop.f32.mrb[0].mxu0
      %v1624 = vpop.f32.mrb[0].mxu0
      %v1625 = vadd.f32 %v1529, %v1624
      %v1626 = vpop.f32.mrb[0].mxu0
      %1627 = vmatprep.mubr.bf16.mxu0 0
      %1628 = vmatmul.mubr.bf16.gmra.mrb[0].mxu0 %v1494
      %v1629 = vpop.f32.mrb[0].mxu0
      %v1630 = vadd.f32 %v1529, %v1629
      %v1631 = vpop.f32.mrb[0].mxu0
      %v1632 = vpop.f32.mrb[0].mxu0
      %v1633 = vadd.f32 %v1529, %v1632
      %v1634 = vpop.f32.mrb[0].mxu0
      %1635 = vmatprep.mubr.bf16.mxu0 0
      %1636 = vmatmul.mubr.bf16.gmra.mrb[0].mxu0 %v1495
      %v1637 = vpop.f32.mrb[0].mxu0
      %v1638 = vadd.f32 %v1529, %v1637
      %v1639 = vpop.f32.mrb[0].mxu0
      %v1640 = vpop.f32.mrb[0].mxu0
      %v1641 = vadd.f32 %v1529, %v1640
      %v1642 = vpop.f32.mrb[0].mxu0
      %1643 = vmatprep.mubr.bf16.mxu0 0
      %1644 = vmatmul.mubr.bf16.gmra.mrb[0].mxu0 %v1496
      %v1645 = vpop.f32.mrb[0].mxu0
      %v1646 = vadd.f32 %v1529, %v1645
      %v1647 = vpop.f32.mrb[0].mxu0
      %v1648 = vpop.f32.mrb[0].mxu0
      %v1649 = vadd.f32 %v1529, %v1648
      %v1650 = vpop.f32.mrb[0].mxu0
      %1651 = vmatprep.mubr.bf16.mxu0 0
      %1652 = vmatmul.mubr.bf16.gmra.mrb[0].mxu0 %v1497
      %v1653 = vpop.f32.mrb[0].mxu0
      %v1654 = vadd.f32 %v1529, %v1653
      %v1655 = vpop.f32.mrb[0].mxu0
      %v1656 = vpop.f32.mrb[0].mxu0
      %v1657 = vadd.f32 %v1529, %v1656
      %v1658 = vpop.f32.mrb[0].mxu0
      %1659 = vmatprep.mubr.bf16.mxu0 0
      %1660 = vmatmul.mubr.bf16.gmra.mrb[0].mxu0 %v1498
      %v1661 = vpop.f32.mrb[0].mxu0
      %v1662 = vadd.f32 %v1529, %v1661
      %v1663 = vpop.f32.mrb[0].mxu0
      %v1664 = vpop.f32.mrb[0].mxu0
      %v1665 = vadd.f32 %v1529, %v1664
      %v1666 = vpop.f32.mrb[0].mxu0
      %1667 = vmatprep.mubr.bf16.mxu0 0
      %1668 = vmatmul.mubr.bf16.gmra.mrb[0].mxu0 %v1499
      %v1669 = vpop.f32.mrb[0].mxu0
      %v1670 = vadd.f32 %v1529, %v1669
      %v1671 = vpop.f32.mrb[0].mxu0
      %v1672 = vpop.f32.mrb[0].mxu0
      %v1673 = vadd.f32 %v1529, %v1672
      %v1674 = vpop.f32.mrb[0].mxu0
      %1675 = vmatprep.mubr.bf16.mxu0 0
      %1676 = vmatmul.mubr.bf16.gmra.mrb[0].mxu0 %v1500
      %v1677 = vpop.f32.mrb[0].mxu0
      %v1678 = vadd.f32 %v1529, %v1677
      %v1679 = vpop.f32.mrb[0].mxu0
      %v1680 = vpop.f32.mrb[0].mxu0
      %v1681 = vadd.f32 %v1529, %v1680
      %v1682 = vpop.f32.mrb[0].mxu0
      %1683 = vmatprep.mubr.bf16.mxu0 0
      %1684 = vmatmul.mubr.bf16.gmra.mrb[0].mxu0 %v1501
      %v1685 = vpop.f32.mrb[0].mxu0
      %v1686 = vadd.f32 %v1529, %v1685
      %v1687 = vpop.f32.mrb[0].mxu0
      %v1688 = vpop.f32.mrb[0].mxu0
      %v1689 = vadd.f32 %v1529, %v1688
      %v1690 = vpop.f32.mrb[0].mxu0
      %1691 = vmatprep.mubr.bf16.mxu0 0
      %1692 = vmatmul.mubr.bf16.gmra.mrb[0].mxu0 %v1502
      %v1693 = vpop.f32.mrb[0].mxu0
      %v1694 = vadd.f32 %v1529, %v1693
      %v1695 = vpop.f32.mrb[0].mxu0
      %v1696 = vpop.f32.mrb[0].mxu0
      %v1697 = vadd.f32 %v1529, %v1696
      %v1698 = vpop.f32.mrb[0].mxu0
      %1699 = vmatprep.mubr.bf16.mxu0 0
      %1700 = vmatmul.mubr.bf16.gmra.mrb[0].mxu0 %v1503
      %v1701 = vpop.f32.mrb[0].mxu0
      %v1702 = vadd.f32 %v1529, %v1701
      %v1703 = vpop.f32.mrb[0].mxu0
      %v1704 = vpop.f32.mrb[0].mxu0
      %v1705 = vadd.f32 %v1529, %v1704
      %v1706 = vpop.f32.mrb[0].mxu0
      %1707 = vmatprep.mubr.bf16.mxu0 0
      %1708 = vmatmul.mubr.bf16.gmra.mrb[0].mxu0 %v1504
      %v1709 = vpop.f32.mrb[0].mxu0
      %v1710 = vadd.f32 %v1529, %v1709
      %v1711 = vpop.f32.mrb[0].mxu0
      %v1712 = vpop.f32.mrb[0].mxu0
      %v1713 = vadd.f32 %v1529, %v1712
      %v1714 = vpop.f32.mrb[0].mxu0
      %1715 = vmatprep.mubr.bf16.mxu0 0
      %1716 = vmatmul.mubr.bf16.gmra.mrb[0].mxu0 %v1505
      %v1717 = vpop.f32.mrb[0].mxu0
      %v1718 = vadd.f32 %v1529, %v1717
      %v1719 = vpop.f32.mrb[0].mxu0
      %v1720 = vpop.f32.mrb[0].mxu0
      %v1721 = vadd.f32 %v1529, %v1720
      %v1722 = vpop.f32.mrb[0].mxu0
      %1723 = vmatprep.mubr.bf16.mxu0 0
      %1724 = vmatmul.mubr.bf16.gmra.mrb[0].mxu0 %v1506
      %v1725 = vpop.f32.mrb[0].mxu0
      %v1726 = vadd.f32 %v1529, %v1725
      %v1727 = vpop.f32.mrb[0].mxu0
      %v1728 = vpop.f32.mrb[0].mxu0
      %v1729 = vadd.f32 %v1529, %v1728
      %v1730 = vpop.f32.mrb[0].mxu0
      %1731 = vmatprep.mubr.bf16.mxu0 0
      %1732 = vmatmul.mubr.bf16.gmra.mrb[0].mxu0 %v1507
      %v1733 = vpop.f32.mrb[0].mxu0
      %v1734 = vadd.f32 %v1529, %v1733
      %v1735 = vpop.f32.mrb[0].mxu0
      %v1736 = vpop.f32.mrb[0].mxu0
      %v1737 = vadd.f32 %v1529, %v1736
      %v1738 = vpop.f32.mrb[0].mxu0
      %1739 = vdwg.mxu0
      %v1740 = vadd.f32 %v428, %v1614
      %v1741 = vadd.f32 %v429, %v1617
      %v1742 = vadd.f32 %v430, %v1622
      %v1743 = vadd.f32 %v431, %v1625
      %v1744 = vadd.f32 %v432, %v1630
      %v1745 = vadd.f32 %v433, %v1633
      %v1746 = vadd.f32 %v434, %v1638
      %v1747 = vadd.f32 %v435, %v1641
      %v1748 = vadd.f32 %v436, %v1646
      %v1749 = vadd.f32 %v437, %v1649
      %v1750 = vadd.f32 %v438, %v1654
      %v1751 = vadd.f32 %v439, %v1657
      %v1752 = vadd.f32 %v440, %v1662
      %v1753 = vadd.f32 %v441, %v1665
      %v1754 = vadd.f32 %v442, %v1670
      %v1755 = vadd.f32 %v443, %v1673
      %v1756 = vadd.f32 %v444, %v1678
      %v1757 = vadd.f32 %v445, %v1681
      %v1758 = vadd.f32 %v446, %v1686
      %v1759 = vadd.f32 %v447, %v1689
      %v1760 = vadd.f32 %v448, %v1694
      %v1761 = vadd.f32 %v449, %v1697
      %v1762 = vadd.f32 %v450, %v1702
      %v1763 = vadd.f32 %v451, %v1705
      %v1764 = vadd.f32 %v452, %v1710
      %v1765 = vadd.f32 %v453, %v1713
      %v1766 = vadd.f32 %v454, %v1718
      %v1767 = vadd.f32 %v455, %v1721
      %v1768 = vadd.f32 %v456, %v1726
      %v1769 = vadd.f32 %v457, %v1729
      %v1770 = vadd.f32 %v458, %v1734
      %v1771 = vadd.f32 %v459, %v1737
      %1772 = vst.msk [vmem:[%s329] sm:$0xff] %vm460, %v1740
      %1773 = vst.msk [vmem:[%s329 + $0x8] sm:$0xff] %vm460, %v1741
      %1774 = vst.msk [vmem:[%s329 + $0x10] sm:$0xff] %vm460, %v1742
      %1775 = vst.msk [vmem:[%s329 + $0x18] sm:$0xff] %vm460, %v1743
      %1776 = vst.msk [vmem:[%s329 + $0x20] sm:$0xff] %vm460, %v1744
      %1777 = vst.msk [vmem:[%s329 + $0x28] sm:$0xff] %vm460, %v1745
      %1778 = vst.msk [vmem:[%s329 + $0x30] sm:$0xff] %vm460, %v1746
      %1779 = vst.msk [vmem:[%s329 + $0x38] sm:$0xff] %vm460, %v1747
      %1780 = vst.msk [vmem:[%s329 + $0x40] sm:$0xff] %vm460, %v1748
      %1781 = vst.msk [vmem:[%s329 + $0x48] sm:$0xff] %vm460, %v1749
      %1782 = vst.msk [vmem:[%s329 + $0x50] sm:$0xff] %vm460, %v1750
      %1783 = vst.msk [vmem:[%s329 + $0x58] sm:$0xff] %vm460, %v1751
      %1784 = vst.msk [vmem:[%s329 + $0x60] sm:$0xff] %vm460, %v1752
      %1785 = vst.msk [vmem:[%s329 + $0x68] sm:$0xff] %vm460, %v1753
      %1786 = vst.msk [vmem:[%s329 + $0x70] sm:$0xff] %vm460, %v1754
      %1787 = vst.msk [vmem:[%s329 + $0x78] sm:$0xff] %vm460, %v1755
      %1788 = vst.msk [vmem:[%s329 + $0x80] sm:$0xff] %vm460, %v1756
      %1789 = vst.msk [vmem:[%s329 + $0x88] sm:$0xff] %vm460, %v1757
      %1790 = vst.msk [vmem:[%s329 + $0x90] sm:$0xff] %vm460, %v1758
      %1791 = vst.msk [vmem:[%s329 + $0x98] sm:$0xff] %vm460, %v1759
      %1792 = vst.msk [vmem:[%s329 + $0xa0] sm:$0xff] %vm460, %v1760
      %1793 = vst.msk [vmem:[%s329 + $0xa8] sm:$0xff] %vm460, %v1761
      %1794 = vst.msk [vmem:[%s329 + $0xb0] sm:$0xff] %vm460, %v1762
      %1795 = vst.msk [vmem:[%s329 + $0xb8] sm:$0xff] %vm460, %v1763
      %1796 = vst.msk [vmem:[%s329 + $0xc0] sm:$0xff] %vm460, %v1764
      %1797 = vst.msk [vmem:[%s329 + $0xc8] sm:$0xff] %vm460, %v1765
      %1798 = vst.msk [vmem:[%s329 + $0xd0] sm:$0xff] %vm460, %v1766
      %1799 = vst.msk [vmem:[%s329 + $0xd8] sm:$0xff] %vm460, %v1767
      %1800 = vst.msk [vmem:[%s329 + $0xe0] sm:$0xff] %vm460, %v1768
      %1801 = vst.msk [vmem:[%s329 + $0xe8] sm:$0xff] %vm460, %v1769
      %1802 = vst.msk [vmem:[%s329 + $0xf0] sm:$0xff] %vm460, %v1770
      %1803 = vst.msk [vmem:[%s329 + $0xf8] sm:$0xff] %vm460, %v1771
      %s1804 = smul.u32 32, %s19
      %p1805 = scmp.lt.s32.totalorder %s1804, 63
      %s1806 = scalar_select %p1805, %s1804, 63
      %s1807 = smul.addr %s1806, 8
      %s1808 = scalar_lea.vmem %s8, %s1807
      // Predicated region
      $region53: #{earth_specific_layer.5} parent=51 // pred_check
        %p1809 = pneg %p215
      $region54: #{earth_specific_layer.5} parent=51 // pred_check_branch
        %1811 = sbr.rel (%p1809) target = $region56
      $region55: #{earth_specific_layer.5} parent=51 // pred_region
        %s1812 = smul.u32 32, %s19
      $region56: #{earth_specific_layer.5} parent=51 // pred_fallthru
        _
    $region52: #{earth_specific_layer.5} parent=5 // pred_fallthru
      _
    %p1813 = scmp.le.s32.totalorder 2, %s14
    // Predicated region
    $region57: #{earth_specific_layer.5} parent=5 // pred_check
      %p1814 = pneg %p1813
    $region58: #{earth_specific_layer.5} parent=5 // pred_check_branch
      %1816 = sbr.rel (%p1814) target = $region60
    $region59: #{earth_specific_layer.5} parent=5 // pred_region
      %s1817 = ssub.s32 %s14, 2
      // Predicated region
      $region61: #{earth_specific_layer.5} parent=59 // pred_check
        %p1818 = pneg %p221
      $region62: #{earth_specific_layer.5} parent=59 // pred_check_branch
        %1820 = sbr.rel (%p1818) target = $region64
      $region63: #{earth_specific_layer.5} parent=59 // pred_region
        %s1821 = smul.u32 32, %s20
        %p1822 = scmp.lt.s32.totalorder %s1821, 63
        %s1823 = scalar_select %p1822, %s1821, 63
        %s1824 = smul.addr %s1823, 8
        %s1825 = scalar_lea.vmem %s8, %s1824
      $region64: #{earth_specific_layer.5} parent=59 // pred_fallthru
        _
    $region60: #{earth_specific_layer.5} parent=5 // pred_fallthru
      _
  $region6: #{earth_specific_layer.5} parent=0 // loop_footer
    %s18 = sadd.s32 1, %s14
  $region7: #{earth_specific_layer.5} parent=0 // loop_footer_branch
    %13 = sbr.rel target = $region3
  $region8: #{earth_specific_layer.5} parent=0 // loop_exit
    _

// kernel: earth_specific_layer.4
$region0: #{earth_specific_layer.4}
  #allocation0 [shape = 'u32[]', space=smem, size = 0x4, offset = 0x4, fixed_abs, tag = 'smem constant byte address 0x4 - core index']
  #allocation1 [shape = 'u32[144,128]{1,0:T(1,128)}', space=vmem, size = 0x12000, scoped, tag = 'internal scratch']
  #allocation2 [shape = 's32[1]{0}', space=sflag, size = 0x4, scoped, tag = 'scoped memory for earth_specific_layer.4']
  #allocation3 [shape = 'u8[512]{0}', space=smem, size = 0x200, scoped, tag = 'prefetched SMEM operand 0']
  %s0 = inlined_call_operand.vmem [shape: s32[4], index: 0, kind: input, shape index: {}]
  %s1 = inlined_call_operand.vmem [shape: bf16[16,32,32], index: 1, kind: input, shape index: {}]
  %s2 = inlined_call_operand.vmem [shape: f32[1,32], index: 2, kind: input, shape index: {}]
  %s3 = inlined_call_operand.vmem [shape: f32[1,32], index: 3, kind: input, shape index: {}]
  %s4 = inlined_call_operand.vmem [shape: bf16[32,96], index: 4, kind: input, shape index: {}]
  %s5 = inlined_call_operand.vmem [shape: f32[1,96], index: 5, kind: input, shape index: {}]
  %s6 = inlined_call_operand.vmem [shape: bf16[2,4,32,32], index: 6, kind: input, shape index: {}]
  %s7 = inlined_call_operand.vmem [shape: bf16[4,8,32], index: 7, kind: input, shape index: {}]
  %s8 = inlined_call_operand.vmem [shape: f32[1,32], index: 8, kind: input, shape index: {}]
  %s9 = inlined_call_operand.vmem [shape: bf16[16,32,32], index: 9, kind: output, shape index: {}]
  %s10 = sld [smem:[#allocation0]]
  $region65: #{earth_specific_layer.4} parent=0
    _
  %s12 = ssub.s32 1, %s10
  %s13 = scalar_select 0, %s12, %s10
  %s14 = sshll.u32 %s0, 4
  %s15 = int_to_ptr.vmem [resolvable:$true] %s14
  %17 = dma.vmem_to_smem %s15, 16, [#allocation3], [#allocation2]
  %18 = dma.done [#allocation2], 16
  %19 = sfence
  loop: start=0, step=1, limit=6
  $region2: #{earth_specific_layer.4} parent=0 // loop_pre_header
    _
  $region3: #{earth_specific_layer.4} parent=0 // loop_header
    %s21 = sphi 0, %s25
    %p22 = scmp.ge.s32.totalorder %s21, 6
    %s31 = sphi 0, %s33
    %s34 = sphi 0, %s31
    %s35 = sphi 0, %s34
    %s51 = sphi 0, %s35
    %s55 = sphi 0, %s55
    %s57 = sphi 0, %s55
    %s58 = sphi 0, %s57
    %s72 = sphi 0, %s58
    %s76 = sphi 0, %s76
    %s78 = sphi 0, %s76
    %s79 = sphi 0, %s78
    %s93 = sphi 0, %s79
    %s97 = sphi 0, %s97
    %s99 = sphi 0, %s97
    %s100 = sphi 0, %s99
    %s114 = sphi 0, %s100
    %s118 = sphi 0, %s118
    %s120 = sphi 0, %s118
    %s121 = sphi 0, %s120
    %s135 = sphi 0, %s121
    %s143 = sphi 0, %s145
    %s146 = sphi 0, %s143
    %s147 = sphi 0, %s146
    %s163 = sphi 0, %s147
    %s167 = sphi 0, %s167
    %s169 = sphi 0, %s167
    %s170 = sphi 0, %s169
    %s184 = sphi 0, %s170
    %s188 = sphi 0, %s188
    %s190 = sphi 0, %s188
    %s191 = sphi 0, %s190
    %s205 = sphi 0, %s191
    %s211 = sphi 0, %s213
    %s214 = sphi 0, %s211
    %s215 = sphi 0, %s214
    %s231 = sphi 0, %s215
  $region4: #{earth_specific_layer.4} parent=0 // loop_header_branch
    %24 = sbr.rel (%p22) target = $region8
  $region5: #{earth_specific_layer.4} parent=0 // loop_body
    %s26 = ssub.s32 %s21, 1
    %s27 = ssub.s32 %s21, 2
    %s28 = sadd.s32 %s21, 1
    %s29 = ssub.s32 %s21, %s28
    %p30 = scmp.eq.s32.totalorder %s29, 0
    %s32 = sadd.s32 %s31, 1
    %s33 = scalar_select %p30, %s31, %s32
    %p36 = pneg %p30
    %p37 = scmp.eq.s32.totalorder %s21, 3
    %p38 = por %p36, %p37
    %p39 = scmp.ne.s32.totalorder %s31, %s34
    %p40 = scmp.eq.s32.totalorder %s21, 0
    %p41 = por %p39, %p40
    %p42 = scmp.ne.s32.totalorder %s31, %s34
    %p43 = scmp.eq.s32.totalorder %s26, 3
    %p44 = por %p42, %p43
    %p45 = scmp.ne.s32.totalorder %s34, %s35
    %p46 = scmp.eq.s32.totalorder %s26, 0
    %p47 = por %p45, %p46
    %p48 = scmp.ne.s32.totalorder %s34, %s35
    %p49 = scmp.eq.s32.totalorder %s27, 3
    %p50 = por %p48, %p49
    %p52 = scmp.ne.s32.totalorder %s35, %s51
    %p53 = scmp.eq.s32.totalorder %s27, 0
    %p54 = por %p52, %p53
    %s56 = sadd.s32 %s55, 1
    %p59 = scmp.eq.s32.totalorder %s21, 3
    %p60 = scmp.ne.s32.totalorder %s55, %s57
    %p61 = scmp.eq.s32.totalorder %s21, 0
    %p62 = por %p60, %p61
    %p63 = scmp.ne.s32.totalorder %s55, %s57
    %p64 = scmp.eq.s32.totalorder %s26, 3
    %p65 = por %p63, %p64
    %p66 = scmp.ne.s32.totalorder %s57, %s58
    %p67 = scmp.eq.s32.totalorder %s26, 0
    %p68 = por %p66, %p67
    %p69 = scmp.ne.s32.totalorder %s57, %s58
    %p70 = scmp.eq.s32.totalorder %s27, 3
    %p71 = por %p69, %p70
    %p73 = scmp.ne.s32.totalorder %s58, %s72
    %p74 = scmp.eq.s32.totalorder %s27, 0
    %p75 = por %p73, %p74
    %s77 = sadd.s32 %s76, 1
    %p80 = scmp.eq.s32.totalorder %s21, 3
    %p81 = scmp.ne.s32.totalorder %s76, %s78
    %p82 = scmp.eq.s32.totalorder %s21, 0
    %p83 = por %p81, %p82
    %p84 = scmp.ne.s32.totalorder %s76, %s78
    %p85 = scmp.eq.s32.totalorder %s26, 3
    %p86 = por %p84, %p85
    %p87 = scmp.ne.s32.totalorder %s78, %s79
    %p88 = scmp.eq.s32.totalorder %s26, 0
    %p89 = por %p87, %p88
    %p90 = scmp.ne.s32.totalorder %s78, %s79
    %p91 = scmp.eq.s32.totalorder %s27, 3
    %p92 = por %p90, %p91
    %p94 = scmp.ne.s32.totalorder %s79, %s93
    %p95 = scmp.eq.s32.totalorder %s27, 0
    %p96 = por %p94, %p95
    %s98 = sadd.s32 %s97, 1
    %p101 = scmp.eq.s32.totalorder %s21, 3
    %p102 = scmp.ne.s32.totalorder %s97, %s99
    %p103 = scmp.eq.s32.totalorder %s21, 0
    %p104 = por %p102, %p103
    %p105 = scmp.ne.s32.totalorder %s97, %s99
    %p106 = scmp.eq.s32.totalorder %s26, 3
    %p107 = por %p105, %p106
    %p108 = scmp.ne.s32.totalorder %s99, %s100
    %p109 = scmp.eq.s32.totalorder %s26, 0
    %p110 = por %p108, %p109
    %p111 = scmp.ne.s32.totalorder %s99, %s100
    %p112 = scmp.eq.s32.totalorder %s27, 3
    %p113 = por %p111, %p112
    %p115 = scmp.ne.s32.totalorder %s100, %s114
    %p116 = scmp.eq.s32.totalorder %s27, 0
    %p117 = por %p115, %p116
    %s119 = sadd.s32 %s118, 1
    %p122 = scmp.eq.s32.totalorder %s21, 3
    %p123 = scmp.ne.s32.totalorder %s118, %s120
    %p124 = scmp.eq.s32.totalorder %s21, 0
    %p125 = por %p123, %p124
    %p126 = scmp.ne.s32.totalorder %s118, %s120
    %p127 = scmp.eq.s32.totalorder %s26, 3
    %p128 = por %p126, %p127
    %p129 = scmp.ne.s32.totalorder %s120, %s121
    %p130 = scmp.eq.s32.totalorder %s26, 0
    %p131 = por %p129, %p130
    %p132 = scmp.ne.s32.totalorder %s120, %s121
    %p133 = scmp.eq.s32.totalorder %s27, 3
    %p134 = por %p132, %p133
    %p136 = scmp.ne.s32.totalorder %s121, %s135
    %p137 = scmp.eq.s32.totalorder %s27, 0
    %p138 = por %p136, %p137
    %s139 = sld [smem:[#allocation3 + %s21]]
    %s140 = sld [smem:[#allocation3 + %s28]]
    %s141 = ssub.s32 %s139, %s140
    %p142 = scmp.eq.s32.totalorder %s141, 0
    %s144 = sadd.s32 %s143, 1
    %s145 = scalar_select %p142, %s143, %s144
    %p148 = pneg %p142
    %p149 = scmp.eq.s32.totalorder %s21, 3
    %p150 = por %p148, %p149
    %p151 = scmp.ne.s32.totalorder %s143, %s146
    %p152 = scmp.eq.s32.totalorder %s21, 0
    %p153 = por %p151, %p152
    %p154 = scmp.ne.s32.totalorder %s143, %s146
    %p155 = scmp.eq.s32.totalorder %s26, 3
    %p156 = por %p154, %p155
    %p157 = scmp.ne.s32.totalorder %s146, %s147
    %p158 = scmp.eq.s32.totalorder %s26, 0
    %p159 = por %p157, %p158
    %p160 = scmp.ne.s32.totalorder %s146, %s147
    %p161 = scmp.eq.s32.totalorder %s27, 3
    %p162 = por %p160, %p161
    %p164 = scmp.ne.s32.totalorder %s147, %s163
    %p165 = scmp.eq.s32.totalorder %s27, 0
    %p166 = por %p164, %p165
    %s168 = sadd.s32 %s167, 1
    %p171 = scmp.eq.s32.totalorder %s21, 3
    %p172 = scmp.ne.s32.totalorder %s167, %s169
    %p173 = scmp.eq.s32.totalorder %s21, 0
    %p174 = por %p172, %p173
    %p175 = scmp.ne.s32.totalorder %s167, %s169
    %p176 = scmp.eq.s32.totalorder %s26, 3
    %p177 = por %p175, %p176
    %p178 = scmp.ne.s32.totalorder %s169, %s170
    %p179 = scmp.eq.s32.totalorder %s26, 0
    %p180 = por %p178, %p179
    %p181 = scmp.ne.s32.totalorder %s169, %s170
    %p182 = scmp.eq.s32.totalorder %s27, 3
    %p183 = por %p181, %p182
    %p185 = scmp.ne.s32.totalorder %s170, %s184
    %p186 = scmp.eq.s32.totalorder %s27, 0
    %p187 = por %p185, %p186
    %s189 = sadd.s32 %s188, 1
    %p192 = scmp.eq.s32.totalorder %s21, 3
    %p193 = scmp.ne.s32.totalorder %s188, %s190
    %p194 = scmp.eq.s32.totalorder %s21, 0
    %p195 = por %p193, %p194
    %p196 = scmp.ne.s32.totalorder %s188, %s190
    %p197 = scmp.eq.s32.totalorder %s26, 3
    %p198 = por %p196, %p197
    %p199 = scmp.ne.s32.totalorder %s190, %s191
    %p200 = scmp.eq.s32.totalorder %s26, 0
    %p201 = por %p199, %p200
    %p202 = scmp.ne.s32.totalorder %s190, %s191
    %p203 = scmp.eq.s32.totalorder %s27, 3
    %p204 = por %p202, %p203
    %p206 = scmp.ne.s32.totalorder %s191, %s205
    %p207 = scmp.eq.s32.totalorder %s27, 0
    %p208 = por %p206, %p207
    %s209 = ssub.s32 %s21, %s28
    %p210 = scmp.eq.s32.totalorder %s209, 0
    %s212 = sadd.s32 %s211, 1
    %s213 = scalar_select %p210, %s211, %s212
    %p216 = pneg %p210
    %p217 = scmp.eq.s32.totalorder %s21, 3
    %p218 = por %p216, %p217
    %p219 = scmp.ne.s32.totalorder %s211, %s214
    %p220 = scmp.eq.s32.totalorder %s21, 0
    %p221 = por %p219, %p220
    %p222 = scmp.ne.s32.totalorder %s211, %s214
    %p223 = scmp.eq.s32.totalorder %s26, 3
    %p224 = por %p222, %p223
    %p225 = scmp.ne.s32.totalorder %s214, %s215
    %p226 = scmp.eq.s32.totalorder %s26, 0
    %p227 = por %p225, %p226
    %p228 = scmp.ne.s32.totalorder %s214, %s215
    %p229 = scmp.eq.s32.totalorder %s27, 3
    %p230 = por %p228, %p229
    %p232 = scmp.ne.s32.totalorder %s215, %s231
    %p233 = scmp.eq.s32.totalorder %s27, 0
    %p234 = por %p232, %p233
    %p235 = scmp.le.s32.totalorder 1, %s21
    %p236 = scmp.lt.s32.totalorder %s21, 5
    %p237 = pnand %p235, %p236
    %p238 = pneg %p237
    // Predicated region
    $region9: #{earth_specific_layer.4} parent=5 // pred_check
      _
    $region10: #{earth_specific_layer.4} parent=5 // pred_check_branch
      %240 = sbr.rel (%p237) target = $region12
    $region11: #{earth_specific_layer.4} parent=5 // pred_region
      %s241 = ssub.s32 %s21, 1
      // Predicated region
      $region13: #{earth_specific_layer.4} parent=11 // pred_check
        %p242 = pneg %p68
      $region14: #{earth_specific_layer.4} parent=11 // pred_check_branch
        %244 = sbr.rel (%p242) target = $region16
      $region15: #{earth_specific_layer.4} parent=11 // pred_region
        _
      $region16: #{earth_specific_layer.4} parent=11 // pred_fallthru
        _
      // Predicated region
      $region17: #{earth_specific_layer.4} parent=11 // pred_check
        %p245 = pneg %p89
      $region18: #{earth_specific_layer.4} parent=11 // pred_check_branch
        %247 = sbr.rel (%p245) target = $region20
      $region19: #{earth_specific_layer.4} parent=11 // pred_region
        _
      $region20: #{earth_specific_layer.4} parent=11 // pred_fallthru
        _
      // Predicated region
      $region21: #{earth_specific_layer.4} parent=11 // pred_check
        %p248 = pneg %p110
      $region22: #{earth_specific_layer.4} parent=11 // pred_check_branch
        %250 = sbr.rel (%p248) target = $region24
      $region23: #{earth_specific_layer.4} parent=11 // pred_region
        _
      $region24: #{earth_specific_layer.4} parent=11 // pred_fallthru
        _
      // Predicated region
      $region25: #{earth_specific_layer.4} parent=11 // pred_check
        %p251 = pneg %p131
      $region26: #{earth_specific_layer.4} parent=11 // pred_check_branch
        %253 = sbr.rel (%p251) target = $region28
      $region27: #{earth_specific_layer.4} parent=11 // pred_region
        _
      $region28: #{earth_specific_layer.4} parent=11 // pred_fallthru
        _
      // Predicated region
      $region29: #{earth_specific_layer.4} parent=11 // pred_check
        %p254 = pneg %p180
      $region30: #{earth_specific_layer.4} parent=11 // pred_check_branch
        %256 = sbr.rel (%p254) target = $region32
      $region31: #{earth_specific_layer.4} parent=11 // pred_region
        _
      $region32: #{earth_specific_layer.4} parent=11 // pred_fallthru
        _
      // Predicated region
      $region33: #{earth_specific_layer.4} parent=11 // pred_check
        %p257 = pneg %p201
      $region34: #{earth_specific_layer.4} parent=11 // pred_check_branch
        %259 = sbr.rel (%p257) target = $region36
      $region35: #{earth_specific_layer.4} parent=11 // pred_region
        _
      $region36: #{earth_specific_layer.4} parent=11 // pred_fallthru
        _
    $region12: #{earth_specific_layer.4} parent=5 // pred_fallthru
      _
    %p260 = scmp.lt.s32.totalorder %s21, 4
    // Predicated region
    $region37: #{earth_specific_layer.4} parent=5 // pred_check
      %p261 = pneg %p260
    $region38: #{earth_specific_layer.4} parent=5 // pred_check_branch
      %263 = sbr.rel (%p261) target = $region40
    $region39: #{earth_specific_layer.4} parent=5 // pred_region
      // Predicated region
      $region41: #{earth_specific_layer.4} parent=39 // pred_check
        %p264 = pneg %p41
      $region42: #{earth_specific_layer.4} parent=39 // pred_check_branch
        %266 = sbr.rel (%p264) target = $region44
      $region43: #{earth_specific_layer.4} parent=39 // pred_region
        %s267 = smul.u32 4, %s21
        %p268 = scmp.lt.s32.totalorder %s267, 15
        %s269 = scalar_select %p268, %s267, 15
        %s270 = smul.addr %s269, 4
        %s271 = smul.addr %s270, 4
        %s272 = scalar_lea.vmem %s1, %s271
        %s273 = smul.u32 4, %s21
      $region44: #{earth_specific_layer.4} parent=39 // pred_fallthru
        _
      // Predicated region
      $region45: #{earth_specific_layer.4} parent=39 // pred_check
        %p274 = pneg %p153
      $region46: #{earth_specific_layer.4} parent=39 // pred_check_branch
        %276 = sbr.rel (%p274) target = $region48
      $region47: #{earth_specific_layer.4} parent=39 // pred_region
        %s277 = sld [smem:[#allocation3 + %s21]]
        %p278 = scmp.lt.s32.totalorder %s277, 1
        %s279 = scalar_select %p278, %s277, 1
        %s280 = smul.addr %s279, 16
        %s281 = smul.addr %s280, 4
        %s282 = scalar_lea.vmem %s6, %s281
        %s283 = sld [smem:[#allocation3 + %s21]]
      $region48: #{earth_specific_layer.4} parent=39 // pred_fallthru
        _
    $region40: #{earth_specific_layer.4} parent=5 // pred_fallthru
      _
    %p284 = scmp.le.s32.totalorder 1, %s21
    %p285 = scmp.lt.s32.totalorder %s21, 5
    %p286 = pnand %p284, %p285
    %p287 = pneg %p286
    // Predicated region
    $region49: #{earth_specific_layer.4} parent=5 // pred_check
      _
    $region50: #{earth_specific_layer.4} parent=5 // pred_check_branch
      %289 = sbr.rel (%p286) target = $region52
    $region51: #{earth_specific_layer.4} parent=5 // pred_region
      %s290 = ssub.s32 %s21, 1
      %s291 = smul.u32 4, %s26
      %p292 = scmp.lt.s32.totalorder %s291, 15
      %s293 = scalar_select %p292, %s291, 15
      %s294 = smul.addr %s293, 4
      %s295 = smul.addr %s294, 4
      %s296 = scalar_lea.vmem %s1, %s295
      %p297 = pneg %p47
      %p298 = pneg %p44
      %p299 = pneg %p68
      %p300 = pneg %p65
      %p301 = pneg %p89
      %p302 = pneg %p86
      %p303 = pneg %p110
      %p304 = pneg %p107
      %p305 = pneg %p131
      %p306 = pneg %p128
      %s307 = sld [smem:[#allocation3 + %s26]]
      %p308 = scmp.lt.s32.totalorder %s307, 1
      %s309 = scalar_select %p308, %s307, 1
      %s310 = smul.addr %s309, 16
      %s311 = smul.addr %s310, 4
      %s312 = scalar_lea.vmem %s6, %s311
      %p313 = pneg %p159
      %p314 = pneg %p156
      %p315 = pneg %p180
      %p316 = pneg %p177
      %p317 = pneg %p201
      %p318 = pneg %p198
      %p319 = pneg %p227
      %p320 = pneg %p224
      %s321 = smul.u32 4, %s26
      %p322 = scmp.lt.s32.totalorder %s321, 15
      %s323 = scalar_select %p322, %s321, 15
      %s324 = smul.addr %s323, 4
      %s325 = smul.addr %s324, 4
      %s326 = scalar_lea.vmem %s9, %s325
      %s327 = smul.u32 4, %s26
      %p328 = scmp.lt.s32.totalorder %s327, 15
      %s329 = scalar_select %p328, %s327, 15
      %s330 = smul.addr %s329, 4
      %s331 = smul.addr %s330, 4
      %s332 = scalar_lea.vmem %s1, %s331
      %s333 = smul.u32 4, %s26
      %s334 = sld [smem:[#allocation3 + %s26]]
      %p335 = scmp.lt.s32.totalorder %s334, 1
      %s336 = scalar_select %p335, %s334, 1
      %s337 = smul.addr %s336, 16
      %s338 = smul.addr %s337, 4
      %s339 = scalar_lea.vmem %s6, %s338
      %s340 = sld [smem:[#allocation3 + %s26]]
      %s341 = smul.u32 4, %s26
      %p342 = scmp.lt.s32.totalorder %s341, 15
      %s343 = scalar_select %p342, %s341, 15
      %s344 = smul.addr %s343, 4
      %s345 = smul.addr %s344, 4
      %s346 = scalar_lea.vmem %s9, %s345
      %s347 = smul.u32 4, %s26
      %v349 = vld [vmem:[%s332] sm:$0xf]
      %v350 = vld [vmem:[%s332 + $0x4] sm:$0xf]
      %v351 = vld [vmem:[%s332 + $0x8] sm:$0xf]
      %v352 = vld [vmem:[%s332 + $0xc] sm:$0xf]
      %v353 = vld [vmem:[%s332 + $0x10] sm:$0xf]
      %v354 = vld [vmem:[%s332 + $0x14] sm:$0xf]
      %v355 = vld [vmem:[%s332 + $0x18] sm:$0xf]
      %v356 = vld [vmem:[%s332 + $0x1c] sm:$0xf]
      %v357 = vld [vmem:[%s332 + $0x20] sm:$0xf]
      %v358 = vld [vmem:[%s332 + $0x24] sm:$0xf]
      %v359 = vld [vmem:[%s332 + $0x28] sm:$0xf]
      %v360 = vld [vmem:[%s332 + $0x2c] sm:$0xf]
      %v361 = vld [vmem:[%s332 + $0x30] sm:$0xf]
      %v362 = vld [vmem:[%s332 + $0x34] sm:$0xf]
      %v363 = vld [vmem:[%s332 + $0x38] sm:$0xf]
      %v364 = vld [vmem:[%s332 + $0x3c] sm:$0xf]
      %v365 = vunpack.c.l.bf16 %v349
      %v366 = vunpack.c.l.bf16 %v350
      %v367 = vunpack.c.l.bf16 %v351
      %v368 = vunpack.c.l.bf16 %v352
      %v369 = vunpack.c.l.bf16 %v353
      %v370 = vunpack.c.l.bf16 %v354
      %v371 = vunpack.c.l.bf16 %v355
      %v372 = vunpack.c.l.bf16 %v356
      %v373 = vunpack.c.l.bf16 %v357
      %v374 = vunpack.c.l.bf16 %v358
      %v375 = vunpack.c.l.bf16 %v359
      %v376 = vunpack.c.l.bf16 %v360
      %v377 = vunpack.c.l.bf16 %v361
      %v378 = vunpack.c.l.bf16 %v362
      %v379 = vunpack.c.l.bf16 %v363
      %v380 = vunpack.c.l.bf16 %v364
      %vm381 = vcmask 261120
      %v382 = vsel %vm381, %v365, 0.0
      %383 = vadd.xlane.f32.xlu0 %v382
      %v384 = vpop.xlane.xlu0 %383
      %v385 = vsel %vm381, %v366, 0.0
      %386 = vadd.xlane.f32.xlu0 %v385
      %v387 = vpop.xlane.xlu0 %386
      %v388 = vsel %vm381, %v367, 0.0
      %389 = vadd.xlane.f32.xlu0 %v388
      %v390 = vpop.xlane.xlu0 %389
      %v391 = vsel %vm381, %v368, 0.0
      %392 = vadd.xlane.f32.xlu0 %v391
      %v393 = vpop.xlane.xlu0 %392
      %v394 = vsel %vm381, %v369, 0.0
      %395 = vadd.xlane.f32.xlu0 %v394
      %v396 = vpop.xlane.xlu0 %395
      %v397 = vsel %vm381, %v370, 0.0
      %398 = vadd.xlane.f32.xlu0 %v397
      %v399 = vpop.xlane.xlu0 %398
      %v400 = vsel %vm381, %v371, 0.0
      %401 = vadd.xlane.f32.xlu0 %v400
      %v402 = vpop.xlane.xlu0 %401
      %v403 = vsel %vm381, %v372, 0.0
      %404 = vadd.xlane.f32.xlu0 %v403
      %v405 = vpop.xlane.xlu0 %404
      %v406 = vsel %vm381, %v373, 0.0
      %407 = vadd.xlane.f32.xlu0 %v406
      %v408 = vpop.xlane.xlu0 %407
      %v409 = vsel %vm381, %v374, 0.0
      %410 = vadd.xlane.f32.xlu0 %v409
      %v411 = vpop.xlane.xlu0 %410
      %v412 = vsel %vm381, %v375, 0.0
      %413 = vadd.xlane.f32.xlu0 %v412
      %v414 = vpop.xlane.xlu0 %413
      %v415 = vsel %vm381, %v376, 0.0
      %416 = vadd.xlane.f32.xlu0 %v415
      %v417 = vpop.xlane.xlu0 %416
      %v418 = vsel %vm381, %v377, 0.0
      %419 = vadd.xlane.f32.xlu0 %v418
      %v420 = vpop.xlane.xlu0 %419
      %v421 = vsel %vm381, %v378, 0.0
      %422 = vadd.xlane.f32.xlu0 %v421
      %v423 = vpop.xlane.xlu0 %422
      %v424 = vsel %vm381, %v379, 0.0
      %425 = vadd.xlane.f32.xlu0 %v424
      %v426 = vpop.xlane.xlu0 %425
      %v427 = vsel %vm381, %v380, 0.0
      %428 = vadd.xlane.f32.xlu0 %v427
      %v429 = vpop.xlane.xlu0 %428
      %v430 = vrcp.pop 32.0
      %v431 = vmul.f32 %v384, %v430
      %v432 = vmul.f32 %v387, %v430
      %v433 = vmul.f32 %v390, %v430
      %v434 = vmul.f32 %v393, %v430
      %v435 = vmul.f32 %v396, %v430
      %v436 = vmul.f32 %v399, %v430
      %v437 = vmul.f32 %v402, %v430
      %v438 = vmul.f32 %v405, %v430
      %v439 = vmul.f32 %v408, %v430
      %v440 = vmul.f32 %v411, %v430
      %v441 = vmul.f32 %v414, %v430
      %v442 = vmul.f32 %v417, %v430
      %v443 = vmul.f32 %v420, %v430
      %v444 = vmul.f32 %v423, %v430
      %v445 = vmul.f32 %v426, %v430
      %v446 = vmul.f32 %v429, %v430
      %v447 = vsub.f32 %v365, %v431
      %v448 = vsub.f32 %v366, %v432
      %v449 = vsub.f32 %v367, %v433
      %v450 = vsub.f32 %v368, %v434
      %v451 = vsub.f32 %v369, %v435
      %v452 = vsub.f32 %v370, %v436
      %v453 = vsub.f32 %v371, %v437
      %v454 = vsub.f32 %v372, %v438
      %v455 = vsub.f32 %v373, %v439
      %v456 = vsub.f32 %v374, %v440
      %v457 = vsub.f32 %v375, %v441
      %v458 = vsub.f32 %v376, %v442
      %v459 = vsub.f32 %v377, %v443
      %v460 = vsub.f32 %v378, %v444
      %v461 = vsub.f32 %v379, %v445
      %v462 = vsub.f32 %v380, %v446
      %v463 = vmul.f32 %v447, %v447
      %v464 = vmul.f32 %v448, %v448
      %v465 = vmul.f32 %v449, %v449
      %v466 = vmul.f32 %v450, %v450
      %v467 = vmul.f32 %v451, %v451
      %v468 = vmul.f32 %v452, %v452
      %v469 = vmul.f32 %v453, %v453
      %v470 = vmul.f32 %v454, %v454
      %v471 = vmul.f32 %v455, %v455
      %v472 = vmul.f32 %v456, %v456
      %v473 = vmul.f32 %v457, %v457
      %v474 = vmul.f32 %v458, %v458
      %v475 = vmul.f32 %v459, %v459
      %v476 = vmul.f32 %v460, %v460
      %v477 = vmul.f32 %v461, %v461
      %v478 = vmul.f32 %v462, %v462
      %v479 = vsel %vm381, %v463, 0.0
      %480 = vadd.xlane.f32.xlu0 %v479
      %v481 = vpop.xlane.xlu0 %480
      %v482 = vsel %vm381, %v464, 0.0
      %483 = vadd.xlane.f32.xlu0 %v482
      %v484 = vpop.xlane.xlu0 %483
      %v485 = vsel %vm381, %v465, 0.0
      %486 = vadd.xlane.f32.xlu0 %v485
      %v487 = vpop.xlane.xlu0 %486
      %v488 = vsel %vm381, %v466, 0.0
      %489 = vadd.xlane.f32.xlu0 %v488
      %v490 = vpop.xlane.xlu0 %489
      %v491 = vsel %vm381, %v467, 0.0
      %492 = vadd.xlane.f32.xlu0 %v491
      %v493 = vpop.xlane.xlu0 %492
      %v494 = vsel %vm381, %v468, 0.0
      %495 = vadd.xlane.f32.xlu0 %v494
      %v496 = vpop.xlane.xlu0 %495
      %v497 = vsel %vm381, %v469, 0.0
      %498 = vadd.xlane.f32.xlu0 %v497
      %v499 = vpop.xlane.xlu0 %498
      %v500 = vsel %vm381, %v470, 0.0
      %501 = vadd.xlane.f32.xlu0 %v500
      %v502 = vpop.xlane.xlu0 %501
      %v503 = vsel %vm381, %v471, 0.0
      %504 = vadd.xlane.f32.xlu0 %v503
      %v505 = vpop.xlane.xlu0 %504
      %v506 = vsel %vm381, %v472, 0.0
      %507 = vadd.xlane.f32.xlu0 %v506
      %v508 = vpop.xlane.xlu0 %507
      %v509 = vsel %vm381, %v473, 0.0
      %510 = vadd.xlane.f32.xlu0 %v509
      %v511 = vpop.xlane.xlu0 %510
      %v512 = vsel %vm381, %v474, 0.0
      %513 = vadd.xlane.f32.xlu0 %v512
      %v514 = vpop.xlane.xlu0 %513
      %v515 = vsel %vm381, %v475, 0.0
      %516 = vadd.xlane.f32.xlu0 %v515
      %v517 = vpop.xlane.xlu0 %516
      %v518 = vsel %vm381, %v476, 0.0
      %519 = vadd.xlane.f32.xlu0 %v518
      %v520 = vpop.xlane.xlu0 %519
      %v521 = vsel %vm381, %v477, 0.0
      %522 = vadd.xlane.f32.xlu0 %v521
      %v523 = vpop.xlane.xlu0 %522
      %v524 = vsel %vm381, %v478, 0.0
      %525 = vadd.xlane.f32.xlu0 %v524
      %v526 = vpop.xlane.xlu0 %525
      %v527 = vmul.f32 %v481, %v430
      %v528 = vmul.f32 %v484, %v430
      %v529 = vmul.f32 %v487, %v430
      %v530 = vmul.f32 %v490, %v430
      %v531 = vmul.f32 %v493, %v430
      %v532 = vmul.f32 %v496, %v430
      %v533 = vmul.f32 %v499, %v430
      %v534 = vmul.f32 %v502, %v430
      %v535 = vmul.f32 %v505, %v430
      %v536 = vmul.f32 %v508, %v430
      %v537 = vmul.f32 %v511, %v430
      %v538 = vmul.f32 %v514, %v430
      %v539 = vmul.f32 %v517, %v430
      %v540 = vmul.f32 %v520, %v430
      %v541 = vmul.f32 %v523, %v430
      %v542 = vmul.f32 %v526, %v430
      %v543 = vadd.f32 %v527, 1e-05
      %v544 = vadd.f32 %v528, 1e-05
      %v545 = vadd.f32 %v529, 1e-05
      %v546 = vadd.f32 %v530, 1e-05
      %v547 = vadd.f32 %v531, 1e-05
      %v548 = vadd.f32 %v532, 1e-05
      %v549 = vadd.f32 %v533, 1e-05
      %v550 = vadd.f32 %v534, 1e-05
      %v551 = vadd.f32 %v535, 1e-05
      %v552 = vadd.f32 %v536, 1e-05
      %v553 = vadd.f32 %v537, 1e-05
      %v554 = vadd.f32 %v538, 1e-05
      %v555 = vadd.f32 %v539, 1e-05
      %v556 = vadd.f32 %v540, 1e-05
      %v557 = vadd.f32 %v541, 1e-05
      %v558 = vadd.f32 %v542, 1e-05
      %v559 = vrsqrt.pop %v543
      %v560 = vrsqrt.pop %v544
      %v561 = vrsqrt.pop %v545
      %v562 = vrsqrt.pop %v546
      %v563 = vrsqrt.pop %v547
      %v564 = vrsqrt.pop %v548
      %v565 = vrsqrt.pop %v549
      %v566 = vrsqrt.pop %v550
      %v567 = vrsqrt.pop %v551
      %v568 = vrsqrt.pop %v552
      %v569 = vrsqrt.pop %v553
      %v570 = vrsqrt.pop %v554
      %v571 = vrsqrt.pop %v555
      %v572 = vrsqrt.pop %v556
      %v573 = vrsqrt.pop %v557
      %v574 = vrsqrt.pop %v558
      %v575 = vmul.f32 %v447, %v559
      %v576 = vmul.f32 %v448, %v560
      %v577 = vmul.f32 %v449, %v561
      %v578 = vmul.f32 %v450, %v562
      %v579 = vmul.f32 %v451, %v563
      %v580 = vmul.f32 %v452, %v564
      %v581 = vmul.f32 %v453, %v565
      %v582 = vmul.f32 %v454, %v566
      %v583 = vmul.f32 %v455, %v567
      %v584 = vmul.f32 %v456, %v568
      %v585 = vmul.f32 %v457, %v569
      %v586 = vmul.f32 %v458, %v570
      %v587 = vmul.f32 %v459, %v571
      %v588 = vmul.f32 %v460, %v572
      %v589 = vmul.f32 %v461, %v573
      %v590 = vmul.f32 %v462, %v574
      %v591 = vld [vmem:[%s2] sm:$0x1]
      %v593 = vlaneseq
      %v594 = vshrl.u32 %v593, 7
      %v595 = vsub.s32 0, %v594
      %v596 = vrot.slane %v591, %v595
      %v598 = vmul.f32 %v575, %v596
      %v599 = vmul.f32 %v576, %v596
      %v600 = vmul.f32 %v577, %v596
      %v601 = vmul.f32 %v578, %v596
      %v602 = vmul.f32 %v579, %v596
      %v603 = vmul.f32 %v580, %v596
      %v604 = vmul.f32 %v581, %v596
      %v605 = vmul.f32 %v582, %v596
      %v606 = vmul.f32 %v583, %v596
      %v607 = vmul.f32 %v584, %v596
      %v608 = vmul.f32 %v585, %v596
      %v609 = vmul.f32 %v586, %v596
      %v610 = vmul.f32 %v587, %v596
      %v611 = vmul.f32 %v588, %v596
      %v612 = vmul.f32 %v589, %v596
      %v613 = vmul.f32 %v590, %v596
      %v614 = vld [vmem:[%s3] sm:$0x1]
      %v616 = vlaneseq
      %v617 = vshrl.u32 %v616, 7
      %v618 = vsub.s32 0, %v617
      %v619 = vrot.slane %v614, %v618
      %v621 = vadd.f32 %v598, %v619
      %v622 = vadd.f32 %v599, %v619
      %v623 = vadd.f32 %v600, %v619
      %v624 = vadd.f32 %v601, %v619
      %v625 = vadd.f32 %v602, %v619
      %v626 = vadd.f32 %v603, %v619
      %v627 = vadd.f32 %v604, %v619
      %v628 = vadd.f32 %v605, %v619
      %v629 = vadd.f32 %v606, %v619
      %v630 = vadd.f32 %v607, %v619
      %v631 = vadd.f32 %v608, %v619
      %v632 = vadd.f32 %v609, %v619
      %v633 = vadd.f32 %v610, %v619
      %v634 = vadd.f32 %v611, %v619
      %v635 = vadd.f32 %v612, %v619
      %v636 = vadd.f32 %v613, %v619
      %v637 = vpack.c.bf16 %v622, %v621
      %v638 = vpack.c.bf16 %v624, %v623
      %v639 = vpack.c.bf16 %v626, %v625
      %v640 = vpack.c.bf16 %v628, %v627
      %v641 = vpack.c.bf16 %v630, %v629
      %v642 = vpack.c.bf16 %v632, %v631
      %v643 = vpack.c.bf16 %v634, %v633
      %v644 = vpack.c.bf16 %v636, %v635
      %v645 = vld [vmem:[%s4] sm:$0xf]
      %v646 = vld [vmem:[%s4 + $0x4] sm:$0xf]
      %v647 = vld [vmem:[%s4 + $0x8] sm:$0xf]
      %v648 = vld [vmem:[%s4 + $0xc] sm:$0xf]
      %v649 = vld [vmem:[%s5] sm:$0x1]
      %v651 = vlaneseq
      %v652 = vshrl.u32 %v651, 7
      %v653 = vsub.s32 0, %v652
      %v654 = vrot.slane %v649, %v653
      %v660 = vunpack.c.l.b16 %v645
      %v661 = vunpack.c.l.b16 %v646
      %v662 = vunpack.c.l.b16 %v647
      %v663 = vunpack.c.l.b16 %v648
      %v664 = vpack.c.b16 %v661, %v660
      %v665 = vpack.c.b16 %v663, %v662
      %v669 = vsel %vm381, %v637, 0
      %v672 = vsel %vm381, %v638, 0
      %v675 = vsel %vm381, %v639, 0
      %v678 = vsel %vm381, %v640, 0
      %v681 = vsel %vm381, %v641, 0
      %v684 = vsel %vm381, %v642, 0
      %v687 = vsel %vm381, %v643, 0
      %v690 = vsel %vm381, %v644, 0
      %692 = vmatprep.subr.bf16.mxu0 0
      %693 = vmatpush1.bf16.msra.mxu0 %v664
      %694 = vmatprep.subr.bf16.mxu0 0
      %695 = vmatpush1.bf16.msra.mxu0 %v665
      %696 = vmatprep.subr.bf16.mxu0 0
      %697 = vmatpush1.bf16.msra.mxu0 0
      %698 = vmatprep.subr.bf16.mxu0 0
      %699 = vmatpush1.bf16.msra.mxu0 0
      %700 = vmatprep.subr.bf16.mxu0 0
      %701 = vmatpush1.bf16.msra.mxu0 0
      %702 = vmatprep.subr.bf16.mxu0 0
      %703 = vmatpush1.bf16.msra.mxu0 0
      %704 = vmatprep.subr.bf16.mxu0 0
      %705 = vmatpush1.bf16.msra.mxu0 0
      %706 = vmatprep.subr.bf16.mxu0 0
      %707 = vmatpush1.bf16.msra.mxu0 0
      %708 = vmatprep.subr.bf16.mxu0 0
      %709 = vmatpush1.bf16.msra.mxu0 0
      %710 = vmatprep.subr.bf16.mxu0 0
      %711 = vmatpush1.bf16.msra.mxu0 0
      %712 = vmatprep.subr.bf16.mxu0 0
      %713 = vmatpush1.bf16.msra.mxu0 0
      %714 = vmatprep.subr.bf16.mxu0 0
      %715 = vmatpush1.bf16.msra.mxu0 0
      %716 = vmatprep.subr.bf16.mxu0 0
      %717 = vmatpush1.bf16.msra.mxu0 0
      %718 = vmatprep.subr.bf16.mxu0 0
      %719 = vmatpush1.bf16.msra.mxu0 0
      %720 = vmatprep.subr.bf16.mxu0 0
      %721 = vmatpush1.bf16.msra.mxu0 0
      %722 = vmatprep.subr.bf16.mxu0 0
      %723 = vmatpush1.bf16.msra.mxu0 0
      %724 = vmatprep.mubr.bf16.mxu0 0
      %725 = vmatmul.mubr.bf16.gmra.mrb[0].mxu0 %v669
      %v726 = vpop.f32.mrb[0].mxu0
      %v727 = vadd.f32 %v654, %v726
      %v728 = vpop.f32.mrb[0].mxu0
      %v729 = vpop.f32.mrb[0].mxu0
      %v730 = vadd.f32 %v654, %v729
      %v731 = vpop.f32.mrb[0].mxu0
      %732 = vmatprep.mubr.bf16.mxu0 0
      %733 = vmatmul.mubr.bf16.gmra.mrb[0].mxu0 %v672
      %v734 = vpop.f32.mrb[0].mxu0
      %v735 = vadd.f32 %v654, %v734
      %v736 = vpop.f32.mrb[0].mxu0
      %v737 = vpop.f32.mrb[0].mxu0
      %v738 = vadd.f32 %v654, %v737
      %v739 = vpop.f32.mrb[0].mxu0
      %740 = vmatprep.mubr.bf16.mxu0 0
      %741 = vmatmul.mubr.bf16.gmra.mrb[0].mxu0 %v675
      %v742 = vpop.f32.mrb[0].mxu0
      %v743 = vadd.f32 %v654, %v742
      %v744 = vpop.f32.mrb[0].mxu0
      %v745 = vpop.f32.mrb[0].mxu0
      %v746 = vadd.f32 %v654, %v745
      %v747 = vpop.f32.mrb[0].mxu0
      %748 = vmatprep.mubr.bf16.mxu0 0
      %749 = vmatmul.mubr.bf16.gmra.mrb[0].mxu0 %v678
      %v750 = vpop.f32.mrb[0].mxu0
      %v751 = vadd.f32 %v654, %v750
      %v752 = vpop.f32.mrb[0].mxu0
      %v753 = vpop.f32.mrb[0].mxu0
      %v754 = vadd.f32 %v654, %v753
      %v755 = vpop.f32.mrb[0].mxu0
      %756 = vmatprep.mubr.bf16.mxu0 0
      %757 = vmatmul.mubr.bf16.gmra.mrb[0].mxu0 %v681
      %v758 = vpop.f32.mrb[0].mxu0
      %v759 = vadd.f32 %v654, %v758
      %v760 = vpop.f32.mrb[0].mxu0
      %v761 = vpop.f32.mrb[0].mxu0
      %v762 = vadd.f32 %v654, %v761
      %v763 = vpop.f32.mrb[0].mxu0
      %764 = vmatprep.mubr.bf16.mxu0 0
      %765 = vmatmul.mubr.bf16.gmra.mrb[0].mxu0 %v684
      %v766 = vpop.f32.mrb[0].mxu0
      %v767 = vadd.f32 %v654, %v766
      %v768 = vpop.f32.mrb[0].mxu0
      %v769 = vpop.f32.mrb[0].mxu0
      %v770 = vadd.f32 %v654, %v769
      %v771 = vpop.f32.mrb[0].mxu0
      %772 = vmatprep.mubr.bf16.mxu0 0
      %773 = vmatmul.mubr.bf16.gmra.mrb[0].mxu0 %v687
      %v774 = vpop.f32.mrb[0].mxu0
      %v775 = vadd.f32 %v654, %v774
      %v776 = vpop.f32.mrb[0].mxu0
      %v777 = vpop.f32.mrb[0].mxu0
      %v778 = vadd.f32 %v654, %v777
      %v779 = vpop.f32.mrb[0].mxu0
      %780 = vmatprep.mubr.bf16.mxu0 0
      %781 = vmatmul.mubr.bf16.gmra.mrb[0].mxu0 %v690
      %v782 = vpop.f32.mrb[0].mxu0
      %v783 = vadd.f32 %v654, %v782
      %v784 = vpop.f32.mrb[0].mxu0
      %v785 = vpop.f32.mrb[0].mxu0
      %v786 = vadd.f32 %v654, %v785
      %v787 = vpop.f32.mrb[0].mxu0
      %788 = vdwg.mxu0
      %v789 = vpack.c.bf16 %v730, %v727
      %v790 = vpack.c.bf16 %v738, %v735
      %v791 = vpack.c.bf16 %v746, %v743
      %v792 = vpack.c.bf16 %v754, %v751
      %v793 = vpack.c.bf16 %v762, %v759
      %v794 = vpack.c.bf16 %v770, %v767
      %v795 = vpack.c.bf16 %v778, %v775
      %v796 = vpack.c.bf16 %v786, %v783
      %805 = vrot.lane.b32.xlu0 %v789, 120
      %v806 = vpop.permute.xlu0 %805
      %807 = vrot.lane.b32.xlu0 %v790, 120
      %v808 = vpop.permute.xlu0 %807
      %809 = vrot.lane.b32.xlu0 %v791, 120
      %v810 = vpop.permute.xlu0 %809
      %811 = vrot.lane.b32.xlu0 %v792, 120
      %v812 = vpop.permute.xlu0 %811
      %813 = vrot.lane.b32.xlu0 %v793, 120
      %v814 = vpop.permute.xlu0 %813
      %815 = vrot.lane.b32.xlu0 %v794, 120
      %v816 = vpop.permute.xlu0 %815
      %817 = vrot.lane.b32.xlu0 %v795, 120
      %v818 = vpop.permute.xlu0 %817
      %819 = vrot.lane.b32.xlu0 %v796, 120
      %v820 = vpop.permute.xlu0 %819
      %821 = vrot.lane.b32.xlu0 %v789, 112
      %v822 = vpop.permute.xlu0 %821
      %823 = vrot.lane.b32.xlu0 %v790, 112
      %v824 = vpop.permute.xlu0 %823
      %825 = vrot.lane.b32.xlu0 %v791, 112
      %v826 = vpop.permute.xlu0 %825
      %827 = vrot.lane.b32.xlu0 %v792, 112
      %v828 = vpop.permute.xlu0 %827
      %829 = vrot.lane.b32.xlu0 %v793, 112
      %v830 = vpop.permute.xlu0 %829
      %831 = vrot.lane.b32.xlu0 %v794, 112
      %v832 = vpop.permute.xlu0 %831
      %833 = vrot.lane.b32.xlu0 %v795, 112
      %v834 = vpop.permute.xlu0 %833
      %835 = vrot.lane.b32.xlu0 %v796, 112
      %v836 = vpop.permute.xlu0 %835
      %837 = vrot.lane.b32.xlu0 %v789, 104
      %v838 = vpop.permute.xlu0 %837
      %839 = vrot.lane.b32.xlu0 %v790, 104
      %v840 = vpop.permute.xlu0 %839
      %841 = vrot.lane.b32.xlu0 %v791, 104
      %v842 = vpop.permute.xlu0 %841
      %843 = vrot.lane.b32.xlu0 %v792, 104
      %v844 = vpop.permute.xlu0 %843
      %845 = vrot.lane.b32.xlu0 %v793, 104
      %v846 = vpop.permute.xlu0 %845
      %847 = vrot.lane.b32.xlu0 %v794, 104
      %v848 = vpop.permute.xlu0 %847
      %849 = vrot.lane.b32.xlu0 %v795, 104
      %v850 = vpop.permute.xlu0 %849
      %851 = vrot.lane.b32.xlu0 %v796, 104
      %v852 = vpop.permute.xlu0 %851
      %853 = vrot.lane.b32.xlu0 %v789, 96
      %v854 = vpop.permute.xlu0 %853
      %855 = vrot.lane.b32.xlu0 %v790, 96
      %v856 = vpop.permute.xlu0 %855
      %vm857 = vcmask 64512
      %v859 = vsel %vm857, %v789, 0
      %v862 = vsel %vm857, %v790, 0
      %v865 = vsel %vm857, %v854, 0
      %v868 = vsel %vm857, %v856, 0
      %870 = vmatprep.subr.bf16.mxu0 0
      %871 = vmatpush1.bf16.xpose.msra.mxu0 %v865
      %872 = vmatprep.subr.bf16.mxu0 0
      %873 = vmatpush1.bf16.xpose.msra.mxu0 %v868
      %874 = vmatprep.subr.bf16.mxu0 0
      %875 = vmatpush1.bf16.xpose.msra.mxu0 0
      %876 = vmatprep.subr.bf16.mxu0 0
      %877 = vmatpush1.bf16.xpose.msra.mxu0 0
      %878 = vmatprep.subr.bf16.mxu0 0
      %879 = vmatpush1.bf16.xpose.msra.mxu0 0
      %880 = vmatprep.subr.bf16.mxu0 0
      %881 = vmatpush1.bf16.xpose.msra.mxu0 0
      %882 = vmatprep.subr.bf16.mxu0 0
      %883 = vmatpush1.bf16.xpose.msra.mxu0 0
      %884 = vmatprep.subr.bf16.mxu0 0
      %885 = vmatpush1.bf16.xpose.msra.mxu0 0
      %886 = vmatprep.subr.bf16.mxu0 0
      %887 = vmatpush1.bf16.xpose.msra.mxu0 0
      %888 = vmatprep.subr.bf16.mxu0 0
      %889 = vmatpush1.bf16.xpose.msra.mxu0 0
      %890 = vmatprep.subr.bf16.mxu0 0
      %891 = vmatpush1.bf16.xpose.msra.mxu0 0
      %892 = vmatprep.subr.bf16.mxu0 0
      %893 = vmatpush1.bf16.xpose.msra.mxu0 0
      %894 = vmatprep.subr.bf16.mxu0 0
      %895 = vmatpush1.bf16.xpose.msra.mxu0 0
      %896 = vmatprep.subr.bf16.mxu0 0
      %897 = vmatpush1.bf16.xpose.msra.mxu0 0
      %898 = vmatprep.subr.bf16.mxu0 0
      %899 = vmatpush1.bf16.xpose.msra.mxu0 0
      %900 = vmatprep.subr.bf16.mxu0 0
      %901 = vmatpush1.bf16.xpose.msra.mxu0 0
      %902 = vmatprep.mubr.bf16.mxu0 0
      %903 = vmatmul.mubr.bf16.gmra.mrb[0].mxu0 %v859
      %v904 = vpop.f32.mrb[0].mxu0
      %v905 = vadd.f32 0.0, %v904
      %v906 = vpop.f32.mrb[0].mxu0
      %v907 = vpop.f32.mrb[0].mxu0
      %v908 = vadd.f32 0.0, %v907
      %v909 = vpop.f32.mrb[0].mxu0
      %910 = vmatprep.mubr.bf16.mxu0 0
      %911 = vmatmul.mubr.bf16.gmra.mrb[0].mxu0 %v862
      %v912 = vpop.f32.mrb[0].mxu0
      %v913 = vadd.f32 0.0, %v912
      %v914 = vpop.f32.mrb[0].mxu0
      %v915 = vpop.f32.mrb[0].mxu0
      %v916 = vadd.f32 0.0, %v915
      %v917 = vpop.f32.mrb[0].mxu0
      %918 = vdwg.mxu0
      %919 = vrot.lane.b32.xlu0 %v791, 96
      %v920 = vpop.permute.xlu0 %919
      %921 = vrot.lane.b32.xlu0 %v792, 96
      %v922 = vpop.permute.xlu0 %921
      %v924 = vsel %vm857, %v791, 0
      %v927 = vsel %vm857, %v792, 0
      %v930 = vsel %vm857, %v920, 0
      %v933 = vsel %vm857, %v922, 0
      %935 = vmatprep.subr.bf16.mxu0 0
      %936 = vmatpush1.bf16.xpose.msra.mxu0 %v930
      %937 = vmatprep.subr.bf16.mxu0 0
      %938 = vmatpush1.bf16.xpose.msra.mxu0 %v933
      %939 = vmatprep.subr.bf16.mxu0 0
      %940 = vmatpush1.bf16.xpose.msra.mxu0 0
      %941 = vmatprep.subr.bf16.mxu0 0
      %942 = vmatpush1.bf16.xpose.msra.mxu0 0
      %943 = vmatprep.subr.bf16.mxu0 0
      %944 = vmatpush1.bf16.xpose.msra.mxu0 0
      %945 = vmatprep.subr.bf16.mxu0 0
      %946 = vmatpush1.bf16.xpose.msra.mxu0 0
      %947 = vmatprep.subr.bf16.mxu0 0
      %948 = vmatpush1.bf16.xpose.msra.mxu0 0
      %949 = vmatprep.subr.bf16.mxu0 0
      %950 = vmatpush1.bf16.xpose.msra.mxu0 0
      %951 = vmatprep.subr.bf16.mxu0 0
      %952 = vmatpush1.bf16.xpose.msra.mxu0 0
      %953 = vmatprep.subr.bf16.mxu0 0
      %954 = vmatpush1.bf16.xpose.msra.mxu0 0
      %955 = vmatprep.subr.bf16.mxu0 0
      %956 = vmatpush1.bf16.xpose.msra.mxu0 0
      %957 = vmatprep.subr.bf16.mxu0 0
      %958 = vmatpush1.bf16.xpose.msra.mxu0 0
      %959 = vmatprep.subr.bf16.mxu0 0
      %960 = vmatpush1.bf16.xpose.msra.mxu0 0
      %961 = vmatprep.subr.bf16.mxu0 0
      %962 = vmatpush1.bf16.xpose.msra.mxu0 0
      %963 = vmatprep.subr.bf16.mxu0 0
      %964 = vmatpush1.bf16.xpose.msra.mxu0 0
      %965 = vmatprep.subr.bf16.mxu0 0
      %966 = vmatpush1.bf16.xpose.msra.mxu0 0
      %967 = vmatprep.mubr.bf16.mxu0 0
      %968 = vmatmul.mubr.bf16.gmra.mrb[0].mxu0 %v924
      %v969 = vpop.f32.mrb[0].mxu0
      %v970 = vadd.f32 0.0, %v969
      %v971 = vpop.f32.mrb[0].mxu0
      %v972 = vpop.f32.mrb[0].mxu0
      %v973 = vadd.f32 0.0, %v972
      %v974 = vpop.f32.mrb[0].mxu0
      %975 = vmatprep.mubr.bf16.mxu0 0
      %976 = vmatmul.mubr.bf16.gmra.mrb[0].mxu0 %v927
      %v977 = vpop.f32.mrb[0].mxu0
      %v978 = vadd.f32 0.0, %v977
      %v979 = vpop.f32.mrb[0].mxu0
      %v980 = vpop.f32.mrb[0].mxu0
      %v981 = vadd.f32 0.0, %v980
      %v982 = vpop.f32.mrb[0].mxu0
      %983 = vdwg.mxu0
      %984 = vrot.lane.b32.xlu0 %v793, 96
      %v985 = vpop.permute.xlu0 %984
      %986 = vrot.lane.b32.xlu0 %v794, 96
      %v987 = vpop.permute.xlu0 %986
      %v989 = vsel %vm857, %v793, 0
      %v992 = vsel %vm857, %v794, 0
      %v995 = vsel %vm857, %v985, 0
      %v998 = vsel %vm857, %v987, 0
      %1000 = vmatprep.subr.bf16.mxu0 0
      %1001 = vmatpush1.bf16.xpose.msra.mxu0 %v995
      %1002 = vmatprep.subr.bf16.mxu0 0
      %1003 = vmatpush1.bf16.xpose.msra.mxu0 %v998
      %1004 = vmatprep.subr.bf16.mxu0 0
      %1005 = vmatpush1.bf16.xpose.msra.mxu0 0
      %1006 = vmatprep.subr.bf16.mxu0 0
      %1007 = vmatpush1.bf16.xpose.msra.mxu0 0
      %1008 = vmatprep.subr.bf16.mxu0 0
      %1009 = vmatpush1.bf16.xpose.msra.mxu0 0
      %1010 = vmatprep.subr.bf16.mxu0 0
      %1011 = vmatpush1.bf16.xpose.msra.mxu0 0
      %1012 = vmatprep.subr.bf16.mxu0 0
      %1013 = vmatpush1.bf16.xpose.msra.mxu0 0
      %1014 = vmatprep.subr.bf16.mxu0 0
      %1015 = vmatpush1.bf16.xpose.msra.mxu0 0
      %1016 = vmatprep.subr.bf16.mxu0 0
      %1017 = vmatpush1.bf16.xpose.msra.mxu0 0
      %1018 = vmatprep.subr.bf16.mxu0 0
      %1019 = vmatpush1.bf16.xpose.msra.mxu0 0
      %1020 = vmatprep.subr.bf16.mxu0 0
      %1021 = vmatpush1.bf16.xpose.msra.mxu0 0
      %1022 = vmatprep.subr.bf16.mxu0 0
      %1023 = vmatpush1.bf16.xpose.msra.mxu0 0
      %1024 = vmatprep.subr.bf16.mxu0 0
      %1025 = vmatpush1.bf16.xpose.msra.mxu0 0
      %1026 = vmatprep.subr.bf16.mxu0 0
      %1027 = vmatpush1.bf16.xpose.msra.mxu0 0
      %1028 = vmatprep.subr.bf16.mxu0 0
      %1029 = vmatpush1.bf16.xpose.msra.mxu0 0
      %1030 = vmatprep.subr.bf16.mxu0 0
      %1031 = vmatpush1.bf16.xpose.msra.mxu0 0
      %1032 = vmatprep.mubr.bf16.mxu0 0
      %1033 = vmatmul.mubr.bf16.gmra.mrb[0].mxu0 %v989
      %v1034 = vpop.f32.mrb[0].mxu0
      %v1035 = vadd.f32 0.0, %v1034
      %v1036 = vpop.f32.mrb[0].mxu0
      %v1037 = vpop.f32.mrb[0].mxu0
      %v1038 = vadd.f32 0.0, %v1037
      %v1039 = vpop.f32.mrb[0].mxu0
      %1040 = vmatprep.mubr.bf16.mxu0 0
      %1041 = vmatmul.mubr.bf16.gmra.mrb[0].mxu0 %v992
      %v1042 = vpop.f32.mrb[0].mxu0
      %v1043 = vadd.f32 0.0, %v1042
      %v1044 = vpop.f32.mrb[0].mxu0
      %v1045 = vpop.f32.mrb[0].mxu0
      %v1046 = vadd.f32 0.0, %v1045
      %v1047 = vpop.f32.mrb[0].mxu0
      %1048 = vdwg.mxu0
      %1049 = vrot.lane.b32.xlu0 %v795, 96
      %v1050 = vpop.permute.xlu0 %1049
      %1051 = vrot.lane.b32.xlu0 %v796, 96
      %v1052 = vpop.permute.xlu0 %1051
      %v1054 = vsel %vm857, %v795, 0
      %v1057 = vsel %vm857, %v796, 0
      %v1060 = vsel %vm857, %v1050, 0
      %v1063 = vsel %vm857, %v1052, 0
      %1065 = vmatprep.subr.bf16.mxu0 0
      %1066 = vmatpush1.bf16.xpose.msra.mxu0 %v1060
      %1067 = vmatprep.subr.bf16.mxu0 0
      %1068 = vmatpush1.bf16.xpose.msra.mxu0 %v1063
      %1069 = vmatprep.subr.bf16.mxu0 0
      %1070 = vmatpush1.bf16.xpose.msra.mxu0 0
      %1071 = vmatprep.subr.bf16.mxu0 0
      %1072 = vmatpush1.bf16.xpose.msra.mxu0 0
      %1073 = vmatprep.subr.bf16.mxu0 0
      %1074 = vmatpush1.bf16.xpose.msra.mxu0 0
      %1075 = vmatprep.subr.bf16.mxu0 0
      %1076 = vmatpush1.bf16.xpose.msra.mxu0 0
      %1077 = vmatprep.subr.bf16.mxu0 0
      %1078 = vmatpush1.bf16.xpose.msra.mxu0 0
      %1079 = vmatprep.subr.bf16.mxu0 0
      %1080 = vmatpush1.bf16.xpose.msra.mxu0 0
      %1081 = vmatprep.subr.bf16.mxu0 0
      %1082 = vmatpush1.bf16.xpose.msra.mxu0 0
      %1083 = vmatprep.subr.bf16.mxu0 0
      %1084 = vmatpush1.bf16.xpose.msra.mxu0 0
      %1085 = vmatprep.subr.bf16.mxu0 0
      %1086 = vmatpush1.bf16.xpose.msra.mxu0 0
      %1087 = vmatprep.subr.bf16.mxu0 0
      %1088 = vmatpush1.bf16.xpose.msra.mxu0 0
      %1089 = vmatprep.subr.bf16.mxu0 0
      %1090 = vmatpush1.bf16.xpose.msra.mxu0 0
      %1091 = vmatprep.subr.bf16.mxu0 0
      %1092 = vmatpush1.bf16.xpose.msra.mxu0 0
      %1093 = vmatprep.subr.bf16.mxu0 0
      %1094 = vmatpush1.bf16.xpose.msra.mxu0 0
      %1095 = vmatprep.subr.bf16.mxu0 0
      %1096 = vmatpush1.bf16.xpose.msra.mxu0 0
      %1097 = vmatprep.mubr.bf16.mxu0 0
      %1098 = vmatmul.mubr.bf16.gmra.mrb[0].mxu0 %v1054
      %v1099 = vpop.f32.mrb[0].mxu0
      %v1100 = vadd.f32 0.0, %v1099
      %v1101 = vpop.f32.mrb[0].mxu0
      %v1102 = vpop.f32.mrb[0].mxu0
      %v1103 = vadd.f32 0.0, %v1102
      %v1104 = vpop.f32.mrb[0].mxu0
      %1105 = vmatprep.mubr.bf16.mxu0 0
      %1106 = vmatmul.mubr.bf16.gmra.mrb[0].mxu0 %v1057
      %v1107 = vpop.f32.mrb[0].mxu0
      %v1108 = vadd.f32 0.0, %v1107
      %v1109 = vpop.f32.mrb[0].mxu0
      %v1110 = vpop.f32.mrb[0].mxu0
      %v1111 = vadd.f32 0.0, %v1110
      %v1112 = vpop.f32.mrb[0].mxu0
      %1113 = vdwg.mxu0
      %1114 = vrot.lane.b32.xlu0 %v806, 96
      %v1115 = vpop.permute.xlu0 %1114
      %1116 = vrot.lane.b32.xlu0 %v808, 96
      %v1117 = vpop.permute.xlu0 %1116
      %v1119 = vsel %vm857, %v806, 0
      %v1122 = vsel %vm857, %v808, 0
      %v1125 = vsel %vm857, %v1115, 0
      %v1128 = vsel %vm857, %v1117, 0
      %1130 = vmatprep.subr.bf16.mxu0 0
      %1131 = vmatpush1.bf16.xpose.msra.mxu0 %v1125
      %1132 = vmatprep.subr.bf16.mxu0 0
      %1133 = vmatpush1.bf16.xpose.msra.mxu0 %v1128
      %1134 = vmatprep.subr.bf16.mxu0 0
      %1135 = vmatpush1.bf16.xpose.msra.mxu0 0
      %1136 = vmatprep.subr.bf16.mxu0 0
      %1137 = vmatpush1.bf16.xpose.msra.mxu0 0
      %1138 = vmatprep.subr.bf16.mxu0 0
      %1139 = vmatpush1.bf16.xpose.msra.mxu0 0
      %1140 = vmatprep.subr.bf16.mxu0 0
      %1141 = vmatpush1.bf16.xpose.msra.mxu0 0
      %1142 = vmatprep.subr.bf16.mxu0 0
      %1143 = vmatpush1.bf16.xpose.msra.mxu0 0
      %1144 = vmatprep.subr.bf16.mxu0 0
      %1145 = vmatpush1.bf16.xpose.msra.mxu0 0
      %1146 = vmatprep.subr.bf16.mxu0 0
      %1147 = vmatpush1.bf16.xpose.msra.mxu0 0
      %1148 = vmatprep.subr.bf16.mxu0 0
      %1149 = vmatpush1.bf16.xpose.msra.mxu0 0
      %1150 = vmatprep.subr.bf16.mxu0 0
      %1151 = vmatpush1.bf16.xpose.msra.mxu0 0
      %1152 = vmatprep.subr.bf16.mxu0 0
      %1153 = vmatpush1.bf16.xpose.msra.mxu0 0
      %1154 = vmatprep.subr.bf16.mxu0 0
      %1155 = vmatpush1.bf16.xpose.msra.mxu0 0
      %1156 = vmatprep.subr.bf16.mxu0 0
      %1157 = vmatpush1.bf16.xpose.msra.mxu0 0
      %1158 = vmatprep.subr.bf16.mxu0 0
      %1159 = vmatpush1.bf16.xpose.msra.mxu0 0
      %1160 = vmatprep.subr.bf16.mxu0 0
      %1161 = vmatpush1.bf16.xpose.msra.mxu0 0
      %1162 = vmatprep.mubr.bf16.mxu0 0
      %1163 = vmatmul.mubr.bf16.gmra.mrb[0].mxu0 %v1119
      %v1164 = vpop.f32.mrb[0].mxu0
      %v1165 = vadd.f32 0.0, %v1164
      %v1166 = vpop.f32.mrb[0].mxu0
      %v1167 = vpop.f32.mrb[0].mxu0
      %v1168 = vadd.f32 0.0, %v1167
      %v1169 = vpop.f32.mrb[0].mxu0
      %1170 = vmatprep.mubr.bf16.mxu0 0
      %1171 = vmatmul.mubr.bf16.gmra.mrb[0].mxu0 %v1122
      %v1172 = vpop.f32.mrb[0].mxu0
      %v1173 = vadd.f32 0.0, %v1172
      %v1174 = vpop.f32.mrb[0].mxu0
      %v1175 = vpop.f32.mrb[0].mxu0
      %v1176 = vadd.f32 0.0, %v1175
      %v1177 = vpop.f32.mrb[0].mxu0
      %1178 = vdwg.mxu0
      %1179 = vrot.lane.b32.xlu0 %v810, 96
      %v1180 = vpop.permute.xlu0 %1179
      %1181 = vrot.lane.b32.xlu0 %v812, 96
      %v1182 = vpop.permute.xlu0 %1181
      %v1184 = vsel %vm857, %v810, 0
      %v1187 = vsel %vm857, %v812, 0
      %v1190 = vsel %vm857, %v1180, 0
      %v1193 = vsel %vm857, %v1182, 0
      %1195 = vmatprep.subr.bf16.mxu0 0
      %1196 = vmatpush1.bf16.xpose.msra.mxu0 %v1190
      %1197 = vmatprep.subr.bf16.mxu0 0
      %1198 = vmatpush1.bf16.xpose.msra.mxu0 %v1193
      %1199 = vmatprep.subr.bf16.mxu0 0
      %1200 = vmatpush1.bf16.xpose.msra.mxu0 0
      %1201 = vmatprep.subr.bf16.mxu0 0
      %1202 = vmatpush1.bf16.xpose.msra.mxu0 0
      %1203 = vmatprep.subr.bf16.mxu0 0
      %1204 = vmatpush1.bf16.xpose.msra.mxu0 0
      %1205 = vmatprep.subr.bf16.mxu0 0
      %1206 = vmatpush1.bf16.xpose.msra.mxu0 0
      %1207 = vmatprep.subr.bf16.mxu0 0
      %1208 = vmatpush1.bf16.xpose.msra.mxu0 0
      %1209 = vmatprep.subr.bf16.mxu0 0
      %1210 = vmatpush1.bf16.xpose.msra.mxu0 0
      %1211 = vmatprep.subr.bf16.mxu0 0
      %1212 = vmatpush1.bf16.xpose.msra.mxu0 0
      %1213 = vmatprep.subr.bf16.mxu0 0
      %1214 = vmatpush1.bf16.xpose.msra.mxu0 0
      %1215 = vmatprep.subr.bf16.mxu0 0
      %1216 = vmatpush1.bf16.xpose.msra.mxu0 0
      %1217 = vmatprep.subr.bf16.mxu0 0
      %1218 = vmatpush1.bf16.xpose.msra.mxu0 0
      %1219 = vmatprep.subr.bf16.mxu0 0
      %1220 = vmatpush1.bf16.xpose.msra.mxu0 0
      %1221 = vmatprep.subr.bf16.mxu0 0
      %1222 = vmatpush1.bf16.xpose.msra.mxu0 0
      %1223 = vmatprep.subr.bf16.mxu0 0
      %1224 = vmatpush1.bf16.xpose.msra.mxu0 0
      %1225 = vmatprep.subr.bf16.mxu0 0
      %1226 = vmatpush1.bf16.xpose.msra.mxu0 0
      %1227 = vmatprep.mubr.bf16.mxu0 0
      %1228 = vmatmul.mubr.bf16.gmra.mrb[0].mxu0 %v1184
      %v1229 = vpop.f32.mrb[0].mxu0
      %v1230 = vadd.f32 0.0, %v1229
      %v1231 = vpop.f32.mrb[0].mxu0
      %v1232 = vpop.f32.mrb[0].mxu0
      %v1233 = vadd.f32 0.0, %v1232
      %v1234 = vpop.f32.mrb[0].mxu0
      %1235 = vmatprep.mubr.bf16.mxu0 0
      %1236 = vmatmul.mubr.bf16.gmra.mrb[0].mxu0 %v1187
      %v1237 = vpop.f32.mrb[0].mxu0
      %v1238 = vadd.f32 0.0, %v1237
      %v1239 = vpop.f32.mrb[0].mxu0
      %v1240 = vpop.f32.mrb[0].mxu0
      %v1241 = vadd.f32 0.0, %v1240
      %v1242 = vpop.f32.mrb[0].mxu0
      %1243 = vdwg.mxu0
      %1244 = vrot.lane.b32.xlu0 %v814, 96
      %v1245 = vpop.permute.xlu0 %1244
      %1246 = vrot.lane.b32.xlu0 %v816, 96
      %v1247 = vpop.permute.xlu0 %1246
      %v1249 = vsel %vm857, %v814, 0
      %v1252 = vsel %vm857, %v816, 0
      %v1255 = vsel %vm857, %v1245, 0
      %v1258 = vsel %vm857, %v1247, 0
      %1260 = vmatprep.subr.bf16.mxu0 0
      %1261 = vmatpush1.bf16.xpose.msra.mxu0 %v1255
      %1262 = vmatprep.subr.bf16.mxu0 0
      %1263 = vmatpush1.bf16.xpose.msra.mxu0 %v1258
      %1264 = vmatprep.subr.bf16.mxu0 0
      %1265 = vmatpush1.bf16.xpose.msra.mxu0 0
      %1266 = vmatprep.subr.bf16.mxu0 0
      %1267 = vmatpush1.bf16.xpose.msra.mxu0 0
      %1268 = vmatprep.subr.bf16.mxu0 0
      %1269 = vmatpush1.bf16.xpose.msra.mxu0 0
      %1270 = vmatprep.subr.bf16.mxu0 0
      %1271 = vmatpush1.bf16.xpose.msra.mxu0 0
      %1272 = vmatprep.subr.bf16.mxu0 0
      %1273 = vmatpush1.bf16.xpose.msra.mxu0 0
      %1274 = vmatprep.subr.bf16.mxu0 0
      %1275 = vmatpush1.bf16.xpose.msra.mxu0 0
      %1276 = vmatprep.subr.bf16.mxu0 0
      %1277 = vmatpush1.bf16.xpose.msra.mxu0 0
      %1278 = vmatprep.subr.bf16.mxu0 0
      %1279 = vmatpush1.bf16.xpose.msra.mxu0 0
      %1280 = vmatprep.subr.bf16.mxu0 0
      %1281 = vmatpush1.bf16.xpose.msra.mxu0 0
      %1282 = vmatprep.subr.bf16.mxu0 0
      %1283 = vmatpush1.bf16.xpose.msra.mxu0 0
      %1284 = vmatprep.subr.bf16.mxu0 0
      %1285 = vmatpush1.bf16.xpose.msra.mxu0 0
      %1286 = vmatprep.subr.bf16.mxu0 0
      %1287 = vmatpush1.bf16.xpose.msra.mxu0 0
      %1288 = vmatprep.subr.bf16.mxu0 0
      %1289 = vmatpush1.bf16.xpose.msra.mxu0 0
      %1290 = vmatprep.subr.bf16.mxu0 0
      %1291 = vmatpush1.bf16.xpose.msra.mxu0 0
      %1292 = vmatprep.mubr.bf16.mxu0 0
      %1293 = vmatmul.mubr.bf16.gmra.mrb[0].mxu0 %v1249
      %v1294 = vpop.f32.mrb[0].mxu0
      %v1295 = vadd.f32 0.0, %v1294
      %v1296 = vpop.f32.mrb[0].mxu0
      %v1297 = vpop.f32.mrb[0].mxu0
      %v1298 = vadd.f32 0.0, %v1297
      %v1299 = vpop.f32.mrb[0].mxu0
      %1300 = vmatprep.mubr.bf16.mxu0 0
      %1301 = vmatmul.mubr.bf16.gmra.mrb[0].mxu0 %v1252
      %v1302 = vpop.f32.mrb[0].mxu0
      %v1303 = vadd.f32 0.0, %v1302
      %v1304 = vpop.f32.mrb[0].mxu0
      %v1305 = vpop.f32.mrb[0].mxu0
      %v1306 = vadd.f32 0.0, %v1305
      %v1307 = vpop.f32.mrb[0].mxu0
      %1308 = vdwg.mxu0
      %1309 = vrot.lane.b32.xlu0 %v818, 96
      %v1310 = vpop.permute.xlu0 %1309
      %1311 = vrot.lane.b32.xlu0 %v820, 96
      %v1312 = vpop.permute.xlu0 %1311
      %v1314 = vsel %vm857, %v818, 0
      %v1317 = vsel %vm857, %v820, 0
      %v1320 = vsel %vm857, %v1310, 0
      %v1323 = vsel %vm857, %v1312, 0
      %1325 = vmatprep.subr.bf16.mxu0 0
      %1326 = vmatpush1.bf16.xpose.msra.mxu0 %v1320
      %1327 = vmatprep.subr.bf16.mxu0 0
      %1328 = vmatpush1.bf16.xpose.msra.mxu0 %v1323
      %1329 = vmatprep.subr.bf16.mxu0 0
      %1330 = vmatpush1.bf16.xpose.msra.mxu0 0
      %1331 = vmatprep.subr.bf16.mxu0 0
      %1332 = vmatpush1.bf16.xpose.msra.mxu0 0
      %1333 = vmatprep.subr.bf16.mxu0 0
      %1334 = vmatpush1.bf16.xpose.msra.mxu0 0
      %1335 = vmatprep.subr.bf16.mxu0 0
      %1336 = vmatpush1.bf16.xpose.msra.mxu0 0
      %1337 = vmatprep.subr.bf16.mxu0 0
      %1338 = vmatpush1.bf16.xpose.msra.mxu0 0
      %1339 = vmatprep.subr.bf16.mxu0 0
      %1340 = vmatpush1.bf16.xpose.msra.mxu0 0
      %1341 = vmatprep.subr.bf16.mxu0 0
      %1342 = vmatpush1.bf16.xpose.msra.mxu0 0
      %1343 = vmatprep.subr.bf16.mxu0 0
      %1344 = vmatpush1.bf16.xpose.msra.mxu0 0
      %1345 = vmatprep.subr.bf16.mxu0 0
      %1346 = vmatpush1.bf16.xpose.msra.mxu0 0
      %1347 = vmatprep.subr.bf16.mxu0 0
      %1348 = vmatpush1.bf16.xpose.msra.mxu0 0
      %1349 = vmatprep.subr.bf16.mxu0 0
      %1350 = vmatpush1.bf16.xpose.msra.mxu0 0
      %1351 = vmatprep.subr.bf16.mxu0 0
      %1352 = vmatpush1.bf16.xpose.msra.mxu0 0
      %1353 = vmatprep.subr.bf16.mxu0 0
      %1354 = vmatpush1.bf16.xpose.msra.mxu0 0
      %1355 = vmatprep.subr.bf16.mxu0 0
      %1356 = vmatpush1.bf16.xpose.msra.mxu0 0
      %1357 = vmatprep.mubr.bf16.mxu0 0
      %1358 = vmatmul.mubr.bf16.gmra.mrb[0].mxu0 %v1314
      %v1359 = vpop.f32.mrb[0].mxu0
      %v1360 = vadd.f32 0.0, %v1359
      %v1361 = vpop.f32.mrb[0].mxu0
      %v1362 = vpop.f32.mrb[0].mxu0
      %v1363 = vadd.f32 0.0, %v1362
      %v1364 = vpop.f32.mrb[0].mxu0
      %1365 = vmatprep.mubr.bf16.mxu0 0
      %1366 = vmatmul.mubr.bf16.gmra.mrb[0].mxu0 %v1317
      %v1367 = vpop.f32.mrb[0].mxu0
      %v1368 = vadd.f32 0.0, %v1367
      %v1369 = vpop.f32.mrb[0].mxu0
      %v1370 = vpop.f32.mrb[0].mxu0
      %v1371 = vadd.f32 0.0, %v1370
      %v1372 = vpop.f32.mrb[0].mxu0
      %1373 = vdwg.mxu0
      %1374 = vrot.lane.b32.xlu0 %v822, 96
      %v1375 = vpop.permute.xlu0 %1374
      %1376 = vrot.lane.b32.xlu0 %v824, 96
      %v1377 = vpop.permute.xlu0 %1376
      %v1379 = vsel %vm857, %v822, 0
      %v1382 = vsel %vm857, %v824, 0
      %v1385 = vsel %vm857, %v1375, 0
      %v1388 = vsel %vm857, %v1377, 0
      %1390 = vmatprep.subr.bf16.mxu0 0
      %1391 = vmatpush1.bf16.xpose.msra.mxu0 %v1385
      %1392 = vmatprep.subr.bf16.mxu0 0
      %1393 = vmatpush1.bf16.xpose.msra.mxu0 %v1388
      %1394 = vmatprep.subr.bf16.mxu0 0
      %1395 = vmatpush1.bf16.xpose.msra.mxu0 0
      %1396 = vmatprep.subr.bf16.mxu0 0
      %1397 = vmatpush1.bf16.xpose.msra.mxu0 0
      %1398 = vmatprep.subr.bf16.mxu0 0
      %1399 = vmatpush1.bf16.xpose.msra.mxu0 0
      %1400 = vmatprep.subr.bf16.mxu0 0
      %1401 = vmatpush1.bf16.xpose.msra.mxu0 0
      %1402 = vmatprep.subr.bf16.mxu0 0
      %1403 = vmatpush1.bf16.xpose.msra.mxu0 0
      %1404 = vmatprep.subr.bf16.mxu0 0
      %1405 = vmatpush1.bf16.xpose.msra.mxu0 0
      %1406 = vmatprep.subr.bf16.mxu0 0
      %1407 = vmatpush1.bf16.xpose.msra.mxu0 0
      %1408 = vmatprep.subr.bf16.mxu0 0
      %1409 = vmatpush1.bf16.xpose.msra.mxu0 0
      %1410 = vmatprep.subr.bf16.mxu0 0
      %1411 = vmatpush1.bf16.xpose.msra.mxu0 0
      %1412 = vmatprep.subr.bf16.mxu0 0
      %1413 = vmatpush1.bf16.xpose.msra.mxu0 0
      %1414 = vmatprep.subr.bf16.mxu0 0
      %1415 = vmatpush1.bf16.xpose.msra.mxu0 0
      %1416 = vmatprep.subr.bf16.mxu0 0
      %1417 = vmatpush1.bf16.xpose.msra.mxu0 0
      %1418 = vmatprep.subr.bf16.mxu0 0
      %1419 = vmatpush1.bf16.xpose.msra.mxu0 0
      %1420 = vmatprep.subr.bf16.mxu0 0
      %1421 = vmatpush1.bf16.xpose.msra.mxu0 0
      %1422 = vmatprep.mubr.bf16.mxu0 0
      %1423 = vmatmul.mubr.bf16.gmra.mrb[0].mxu0 %v1379
      %v1424 = vpop.f32.mrb[0].mxu0
      %v1425 = vadd.f32 0.0, %v1424
      %v1426 = vpop.f32.mrb[0].mxu0
      %v1427 = vpop.f32.mrb[0].mxu0
      %v1428 = vadd.f32 0.0, %v1427
      %v1429 = vpop.f32.mrb[0].mxu0
      %1430 = vmatprep.mubr.bf16.mxu0 0
      %1431 = vmatmul.mubr.bf16.gmra.mrb[0].mxu0 %v1382
      %v1432 = vpop.f32.mrb[0].mxu0
      %v1433 = vadd.f32 0.0, %v1432
      %v1434 = vpop.f32.mrb[0].mxu0
      %v1435 = vpop.f32.mrb[0].mxu0
      %v1436 = vadd.f32 0.0, %v1435
      %v1437 = vpop.f32.mrb[0].mxu0
      %1438 = vdwg.mxu0
      %1439 = vrot.lane.b32.xlu0 %v826, 96
      %v1440 = vpop.permute.xlu0 %1439
      %1441 = vrot.lane.b32.xlu0 %v828, 96
      %v1442 = vpop.permute.xlu0 %1441
      %v1444 = vsel %vm857, %v826, 0
      %v1447 = vsel %vm857, %v828, 0
      %v1450 = vsel %vm857, %v1440, 0
      %v1453 = vsel %vm857, %v1442, 0
      %1455 = vmatprep.subr.bf16.mxu0 0
      %1456 = vmatpush1.bf16.xpose.msra.mxu0 %v1450
      %1457 = vmatprep.subr.bf16.mxu0 0
      %1458 = vmatpush1.bf16.xpose.msra.mxu0 %v1453
      %1459 = vmatprep.subr.bf16.mxu0 0
      %1460 = vmatpush1.bf16.xpose.msra.mxu0 0
      %1461 = vmatprep.subr.bf16.mxu0 0
      %1462 = vmatpush1.bf16.xpose.msra.mxu0 0
      %1463 = vmatprep.subr.bf16.mxu0 0
      %1464 = vmatpush1.bf16.xpose.msra.mxu0 0
      %1465 = vmatprep.subr.bf16.mxu0 0
      %1466 = vmatpush1.bf16.xpose.msra.mxu0 0
      %1467 = vmatprep.subr.bf16.mxu0 0
      %1468 = vmatpush1.bf16.xpose.msra.mxu0 0
      %1469 = vmatprep.subr.bf16.mxu0 0
      %1470 = vmatpush1.bf16.xpose.msra.mxu0 0
      %1471 = vmatprep.subr.bf16.mxu0 0
      %1472 = vmatpush1.bf16.xpose.msra.mxu0 0
      %1473 = vmatprep.subr.bf16.mxu0 0
      %1474 = vmatpush1.bf16.xpose.msra.mxu0 0
      %1475 = vmatprep.subr.bf16.mxu0 0
      %1476 = vmatpush1.bf16.xpose.msra.mxu0 0
      %1477 = vmatprep.subr.bf16.mxu0 0
      %1478 = vmatpush1.bf16.xpose.msra.mxu0 0
      %1479 = vmatprep.subr.bf16.mxu0 0
      %1480 = vmatpush1.bf16.xpose.msra.mxu0 0
      %1481 = vmatprep.subr.bf16.mxu0 0
      %1482 = vmatpush1.bf16.xpose.msra.mxu0 0
      %1483 = vmatprep.subr.bf16.mxu0 0
      %1484 = vmatpush1.bf16.xpose.msra.mxu0 0
      %1485 = vmatprep.subr.bf16.mxu0 0
      %1486 = vmatpush1.bf16.xpose.msra.mxu0 0
      %1487 = vmatprep.mubr.bf16.mxu0 0
      %1488 = vmatmul.mubr.bf16.gmra.mrb[0].mxu0 %v1444
      %v1489 = vpop.f32.mrb[0].mxu0
      %v1490 = vadd.f32 0.0, %v1489
      %v1491 = vpop.f32.mrb[0].mxu0
      %v1492 = vpop.f32.mrb[0].mxu0
      %v1493 = vadd.f32 0.0, %v1492
      %v1494 = vpop.f32.mrb[0].mxu0
      %1495 = vmatprep.mubr.bf16.mxu0 0
      %1496 = vmatmul.mubr.bf16.gmra.mrb[0].mxu0 %v1447
      %v1497 = vpop.f32.mrb[0].mxu0
      %v1498 = vadd.f32 0.0, %v1497
      %v1499 = vpop.f32.mrb[0].mxu0
      %v1500 = vpop.f32.mrb[0].mxu0
      %v1501 = vadd.f32 0.0, %v1500
      %v1502 = vpop.f32.mrb[0].mxu0
      %1503 = vdwg.mxu0
      %1504 = vrot.lane.b32.xlu0 %v830, 96
      %v1505 = vpop.permute.xlu0 %1504
      %1506 = vrot.lane.b32.xlu0 %v832, 96
      %v1507 = vpop.permute.xlu0 %1506
      %v1509 = vsel %vm857, %v830, 0
      %v1512 = vsel %vm857, %v832, 0
      %v1515 = vsel %vm857, %v1505, 0
      %v1518 = vsel %vm857, %v1507, 0
      %1520 = vmatprep.subr.bf16.mxu0 0
      %1521 = vmatpush1.bf16.xpose.msra.mxu0 %v1515
      %1522 = vmatprep.subr.bf16.mxu0 0
      %1523 = vmatpush1.bf16.xpose.msra.mxu0 %v1518
      %1524 = vmatprep.subr.bf16.mxu0 0
      %1525 = vmatpush1.bf16.xpose.msra.mxu0 0
      %1526 = vmatprep.subr.bf16.mxu0 0
      %1527 = vmatpush1.bf16.xpose.msra.mxu0 0
      %1528 = vmatprep.subr.bf16.mxu0 0
      %1529 = vmatpush1.bf16.xpose.msra.mxu0 0
      %1530 = vmatprep.subr.bf16.mxu0 0
      %1531 = vmatpush1.bf16.xpose.msra.mxu0 0
      %1532 = vmatprep.subr.bf16.mxu0 0
      %1533 = vmatpush1.bf16.xpose.msra.mxu0 0
      %1534 = vmatprep.subr.bf16.mxu0 0
      %1535 = vmatpush1.bf16.xpose.msra.mxu0 0
      %1536 = vmatprep.subr.bf16.mxu0 0
      %1537 = vmatpush1.bf16.xpose.msra.mxu0 0
      %1538 = vmatprep.subr.bf16.mxu0 0
      %1539 = vmatpush1.bf16.xpose.msra.mxu0 0
      %1540 = vmatprep.subr.bf16.mxu0 0
      %1541 = vmatpush1.bf16.xpose.msra.mxu0 0
      %1542 = vmatprep.subr.bf16.mxu0 0
      %1543 = vmatpush1.bf16.xpose.msra.mxu0 0
      %1544 = vmatprep.subr.bf16.mxu0 0
      %1545 = vmatpush1.bf16.xpose.msra.mxu0 0
      %1546 = vmatprep.subr.bf16.mxu0 0
      %1547 = vmatpush1.bf16.xpose.msra.mxu0 0
      %1548 = vmatprep.subr.bf16.mxu0 0
      %1549 = vmatpush1.bf16.xpose.msra.mxu0 0
      %1550 = vmatprep.subr.bf16.mxu0 0
      %1551 = vmatpush1.bf16.xpose.msra.mxu0 0
      %1552 = vmatprep.mubr.bf16.mxu0 0
      %1553 = vmatmul.mubr.bf16.gmra.mrb[0].mxu0 %v1509
      %v1554 = vpop.f32.mrb[0].mxu0
      %v1555 = vadd.f32 0.0, %v1554
      %v1556 = vpop.f32.mrb[0].mxu0
      %v1557 = vpop.f32.mrb[0].mxu0
      %v1558 = vadd.f32 0.0, %v1557
      %v1559 = vpop.f32.mrb[0].mxu0
      %1560 = vmatprep.mubr.bf16.mxu0 0
      %1561 = vmatmul.mubr.bf16.gmra.mrb[0].mxu0 %v1512
      %v1562 = vpop.f32.mrb[0].mxu0
      %v1563 = vadd.f32 0.0, %v1562
      %v1564 = vpop.f32.mrb[0].mxu0
      %v1565 = vpop.f32.mrb[0].mxu0
      %v1566 = vadd.f32 0.0, %v1565
      %v1567 = vpop.f32.mrb[0].mxu0
      %1568 = vdwg.mxu0
      %1569 = vrot.lane.b32.xlu0 %v834, 96
      %v1570 = vpop.permute.xlu0 %1569
      %1571 = vrot.lane.b32.xlu0 %v836, 96
      %v1572 = vpop.permute.xlu0 %1571
      %v1574 = vsel %vm857, %v834, 0
      %v1577 = vsel %vm857, %v836, 0
      %v1580 = vsel %vm857, %v1570, 0
      %v1583 = vsel %vm857, %v1572, 0
      %1585 = vmatprep.subr.bf16.mxu0 0
      %1586 = vmatpush1.bf16.xpose.msra.mxu0 %v1580
      %1587 = vmatprep.subr.bf16.mxu0 0
      %1588 = vmatpush1.bf16.xpose.msra.mxu0 %v1583
      %1589 = vmatprep.subr.bf16.mxu0 0
      %1590 = vmatpush1.bf16.xpose.msra.mxu0 0
      %1591 = vmatprep.subr.bf16.mxu0 0
      %1592 = vmatpush1.bf16.xpose.msra.mxu0 0
      %1593 = vmatprep.subr.bf16.mxu0 0
      %1594 = vmatpush1.bf16.xpose.msra.mxu0 0
      %1595 = vmatprep.subr.bf16.mxu0 0
      %1596 = vmatpush1.bf16.xpose.msra.mxu0 0
      %1597 = vmatprep.subr.bf16.mxu0 0
      %1598 = vmatpush1.bf16.xpose.msra.mxu0 0
      %1599 = vmatprep.subr.bf16.mxu0 0
      %1600 = vmatpush1.bf16.xpose.msra.mxu0 0
      %1601 = vmatprep.subr.bf16.mxu0 0
      %1602 = vmatpush1.bf16.xpose.msra.mxu0 0
      %1603 = vmatprep.subr.bf16.mxu0 0
      %1604 = vmatpush1.bf16.xpose.msra.mxu0 0
      %1605 = vmatprep.subr.bf16.mxu0 0
      %1606 = vmatpush1.bf16.xpose.msra.mxu0 0
      %1607 = vmatprep.subr.bf16.mxu0 0
      %1608 = vmatpush1.bf16.xpose.msra.mxu0 0
      %1609 = vmatprep.subr.bf16.mxu0 0
      %1610 = vmatpush1.bf16.xpose.msra.mxu0 0
      %1611 = vmatprep.subr.bf16.mxu0 0
      %1612 = vmatpush1.bf16.xpose.msra.mxu0 0
      %1613 = vmatprep.subr.bf16.mxu0 0
      %1614 = vmatpush1.bf16.xpose.msra.mxu0 0
      %1615 = vmatprep.subr.bf16.mxu0 0
      %1616 = vmatpush1.bf16.xpose.msra.mxu0 0
      %1617 = vmatprep.mubr.bf16.mxu0 0
      %1618 = vmatmul.mubr.bf16.gmra.mrb[0].mxu0 %v1574
      %v1619 = vpop.f32.mrb[0].mxu0
      %v1620 = vadd.f32 0.0, %v1619
      %v1621 = vpop.f32.mrb[0].mxu0
      %v1622 = vpop.f32.mrb[0].mxu0
      %v1623 = vadd.f32 0.0, %v1622
      %v1624 = vpop.f32.mrb[0].mxu0
      %1625 = vmatprep.mubr.bf16.mxu0 0
      %1626 = vmatmul.mubr.bf16.gmra.mrb[0].mxu0 %v1577
      %v1627 = vpop.f32.mrb[0].mxu0
      %v1628 = vadd.f32 0.0, %v1627
      %v1629 = vpop.f32.mrb[0].mxu0
      %v1630 = vpop.f32.mrb[0].mxu0
      %v1631 = vadd.f32 0.0, %v1630
      %v1632 = vpop.f32.mrb[0].mxu0
      %1633 = vdwg.mxu0
      %1634 = vrot.lane.b32.xlu0 %v838, 96
      %v1635 = vpop.permute.xlu0 %1634
      %1636 = vrot.lane.b32.xlu0 %v840, 96
      %v1637 = vpop.permute.xlu0 %1636
      %v1639 = vsel %vm857, %v838, 0
      %v1642 = vsel %vm857, %v840, 0
      %v1645 = vsel %vm857, %v1635, 0
      %v1648 = vsel %vm857, %v1637, 0
      %1650 = vmatprep.subr.bf16.mxu0 0
      %1651 = vmatpush1.bf16.xpose.msra.mxu0 %v1645
      %1652 = vmatprep.subr.bf16.mxu0 0
      %1653 = vmatpush1.bf16.xpose.msra.mxu0 %v1648
      %1654 = vmatprep.subr.bf16.mxu0 0
      %1655 = vmatpush1.bf16.xpose.msra.mxu0 0
      %1656 = vmatprep.subr.bf16.mxu0 0
      %1657 = vmatpush1.bf16.xpose.msra.mxu0 0
      %1658 = vmatprep.subr.bf16.mxu0 0
      %1659 = vmatpush1.bf16.xpose.msra.mxu0 0
      %1660 = vmatprep.subr.bf16.mxu0 0
      %1661 = vmatpush1.bf16.xpose.msra.mxu0 0
      %1662 = vmatprep.subr.bf16.mxu0 0
      %1663 = vmatpush1.bf16.xpose.msra.mxu0 0
      %1664 = vmatprep.subr.bf16.mxu0 0
      %1665 = vmatpush1.bf16.xpose.msra.mxu0 0
      %1666 = vmatprep.subr.bf16.mxu0 0
      %1667 = vmatpush1.bf16.xpose.msra.mxu0 0
      %1668 = vmatprep.subr.bf16.mxu0 0
      %1669 = vmatpush1.bf16.xpose.msra.mxu0 0
      %1670 = vmatprep.subr.bf16.mxu0 0
      %1671 = vmatpush1.bf16.xpose.msra.mxu0 0
      %1672 = vmatprep.subr.bf16.mxu0 0
      %1673 = vmatpush1.bf16.xpose.msra.mxu0 0
      %1674 = vmatprep.subr.bf16.mxu0 0
      %1675 = vmatpush1.bf16.xpose.msra.mxu0 0
      %1676 = vmatprep.subr.bf16.mxu0 0
      %1677 = vmatpush1.bf16.xpose.msra.mxu0 0
      %1678 = vmatprep.subr.bf16.mxu0 0
      %1679 = vmatpush1.bf16.xpose.msra.mxu0 0
      %1680 = vmatprep.subr.bf16.mxu0 0
      %1681 = vmatpush1.bf16.xpose.msra.mxu0 0
      %1682 = vmatprep.mubr.bf16.mxu0 0
      %1683 = vmatmul.mubr.bf16.gmra.mrb[0].mxu0 %v1639
      %v1684 = vpop.f32.mrb[0].mxu0
      %v1685 = vadd.f32 0.0, %v1684
      %v1686 = vpop.f32.mrb[0].mxu0
      %v1687 = vpop.f32.mrb[0].mxu0
      %v1688 = vadd.f32 0.0, %v1687
      %v1689 = vpop.f32.mrb[0].mxu0
      %1690 = vmatprep.mubr.bf16.mxu0 0
      %1691 = vmatmul.mubr.bf16.gmra.mrb[0].mxu0 %v1642
      %v1692 = vpop.f32.mrb[0].mxu0
      %v1693 = vadd.f32 0.0, %v1692
      %v1694 = vpop.f32.mrb[0].mxu0
      %v1695 = vpop.f32.mrb[0].mxu0
      %v1696 = vadd.f32 0.0, %v1695
      %v1697 = vpop.f32.mrb[0].mxu0
      %1698 = vdwg.mxu0
      %1699 = vrot.lane.b32.xlu0 %v842, 96
      %v1700 = vpop.permute.xlu0 %1699
      %1701 = vrot.lane.b32.xlu0 %v844, 96
      %v1702 = vpop.permute.xlu0 %1701
      %v1704 = vsel %vm857, %v842, 0
      %v1707 = vsel %vm857, %v844, 0
      %v1710 = vsel %vm857, %v1700, 0
      %v1713 = vsel %vm857, %v1702, 0
      %1715 = vmatprep.subr.bf16.mxu0 0
      %1716 = vmatpush1.bf16.xpose.msra.mxu0 %v1710
      %1717 = vmatprep.subr.bf16.mxu0 0
      %1718 = vmatpush1.bf16.xpose.msra.mxu0 %v1713
      %1719 = vmatprep.subr.bf16.mxu0 0
      %1720 = vmatpush1.bf16.xpose.msra.mxu0 0
      %1721 = vmatprep.subr.bf16.mxu0 0
      %1722 = vmatpush1.bf16.xpose.msra.mxu0 0
      %1723 = vmatprep.subr.bf16.mxu0 0
      %1724 = vmatpush1.bf16.xpose.msra.mxu0 0
      %1725 = vmatprep.subr.bf16.mxu0 0
      %1726 = vmatpush1.bf16.xpose.msra.mxu0 0
      %1727 = vmatprep.subr.bf16.mxu0 0
      %1728 = vmatpush1.bf16.xpose.msra.mxu0 0
      %1729 = vmatprep.subr.bf16.mxu0 0
      %1730 = vmatpush1.bf16.xpose.msra.mxu0 0
      %1731 = vmatprep.subr.bf16.mxu0 0
      %1732 = vmatpush1.bf16.xpose.msra.mxu0 0
      %1733 = vmatprep.subr.bf16.mxu0 0
      %1734 = vmatpush1.bf16.xpose.msra.mxu0 0
      %1735 = vmatprep.subr.bf16.mxu0 0
      %1736 = vmatpush1.bf16.xpose.msra.mxu0 0
      %1737 = vmatprep.subr.bf16.mxu0 0
      %1738 = vmatpush1.bf16.xpose.msra.mxu0 0
      %1739 = vmatprep.subr.bf16.mxu0 0
      %1740 = vmatpush1.bf16.xpose.msra.mxu0 0
      %1741 = vmatprep.subr.bf16.mxu0 0
      %1742 = vmatpush1.bf16.xpose.msra.mxu0 0
      %1743 = vmatprep.subr.bf16.mxu0 0
      %1744 = vmatpush1.bf16.xpose.msra.mxu0 0
      %1745 = vmatprep.subr.bf16.mxu0 0
      %1746 = vmatpush1.bf16.xpose.msra.mxu0 0
      %1747 = vmatprep.mubr.bf16.mxu0 0
      %1748 = vmatmul.mubr.bf16.gmra.mrb[0].mxu0 %v1704
      %v1749 = vpop.f32.mrb[0].mxu0
      %v1750 = vadd.f32 0.0, %v1749
      %v1751 = vpop.f32.mrb[0].mxu0
      %v1752 = vpop.f32.mrb[0].mxu0
      %v1753 = vadd.f32 0.0, %v1752
      %v1754 = vpop.f32.mrb[0].mxu0
      %1755 = vmatprep.mubr.bf16.mxu0 0
      %1756 = vmatmul.mubr.bf16.gmra.mrb[0].mxu0 %v1707
      %v1757 = vpop.f32.mrb[0].mxu0
      %v1758 = vadd.f32 0.0, %v1757
      %v1759 = vpop.f32.mrb[0].mxu0
      %v1760 = vpop.f32.mrb[0].mxu0
      %v1761 = vadd.f32 0.0, %v1760
      %v1762 = vpop.f32.mrb[0].mxu0
      %1763 = vdwg.mxu0
      %1764 = vrot.lane.b32.xlu0 %v846, 96
      %v1765 = vpop.permute.xlu0 %1764
      %1766 = vrot.lane.b32.xlu0 %v848, 96
      %v1767 = vpop.permute.xlu0 %1766
      %v1769 = vsel %vm857, %v846, 0
      %v1772 = vsel %vm857, %v848, 0
      %v1775 = vsel %vm857, %v1765, 0
      %v1778 = vsel %vm857, %v1767, 0
      %1780 = vmatprep.subr.bf16.mxu0 0
      %1781 = vmatpush1.bf16.xpose.msra.mxu0 %v1775
      %1782 = vmatprep.subr.bf16.mxu0 0
      %1783 = vmatpush1.bf16.xpose.msra.mxu0 %v1778
      %1784 = vmatprep.subr.bf16.mxu0 0
      %1785 = vmatpush1.bf16.xpose.msra.mxu0 0
      %1786 = vmatprep.subr.bf16.mxu0 0
      %1787 = vmatpush1.bf16.xpose.msra.mxu0 0
      %1788 = vmatprep.subr.bf16.mxu0 0
      %1789 = vmatpush1.bf16.xpose.msra.mxu0 0
      %1790 = vmatprep.subr.bf16.mxu0 0
      %1791 = vmatpush1.bf16.xpose.msra.mxu0 0
      %1792 = vmatprep.subr.bf16.mxu0 0
      %1793 = vmatpush1.bf16.xpose.msra.mxu0 0
      %1794 = vmatprep.subr.bf16.mxu0 0
      %1795 = vmatpush1.bf16.xpose.msra.mxu0 0
      %1796 = vmatprep.subr.bf16.mxu0 0
      %1797 = vmatpush1.bf16.xpose.msra.mxu0 0
      %1798 = vmatprep.subr.bf16.mxu0 0
      %1799 = vmatpush1.bf16.xpose.msra.mxu0 0
      %1800 = vmatprep.subr.bf16.mxu0 0
      %1801 = vmatpush1.bf16.xpose.msra.mxu0 0
      %1802 = vmatprep.subr.bf16.mxu0 0
      %1803 = vmatpush1.bf16.xpose.msra.mxu0 0
      %1804 = vmatprep.subr.bf16.mxu0 0
      %1805 = vmatpush1.bf16.xpose.msra.mxu0 0
      %1806 = vmatprep.subr.bf16.mxu0 0
      %1807 = vmatpush1.bf16.xpose.msra.mxu0 0
      %1808 = vmatprep.subr.bf16.mxu0 0
      %1809 = vmatpush1.bf16.xpose.msra.mxu0 0
      %1810 = vmatprep.subr.bf16.mxu0 0
      %1811 = vmatpush1.bf16.xpose.msra.mxu0 0
      %1812 = vmatprep.mubr.bf16.mxu0 0
      %1813 = vmatmul.mubr.bf16.gmra.mrb[0].mxu0 %v1769
      %v1814 = vpop.f32.mrb[0].mxu0
      %v1815 = vadd.f32 0.0, %v1814
      %v1816 = vpop.f32.mrb[0].mxu0
      %v1817 = vpop.f32.mrb[0].mxu0
      %v1818 = vadd.f32 0.0, %v1817
      %v1819 = vpop.f32.mrb[0].mxu0
      %1820 = vmatprep.mubr.bf16.mxu0 0
      %1821 = vmatmul.mubr.bf16.gmra.mrb[0].mxu0 %v1772
      %v1822 = vpop.f32.mrb[0].mxu0
      %v1823 = vadd.f32 0.0, %v1822
      %v1824 = vpop.f32.mrb[0].mxu0
      %v1825 = vpop.f32.mrb[0].mxu0
      %v1826 = vadd.f32 0.0, %v1825
      %v1827 = vpop.f32.mrb[0].mxu0
      %1828 = vdwg.mxu0
      %1829 = vrot.lane.b32.xlu0 %v850, 96
      %v1830 = vpop.permute.xlu0 %1829
      %1831 = vrot.lane.b32.xlu0 %v852, 96
      %v1832 = vpop.permute.xlu0 %1831
      %v1834 = vsel %vm857, %v850, 0
      %v1837 = vsel %vm857, %v852, 0
      %v1840 = vsel %vm857, %v1830, 0
      %v1843 = vsel %vm857, %v1832, 0
      %1845 = vmatprep.subr.bf16.mxu0 0
      %1846 = vmatpush1.bf16.xpose.msra.mxu0 %v1840
      %1847 = vmatprep.subr.bf16.mxu0 0
      %1848 = vmatpush1.bf16.xpose.msra.mxu0 %v1843
      %1849 = vmatprep.subr.bf16.mxu0 0
      %1850 = vmatpush1.bf16.xpose.msra.mxu0 0
      %1851 = vmatprep.subr.bf16.mxu0 0
      %1852 = vmatpush1.bf16.xpose.msra.mxu0 0
      %1853 = vmatprep.subr.bf16.mxu0 0
      %1854 = vmatpush1.bf16.xpose.msra.mxu0 0
      %1855 = vmatprep.subr.bf16.mxu0 0
      %1856 = vmatpush1.bf16.xpose.msra.mxu0 0
      %1857 = vmatprep.subr.bf16.mxu0 0
      %1858 = vmatpush1.bf16.xpose.msra.mxu0 0
      %1859 = vmatprep.subr.bf16.mxu0 0
      %1860 = vmatpush1.bf16.xpose.msra.mxu0 0
      %1861 = vmatprep.subr.bf16.mxu0 0
      %1862 = vmatpush1.bf16.xpose.msra.mxu0 0
      %1863 = vmatprep.subr.bf16.mxu0 0
      %1864 = vmatpush1.bf16.xpose.msra.mxu0 0
      %1865 = vmatprep.subr.bf16.mxu0 0
      %1866 = vmatpush1.bf16.xpose.msra.mxu0 0
      %1867 = vmatprep.subr.bf16.mxu0 0
      %1868 = vmatpush1.bf16.xpose.msra.mxu0 0
      %1869 = vmatprep.subr.bf16.mxu0 0
      %1870 = vmatpush1.bf16.xpose.msra.mxu0 0
      %1871 = vmatprep.subr.bf16.mxu0 0
      %1872 = vmatpush1.bf16.xpose.msra.mxu0 0
      %1873 = vmatprep.subr.bf16.mxu0 0
      %1874 = vmatpush1.bf16.xpose.msra.mxu0 0
      %1875 = vmatprep.subr.bf16.mxu0 0
      %1876 = vmatpush1.bf16.xpose.msra.mxu0 0
      %1877 = vmatprep.mubr.bf16.mxu0 0
      %1878 = vmatmul.mubr.bf16.gmra.mrb[0].mxu0 %v1834
      %v1879 = vpop.f32.mrb[0].mxu0
      %v1880 = vadd.f32 0.0, %v1879
      %v1881 = vpop.f32.mrb[0].mxu0
      %v1882 = vpop.f32.mrb[0].mxu0
      %v1883 = vadd.f32 0.0, %v1882
      %v1884 = vpop.f32.mrb[0].mxu0
      %1885 = vmatprep.mubr.bf16.mxu0 0
      %1886 = vmatmul.mubr.bf16.gmra.mrb[0].mxu0 %v1837
      %v1887 = vpop.f32.mrb[0].mxu0
      %v1888 = vadd.f32 0.0, %v1887
      %v1889 = vpop.f32.mrb[0].mxu0
      %v1890 = vpop.f32.mrb[0].mxu0
      %v1891 = vadd.f32 0.0, %v1890
      %v1892 = vpop.f32.mrb[0].mxu0
      %1893 = vdwg.mxu0
      %v1894 = vmul.f32 %v905, 0.35355338
      %v1895 = vmul.f32 %v908, 0.35355338
      %v1896 = vmul.f32 %v913, 0.35355338
      %v1897 = vmul.f32 %v916, 0.35355338
      %v1898 = vmul.f32 %v970, 0.35355338
      %v1899 = vmul.f32 %v973, 0.35355338
      %v1900 = vmul.f32 %v978, 0.35355338
      %v1901 = vmul.f32 %v981, 0.35355338
      %v1902 = vmul.f32 %v1035, 0.35355338
      %v1903 = vmul.f32 %v1038, 0.35355338
      %v1904 = vmul.f32 %v1043, 0.35355338
      %v1905 = vmul.f32 %v1046, 0.35355338
      %v1906 = vmul.f32 %v1100, 0.35355338
      %v1907 = vmul.f32 %v1103, 0.35355338
      %v1908 = vmul.f32 %v1108, 0.35355338
      %v1909 = vmul.f32 %v1111, 0.35355338
      %v1910 = vmul.f32 %v1165, 0.35355338
      %v1911 = vmul.f32 %v1168, 0.35355338
      %v1912 = vmul.f32 %v1173, 0.35355338
      %v1913 = vmul.f32 %v1176, 0.35355338
      %v1914 = vmul.f32 %v1230, 0.35355338
      %v1915 = vmul.f32 %v1233, 0.35355338
      %v1916 = vmul.f32 %v1238, 0.35355338
      %v1917 = vmul.f32 %v1241, 0.35355338
      %v1918 = vmul.f32 %v1295, 0.35355338
      %v1919 = vmul.f32 %v1298, 0.35355338
      %v1920 = vmul.f32 %v1303, 0.35355338
      %v1921 = vmul.f32 %v1306, 0.35355338
      %v1922 = vmul.f32 %v1360, 0.35355338
      %v1923 = vmul.f32 %v1363, 0.35355338
      %v1924 = vmul.f32 %v1368, 0.35355338
      %v1925 = vmul.f32 %v1371, 0.35355338
      %v1926 = vmul.f32 %v1425, 0.35355338
      %v1927 = vmul.f32 %v1428, 0.35355338
      %v1928 = vmul.f32 %v1433, 0.35355338
      %v1929 = vmul.f32 %v1436, 0.35355338
      %v1930 = vmul.f32 %v1490, 0.35355338
      %v1931 = vmul.f32 %v1493, 0.35355338
      %v1932 = vmul.f32 %v1498, 0.35355338
      %v1933 = vmul.f32 %v1501, 0.35355338
      %v1934 = vmul.f32 %v1555, 0.35355338
      %v1935 = vmul.f32 %v1558, 0.35355338
      %v1936 = vmul.f32 %v1563, 0.35355338
      %v1937 = vmul.f32 %v1566, 0.35355338
      %v1938 = vmul.f32 %v1620, 0.35355338
      %v1939 = vmul.f32 %v1623, 0.35355338
      %v1940 = vmul.f32 %v1628, 0.35355338
      %v1941 = vmul.f32 %v1631, 0.35355338
      %v1942 = vmul.f32 %v1685, 0.35355338
      %v1943 = vmul.f32 %v1688, 0.35355338
      %v1944 = vmul.f32 %v1693, 0.35355338
      %v1945 = vmul.f32 %v1696, 0.35355338
      %v1946 = vmul.f32 %v1750, 0.35355338
      %v1947 = vmul.f32 %v1753, 0.35355338
      %v1948 = vmul.f32 %v1758, 0.35355338
      %v1949 = vmul.f32 %v1761, 0.35355338
      %v1950 = vmul.f32 %v1815, 0.35355338
      %v1951 = vmul.f32 %v1818, 0.35355338
      %v1952 = vmul.f32 %v1823, 0.35355338
      %v1953 = vmul.f32 %v1826, 0.35355338
      %v1954 = vmul.f32 %v1880, 0.35355338
      %v1955 = vmul.f32 %v1883, 0.35355338
      %v1956 = vmul.f32 %v1888, 0.35355338
      %v1957 = vmul.f32 %v1891, 0.35355338
      %v1958 = vld [vmem:[%s339] sm:$0xf]
      %v1959 = vld [vmem:[%s339 + $0x4] sm:$0xf]
      %v1960 = vld [vmem:[%s339 + $0x8] sm:$0xf]
      %v1961 = vld [vmem:[%s339 + $0xc] sm:$0xf]
      %v1962 = vld [vmem:[%s339 + $0x10] sm:$0xf]
      %v1963 = vld [vmem:[%s339 + $0x14] sm:$0xf]
      %v1964 = vld [vmem:[%s339 + $0x18] sm:$0xf]
      %v1965 = vld [vmem:[%s339 + $0x1c] sm:$0xf]
      %v1966 = vld [vmem:[%s339 + $0x20] sm:$0xf]
      %v1967 = vld [vmem:[%s339 + $0x24] sm:$0xf]
      %v1968 = vld [vmem:[%s339 + $0x28] sm:$0xf]
      %v1969 = vld [vmem:[%s339 + $0x2c] sm:$0xf]
      %v1970 = vld [vmem:[%s339 + $0x30] sm:$0xf]
      %v1971 = vld [vmem:[%s339 + $0x34] sm:$0xf]
      %v1972 = vld [vmem:[%s339 + $0x38] sm:$0xf]
      %v1973 = vld [vmem:[%s339 + $0x3c] sm:$0xf]
      %v1974 = vunpack.c.l.bf16 %v1958
      %v1975 = vunpack.c.l.bf16 %v1959
      %v1976 = vunpack.c.l.bf16 %v1960
      %v1977 = vunpack.c.l.bf16 %v1961
      %v1978 = vunpack.c.l.bf16 %v1962
      %v1979 = vunpack.c.l.bf16 %v1963
      %v1980 = vunpack.c.l.bf16 %v1964
      %v1981 = vunpack.c.l.bf16 %v1965
      %v1982 = vunpack.c.l.bf16 %v1966
      %v1983 = vunpack.c.l.bf16 %v1967
      %v1984 = vunpack.c.l.bf16 %v1968
      %v1985 = vunpack.c.l.bf16 %v1969
      %v1986 = vunpack.c.l.bf16 %v1970
      %v1987 = vunpack.c.l.bf16 %v1971
      %v1988 = vunpack.c.l.bf16 %v1972
      %v1989 = vunpack.c.l.bf16 %v1973
      %v1990 = vadd.f32 %v1894, %v1974
      %v1991 = vadd.f32 %v1895, %v1975
      %v1992 = vadd.f32 %v1896, %v1976
      %v1993 = vadd.f32 %v1897, %v1977
      %v1994 = vadd.f32 %v1898, %v1974
      %v1995 = vadd.f32 %v1899, %v1975
      %v1996 = vadd.f32 %v1900, %v1976
      %v1997 = vadd.f32 %v1901, %v1977
      %v1998 = vadd.f32 %v1902, %v1974
      %v1999 = vadd.f32 %v1903, %v1975
      %v2000 = vadd.f32 %v1904, %v1976
      %v2001 = vadd.f32 %v1905, %v1977
      %v2002 = vadd.f32 %v1906, %v1974
      %v2003 = vadd.f32 %v1907, %v1975
      %v2004 = vadd.f32 %v1908, %v1976
      %v2005 = vadd.f32 %v1909, %v1977
      %v2006 = vadd.f32 %v1910, %v1978
      %v2007 = vadd.f32 %v1911, %v1979
      %v2008 = vadd.f32 %v1912, %v1980
      %v2009 = vadd.f32 %v1913, %v1981
      %v2010 = vadd.f32 %v1914, %v1978
      %v2011 = vadd.f32 %v1915, %v1979
      %v2012 = vadd.f32 %v1916, %v1980
      %v2013 = vadd.f32 %v1917, %v1981
      %v2014 = vadd.f32 %v1918, %v1978
      %v2015 = vadd.f32 %v1919, %v1979
      %v2016 = vadd.f32 %v1920, %v1980
      %v2017 = vadd.f32 %v1921, %v1981
      %v2018 = vadd.f32 %v1922, %v1978
      %v2019 = vadd.f32 %v1923, %v1979
      %v2020 = vadd.f32 %v1924, %v1980
      %v2021 = vadd.f32 %v1925, %v1981
      %v2022 = vadd.f32 %v1926, %v1982
      %v2023 = vadd.f32 %v1927, %v1983
      %v2024 = vadd.f32 %v1928, %v1984
      %v2025 = vadd.f32 %v1929, %v1985
      %v2026 = vadd.f32 %v1930, %v1982
      %v2027 = vadd.f32 %v1931, %v1983
      %v2028 = vadd.f32 %v1932, %v1984
      %v2029 = vadd.f32 %v1933, %v1985
      %v2030 = vadd.f32 %v1934, %v1982
      %v2031 = vadd.f32 %v1935, %v1983
      %v2032 = vadd.f32 %v1936, %v1984
      %v2033 = vadd.f32 %v1937, %v1985
      %v2034 = vadd.f32 %v1938, %v1982
      %v2035 = vadd.f32 %v1939, %v1983
      %v2036 = vadd.f32 %v1940, %v1984
      %v2037 = vadd.f32 %v1941, %v1985
      %v2038 = vadd.f32 %v1942, %v1986
      %v2039 = vadd.f32 %v1943, %v1987
      %v2040 = vadd.f32 %v1944, %v1988
      %v2041 = vadd.f32 %v1945, %v1989
      %v2042 = vadd.f32 %v1946, %v1986
      %v2043 = vadd.f32 %v1947, %v1987
      %v2044 = vadd.f32 %v1948, %v1988
      %v2045 = vadd.f32 %v1949, %v1989
      %v2046 = vadd.f32 %v1950, %v1986
      %v2047 = vadd.f32 %v1951, %v1987
      %v2048 = vadd.f32 %v1952, %v1988
      %v2049 = vadd.f32 %v1953, %v1989
      %v2050 = vadd.f32 %v1954, %v1986
      %v2051 = vadd.f32 %v1955, %v1987
      %v2052 = vadd.f32 %v1956, %v1988
      %v2053 = vadd.f32 %v1957, %v1989
      %v2054 = vsel %vm381, %v1990, -inf
      %2055 = vmax.xlane.f32.xlu0 %v2054
      %v2056 = vpop.xlane.xlu0 %2055
      %v2057 = vsel %vm381, %v1991, -inf
      %2058 = vmax.xlane.f32.xlu0 %v2057
      %v2059 = vpop.xlane.xlu0 %2058
      %v2060 = vsel %vm381, %v1992, -inf
      %2061 = vmax.xlane.f32.xlu0 %v2060
      %v2062 = vpop.xlane.xlu0 %2061
      %v2063 = vsel %vm381, %v1993, -inf
      %2064 = vmax.xlane.f32.xlu0 %v2063
      %v2065 = vpop.xlane.xlu0 %2064
      %v2066 = vsel %vm381, %v1994, -inf
      %2067 = vmax.xlane.f32.xlu0 %v2066
      %v2068 = vpop.xlane.xlu0 %2067
      %v2069 = vsel %vm381, %v1995, -inf
      %2070 = vmax.xlane.f32.xlu0 %v2069
      %v2071 = vpop.xlane.xlu0 %2070
      %v2072 = vsel %vm381, %v1996, -inf
      %2073 = vmax.xlane.f32.xlu0 %v2072
      %v2074 = vpop.xlane.xlu0 %2073
      %v2075 = vsel %vm381, %v1997, -inf
      %2076 = vmax.xlane.f32.xlu0 %v2075
      %v2077 = vpop.xlane.xlu0 %2076
      %v2078 = vsel %vm381, %v1998, -inf
      %2079 = vmax.xlane.f32.xlu0 %v2078
      %v2080 = vpop.xlane.xlu0 %2079
      %v2081 = vsel %vm381, %v1999, -inf
      %2082 = vmax.xlane.f32.xlu0 %v2081
      %v2083 = vpop.xlane.xlu0 %2082
      %v2084 = vsel %vm381, %v2000, -inf
      %2085 = vmax.xlane.f32.xlu0 %v2084
      %v2086 = vpop.xlane.xlu0 %2085
      %v2087 = vsel %vm381, %v2001, -inf
      %2088 = vmax.xlane.f32.xlu0 %v2087
      %v2089 = vpop.xlane.xlu0 %2088
      %v2090 = vsel %vm381, %v2002, -inf
      %2091 = vmax.xlane.f32.xlu0 %v2090
      %v2092 = vpop.xlane.xlu0 %2091
      %v2093 = vsel %vm381, %v2003, -inf
      %2094 = vmax.xlane.f32.xlu0 %v2093
      %v2095 = vpop.xlane.xlu0 %2094
      %v2096 = vsel %vm381, %v2004, -inf
      %2097 = vmax.xlane.f32.xlu0 %v2096
      %v2098 = vpop.xlane.xlu0 %2097
      %v2099 = vsel %vm381, %v2005, -inf
      %2100 = vmax.xlane.f32.xlu0 %v2099
      %v2101 = vpop.xlane.xlu0 %2100
      %v2102 = vsel %vm381, %v2006, -inf
      %2103 = vmax.xlane.f32.xlu0 %v2102
      %v2104 = vpop.xlane.xlu0 %2103
      %v2105 = vsel %vm381, %v2007, -inf
      %2106 = vmax.xlane.f32.xlu0 %v2105
      %v2107 = vpop.xlane.xlu0 %2106
      %v2108 = vsel %vm381, %v2008, -inf
      %2109 = vmax.xlane.f32.xlu0 %v2108
      %v2110 = vpop.xlane.xlu0 %2109
      %v2111 = vsel %vm381, %v2009, -inf
      %2112 = vmax.xlane.f32.xlu0 %v2111
      %v2113 = vpop.xlane.xlu0 %2112
      %v2114 = vsel %vm381, %v2010, -inf
      %2115 = vmax.xlane.f32.xlu0 %v2114
      %v2116 = vpop.xlane.xlu0 %2115
      %v2117 = vsel %vm381, %v2011, -inf
      %2118 = vmax.xlane.f32.xlu0 %v2117
      %v2119 = vpop.xlane.xlu0 %2118
      %v2120 = vsel %vm381, %v2012, -inf
      %2121 = vmax.xlane.f32.xlu0 %v2120
      %v2122 = vpop.xlane.xlu0 %2121
      %v2123 = vsel %vm381, %v2013, -inf
      %2124 = vmax.xlane.f32.xlu0 %v2123
      %v2125 = vpop.xlane.xlu0 %2124
      %v2126 = vsel %vm381, %v2014, -inf
      %2127 = vmax.xlane.f32.xlu0 %v2126
      %v2128 = vpop.xlane.xlu0 %2127
      %v2129 = vsel %vm381, %v2015, -inf
      %2130 = vmax.xlane.f32.xlu0 %v2129
      %v2131 = vpop.xlane.xlu0 %2130
      %v2132 = vsel %vm381, %v2016, -inf
      %2133 = vmax.xlane.f32.xlu0 %v2132
      %v2134 = vpop.xlane.xlu0 %2133
      %v2135 = vsel %vm381, %v2017, -inf
      %2136 = vmax.xlane.f32.xlu0 %v2135
      %v2137 = vpop.xlane.xlu0 %2136
      %v2138 = vsel %vm381, %v2018, -inf
      %2139 = vmax.xlane.f32.xlu0 %v2138
      %v2140 = vpop.xlane.xlu0 %2139
      %v2141 = vsel %vm381, %v2019, -inf
      %2142 = vmax.xlane.f32.xlu0 %v2141
      %v2143 = vpop.xlane.xlu0 %2142
      %v2144 = vsel %vm381, %v2020, -inf
      %2145 = vmax.xlane.f32.xlu0 %v2144
      %v2146 = vpop.xlane.xlu0 %2145
      %v2147 = vsel %vm381, %v2021, -inf
      %2148 = vmax.xlane.f32.xlu0 %v2147
      %v2149 = vpop.xlane.xlu0 %2148
      %v2150 = vsel %vm381, %v2022, -inf
      %2151 = vmax.xlane.f32.xlu0 %v2150
      %v2152 = vpop.xlane.xlu0 %2151
      %v2153 = vsel %vm381, %v2023, -inf
      %2154 = vmax.xlane.f32.xlu0 %v2153
      %v2155 = vpop.xlane.xlu0 %2154
      %v2156 = vsel %vm381, %v2024, -inf
      %2157 = vmax.xlane.f32.xlu0 %v2156
      %v2158 = vpop.xlane.xlu0 %2157
      %v2159 = vsel %vm381, %v2025, -inf
      %2160 = vmax.xlane.f32.xlu0 %v2159
      %v2161 = vpop.xlane.xlu0 %2160
      %v2162 = vsel %vm381, %v2026, -inf
      %2163 = vmax.xlane.f32.xlu0 %v2162
      %v2164 = vpop.xlane.xlu0 %2163
      %v2165 = vsel %vm381, %v2027, -inf
      %2166 = vmax.xlane.f32.xlu0 %v2165
      %v2167 = vpop.xlane.xlu0 %2166
      %v2168 = vsel %vm381, %v2028, -inf
      %2169 = vmax.xlane.f32.xlu0 %v2168
      %v2170 = vpop.xlane.xlu0 %2169
      %v2171 = vsel %vm381, %v2029, -inf
      %2172 = vmax.xlane.f32.xlu0 %v2171
      %v2173 = vpop.xlane.xlu0 %2172
      %v2174 = vsel %vm381, %v2030, -inf
      %2175 = vmax.xlane.f32.xlu0 %v2174
      %v2176 = vpop.xlane.xlu0 %2175
      %v2177 = vsel %vm381, %v2031, -inf
      %2178 = vmax.xlane.f32.xlu0 %v2177
      %v2179 = vpop.xlane.xlu0 %2178
      %v2180 = vsel %vm381, %v2032, -inf
      %2181 = vmax.xlane.f32.xlu0 %v2180
      %v2182 = vpop.xlane.xlu0 %2181
      %v2183 = vsel %vm381, %v2033, -inf
      %2184 = vmax.xlane.f32.xlu0 %v2183
      %v2185 = vpop.xlane.xlu0 %2184
      %v2186 = vsel %vm381, %v2034, -inf
      %2187 = vmax.xlane.f32.xlu0 %v2186
      %v2188 = vpop.xlane.xlu0 %2187
      %v2189 = vsel %vm381, %v2035, -inf
      %2190 = vmax.xlane.f32.xlu0 %v2189
      %v2191 = vpop.xlane.xlu0 %2190
      %v2192 = vsel %vm381, %v2036, -inf
      %2193 = vmax.xlane.f32.xlu0 %v2192
      %v2194 = vpop.xlane.xlu0 %2193
      %v2195 = vsel %vm381, %v2037, -inf
      %2196 = vmax.xlane.f32.xlu0 %v2195
      %v2197 = vpop.xlane.xlu0 %2196
      %v2198 = vsel %vm381, %v2038, -inf
      %2199 = vmax.xlane.f32.xlu0 %v2198
      %v2200 = vpop.xlane.xlu0 %2199
      %v2201 = vsel %vm381, %v2039, -inf
      %2202 = vmax.xlane.f32.xlu0 %v2201
      %v2203 = vpop.xlane.xlu0 %2202
      %v2204 = vsel %vm381, %v2040, -inf
      %2205 = vmax.xlane.f32.xlu0 %v2204
      %v2206 = vpop.xlane.xlu0 %2205
      %v2207 = vsel %vm381, %v2041, -inf
      %2208 = vmax.xlane.f32.xlu0 %v2207
      %v2209 = vpop.xlane.xlu0 %2208
      %v2210 = vsel %vm381, %v2042, -inf
      %2211 = vmax.xlane.f32.xlu0 %v2210
      %v2212 = vpop.xlane.xlu0 %2211
      %v2213 = vsel %vm381, %v2043, -inf
      %2214 = vmax.xlane.f32.xlu0 %v2213
      %v2215 = vpop.xlane.xlu0 %2214
      %v2216 = vsel %vm381, %v2044, -inf
      %2217 = vmax.xlane.f32.xlu0 %v2216
      %v2218 = vpop.xlane.xlu0 %2217
      %v2219 = vsel %vm381, %v2045, -inf
      %2220 = vmax.xlane.f32.xlu0 %v2219
      %v2221 = vpop.xlane.xlu0 %2220
      %v2222 = vsel %vm381, %v2046, -inf
      %2223 = vmax.xlane.f32.xlu0 %v2222
      %v2224 = vpop.xlane.xlu0 %2223
      %v2225 = vsel %vm381, %v2047, -inf
      %2226 = vmax.xlane.f32.xlu0 %v2225
      %v2227 = vpop.xlane.xlu0 %2226
      %v2228 = vsel %vm381, %v2048, -inf
      %2229 = vmax.xlane.f32.xlu0 %v2228
      %v2230 = vpop.xlane.xlu0 %2229
      %v2231 = vsel %vm381, %v2049, -inf
      %2232 = vmax.xlane.f32.xlu0 %v2231
      %v2233 = vpop.xlane.xlu0 %2232
      %v2234 = vsel %vm381, %v2050, -inf
      %2235 = vmax.xlane.f32.xlu0 %v2234
      %v2236 = vpop.xlane.xlu0 %2235
      %v2237 = vsel %vm381, %v2051, -inf
      %2238 = vmax.xlane.f32.xlu0 %v2237
      %v2239 = vpop.xlane.xlu0 %2238
      %v2240 = vsel %vm381, %v2052, -inf
      %2241 = vmax.xlane.f32.xlu0 %v2240
      %v2242 = vpop.xlane.xlu0 %2241
      %v2243 = vsel %vm381, %v2053, -inf
      %2244 = vmax.xlane.f32.xlu0 %v2243
      %v2245 = vpop.xlane.xlu0 %2244
      %v2246 = vsub.f32 %v1990, %v2056
      %v2247 = vsub.f32 %v1991, %v2059
      %v2248 = vsub.f32 %v1992, %v2062
      %v2249 = vsub.f32 %v1993, %v2065
      %v2250 = vsub.f32 %v1994, %v2068
      %v2251 = vsub.f32 %v1995, %v2071
      %v2252 = vsub.f32 %v1996, %v2074
      %v2253 = vsub.f32 %v1997, %v2077
      %v2254 = vsub.f32 %v1998, %v2080
      %v2255 = vsub.f32 %v1999, %v2083
      %v2256 = vsub.f32 %v2000, %v2086
      %v2257 = vsub.f32 %v2001, %v2089
      %v2258 = vsub.f32 %v2002, %v2092
      %v2259 = vsub.f32 %v2003, %v2095
      %v2260 = vsub.f32 %v2004, %v2098
      %v2261 = vsub.f32 %v2005, %v2101
      %v2262 = vsub.f32 %v2006, %v2104
      %v2263 = vsub.f32 %v2007, %v2107
      %v2264 = vsub.f32 %v2008, %v2110
      %v2265 = vsub.f32 %v2009, %v2113
      %v2266 = vsub.f32 %v2010, %v2116
      %v2267 = vsub.f32 %v2011, %v2119
      %v2268 = vsub.f32 %v2012, %v2122
      %v2269 = vsub.f32 %v2013, %v2125
      %v2270 = vsub.f32 %v2014, %v2128
      %v2271 = vsub.f32 %v2015, %v2131
      %v2272 = vsub.f32 %v2016, %v2134
      %v2273 = vsub.f32 %v2017, %v2137
      %v2274 = vsub.f32 %v2018, %v2140
      %v2275 = vsub.f32 %v2019, %v2143
      %v2276 = vsub.f32 %v2020, %v2146
      %v2277 = vsub.f32 %v2021, %v2149
      %v2278 = vsub.f32 %v2022, %v2152
      %v2279 = vsub.f32 %v2023, %v2155
      %v2280 = vsub.f32 %v2024, %v2158
      %v2281 = vsub.f32 %v2025, %v2161
      %v2282 = vsub.f32 %v2026, %v2164
      %v2283 = vsub.f32 %v2027, %v2167
      %v2284 = vsub.f32 %v2028, %v2170
      %v2285 = vsub.f32 %v2029, %v2173
      %v2286 = vsub.f32 %v2030, %v2176
      %v2287 = vsub.f32 %v2031, %v2179
      %v2288 = vsub.f32 %v2032, %v2182
      %v2289 = vsub.f32 %v2033, %v2185
      %v2290 = vsub.f32 %v2034, %v2188
      %v2291 = vsub.f32 %v2035, %v2191
      %v2292 = vsub.f32 %v2036, %v2194
      %v2293 = vsub.f32 %v2037, %v2197
      %v2294 = vsub.f32 %v2038, %v2200
      %v2295 = vsub.f32 %v2039, %v2203
      %v2296 = vsub.f32 %v2040, %v2206
      %v2297 = vsub.f32 %v2041, %v2209
      %v2298 = vsub.f32 %v2042, %v2212
      %v2299 = vsub.f32 %v2043, %v2215
      %v2300 = vsub.f32 %v2044, %v2218
      %v2301 = vsub.f32 %v2045, %v2221
      %v2302 = vsub.f32 %v2046, %v2224
      %v2303 = vsub.f32 %v2047, %v2227
      %v2304 = vsub.f32 %v2048, %v2230
      %v2305 = vsub.f32 %v2049, %v2233
      %v2306 = vsub.f32 %v2050, %v2236
      %v2307 = vsub.f32 %v2051, %v2239
      %v2308 = vsub.f32 %v2052, %v2242
      %v2309 = vsub.f32 %v2053, %v2245
      %v2310 = vmul.f32 %v2246, 1.442695
      %v2311 = vpow.pop %v2310
      %v2312 = vmul.f32 %v2247, 1.442695
      %v2313 = vpow.pop %v2312
      %v2314 = vmul.f32 %v2248, 1.442695
      %v2315 = vpow.pop %v2314
      %v2316 = vmul.f32 %v2249, 1.442695
      %v2317 = vpow.pop %v2316
      %v2318 = vmul.f32 %v2250, 1.442695
      %v2319 = vpow.pop %v2318
      %v2320 = vmul.f32 %v2251, 1.442695
      %v2321 = vpow.pop %v2320
      %v2322 = vmul.f32 %v2252, 1.442695
      %v2323 = vpow.pop %v2322
      %v2324 = vmul.f32 %v2253, 1.442695
      %v2325 = vpow.pop %v2324
      %v2326 = vmul.f32 %v2254, 1.442695
      %v2327 = vpow.pop %v2326
      %v2328 = vmul.f32 %v2255, 1.442695
      %v2329 = vpow.pop %v2328
      %v2330 = vmul.f32 %v2256, 1.442695
      %v2331 = vpow.pop %v2330
      %v2332 = vmul.f32 %v2257, 1.442695
      %v2333 = vpow.pop %v2332
      %v2334 = vmul.f32 %v2258, 1.442695
      %v2335 = vpow.pop %v2334
      %v2336 = vmul.f32 %v2259, 1.442695
      %v2337 = vpow.pop %v2336
      %v2338 = vmul.f32 %v2260, 1.442695
      %v2339 = vpow.pop %v2338
      %v2340 = vmul.f32 %v2261, 1.442695
      %v2341 = vpow.pop %v2340
      %v2342 = vmul.f32 %v2262, 1.442695
      %v2343 = vpow.pop %v2342
      %v2344 = vmul.f32 %v2263, 1.442695
      %v2345 = vpow.pop %v2344
      %v2346 = vmul.f32 %v2264, 1.442695
      %v2347 = vpow.pop %v2346
      %v2348 = vmul.f32 %v2265, 1.442695
      %v2349 = vpow.pop %v2348
      %v2350 = vmul.f32 %v2266, 1.442695
      %v2351 = vpow.pop %v2350
      %v2352 = vmul.f32 %v2267, 1.442695
      %v2353 = vpow.pop %v2352
      %v2354 = vmul.f32 %v2268, 1.442695
      %v2355 = vpow.pop %v2354
      %v2356 = vmul.f32 %v2269, 1.442695
      %v2357 = vpow.pop %v2356
      %v2358 = vmul.f32 %v2270, 1.442695
      %v2359 = vpow.pop %v2358
      %v2360 = vmul.f32 %v2271, 1.442695
      %v2361 = vpow.pop %v2360
      %v2362 = vmul.f32 %v2272, 1.442695
      %v2363 = vpow.pop %v2362
      %v2364 = vmul.f32 %v2273, 1.442695
      %v2365 = vpow.pop %v2364
      %v2366 = vmul.f32 %v2274, 1.442695
      %v2367 = vpow.pop %v2366
      %v2368 = vmul.f32 %v2275, 1.442695
      %v2369 = vpow.pop %v2368
      %v2370 = vmul.f32 %v2276, 1.442695
      %v2371 = vpow.pop %v2370
      %v2372 = vmul.f32 %v2277, 1.442695
      %v2373 = vpow.pop %v2372
      %v2374 = vmul.f32 %v2278, 1.442695
      %v2375 = vpow.pop %v2374
      %v2376 = vmul.f32 %v2279, 1.442695
      %v2377 = vpow.pop %v2376
      %v2378 = vmul.f32 %v2280, 1.442695
      %v2379 = vpow.pop %v2378
      %v2380 = vmul.f32 %v2281, 1.442695
      %v2381 = vpow.pop %v2380
      %v2382 = vmul.f32 %v2282, 1.442695
      %v2383 = vpow.pop %v2382
      %v2384 = vmul.f32 %v2283, 1.442695
      %v2385 = vpow.pop %v2384
      %v2386 = vmul.f32 %v2284, 1.442695
      %v2387 = vpow.pop %v2386
      %v2388 = vmul.f32 %v2285, 1.442695
      %v2389 = vpow.pop %v2388
      %v2390 = vmul.f32 %v2286, 1.442695
      %v2391 = vpow.pop %v2390
      %v2392 = vmul.f32 %v2287, 1.442695
      %v2393 = vpow.pop %v2392
      %v2394 = vmul.f32 %v2288, 1.442695
      %v2395 = vpow.pop %v2394
      %v2396 = vmul.f32 %v2289, 1.442695
      %v2397 = vpow.pop %v2396
      %v2398 = vmul.f32 %v2290, 1.442695
      %v2399 = vpow.pop %v2398
      %v2400 = vmul.f32 %v2291, 1.442695
      %v2401 = vpow.pop %v2400
      %v2402 = vmul.f32 %v2292, 1.442695
      %v2403 = vpow.pop %v2402
      %v2404 = vmul.f32 %v2293, 1.442695
      %v2405 = vpow.pop %v2404
      %v2406 = vmul.f32 %v2294, 1.442695
      %v2407 = vpow.pop %v2406
      %v2408 = vmul.f32 %v2295, 1.442695
      %v2409 = vpow.pop %v2408
      %v2410 = vmul.f32 %v2296, 1.442695
      %v2411 = vpow.pop %v2410
      %v2412 = vmul.f32 %v2297, 1.442695
      %v2413 = vpow.pop %v2412
      %v2414 = vmul.f32 %v2298, 1.442695
      %v2415 = vpow.pop %v2414
      %v2416 = vmul.f32 %v2299, 1.442695
      %v2417 = vpow.pop %v2416
      %v2418 = vmul.f32 %v2300, 1.442695
      %v2419 = vpow.pop %v2418
      %v2420 = vmul.f32 %v2301, 1.442695
      %v2421 = vpow.pop %v2420
      %v2422 = vmul.f32 %v2302, 1.442695
      %v2423 = vpow.pop %v2422
      %v2424 = vmul.f32 %v2303, 1.442695
      %v2425 = vpow.pop %v2424
      %v2426 = vmul.f32 %v2304, 1.442695
      %v2427 = vpow.pop %v2426
      %v2428 = vmul.f32 %v2305, 1.442695
      %v2429 = vpow.pop %v2428
      %v2430 = vmul.f32 %v2306, 1.442695
      %v2431 = vpow.pop %v2430
      %v2432 = vmul.f32 %v2307, 1.442695
      %v2433 = vpow.pop %v2432
      %v2434 = vmul.f32 %v2308, 1.442695
      %v2435 = vpow.pop %v2434
      %v2436 = vmul.f32 %v2309, 1.442695
      %v2437 = vpow.pop %v2436
      %v2438 = vsel %vm381, %v2311, 0.0
      %2439 = vadd.xlane.f32.xlu0 %v2438
      %v2440 = vpop.xlane.xlu0 %2439
      %v2441 = vsel %vm381, %v2313, 0.0
      %2442 = vadd.xlane.f32.xlu0 %v2441
      %v2443 = vpop.xlane.xlu0 %2442
      %v2444 = vsel %vm381, %v2315, 0.0
      %2445 = vadd.xlane.f32.xlu0 %v2444
      %v2446 = vpop.xlane.xlu0 %2445
      %v2447 = vsel %vm381, %v2317, 0.0
      %2448 = vadd.xlane.f32.xlu0 %v2447
      %v2449 = vpop.xlane.xlu0 %2448
      %v2450 = vsel %vm381, %v2319, 0.0
      %2451 = vadd.xlane.f32.xlu0 %v2450
      %v2452 = vpop.xlane.xlu0 %2451
      %v2453 = vsel %vm381, %v2321, 0.0
      %2454 = vadd.xlane.f32.xlu0 %v2453
      %v2455 = vpop.xlane.xlu0 %2454
      %v2456 = vsel %vm381, %v2323, 0.0
      %2457 = vadd.xlane.f32.xlu0 %v2456
      %v2458 = vpop.xlane.xlu0 %2457
      %v2459 = vsel %vm381, %v2325, 0.0
      %2460 = vadd.xlane.f32.xlu0 %v2459
      %v2461 = vpop.xlane.xlu0 %2460
      %v2462 = vsel %vm381, %v2327, 0.0
      %2463 = vadd.xlane.f32.xlu0 %v2462
      %v2464 = vpop.xlane.xlu0 %2463
      %v2465 = vsel %vm381, %v2329, 0.0
      %2466 = vadd.xlane.f32.xlu0 %v2465
      %v2467 = vpop.xlane.xlu0 %2466
      %v2468 = vsel %vm381, %v2331, 0.0
      %2469 = vadd.xlane.f32.xlu0 %v2468
      %v2470 = vpop.xlane.xlu0 %2469
      %v2471 = vsel %vm381, %v2333, 0.0
      %2472 = vadd.xlane.f32.xlu0 %v2471
      %v2473 = vpop.xlane.xlu0 %2472
      %v2474 = vsel %vm381, %v2335, 0.0
      %2475 = vadd.xlane.f32.xlu0 %v2474
      %v2476 = vpop.xlane.xlu0 %2475
      %v2477 = vsel %vm381, %v2337, 0.0
      %2478 = vadd.xlane.f32.xlu0 %v2477
      %v2479 = vpop.xlane.xlu0 %2478
      %v2480 = vsel %vm381, %v2339, 0.0
      %2481 = vadd.xlane.f32.xlu0 %v2480
      %v2482 = vpop.xlane.xlu0 %2481
      %v2483 = vsel %vm381, %v2341, 0.0
      %2484 = vadd.xlane.f32.xlu0 %v2483
      %v2485 = vpop.xlane.xlu0 %2484
      %v2486 = vsel %vm381, %v2343, 0.0
      %2487 = vadd.xlane.f32.xlu0 %v2486
      %v2488 = vpop.xlane.xlu0 %2487
      %v2489 = vsel %vm381, %v2345, 0.0
      %2490 = vadd.xlane.f32.xlu0 %v2489
      %v2491 = vpop.xlane.xlu0 %2490
      %v2492 = vsel %vm381, %v2347, 0.0
      %2493 = vadd.xlane.f32.xlu0 %v2492
      %v2494 = vpop.xlane.xlu0 %2493
      %v2495 = vsel %vm381, %v2349, 0.0
      %2496 = vadd.xlane.f32.xlu0 %v2495
      %v2497 = vpop.xlane.xlu0 %2496
      %v2498 = vsel %vm381, %v2351, 0.0
      %2499 = vadd.xlane.f32.xlu0 %v2498
      %v2500 = vpop.xlane.xlu0 %2499
      %v2501 = vsel %vm381, %v2353, 0.0
      %2502 = vadd.xlane.f32.xlu0 %v2501
      %v2503 = vpop.xlane.xlu0 %2502
      %v2504 = vsel %vm381, %v2355, 0.0
      %2505 = vadd.xlane.f32.xlu0 %v2504
      %v2506 = vpop.xlane.xlu0 %2505
      %v2507 = vsel %vm381, %v2357, 0.0
      %2508 = vadd.xlane.f32.xlu0 %v2507
      %v2509 = vpop.xlane.xlu0 %2508
      %v2510 = vsel %vm381, %v2359, 0.0
      %2511 = vadd.xlane.f32.xlu0 %v2510
      %v2512 = vpop.xlane.xlu0 %2511
      %v2513 = vsel %vm381, %v2361, 0.0
      %2514 = vadd.xlane.f32.xlu0 %v2513
      %v2515 = vpop.xlane.xlu0 %2514
      %v2516 = vsel %vm381, %v2363, 0.0
      %2517 = vadd.xlane.f32.xlu0 %v2516
      %v2518 = vpop.xlane.xlu0 %2517
      %v2519 = vsel %vm381, %v2365, 0.0
      %2520 = vadd.xlane.f32.xlu0 %v2519
      %v2521 = vpop.xlane.xlu0 %2520
      %v2522 = vsel %vm381, %v2367, 0.0
      %2523 = vadd.xlane.f32.xlu0 %v2522
      %v2524 = vpop.xlane.xlu0 %2523
      %v2525 = vsel %vm381, %v2369, 0.0
      %2526 = vadd.xlane.f32.xlu0 %v2525
      %v2527 = vpop.xlane.xlu0 %2526
      %v2528 = vsel %vm381, %v2371, 0.0
      %2529 = vadd.xlane.f32.xlu0 %v2528
      %v2530 = vpop.xlane.xlu0 %2529
      %v2531 = vsel %vm381, %v2373, 0.0
      %2532 = vadd.xlane.f32.xlu0 %v2531
      %v2533 = vpop.xlane.xlu0 %2532
      %v2534 = vsel %vm381, %v2375, 0.0
      %2535 = vadd.xlane.f32.xlu0 %v2534
      %v2536 = vpop.xlane.xlu0 %2535
      %v2537 = vsel %vm381, %v2377, 0.0
      %2538 = vadd.xlane.f32.xlu0 %v2537
      %v2539 = vpop.xlane.xlu0 %2538
      %v2540 = vsel %vm381, %v2379, 0.0
      %2541 = vadd.xlane.f32.xlu0 %v2540
      %v2542 = vpop.xlane.xlu0 %2541
      %v2543 = vsel %vm381, %v2381, 0.0
      %2544 = vadd.xlane.f32.xlu0 %v2543
      %v2545 = vpop.xlane.xlu0 %2544
      %v2546 = vsel %vm381, %v2383, 0.0
      %2547 = vadd.xlane.f32.xlu0 %v2546
      %v2548 = vpop.xlane.xlu0 %2547
      %v2549 = vsel %vm381, %v2385, 0.0
      %2550 = vadd.xlane.f32.xlu0 %v2549
      %v2551 = vpop.xlane.xlu0 %2550
      %v2552 = vsel %vm381, %v2387, 0.0
      %2553 = vadd.xlane.f32.xlu0 %v2552
      %v2554 = vpop.xlane.xlu0 %2553
      %v2555 = vsel %vm381, %v2389, 0.0
      %2556 = vadd.xlane.f32.xlu0 %v2555
      %v2557 = vpop.xlane.xlu0 %2556
      %v2558 = vsel %vm381, %v2391, 0.0
      %2559 = vadd.xlane.f32.xlu0 %v2558
      %v2560 = vpop.xlane.xlu0 %2559
      %v2561 = vsel %vm381, %v2393, 0.0
      %2562 = vadd.xlane.f32.xlu0 %v2561
      %v2563 = vpop.xlane.xlu0 %2562
      %v2564 = vsel %vm381, %v2395, 0.0
      %2565 = vadd.xlane.f32.xlu0 %v2564
      %v2566 = vpop.xlane.xlu0 %2565
      %v2567 = vsel %vm381, %v2397, 0.0
      %2568 = vadd.xlane.f32.xlu0 %v2567
      %v2569 = vpop.xlane.xlu0 %2568
      %v2570 = vsel %vm381, %v2399, 0.0
      %2571 = vadd.xlane.f32.xlu0 %v2570
      %v2572 = vpop.xlane.xlu0 %2571
      %v2573 = vsel %vm381, %v2401, 0.0
      %2574 = vadd.xlane.f32.xlu0 %v2573
      %v2575 = vpop.xlane.xlu0 %2574
      %v2576 = vsel %vm381, %v2403, 0.0
      %2577 = vadd.xlane.f32.xlu0 %v2576
      %v2578 = vpop.xlane.xlu0 %2577
      %v2579 = vsel %vm381, %v2405, 0.0
      %2580 = vadd.xlane.f32.xlu0 %v2579
      %v2581 = vpop.xlane.xlu0 %2580
      %v2582 = vsel %vm381, %v2407, 0.0
      %2583 = vadd.xlane.f32.xlu0 %v2582
      %v2584 = vpop.xlane.xlu0 %2583
      %v2585 = vsel %vm381, %v2409, 0.0
      %2586 = vadd.xlane.f32.xlu0 %v2585
      %v2587 = vpop.xlane.xlu0 %2586
      %v2588 = vsel %vm381, %v2411, 0.0
      %2589 = vadd.xlane.f32.xlu0 %v2588
      %v2590 = vpop.xlane.xlu0 %2589
      %v2591 = vsel %vm381, %v2413, 0.0
      %2592 = vadd.xlane.f32.xlu0 %v2591
      %v2593 = vpop.xlane.xlu0 %2592
      %v2594 = vsel %vm381, %v2415, 0.0
      %2595 = vadd.xlane.f32.xlu0 %v2594
      %v2596 = vpop.xlane.xlu0 %2595
      %v2597 = vsel %vm381, %v2417, 0.0
      %2598 = vadd.xlane.f32.xlu0 %v2597
      %v2599 = vpop.xlane.xlu0 %2598
      %v2600 = vsel %vm381, %v2419, 0.0
      %2601 = vadd.xlane.f32.xlu0 %v2600
      %v2602 = vpop.xlane.xlu0 %2601
      %v2603 = vsel %vm381, %v2421, 0.0
      %2604 = vadd.xlane.f32.xlu0 %v2603
      %v2605 = vpop.xlane.xlu0 %2604
      %v2606 = vsel %vm381, %v2423, 0.0
      %2607 = vadd.xlane.f32.xlu0 %v2606
      %v2608 = vpop.xlane.xlu0 %2607
      %v2609 = vsel %vm381, %v2425, 0.0
      %2610 = vadd.xlane.f32.xlu0 %v2609
      %v2611 = vpop.xlane.xlu0 %2610
      %v2612 = vsel %vm381, %v2427, 0.0
      %2613 = vadd.xlane.f32.xlu0 %v2612
      %v2614 = vpop.xlane.xlu0 %2613
      %v2615 = vsel %vm381, %v2429, 0.0
      %2616 = vadd.xlane.f32.xlu0 %v2615
      %v2617 = vpop.xlane.xlu0 %2616
      %v2618 = vsel %vm381, %v2431, 0.0
      %2619 = vadd.xlane.f32.xlu0 %v2618
      %v2620 = vpop.xlane.xlu0 %2619
      %v2621 = vsel %vm381, %v2433, 0.0
      %2622 = vadd.xlane.f32.xlu0 %v2621
      %v2623 = vpop.xlane.xlu0 %2622
      %v2624 = vsel %vm381, %v2435, 0.0
      %2625 = vadd.xlane.f32.xlu0 %v2624
      %v2626 = vpop.xlane.xlu0 %2625
      %v2627 = vsel %vm381, %v2437, 0.0
      %2628 = vadd.xlane.f32.xlu0 %v2627
      %v2629 = vpop.xlane.xlu0 %2628
      %v2630 = vrcp.pop %v2440
      %v2631 = vrcp.pop %v2443
      %v2632 = vrcp.pop %v2446
      %v2633 = vrcp.pop %v2449
      %v2634 = vrcp.pop %v2452
      %v2635 = vrcp.pop %v2455
      %v2636 = vrcp.pop %v2458
      %v2637 = vrcp.pop %v2461
      %v2638 = vrcp.pop %v2464
      %v2639 = vrcp.pop %v2467
      %v2640 = vrcp.pop %v2470
      %v2641 = vrcp.pop %v2473
      %v2642 = vrcp.pop %v2476
      %v2643 = vrcp.pop %v2479
      %v2644 = vrcp.pop %v2482
      %v2645 = vrcp.pop %v2485
      %v2646 = vrcp.pop %v2488
      %v2647 = vrcp.pop %v2491
      %v2648 = vrcp.pop %v2494
      %v2649 = vrcp.pop %v2497
      %v2650 = vrcp.pop %v2500
      %v2651 = vrcp.pop %v2503
      %v2652 = vrcp.pop %v2506
      %v2653 = vrcp.pop %v2509
      %v2654 = vrcp.pop %v2512
      %v2655 = vrcp.pop %v2515
      %v2656 = vrcp.pop %v2518
      %v2657 = vrcp.pop %v2521
      %v2658 = vrcp.pop %v2524
      %v2659 = vrcp.pop %v2527
      %v2660 = vrcp.pop %v2530
      %v2661 = vrcp.pop %v2533
      %v2662 = vrcp.pop %v2536
      %v2663 = vrcp.pop %v2539
      %v2664 = vrcp.pop %v2542
      %v2665 = vrcp.pop %v2545
      %v2666 = vrcp.pop %v2548
      %v2667 = vrcp.pop %v2551
      %v2668 = vrcp.pop %v2554
      %v2669 = vrcp.pop %v2557
      %v2670 = vrcp.pop %v2560
      %v2671 = vrcp.pop %v2563
      %v2672 = vrcp.pop %v2566
      %v2673 = vrcp.pop %v2569
      %v2674 = vrcp.pop %v2572
      %v2675 = vrcp.pop %v2575
      %v2676 = vrcp.pop %v2578
      %v2677 = vrcp.pop %v2581
      %v2678 = vrcp.pop %v2584
      %v2679 = vrcp.pop %v2587
      %v2680 = vrcp.pop %v2590
      %v2681 = vrcp.pop %v2593
      %v2682 = vrcp.pop %v2596
      %v2683 = vrcp.pop %v2599
      %v2684 = vrcp.pop %v2602
      %v2685 = vrcp.pop %v2605
      %v2686 = vrcp.pop %v2608
      %v2687 = vrcp.pop %v2611
      %v2688 = vrcp.pop %v2614
      %v2689 = vrcp.pop %v2617
      %v2690 = vrcp.pop %v2620
      %v2691 = vrcp.pop %v2623
      %v2692 = vrcp.pop %v2626
      %v2693 = vrcp.pop %v2629
      %v2694 = vmul.f32 %v2311, %v2630
      %v2695 = vmul.f32 %v2313, %v2631
      %v2696 = vmul.f32 %v2315, %v2632
      %v2697 = vmul.f32 %v2317, %v2633
      %v2698 = vmul.f32 %v2319, %v2634
      %v2699 = vmul.f32 %v2321, %v2635
      %v2700 = vmul.f32 %v2323, %v2636
      %v2701 = vmul.f32 %v2325, %v2637
      %v2702 = vmul.f32 %v2327, %v2638
      %v2703 = vmul.f32 %v2329, %v2639
      %v2704 = vmul.f32 %v2331, %v2640
      %v2705 = vmul.f32 %v2333, %v2641
      %v2706 = vmul.f32 %v2335, %v2642
      %v2707 = vmul.f32 %v2337, %v2643
      %v2708 = vmul.f32 %v2339, %v2644
      %v2709 = vmul.f32 %v2341, %v2645
      %v2710 = vmul.f32 %v2343, %v2646
      %v2711 = vmul.f32 %v2345, %v2647
      %v2712 = vmul.f32 %v2347, %v2648
      %v2713 = vmul.f32 %v2349, %v2649
      %v2714 = vmul.f32 %v2351, %v2650
      %v2715 = vmul.f32 %v2353, %v2651
      %v2716 = vmul.f32 %v2355, %v2652
      %v2717 = vmul.f32 %v2357, %v2653
      %v2718 = vmul.f32 %v2359, %v2654
      %v2719 = vmul.f32 %v2361, %v2655
      %v2720 = vmul.f32 %v2363, %v2656
      %v2721 = vmul.f32 %v2365, %v2657
      %v2722 = vmul.f32 %v2367, %v2658
      %v2723 = vmul.f32 %v2369, %v2659
      %v2724 = vmul.f32 %v2371, %v2660
      %v2725 = vmul.f32 %v2373, %v2661
      %v2726 = vmul.f32 %v2375, %v2662
      %v2727 = vmul.f32 %v2377, %v2663
      %v2728 = vmul.f32 %v2379, %v2664
      %v2729 = vmul.f32 %v2381, %v2665
      %v2730 = vmul.f32 %v2383, %v2666
      %v2731 = vmul.f32 %v2385, %v2667
      %v2732 = vmul.f32 %v2387, %v2668
      %v2733 = vmul.f32 %v2389, %v2669
      %v2734 = vmul.f32 %v2391, %v2670
      %v2735 = vmul.f32 %v2393, %v2671
      %v2736 = vmul.f32 %v2395, %v2672
      %v2737 = vmul.f32 %v2397, %v2673
      %v2738 = vmul.f32 %v2399, %v2674
      %v2739 = vmul.f32 %v2401, %v2675
      %v2740 = vmul.f32 %v2403, %v2676
      %v2741 = vmul.f32 %v2405, %v2677
      %v2742 = vmul.f32 %v2407, %v2678
      %v2743 = vmul.f32 %v2409, %v2679
      %v2744 = vmul.f32 %v2411, %v2680
      %v2745 = vmul.f32 %v2413, %v2681
      %v2746 = vmul.f32 %v2415, %v2682
      %v2747 = vmul.f32 %v2417, %v2683
      %v2748 = vmul.f32 %v2419, %v2684
      %v2749 = vmul.f32 %v2421, %v2685
      %v2750 = vmul.f32 %v2423, %v2686
      %v2751 = vmul.f32 %v2425, %v2687
      %v2752 = vmul.f32 %v2427, %v2688
      %v2753 = vmul.f32 %v2429, %v2689
      %v2754 = vmul.f32 %v2431, %v2690
      %v2755 = vmul.f32 %v2433, %v2691
      %v2756 = vmul.f32 %v2435, %v2692
      %v2757 = vmul.f32 %v2437, %v2693
      %v2758 = vpack.c.bf16 %v2695, %v2694
      %v2759 = vpack.c.bf16 %v2697, %v2696
      %v2760 = vpack.c.bf16 %v2699, %v2698
      %v2761 = vpack.c.bf16 %v2701, %v2700
      %v2762 = vpack.c.bf16 %v2703, %v2702
      %v2763 = vpack.c.bf16 %v2705, %v2704
      %v2764 = vpack.c.bf16 %v2707, %v2706
      %v2765 = vpack.c.bf16 %v2709, %v2708
      %v2766 = vpack.c.bf16 %v2711, %v2710
      %v2767 = vpack.c.bf16 %v2713, %v2712
      %v2768 = vpack.c.bf16 %v2715, %v2714
      %v2769 = vpack.c.bf16 %v2717, %v2716
      %v2770 = vpack.c.bf16 %v2719, %v2718
      %v2771 = vpack.c.bf16 %v2721, %v2720
      %v2772 = vpack.c.bf16 %v2723, %v2722
      %v2773 = vpack.c.bf16 %v2725, %v2724
      %v2774 = vpack.c.bf16 %v2727, %v2726
      %v2775 = vpack.c.bf16 %v2729, %v2728
      %v2776 = vpack.c.bf16 %v2731, %v2730
      %v2777 = vpack.c.bf16 %v2733, %v2732
      %v2778 = vpack.c.bf16 %v2735, %v2734
      %v2779 = vpack.c.bf16 %v2737, %v2736
      %v2780 = vpack.c.bf16 %v2739, %v2738
      %v2781 = vpack.c.bf16 %v2741, %v2740
      %v2782 = vpack.c.bf16 %v2743, %v2742
      %v2783 = vpack.c.bf16 %v2745, %v2744
      %v2784 = vpack.c.bf16 %v2747, %v2746
      %v2785 = vpack.c.bf16 %v2749, %v2748
      %v2786 = vpack.c.bf16 %v2751, %v2750
      %v2787 = vpack.c.bf16 %v2753, %v2752
      %v2788 = vpack.c.bf16 %v2755, %v2754
      %v2789 = vpack.c.bf16 %v2757, %v2756
      %2790 = vrot.lane.b32.xlu0 %v789, 64
      %v2791 = vpop.permute.xlu0 %2790
      %2792 = vrot.lane.b32.xlu0 %v790, 64
      %v2793 = vpop.permute.xlu0 %2792
      %v2797 = vsel %vm381, %v2758, 0
      %v2800 = vsel %vm381, %v2759, 0
      %2802 = vmatprep.subr.bf16.mxu0 0
      %2803 = vmatpush1.bf16.msra.mxu0 %v2791
      %2804 = vmatprep.subr.bf16.mxu0 0
      %2805 = vmatpush1.bf16.msra.mxu0 %v2793
      %2806 = vmatprep.subr.bf16.mxu0 0
      %2807 = vmatpush1.bf16.msra.mxu0 0
      %2808 = vmatprep.subr.bf16.mxu0 0
      %2809 = vmatpush1.bf16.msra.mxu0 0
      %2810 = vmatprep.subr.bf16.mxu0 0
      %2811 = vmatpush1.bf16.msra.mxu0 0
      %2812 = vmatprep.subr.bf16.mxu0 0
      %2813 = vmatpush1.bf16.msra.mxu0 0
      %2814 = vmatprep.subr.bf16.mxu0 0
      %2815 = vmatpush1.bf16.msra.mxu0 0
      %2816 = vmatprep.subr.bf16.mxu0 0
      %2817 = vmatpush1.bf16.msra.mxu0 0
      %2818 = vmatprep.subr.bf16.mxu0 0
      %2819 = vmatpush1.bf16.msra.mxu0 0
      %2820 = vmatprep.subr.bf16.mxu0 0
      %2821 = vmatpush1.bf16.msra.mxu0 0
      %2822 = vmatprep.subr.bf16.mxu0 0
      %2823 = vmatpush1.bf16.msra.mxu0 0
      %2824 = vmatprep.subr.bf16.mxu0 0
      %2825 = vmatpush1.bf16.msra.mxu0 0
      %2826 = vmatprep.subr.bf16.mxu0 0
      %2827 = vmatpush1.bf16.msra.mxu0 0
      %2828 = vmatprep.subr.bf16.mxu0 0
      %2829 = vmatpush1.bf16.msra.mxu0 0
      %2830 = vmatprep.subr.bf16.mxu0 0
      %2831 = vmatpush1.bf16.msra.mxu0 0
      %2832 = vmatprep.subr.bf16.mxu0 0
      %2833 = vmatpush1.bf16.msra.mxu0 0
      %2834 = vmatprep.mubr.bf16.mxu0 0
      %2835 = vmatmul.mubr.bf16.gmra.mrb[0].mxu0 %v2797
      %v2836 = vpop.f32.mrb[0].mxu0
      %v2837 = vadd.f32 0.0, %v2836
      %v2838 = vpop.f32.mrb[0].mxu0
      %v2839 = vpop.f32.mrb[0].mxu0
      %v2840 = vadd.f32 0.0, %v2839
      %v2841 = vpop.f32.mrb[0].mxu0
      %2842 = vmatprep.mubr.bf16.mxu0 0
      %2843 = vmatmul.mubr.bf16.gmra.mrb[0].mxu0 %v2800
      %v2844 = vpop.f32.mrb[0].mxu0
      %v2845 = vadd.f32 0.0, %v2844
      %v2846 = vpop.f32.mrb[0].mxu0
      %v2847 = vpop.f32.mrb[0].mxu0
      %v2848 = vadd.f32 0.0, %v2847
      %v2849 = vpop.f32.mrb[0].mxu0
      %2850 = vdwg.mxu0
      %2851 = vrot.lane.b32.xlu0 %v791, 64
      %v2852 = vpop.permute.xlu0 %2851
      %2853 = vrot.lane.b32.xlu0 %v792, 64
      %v2854 = vpop.permute.xlu0 %2853
      %v2858 = vsel %vm381, %v2760, 0
      %v2861 = vsel %vm381, %v2761, 0
      %2863 = vmatprep.subr.bf16.mxu0 0
      %2864 = vmatpush1.bf16.msra.mxu0 %v2852
      %2865 = vmatprep.subr.bf16.mxu0 0
      %2866 = vmatpush1.bf16.msra.mxu0 %v2854
      %2867 = vmatprep.subr.bf16.mxu0 0
      %2868 = vmatpush1.bf16.msra.mxu0 0
      %2869 = vmatprep.subr.bf16.mxu0 0
      %2870 = vmatpush1.bf16.msra.mxu0 0
      %2871 = vmatprep.subr.bf16.mxu0 0
      %2872 = vmatpush1.bf16.msra.mxu0 0
      %2873 = vmatprep.subr.bf16.mxu0 0
      %2874 = vmatpush1.bf16.msra.mxu0 0
      %2875 = vmatprep.subr.bf16.mxu0 0
      %2876 = vmatpush1.bf16.msra.mxu0 0
      %2877 = vmatprep.subr.bf16.mxu0 0
      %2878 = vmatpush1.bf16.msra.mxu0 0
      %2879 = vmatprep.subr.bf16.mxu0 0
      %2880 = vmatpush1.bf16.msra.mxu0 0
      %2881 = vmatprep.subr.bf16.mxu0 0
      %2882 = vmatpush1.bf16.msra.mxu0 0
      %2883 = vmatprep.subr.bf16.mxu0 0
      %2884 = vmatpush1.bf16.msra.mxu0 0
      %2885 = vmatprep.subr.bf16.mxu0 0
      %2886 = vmatpush1.bf16.msra.mxu0 0
      %2887 = vmatprep.subr.bf16.mxu0 0
      %2888 = vmatpush1.bf16.msra.mxu0 0
      %2889 = vmatprep.subr.bf16.mxu0 0
      %2890 = vmatpush1.bf16.msra.mxu0 0
      %2891 = vmatprep.subr.bf16.mxu0 0
      %2892 = vmatpush1.bf16.msra.mxu0 0
      %2893 = vmatprep.subr.bf16.mxu0 0
      %2894 = vmatpush1.bf16.msra.mxu0 0
      %2895 = vmatprep.mubr.bf16.mxu0 0
      %2896 = vmatmul.mubr.bf16.gmra.mrb[0].mxu0 %v2858
      %v2897 = vpop.f32.mrb[0].mxu0
      %v2898 = vadd.f32 0.0, %v2897
      %v2899 = vpop.f32.mrb[0].mxu0
      %v2900 = vpop.f32.mrb[0].mxu0
      %v2901 = vadd.f32 0.0, %v2900
      %v2902 = vpop.f32.mrb[0].mxu0
      %2903 = vmatprep.mubr.bf16.mxu0 0
      %2904 = vmatmul.mubr.bf16.gmra.mrb[0].mxu0 %v2861
      %v2905 = vpop.f32.mrb[0].mxu0
      %v2906 = vadd.f32 0.0, %v2905
      %v2907 = vpop.f32.mrb[0].mxu0
      %v2908 = vpop.f32.mrb[0].mxu0
      %v2909 = vadd.f32 0.0, %v2908
      %v2910 = vpop.f32.mrb[0].mxu0
      %2911 = vdwg.mxu0
      %2912 = vrot.lane.b32.xlu0 %v793, 64
      %v2913 = vpop.permute.xlu0 %2912
      %2914 = vrot.lane.b32.xlu0 %v794, 64
      %v2915 = vpop.permute.xlu0 %2914
      %v2919 = vsel %vm381, %v2762, 0
      %v2922 = vsel %vm381, %v2763, 0
      %2924 = vmatprep.subr.bf16.mxu0 0
      %2925 = vmatpush1.bf16.msra.mxu0 %v2913
      %2926 = vmatprep.subr.bf16.mxu0 0
      %2927 = vmatpush1.bf16.msra.mxu0 %v2915
      %2928 = vmatprep.subr.bf16.mxu0 0
      %2929 = vmatpush1.bf16.msra.mxu0 0
      %2930 = vmatprep.subr.bf16.mxu0 0
      %2931 = vmatpush1.bf16.msra.mxu0 0
      %2932 = vmatprep.subr.bf16.mxu0 0
      %2933 = vmatpush1.bf16.msra.mxu0 0
      %2934 = vmatprep.subr.bf16.mxu0 0
      %2935 = vmatpush1.bf16.msra.mxu0 0
      %2936 = vmatprep.subr.bf16.mxu0 0
      %2937 = vmatpush1.bf16.msra.mxu0 0
      %2938 = vmatprep.subr.bf16.mxu0 0
      %2939 = vmatpush1.bf16.msra.mxu0 0
      %2940 = vmatprep.subr.bf16.mxu0 0
      %2941 = vmatpush1.bf16.msra.mxu0 0
      %2942 = vmatprep.subr.bf16.mxu0 0
      %2943 = vmatpush1.bf16.msra.mxu0 0
      %2944 = vmatprep.subr.bf16.mxu0 0
      %2945 = vmatpush1.bf16.msra.mxu0 0
      %2946 = vmatprep.subr.bf16.mxu0 0
      %2947 = vmatpush1.bf16.msra.mxu0 0
      %2948 = vmatprep.subr.bf16.mxu0 0
      %2949 = vmatpush1.bf16.msra.mxu0 0
      %2950 = vmatprep.subr.bf16.mxu0 0
      %2951 = vmatpush1.bf16.msra.mxu0 0
      %2952 = vmatprep.subr.bf16.mxu0 0
      %2953 = vmatpush1.bf16.msra.mxu0 0
      %2954 = vmatprep.subr.bf16.mxu0 0
      %2955 = vmatpush1.bf16.msra.mxu0 0
      %2956 = vmatprep.mubr.bf16.mxu0 0
      %2957 = vmatmul.mubr.bf16.gmra.mrb[0].mxu0 %v2919
      %v2958 = vpop.f32.mrb[0].mxu0
      %v2959 = vadd.f32 0.0, %v2958
      %v2960 = vpop.f32.mrb[0].mxu0
      %v2961 = vpop.f32.mrb[0].mxu0
      %v2962 = vadd.f32 0.0, %v2961
      %v2963 = vpop.f32.mrb[0].mxu0
      %2964 = vmatprep.mubr.bf16.mxu0 0
      %2965 = vmatmul.mubr.bf16.gmra.mrb[0].mxu0 %v2922
      %v2966 = vpop.f32.mrb[0].mxu0
      %v2967 = vadd.f32 0.0, %v2966
      %v2968 = vpop.f32.mrb[0].mxu0
      %v2969 = vpop.f32.mrb[0].mxu0
      %v2970 = vadd.f32 0.0, %v2969
      %v2971 = vpop.f32.mrb[0].mxu0
      %2972 = vdwg.mxu0
      %2973 = vrot.lane.b32.xlu0 %v795, 64
      %v2974 = vpop.permute.xlu0 %2973
      %2975 = vrot.lane.b32.xlu0 %v796, 64
      %v2976 = vpop.permute.xlu0 %2975
      %v2980 = vsel %vm381, %v2764, 0
      %v2983 = vsel %vm381, %v2765, 0
      %2985 = vmatprep.subr.bf16.mxu0 0
      %2986 = vmatpush1.bf16.msra.mxu0 %v2974
      %2987 = vmatprep.subr.bf16.mxu0 0
      %2988 = vmatpush1.bf16.msra.mxu0 %v2976
      %2989 = vmatprep.subr.bf16.mxu0 0
      %2990 = vmatpush1.bf16.msra.mxu0 0
      %2991 = vmatprep.subr.bf16.mxu0 0
      %2992 = vmatpush1.bf16.msra.mxu0 0
      %2993 = vmatprep.subr.bf16.mxu0 0
      %2994 = vmatpush1.bf16.msra.mxu0 0
      %2995 = vmatprep.subr.bf16.mxu0 0
      %2996 = vmatpush1.bf16.msra.mxu0 0
      %2997 = vmatprep.subr.bf16.mxu0 0
      %2998 = vmatpush1.bf16.msra.mxu0 0
      %2999 = vmatprep.subr.bf16.mxu0 0
      %3000 = vmatpush1.bf16.msra.mxu0 0
      %3001 = vmatprep.subr.bf16.mxu0 0
      %3002 = vmatpush1.bf16.msra.mxu0 0
      %3003 = vmatprep.subr.bf16.mxu0 0
      %3004 = vmatpush1.bf16.msra.mxu0 0
      %3005 = vmatprep.subr.bf16.mxu0 0
      %3006 = vmatpush1.bf16.msra.mxu0 0
      %3007 = vmatprep.subr.bf16.mxu0 0
      %3008 = vmatpush1.bf16.msra.mxu0 0
      %3009 = vmatprep.subr.bf16.mxu0 0
      %3010 = vmatpush1.bf16.msra.mxu0 0
      %3011 = vmatprep.subr.bf16.mxu0 0
      %3012 = vmatpush1.bf16.msra.mxu0 0
      %3013 = vmatprep.subr.bf16.mxu0 0
      %3014 = vmatpush1.bf16.msra.mxu0 0
      %3015 = vmatprep.subr.bf16.mxu0 0
      %3016 = vmatpush1.bf16.msra.mxu0 0
      %3017 = vmatprep.mubr.bf16.mxu0 0
      %3018 = vmatmul.mubr.bf16.gmra.mrb[0].mxu0 %v2980
      %v3019 = vpop.f32.mrb[0].mxu0
      %v3020 = vadd.f32 0.0, %v3019
      %v3021 = vpop.f32.mrb[0].mxu0
      %v3022 = vpop.f32.mrb[0].mxu0
      %v3023 = vadd.f32 0.0, %v3022
      %v3024 = vpop.f32.mrb[0].mxu0
      %3025 = vmatprep.mubr.bf16.mxu0 0
      %3026 = vmatmul.mubr.bf16.gmra.mrb[0].mxu0 %v2983
      %v3027 = vpop.f32.mrb[0].mxu0
      %v3028 = vadd.f32 0.0, %v3027
      %v3029 = vpop.f32.mrb[0].mxu0
      %v3030 = vpop.f32.mrb[0].mxu0
      %v3031 = vadd.f32 0.0, %v3030
      %v3032 = vpop.f32.mrb[0].mxu0
      %3033 = vdwg.mxu0
      %3034 = vrot.lane.b32.xlu0 %v806, 64
      %v3035 = vpop.permute.xlu0 %3034
      %3036 = vrot.lane.b32.xlu0 %v808, 64
      %v3037 = vpop.permute.xlu0 %3036
      %v3041 = vsel %vm381, %v2766, 0
      %v3044 = vsel %vm381, %v2767, 0
      %3046 = vmatprep.subr.bf16.mxu0 0
      %3047 = vmatpush1.bf16.msra.mxu0 %v3035
      %3048 = vmatprep.subr.bf16.mxu0 0
      %3049 = vmatpush1.bf16.msra.mxu0 %v3037
      %3050 = vmatprep.subr.bf16.mxu0 0
      %3051 = vmatpush1.bf16.msra.mxu0 0
      %3052 = vmatprep.subr.bf16.mxu0 0
      %3053 = vmatpush1.bf16.msra.mxu0 0
      %3054 = vmatprep.subr.bf16.mxu0 0
      %3055 = vmatpush1.bf16.msra.mxu0 0
      %3056 = vmatprep.subr.bf16.mxu0 0
      %3057 = vmatpush1.bf16.msra.mxu0 0
      %3058 = vmatprep.subr.bf16.mxu0 0
      %3059 = vmatpush1.bf16.msra.mxu0 0
      %3060 = vmatprep.subr.bf16.mxu0 0
      %3061 = vmatpush1.bf16.msra.mxu0 0
      %3062 = vmatprep.subr.bf16.mxu0 0
      %3063 = vmatpush1.bf16.msra.mxu0 0
      %3064 = vmatprep.subr.bf16.mxu0 0
      %3065 = vmatpush1.bf16.msra.mxu0 0
      %3066 = vmatprep.subr.bf16.mxu0 0
      %3067 = vmatpush1.bf16.msra.mxu0 0
      %3068 = vmatprep.subr.bf16.mxu0 0
      %3069 = vmatpush1.bf16.msra.mxu0 0
      %3070 = vmatprep.subr.bf16.mxu0 0
      %3071 = vmatpush1.bf16.msra.mxu0 0
      %3072 = vmatprep.subr.bf16.mxu0 0
      %3073 = vmatpush1.bf16.msra.mxu0 0
      %3074 = vmatprep.subr.bf16.mxu0 0
      %3075 = vmatpush1.bf16.msra.mxu0 0
      %3076 = vmatprep.subr.bf16.mxu0 0
      %3077 = vmatpush1.bf16.msra.mxu0 0
      %3078 = vmatprep.mubr.bf16.mxu0 0
      %3079 = vmatmul.mubr.bf16.gmra.mrb[0].mxu0 %v3041
      %v3080 = vpop.f32.mrb[0].mxu0
      %v3081 = vadd.f32 0.0, %v3080
      %v3082 = vpop.f32.mrb[0].mxu0
      %v3083 = vpop.f32.mrb[0].mxu0
      %v3084 = vadd.f32 0.0, %v3083
      %v3085 = vpop.f32.mrb[0].mxu0
      %3086 = vmatprep.mubr.bf16.mxu0 0
      %3087 = vmatmul.mubr.bf16.gmra.mrb[0].mxu0 %v3044
      %v3088 = vpop.f32.mrb[0].mxu0
      %v3089 = vadd.f32 0.0, %v3088
      %v3090 = vpop.f32.mrb[0].mxu0
      %v3091 = vpop.f32.mrb[0].mxu0
      %v3092 = vadd.f32 0.0, %v3091
      %v3093 = vpop.f32.mrb[0].mxu0
      %3094 = vdwg.mxu0
      %3095 = vrot.lane.b32.xlu0 %v810, 64
      %v3096 = vpop.permute.xlu0 %3095
      %3097 = vrot.lane.b32.xlu0 %v812, 64
      %v3098 = vpop.permute.xlu0 %3097
      %v3102 = vsel %vm381, %v2768, 0
      %v3105 = vsel %vm381, %v2769, 0
      %3107 = vmatprep.subr.bf16.mxu0 0
      %3108 = vmatpush1.bf16.msra.mxu0 %v3096
      %3109 = vmatprep.subr.bf16.mxu0 0
      %3110 = vmatpush1.bf16.msra.mxu0 %v3098
      %3111 = vmatprep.subr.bf16.mxu0 0
      %3112 = vmatpush1.bf16.msra.mxu0 0
      %3113 = vmatprep.subr.bf16.mxu0 0
      %3114 = vmatpush1.bf16.msra.mxu0 0
      %3115 = vmatprep.subr.bf16.mxu0 0
      %3116 = vmatpush1.bf16.msra.mxu0 0
      %3117 = vmatprep.subr.bf16.mxu0 0
      %3118 = vmatpush1.bf16.msra.mxu0 0
      %3119 = vmatprep.subr.bf16.mxu0 0
      %3120 = vmatpush1.bf16.msra.mxu0 0
      %3121 = vmatprep.subr.bf16.mxu0 0
      %3122 = vmatpush1.bf16.msra.mxu0 0
      %3123 = vmatprep.subr.bf16.mxu0 0
      %3124 = vmatpush1.bf16.msra.mxu0 0
      %3125 = vmatprep.subr.bf16.mxu0 0
      %3126 = vmatpush1.bf16.msra.mxu0 0
      %3127 = vmatprep.subr.bf16.mxu0 0
      %3128 = vmatpush1.bf16.msra.mxu0 0
      %3129 = vmatprep.subr.bf16.mxu0 0
      %3130 = vmatpush1.bf16.msra.mxu0 0
      %3131 = vmatprep.subr.bf16.mxu0 0
      %3132 = vmatpush1.bf16.msra.mxu0 0
      %3133 = vmatprep.subr.bf16.mxu0 0
      %3134 = vmatpush1.bf16.msra.mxu0 0
      %3135 = vmatprep.subr.bf16.mxu0 0
      %3136 = vmatpush1.bf16.msra.mxu0 0
      %3137 = vmatprep.subr.bf16.mxu0 0
      %3138 = vmatpush1.bf16.msra.mxu0 0
      %3139 = vmatprep.mubr.bf16.mxu0 0
      %3140 = vmatmul.mubr.bf16.gmra.mrb[0].mxu0 %v3102
      %v3141 = vpop.f32.mrb[0].mxu0
      %v3142 = vadd.f32 0.0, %v3141
      %v3143 = vpop.f32.mrb[0].mxu0
      %v3144 = vpop.f32.mrb[0].mxu0
      %v3145 = vadd.f32 0.0, %v3144
      %v3146 = vpop.f32.mrb[0].mxu0
      %3147 = vmatprep.mubr.bf16.mxu0 0
      %3148 = vmatmul.mubr.bf16.gmra.mrb[0].mxu0 %v3105
      %v3149 = vpop.f32.mrb[0].mxu0
      %v3150 = vadd.f32 0.0, %v3149
      %v3151 = vpop.f32.mrb[0].mxu0
      %v3152 = vpop.f32.mrb[0].mxu0
      %v3153 = vadd.f32 0.0, %v3152
      %v3154 = vpop.f32.mrb[0].mxu0
      %3155 = vdwg.mxu0
      %3156 = vrot.lane.b32.xlu0 %v814, 64
      %v3157 = vpop.permute.xlu0 %3156
      %3158 = vrot.lane.b32.xlu0 %v816, 64
      %v3159 = vpop.permute.xlu0 %3158
      %v3163 = vsel %vm381, %v2770, 0
      %v3166 = vsel %vm381, %v2771, 0
      %3168 = vmatprep.subr.bf16.mxu0 0
      %3169 = vmatpush1.bf16.msra.mxu0 %v3157
      %3170 = vmatprep.subr.bf16.mxu0 0
      %3171 = vmatpush1.bf16.msra.mxu0 %v3159
      %3172 = vmatprep.subr.bf16.mxu0 0
      %3173 = vmatpush1.bf16.msra.mxu0 0
      %3174 = vmatprep.subr.bf16.mxu0 0
      %3175 = vmatpush1.bf16.msra.mxu0 0
      %3176 = vmatprep.subr.bf16.mxu0 0
      %3177 = vmatpush1.bf16.msra.mxu0 0
      %3178 = vmatprep.subr.bf16.mxu0 0
      %3179 = vmatpush1.bf16.msra.mxu0 0
      %3180 = vmatprep.subr.bf16.mxu0 0
      %3181 = vmatpush1.bf16.msra.mxu0 0
      %3182 = vmatprep.subr.bf16.mxu0 0
      %3183 = vmatpush1.bf16.msra.mxu0 0
      %3184 = vmatprep.subr.bf16.mxu0 0
      %3185 = vmatpush1.bf16.msra.mxu0 0
      %3186 = vmatprep.subr.bf16.mxu0 0
      %3187 = vmatpush1.bf16.msra.mxu0 0
      %3188 = vmatprep.subr.bf16.mxu0 0
      %3189 = vmatpush1.bf16.msra.mxu0 0
      %3190 = vmatprep.subr.bf16.mxu0 0
      %3191 = vmatpush1.bf16.msra.mxu0 0
      %3192 = vmatprep.subr.bf16.mxu0 0
      %3193 = vmatpush1.bf16.msra.mxu0 0
      %3194 = vmatprep.subr.bf16.mxu0 0
      %3195 = vmatpush1.bf16.msra.mxu0 0
      %3196 = vmatprep.subr.bf16.mxu0 0
      %3197 = vmatpush1.bf16.msra.mxu0 0
      %3198 = vmatprep.subr.bf16.mxu0 0
      %3199 = vmatpush1.bf16.msra.mxu0 0
      %3200 = vmatprep.mubr.bf16.mxu0 0
      %3201 = vmatmul.mubr.bf16.gmra.mrb[0].mxu0 %v3163
      %v3202 = vpop.f32.mrb[0].mxu0
      %v3203 = vadd.f32 0.0, %v3202
      %v3204 = vpop.f32.mrb[0].mxu0
      %v3205 = vpop.f32.mrb[0].mxu0
      %v3206 = vadd.f32 0.0, %v3205
      %v3207 = vpop.f32.mrb[0].mxu0
      %3208 = vmatprep.mubr.bf16.mxu0 0
      %3209 = vmatmul.mubr.bf16.gmra.mrb[0].mxu0 %v3166
      %v3210 = vpop.f32.mrb[0].mxu0
      %v3211 = vadd.f32 0.0, %v3210
      %v3212 = vpop.f32.mrb[0].mxu0
      %v3213 = vpop.f32.mrb[0].mxu0
      %v3214 = vadd.f32 0.0, %v3213
      %v3215 = vpop.f32.mrb[0].mxu0
      %3216 = vdwg.mxu0
      %3217 = vrot.lane.b32.xlu0 %v818, 64
      %v3218 = vpop.permute.xlu0 %3217
      %3219 = vrot.lane.b32.xlu0 %v820, 64
      %v3220 = vpop.permute.xlu0 %3219
      %v3224 = vsel %vm381, %v2772, 0
      %v3227 = vsel %vm381, %v2773, 0
      %3229 = vmatprep.subr.bf16.mxu0 0
      %3230 = vmatpush1.bf16.msra.mxu0 %v3218
      %3231 = vmatprep.subr.bf16.mxu0 0
      %3232 = vmatpush1.bf16.msra.mxu0 %v3220
      %3233 = vmatprep.subr.bf16.mxu0 0
      %3234 = vmatpush1.bf16.msra.mxu0 0
      %3235 = vmatprep.subr.bf16.mxu0 0
      %3236 = vmatpush1.bf16.msra.mxu0 0
      %3237 = vmatprep.subr.bf16.mxu0 0
      %3238 = vmatpush1.bf16.msra.mxu0 0
      %3239 = vmatprep.subr.bf16.mxu0 0
      %3240 = vmatpush1.bf16.msra.mxu0 0
      %3241 = vmatprep.subr.bf16.mxu0 0
      %3242 = vmatpush1.bf16.msra.mxu0 0
      %3243 = vmatprep.subr.bf16.mxu0 0
      %3244 = vmatpush1.bf16.msra.mxu0 0
      %3245 = vmatprep.subr.bf16.mxu0 0
      %3246 = vmatpush1.bf16.msra.mxu0 0
      %3247 = vmatprep.subr.bf16.mxu0 0
      %3248 = vmatpush1.bf16.msra.mxu0 0
      %3249 = vmatprep.subr.bf16.mxu0 0
      %3250 = vmatpush1.bf16.msra.mxu0 0
      %3251 = vmatprep.subr.bf16.mxu0 0
      %3252 = vmatpush1.bf16.msra.mxu0 0
      %3253 = vmatprep.subr.bf16.mxu0 0
      %3254 = vmatpush1.bf16.msra.mxu0 0
      %3255 = vmatprep.subr.bf16.mxu0 0
      %3256 = vmatpush1.bf16.msra.mxu0 0
      %3257 = vmatprep.subr.bf16.mxu0 0
      %3258 = vmatpush1.bf16.msra.mxu0 0
      %3259 = vmatprep.subr.bf16.mxu0 0
      %3260 = vmatpush1.bf16.msra.mxu0 0
      %3261 = vmatprep.mubr.bf16.mxu0 0
      %3262 = vmatmul.mubr.bf16.gmra.mrb[0].mxu0 %v3224
      %v3263 = vpop.f32.mrb[0].mxu0
      %v3264 = vadd.f32 0.0, %v3263
      %v3265 = vpop.f32.mrb[0].mxu0
      %v3266 = vpop.f32.mrb[0].mxu0
      %v3267 = vadd.f32 0.0, %v3266
      %v3268 = vpop.f32.mrb[0].mxu0
      %3269 = vmatprep.mubr.bf16.mxu0 0
      %3270 = vmatmul.mubr.bf16.gmra.mrb[0].mxu0 %v3227
      %v3271 = vpop.f32.mrb[0].mxu0
      %v3272 = vadd.f32 0.0, %v3271
      %v3273 = vpop.f32.mrb[0].mxu0
      %v3274 = vpop.f32.mrb[0].mxu0
      %v3275 = vadd.f32 0.0, %v3274
      %v3276 = vpop.f32.mrb[0].mxu0
      %3277 = vdwg.mxu0
      %3278 = vrot.lane.b32.xlu0 %v822, 64
      %v3279 = vpop.permute.xlu0 %3278
      %3280 = vrot.lane.b32.xlu0 %v824, 64
      %v3281 = vpop.permute.xlu0 %3280
      %v3285 = vsel %vm381, %v2774, 0
      %v3288 = vsel %vm381, %v2775, 0
      %3290 = vmatprep.subr.bf16.mxu0 0
      %3291 = vmatpush1.bf16.msra.mxu0 %v3279
      %3292 = vmatprep.subr.bf16.mxu0 0
      %3293 = vmatpush1.bf16.msra.mxu0 %v3281
      %3294 = vmatprep.subr.bf16.mxu0 0
      %3295 = vmatpush1.bf16.msra.mxu0 0
      %3296 = vmatprep.subr.bf16.mxu0 0
      %3297 = vmatpush1.bf16.msra.mxu0 0
      %3298 = vmatprep.subr.bf16.mxu0 0
      %3299 = vmatpush1.bf16.msra.mxu0 0
      %3300 = vmatprep.subr.bf16.mxu0 0
      %3301 = vmatpush1.bf16.msra.mxu0 0
      %3302 = vmatprep.subr.bf16.mxu0 0
      %3303 = vmatpush1.bf16.msra.mxu0 0
      %3304 = vmatprep.subr.bf16.mxu0 0
      %3305 = vmatpush1.bf16.msra.mxu0 0
      %3306 = vmatprep.subr.bf16.mxu0 0
      %3307 = vmatpush1.bf16.msra.mxu0 0
      %3308 = vmatprep.subr.bf16.mxu0 0
      %3309 = vmatpush1.bf16.msra.mxu0 0
      %3310 = vmatprep.subr.bf16.mxu0 0
      %3311 = vmatpush1.bf16.msra.mxu0 0
      %3312 = vmatprep.subr.bf16.mxu0 0
      %3313 = vmatpush1.bf16.msra.mxu0 0
      %3314 = vmatprep.subr.bf16.mxu0 0
      %3315 = vmatpush1.bf16.msra.mxu0 0
      %3316 = vmatprep.subr.bf16.mxu0 0
      %3317 = vmatpush1.bf16.msra.mxu0 0
      %3318 = vmatprep.subr.bf16.mxu0 0
      %3319 = vmatpush1.bf16.msra.mxu0 0
      %3320 = vmatprep.subr.bf16.mxu0 0
      %3321 = vmatpush1.bf16.msra.mxu0 0
      %3322 = vmatprep.mubr.bf16.mxu0 0
      %3323 = vmatmul.mubr.bf16.gmra.mrb[0].mxu0 %v3285
      %v3324 = vpop.f32.mrb[0].mxu0
      %v3325 = vadd.f32 0.0, %v3324
      %v3326 = vpop.f32.mrb[0].mxu0
      %v3327 = vpop.f32.mrb[0].mxu0
      %v3328 = vadd.f32 0.0, %v3327
      %v3329 = vpop.f32.mrb[0].mxu0
      %3330 = vmatprep.mubr.bf16.mxu0 0
      %3331 = vmatmul.mubr.bf16.gmra.mrb[0].mxu0 %v3288
      %v3332 = vpop.f32.mrb[0].mxu0
      %v3333 = vadd.f32 0.0, %v3332
      %v3334 = vpop.f32.mrb[0].mxu0
      %v3335 = vpop.f32.mrb[0].mxu0
      %v3336 = vadd.f32 0.0, %v3335
      %v3337 = vpop.f32.mrb[0].mxu0
      %3338 = vdwg.mxu0
      %3339 = vrot.lane.b32.xlu0 %v826, 64
      %v3340 = vpop.permute.xlu0 %3339
      %3341 = vrot.lane.b32.xlu0 %v828, 64
      %v3342 = vpop.permute.xlu0 %3341
      %v3346 = vsel %vm381, %v2776, 0
      %v3349 = vsel %vm381, %v2777, 0
      %3351 = vmatprep.subr.bf16.mxu0 0
      %3352 = vmatpush1.bf16.msra.mxu0 %v3340
      %3353 = vmatprep.subr.bf16.mxu0 0
      %3354 = vmatpush1.bf16.msra.mxu0 %v3342
      %3355 = vmatprep.subr.bf16.mxu0 0
      %3356 = vmatpush1.bf16.msra.mxu0 0
      %3357 = vmatprep.subr.bf16.mxu0 0
      %3358 = vmatpush1.bf16.msra.mxu0 0
      %3359 = vmatprep.subr.bf16.mxu0 0
      %3360 = vmatpush1.bf16.msra.mxu0 0
      %3361 = vmatprep.subr.bf16.mxu0 0
      %3362 = vmatpush1.bf16.msra.mxu0 0
      %3363 = vmatprep.subr.bf16.mxu0 0
      %3364 = vmatpush1.bf16.msra.mxu0 0
      %3365 = vmatprep.subr.bf16.mxu0 0
      %3366 = vmatpush1.bf16.msra.mxu0 0
      %3367 = vmatprep.subr.bf16.mxu0 0
      %3368 = vmatpush1.bf16.msra.mxu0 0
      %3369 = vmatprep.subr.bf16.mxu0 0
      %3370 = vmatpush1.bf16.msra.mxu0 0
      %3371 = vmatprep.subr.bf16.mxu0 0
      %3372 = vmatpush1.bf16.msra.mxu0 0
      %3373 = vmatprep.subr.bf16.mxu0 0
      %3374 = vmatpush1.bf16.msra.mxu0 0
      %3375 = vmatprep.subr.bf16.mxu0 0
      %3376 = vmatpush1.bf16.msra.mxu0 0
      %3377 = vmatprep.subr.bf16.mxu0 0
      %3378 = vmatpush1.bf16.msra.mxu0 0
      %3379 = vmatprep.subr.bf16.mxu0 0
      %3380 = vmatpush1.bf16.msra.mxu0 0
      %3381 = vmatprep.subr.bf16.mxu0 0
      %3382 = vmatpush1.bf16.msra.mxu0 0
      %3383 = vmatprep.mubr.bf16.mxu0 0
      %3384 = vmatmul.mubr.bf16.gmra.mrb[0].mxu0 %v3346
      %v3385 = vpop.f32.mrb[0].mxu0
      %v3386 = vadd.f32 0.0, %v3385
      %v3387 = vpop.f32.mrb[0].mxu0
      %v3388 = vpop.f32.mrb[0].mxu0
      %v3389 = vadd.f32 0.0, %v3388
      %v3390 = vpop.f32.mrb[0].mxu0
      %3391 = vmatprep.mubr.bf16.mxu0 0
      %3392 = vmatmul.mubr.bf16.gmra.mrb[0].mxu0 %v3349
      %v3393 = vpop.f32.mrb[0].mxu0
      %v3394 = vadd.f32 0.0, %v3393
      %v3395 = vpop.f32.mrb[0].mxu0
      %v3396 = vpop.f32.mrb[0].mxu0
      %v3397 = vadd.f32 0.0, %v3396
      %v3398 = vpop.f32.mrb[0].mxu0
      %3399 = vdwg.mxu0
      %3400 = vrot.lane.b32.xlu0 %v830, 64
      %v3401 = vpop.permute.xlu0 %3400
      %3402 = vrot.lane.b32.xlu0 %v832, 64
      %v3403 = vpop.permute.xlu0 %3402
      %v3407 = vsel %vm381, %v2778, 0
      %v3410 = vsel %vm381, %v2779, 0
      %3412 = vmatprep.subr.bf16.mxu0 0
      %3413 = vmatpush1.bf16.msra.mxu0 %v3401
      %3414 = vmatprep.subr.bf16.mxu0 0
      %3415 = vmatpush1.bf16.msra.mxu0 %v3403
      %3416 = vmatprep.subr.bf16.mxu0 0
      %3417 = vmatpush1.bf16.msra.mxu0 0
      %3418 = vmatprep.subr.bf16.mxu0 0
      %3419 = vmatpush1.bf16.msra.mxu0 0
      %3420 = vmatprep.subr.bf16.mxu0 0
      %3421 = vmatpush1.bf16.msra.mxu0 0
      %3422 = vmatprep.subr.bf16.mxu0 0
      %3423 = vmatpush1.bf16.msra.mxu0 0
      %3424 = vmatprep.subr.bf16.mxu0 0
      %3425 = vmatpush1.bf16.msra.mxu0 0
      %3426 = vmatprep.subr.bf16.mxu0 0
      %3427 = vmatpush1.bf16.msra.mxu0 0
      %3428 = vmatprep.subr.bf16.mxu0 0
      %3429 = vmatpush1.bf16.msra.mxu0 0
      %3430 = vmatprep.subr.bf16.mxu0 0
      %3431 = vmatpush1.bf16.msra.mxu0 0
      %3432 = vmatprep.subr.bf16.mxu0 0
      %3433 = vmatpush1.bf16.msra.mxu0 0
      %3434 = vmatprep.subr.bf16.mxu0 0
      %3435 = vmatpush1.bf16.msra.mxu0 0
      %3436 = vmatprep.subr.bf16.mxu0 0
      %3437 = vmatpush1.bf16.msra.mxu0 0
      %3438 = vmatprep.subr.bf16.mxu0 0
      %3439 = vmatpush1.bf16.msra.mxu0 0
      %3440 = vmatprep.subr.bf16.mxu0 0
      %3441 = vmatpush1.bf16.msra.mxu0 0
      %3442 = vmatprep.subr.bf16.mxu0 0
      %3443 = vmatpush1.bf16.msra.mxu0 0
      %3444 = vmatprep.mubr.bf16.mxu0 0
      %3445 = vmatmul.mubr.bf16.gmra.mrb[0].mxu0 %v3407
      %v3446 = vpop.f32.mrb[0].mxu0
      %v3447 = vadd.f32 0.0, %v3446
      %v3448 = vpop.f32.mrb[0].mxu0
      %v3449 = vpop.f32.mrb[0].mxu0
      %v3450 = vadd.f32 0.0, %v3449
      %v3451 = vpop.f32.mrb[0].mxu0
      %3452 = vmatprep.mubr.bf16.mxu0 0
      %3453 = vmatmul.mubr.bf16.gmra.mrb[0].mxu0 %v3410
      %v3454 = vpop.f32.mrb[0].mxu0
      %v3455 = vadd.f32 0.0, %v3454
      %v3456 = vpop.f32.mrb[0].mxu0
      %v3457 = vpop.f32.mrb[0].mxu0
      %v3458 = vadd.f32 0.0, %v3457
      %v3459 = vpop.f32.mrb[0].mxu0
      %3460 = vdwg.mxu0
      %3461 = vrot.lane.b32.xlu0 %v834, 64
      %v3462 = vpop.permute.xlu0 %3461
      %3463 = vrot.lane.b32.xlu0 %v836, 64
      %v3464 = vpop.permute.xlu0 %3463
      %v3468 = vsel %vm381, %v2780, 0
      %v3471 = vsel %vm381, %v2781, 0
      %3473 = vmatprep.subr.bf16.mxu0 0
      %3474 = vmatpush1.bf16.msra.mxu0 %v3462
      %3475 = vmatprep.subr.bf16.mxu0 0
      %3476 = vmatpush1.bf16.msra.mxu0 %v3464
      %3477 = vmatprep.subr.bf16.mxu0 0
      %3478 = vmatpush1.bf16.msra.mxu0 0
      %3479 = vmatprep.subr.bf16.mxu0 0
      %3480 = vmatpush1.bf16.msra.mxu0 0
      %3481 = vmatprep.subr.bf16.mxu0 0
      %3482 = vmatpush1.bf16.msra.mxu0 0
      %3483 = vmatprep.subr.bf16.mxu0 0
      %3484 = vmatpush1.bf16.msra.mxu0 0
      %3485 = vmatprep.subr.bf16.mxu0 0
      %3486 = vmatpush1.bf16.msra.mxu0 0
      %3487 = vmatprep.subr.bf16.mxu0 0
      %3488 = vmatpush1.bf16.msra.mxu0 0
      %3489 = vmatprep.subr.bf16.mxu0 0
      %3490 = vmatpush1.bf16.msra.mxu0 0
      %3491 = vmatprep.subr.bf16.mxu0 0
      %3492 = vmatpush1.bf16.msra.mxu0 0
      %3493 = vmatprep.subr.bf16.mxu0 0
      %3494 = vmatpush1.bf16.msra.mxu0 0
      %3495 = vmatprep.subr.bf16.mxu0 0
      %3496 = vmatpush1.bf16.msra.mxu0 0
      %3497 = vmatprep.subr.bf16.mxu0 0
      %3498 = vmatpush1.bf16.msra.mxu0 0
      %3499 = vmatprep.subr.bf16.mxu0 0
      %3500 = vmatpush1.bf16.msra.mxu0 0
      %3501 = vmatprep.subr.bf16.mxu0 0
      %3502 = vmatpush1.bf16.msra.mxu0 0
      %3503 = vmatprep.subr.bf16.mxu0 0
      %3504 = vmatpush1.bf16.msra.mxu0 0
      %3505 = vmatprep.mubr.bf16.mxu0 0
      %3506 = vmatmul.mubr.bf16.gmra.mrb[0].mxu0 %v3468
      %v3507 = vpop.f32.mrb[0].mxu0
      %v3508 = vadd.f32 0.0, %v3507
      %v3509 = vpop.f32.mrb[0].mxu0
      %v3510 = vpop.f32.mrb[0].mxu0
      %v3511 = vadd.f32 0.0, %v3510
      %v3512 = vpop.f32.mrb[0].mxu0
      %3513 = vmatprep.mubr.bf16.mxu0 0
      %3514 = vmatmul.mubr.bf16.gmra.mrb[0].mxu0 %v3471
      %v3515 = vpop.f32.mrb[0].mxu0
      %v3516 = vadd.f32 0.0, %v3515
      %v3517 = vpop.f32.mrb[0].mxu0
      %v3518 = vpop.f32.mrb[0].mxu0
      %v3519 = vadd.f32 0.0, %v3518
      %v3520 = vpop.f32.mrb[0].mxu0
      %3521 = vdwg.mxu0
      %3522 = vrot.lane.b32.xlu0 %v838, 64
      %v3523 = vpop.permute.xlu0 %3522
      %3524 = vrot.lane.b32.xlu0 %v840, 64
      %v3525 = vpop.permute.xlu0 %3524
      %v3529 = vsel %vm381, %v2782, 0
      %v3532 = vsel %vm381, %v2783, 0
      %3534 = vmatprep.subr.bf16.mxu0 0
      %3535 = vmatpush1.bf16.msra.mxu0 %v3523
      %3536 = vmatprep.subr.bf16.mxu0 0
      %3537 = vmatpush1.bf16.msra.mxu0 %v3525
      %3538 = vmatprep.subr.bf16.mxu0 0
      %3539 = vmatpush1.bf16.msra.mxu0 0
      %3540 = vmatprep.subr.bf16.mxu0 0
      %3541 = vmatpush1.bf16.msra.mxu0 0
      %3542 = vmatprep.subr.bf16.mxu0 0
      %3543 = vmatpush1.bf16.msra.mxu0 0
      %3544 = vmatprep.subr.bf16.mxu0 0
      %3545 = vmatpush1.bf16.msra.mxu0 0
      %3546 = vmatprep.subr.bf16.mxu0 0
      %3547 = vmatpush1.bf16.msra.mxu0 0
      %3548 = vmatprep.subr.bf16.mxu0 0
      %3549 = vmatpush1.bf16.msra.mxu0 0
      %3550 = vmatprep.subr.bf16.mxu0 0
      %3551 = vmatpush1.bf16.msra.mxu0 0
      %3552 = vmatprep.subr.bf16.mxu0 0
      %3553 = vmatpush1.bf16.msra.mxu0 0
      %3554 = vmatprep.subr.bf16.mxu0 0
      %3555 = vmatpush1.bf16.msra.mxu0 0
      %3556 = vmatprep.subr.bf16.mxu0 0
      %3557 = vmatpush1.bf16.msra.mxu0 0
      %3558 = vmatprep.subr.bf16.mxu0 0
      %3559 = vmatpush1.bf16.msra.mxu0 0
      %3560 = vmatprep.subr.bf16.mxu0 0
      %3561 = vmatpush1.bf16.msra.mxu0 0
      %3562 = vmatprep.subr.bf16.mxu0 0
      %3563 = vmatpush1.bf16.msra.mxu0 0
      %3564 = vmatprep.subr.bf16.mxu0 0
      %3565 = vmatpush1.bf16.msra.mxu0 0
      %3566 = vmatprep.mubr.bf16.mxu0 0
      %3567 = vmatmul.mubr.bf16.gmra.mrb[0].mxu0 %v3529
      %v3568 = vpop.f32.mrb[0].mxu0
      %v3569 = vadd.f32 0.0, %v3568
      %v3570 = vpop.f32.mrb[0].mxu0
      %v3571 = vpop.f32.mrb[0].mxu0
      %v3572 = vadd.f32 0.0, %v3571
      %v3573 = vpop.f32.mrb[0].mxu0
      %3574 = vmatprep.mubr.bf16.mxu0 0
      %3575 = vmatmul.mubr.bf16.gmra.mrb[0].mxu0 %v3532
      %v3576 = vpop.f32.mrb[0].mxu0
      %v3577 = vadd.f32 0.0, %v3576
      %v3578 = vpop.f32.mrb[0].mxu0
      %v3579 = vpop.f32.mrb[0].mxu0
      %v3580 = vadd.f32 0.0, %v3579
      %v3581 = vpop.f32.mrb[0].mxu0
      %3582 = vdwg.mxu0
      %3583 = vrot.lane.b32.xlu0 %v842, 64
      %v3584 = vpop.permute.xlu0 %3583
      %3585 = vrot.lane.b32.xlu0 %v844, 64
      %v3586 = vpop.permute.xlu0 %3585
      %v3590 = vsel %vm381, %v2784, 0
      %v3593 = vsel %vm381, %v2785, 0
      %3595 = vmatprep.subr.bf16.mxu0 0
      %3596 = vmatpush1.bf16.msra.mxu0 %v3584
      %3597 = vmatprep.subr.bf16.mxu0 0
      %3598 = vmatpush1.bf16.msra.mxu0 %v3586
      %3599 = vmatprep.subr.bf16.mxu0 0
      %3600 = vmatpush1.bf16.msra.mxu0 0
      %3601 = vmatprep.subr.bf16.mxu0 0
      %3602 = vmatpush1.bf16.msra.mxu0 0
      %3603 = vmatprep.subr.bf16.mxu0 0
      %3604 = vmatpush1.bf16.msra.mxu0 0
      %3605 = vmatprep.subr.bf16.mxu0 0
      %3606 = vmatpush1.bf16.msra.mxu0 0
      %3607 = vmatprep.subr.bf16.mxu0 0
      %3608 = vmatpush1.bf16.msra.mxu0 0
      %3609 = vmatprep.subr.bf16.mxu0 0
      %3610 = vmatpush1.bf16.msra.mxu0 0
      %3611 = vmatprep.subr.bf16.mxu0 0
      %3612 = vmatpush1.bf16.msra.mxu0 0
      %3613 = vmatprep.subr.bf16.mxu0 0
      %3614 = vmatpush1.bf16.msra.mxu0 0
      %3615 = vmatprep.subr.bf16.mxu0 0
      %3616 = vmatpush1.bf16.msra.mxu0 0
      %3617 = vmatprep.subr.bf16.mxu0 0
      %3618 = vmatpush1.bf16.msra.mxu0 0
      %3619 = vmatprep.subr.bf16.mxu0 0
      %3620 = vmatpush1.bf16.msra.mxu0 0
      %3621 = vmatprep.subr.bf16.mxu0 0
      %3622 = vmatpush1.bf16.msra.mxu0 0
      %3623 = vmatprep.subr.bf16.mxu0 0
      %3624 = vmatpush1.bf16.msra.mxu0 0
      %3625 = vmatprep.subr.bf16.mxu0 0
      %3626 = vmatpush1.bf16.msra.mxu0 0
      %3627 = vmatprep.mubr.bf16.mxu0 0
      %3628 = vmatmul.mubr.bf16.gmra.mrb[0].mxu0 %v3590
      %v3629 = vpop.f32.mrb[0].mxu0
      %v3630 = vadd.f32 0.0, %v3629
      %v3631 = vpop.f32.mrb[0].mxu0
      %v3632 = vpop.f32.mrb[0].mxu0
      %v3633 = vadd.f32 0.0, %v3632
      %v3634 = vpop.f32.mrb[0].mxu0
      %3635 = vmatprep.mubr.bf16.mxu0 0
      %3636 = vmatmul.mubr.bf16.gmra.mrb[0].mxu0 %v3593
      %v3637 = vpop.f32.mrb[0].mxu0
      %v3638 = vadd.f32 0.0, %v3637
      %v3639 = vpop.f32.mrb[0].mxu0
      %v3640 = vpop.f32.mrb[0].mxu0
      %v3641 = vadd.f32 0.0, %v3640
      %v3642 = vpop.f32.mrb[0].mxu0
      %3643 = vdwg.mxu0
      %3644 = vrot.lane.b32.xlu0 %v846, 64
      %v3645 = vpop.permute.xlu0 %3644
      %3646 = vrot.lane.b32.xlu0 %v848, 64
      %v3647 = vpop.permute.xlu0 %3646
      %v3651 = vsel %vm381, %v2786, 0
      %v3654 = vsel %vm381, %v2787, 0
      %3656 = vmatprep.subr.bf16.mxu0 0
      %3657 = vmatpush1.bf16.msra.mxu0 %v3645
      %3658 = vmatprep.subr.bf16.mxu0 0
      %3659 = vmatpush1.bf16.msra.mxu0 %v3647
      %3660 = vmatprep.subr.bf16.mxu0 0
      %3661 = vmatpush1.bf16.msra.mxu0 0
      %3662 = vmatprep.subr.bf16.mxu0 0
      %3663 = vmatpush1.bf16.msra.mxu0 0
      %3664 = vmatprep.subr.bf16.mxu0 0
      %3665 = vmatpush1.bf16.msra.mxu0 0
      %3666 = vmatprep.subr.bf16.mxu0 0
      %3667 = vmatpush1.bf16.msra.mxu0 0
      %3668 = vmatprep.subr.bf16.mxu0 0
      %3669 = vmatpush1.bf16.msra.mxu0 0
      %3670 = vmatprep.subr.bf16.mxu0 0
      %3671 = vmatpush1.bf16.msra.mxu0 0
      %3672 = vmatprep.subr.bf16.mxu0 0
      %3673 = vmatpush1.bf16.msra.mxu0 0
      %3674 = vmatprep.subr.bf16.mxu0 0
      %3675 = vmatpush1.bf16.msra.mxu0 0
      %3676 = vmatprep.subr.bf16.mxu0 0
      %3677 = vmatpush1.bf16.msra.mxu0 0
      %3678 = vmatprep.subr.bf16.mxu0 0
      %3679 = vmatpush1.bf16.msra.mxu0 0
      %3680 = vmatprep.subr.bf16.mxu0 0
      %3681 = vmatpush1.bf16.msra.mxu0 0
      %3682 = vmatprep.subr.bf16.mxu0 0
      %3683 = vmatpush1.bf16.msra.mxu0 0
      %3684 = vmatprep.subr.bf16.mxu0 0
      %3685 = vmatpush1.bf16.msra.mxu0 0
      %3686 = vmatprep.subr.bf16.mxu0 0
      %3687 = vmatpush1.bf16.msra.mxu0 0
      %3688 = vmatprep.mubr.bf16.mxu0 0
      %3689 = vmatmul.mubr.bf16.gmra.mrb[0].mxu0 %v3651
      %v3690 = vpop.f32.mrb[0].mxu0
      %v3691 = vadd.f32 0.0, %v3690
      %v3692 = vpop.f32.mrb[0].mxu0
      %v3693 = vpop.f32.mrb[0].mxu0
      %v3694 = vadd.f32 0.0, %v3693
      %v3695 = vpop.f32.mrb[0].mxu0
      %3696 = vmatprep.mubr.bf16.mxu0 0
      %3697 = vmatmul.mubr.bf16.gmra.mrb[0].mxu0 %v3654
      %v3698 = vpop.f32.mrb[0].mxu0
      %v3699 = vadd.f32 0.0, %v3698
      %v3700 = vpop.f32.mrb[0].mxu0
      %v3701 = vpop.f32.mrb[0].mxu0
      %v3702 = vadd.f32 0.0, %v3701
      %v3703 = vpop.f32.mrb[0].mxu0
      %3704 = vdwg.mxu0
      %3705 = vrot.lane.b32.xlu0 %v850, 64
      %v3706 = vpop.permute.xlu0 %3705
      %3707 = vrot.lane.b32.xlu0 %v852, 64
      %v3708 = vpop.permute.xlu0 %3707
      %v3712 = vsel %vm381, %v2788, 0
      %v3715 = vsel %vm381, %v2789, 0
      %3717 = vmatprep.subr.bf16.mxu0 0
      %3718 = vmatpush1.bf16.msra.mxu0 %v3706
      %3719 = vmatprep.subr.bf16.mxu0 0
      %3720 = vmatpush1.bf16.msra.mxu0 %v3708
      %3721 = vmatprep.subr.bf16.mxu0 0
      %3722 = vmatpush1.bf16.msra.mxu0 0
      %3723 = vmatprep.subr.bf16.mxu0 0
      %3724 = vmatpush1.bf16.msra.mxu0 0
      %3725 = vmatprep.subr.bf16.mxu0 0
      %3726 = vmatpush1.bf16.msra.mxu0 0
      %3727 = vmatprep.subr.bf16.mxu0 0
      %3728 = vmatpush1.bf16.msra.mxu0 0
      %3729 = vmatprep.subr.bf16.mxu0 0
      %3730 = vmatpush1.bf16.msra.mxu0 0
      %3731 = vmatprep.subr.bf16.mxu0 0
      %3732 = vmatpush1.bf16.msra.mxu0 0
      %3733 = vmatprep.subr.bf16.mxu0 0
      %3734 = vmatpush1.bf16.msra.mxu0 0
      %3735 = vmatprep.subr.bf16.mxu0 0
      %3736 = vmatpush1.bf16.msra.mxu0 0
      %3737 = vmatprep.subr.bf16.mxu0 0
      %3738 = vmatpush1.bf16.msra.mxu0 0
      %3739 = vmatprep.subr.bf16.mxu0 0
      %3740 = vmatpush1.bf16.msra.mxu0 0
      %3741 = vmatprep.subr.bf16.mxu0 0
      %3742 = vmatpush1.bf16.msra.mxu0 0
      %3743 = vmatprep.subr.bf16.mxu0 0
      %3744 = vmatpush1.bf16.msra.mxu0 0
      %3745 = vmatprep.subr.bf16.mxu0 0
      %3746 = vmatpush1.bf16.msra.mxu0 0
      %3747 = vmatprep.subr.bf16.mxu0 0
      %3748 = vmatpush1.bf16.msra.mxu0 0
      %3749 = vmatprep.mubr.bf16.mxu0 0
      %3750 = vmatmul.mubr.bf16.gmra.mrb[0].mxu0 %v3712
      %v3751 = vpop.f32.mrb[0].mxu0
      %v3752 = vadd.f32 0.0, %v3751
      %v3753 = vpop.f32.mrb[0].mxu0
      %v3754 = vpop.f32.mrb[0].mxu0
      %v3755 = vadd.f32 0.0, %v3754
      %v3756 = vpop.f32.mrb[0].mxu0
      %3757 = vmatprep.mubr.bf16.mxu0 0
      %3758 = vmatmul.mubr.bf16.gmra.mrb[0].mxu0 %v3715
      %v3759 = vpop.f32.mrb[0].mxu0
      %v3760 = vadd.f32 0.0, %v3759
      %v3761 = vpop.f32.mrb[0].mxu0
      %v3762 = vpop.f32.mrb[0].mxu0
      %v3763 = vadd.f32 0.0, %v3762
      %v3764 = vpop.f32.mrb[0].mxu0
      %3765 = vdwg.mxu0
      %v3766 = vpack.c.bf16 %v2840, %v2837
      %v3767 = vpack.c.bf16 %v2848, %v2845
      %v3768 = vpack.c.bf16 %v2901, %v2898
      %v3769 = vpack.c.bf16 %v2909, %v2906
      %v3770 = vpack.c.bf16 %v2962, %v2959
      %v3771 = vpack.c.bf16 %v2970, %v2967
      %v3772 = vpack.c.bf16 %v3023, %v3020
      %v3773 = vpack.c.bf16 %v3031, %v3028
      %v3774 = vpack.c.bf16 %v3084, %v3081
      %v3775 = vpack.c.bf16 %v3092, %v3089
      %v3776 = vpack.c.bf16 %v3145, %v3142
      %v3777 = vpack.c.bf16 %v3153, %v3150
      %v3778 = vpack.c.bf16 %v3206, %v3203
      %v3779 = vpack.c.bf16 %v3214, %v3211
      %v3780 = vpack.c.bf16 %v3267, %v3264
      %v3781 = vpack.c.bf16 %v3275, %v3272
      %v3782 = vpack.c.bf16 %v3328, %v3325
      %v3783 = vpack.c.bf16 %v3336, %v3333
      %v3784 = vpack.c.bf16 %v3389, %v3386
      %v3785 = vpack.c.bf16 %v3397, %v3394
      %v3786 = vpack.c.bf16 %v3450, %v3447
      %v3787 = vpack.c.bf16 %v3458, %v3455
      %v3788 = vpack.c.bf16 %v3511, %v3508
      %v3789 = vpack.c.bf16 %v3519, %v3516
      %v3790 = vpack.c.bf16 %v3572, %v3569
      %v3791 = vpack.c.bf16 %v3580, %v3577
      %v3792 = vpack.c.bf16 %v3633, %v3630
      %v3793 = vpack.c.bf16 %v3641, %v3638
      %v3794 = vpack.c.bf16 %v3694, %v3691
      %v3795 = vpack.c.bf16 %v3702, %v3699
      %v3796 = vpack.c.bf16 %v3755, %v3752
      %v3797 = vpack.c.bf16 %v3763, %v3760
      %v3798 = vld [vmem:[%s7] sm:$0xf]
      %v3799 = vld [vmem:[%s7 + $0x4] sm:$0xf]
      %v3800 = vld [vmem:[%s7 + $0x8] sm:$0xf]
      %v3801 = vld [vmem:[%s7 + $0xc] sm:$0xf]
      %v3803 = vsel %vm857, %v3766, 0
      %v3806 = vsel %vm857, %v3767, 0
      %v3809 = vsel %vm857, %v3768, 0
      %v3812 = vsel %vm857, %v3769, 0
      %v3815 = vsel %vm857, %v3770, 0
      %v3818 = vsel %vm857, %v3771, 0
      %v3821 = vsel %vm857, %v3772, 0
      %v3824 = vsel %vm857, %v3773, 0
      %vm3826 = vcmask 1043456
      %v3828 = vsel %vm3826, %v3798, 0
      %3830 = vmatprep.subr.bf16.mxu0 0
      %3831 = vmatpush1.bf16.msra.mxu0 %v3828
      %3832 = vmatprep.subr.bf16.mxu0 0
      %3833 = vmatpush1.bf16.msra.mxu0 0
      %3834 = vmatprep.subr.bf16.mxu0 0
      %3835 = vmatpush1.bf16.msra.mxu0 0
      %3836 = vmatprep.subr.bf16.mxu0 0
      %3837 = vmatpush1.bf16.msra.mxu0 0
      %3838 = vmatprep.subr.bf16.mxu0 0
      %3839 = vmatpush1.bf16.msra.mxu0 0
      %3840 = vmatprep.subr.bf16.mxu0 0
      %3841 = vmatpush1.bf16.msra.mxu0 0
      %3842 = vmatprep.subr.bf16.mxu0 0
      %3843 = vmatpush1.bf16.msra.mxu0 0
      %3844 = vmatprep.subr.bf16.mxu0 0
      %3845 = vmatpush1.bf16.msra.mxu0 0
      %3846 = vmatprep.subr.bf16.mxu0 0
      %3847 = vmatpush1.bf16.msra.mxu0 0
      %3848 = vmatprep.subr.bf16.mxu0 0
      %3849 = vmatpush1.bf16.msra.mxu0 0
      %3850 = vmatprep.subr.bf16.mxu0 0
      %3851 = vmatpush1.bf16.msra.mxu0 0
      %3852 = vmatprep.subr.bf16.mxu0 0
      %3853 = vmatpush1.bf16.msra.mxu0 0
      %3854 = vmatprep.subr.bf16.mxu0 0
      %3855 = vmatpush1.bf16.msra.mxu0 0
      %3856 = vmatprep.subr.bf16.mxu0 0
      %3857 = vmatpush1.bf16.msra.mxu0 0
      %3858 = vmatprep.subr.bf16.mxu0 0
      %3859 = vmatpush1.bf16.msra.mxu0 0
      %3860 = vmatprep.subr.bf16.mxu0 0
      %3861 = vmatpush1.bf16.msra.mxu0 0
      %3862 = vmatprep.mubr.bf16.mxu0 0
      %3863 = vmatmul.mubr.bf16.gmra.mrb[0].mxu0 %v3803
      %v3864 = vpop.f32.mrb[0].mxu0
      %v3865 = vadd.f32 0.0, %v3864
      %v3866 = vpop.f32.mrb[0].mxu0
      %v3867 = vpop.f32.mrb[0].mxu0
      %v3868 = vadd.f32 0.0, %v3867
      %v3869 = vpop.f32.mrb[0].mxu0
      %3870 = vmatprep.mubr.bf16.mxu0 0
      %3871 = vmatmul.mubr.bf16.gmra.mrb[0].mxu0 %v3806
      %v3872 = vpop.f32.mrb[0].mxu0
      %v3873 = vadd.f32 0.0, %v3872
      %v3874 = vpop.f32.mrb[0].mxu0
      %v3875 = vpop.f32.mrb[0].mxu0
      %v3876 = vadd.f32 0.0, %v3875
      %v3877 = vpop.f32.mrb[0].mxu0
      %3878 = vmatprep.mubr.bf16.mxu0 0
      %3879 = vmatmul.mubr.bf16.gmra.mrb[0].mxu0 %v3809
      %v3880 = vpop.f32.mrb[0].mxu0
      %v3881 = vadd.f32 0.0, %v3880
      %v3882 = vpop.f32.mrb[0].mxu0
      %v3883 = vpop.f32.mrb[0].mxu0
      %v3884 = vadd.f32 0.0, %v3883
      %v3885 = vpop.f32.mrb[0].mxu0
      %3886 = vmatprep.mubr.bf16.mxu0 0
      %3887 = vmatmul.mubr.bf16.gmra.mrb[0].mxu0 %v3812
      %v3888 = vpop.f32.mrb[0].mxu0
      %v3889 = vadd.f32 0.0, %v3888
      %v3890 = vpop.f32.mrb[0].mxu0
      %v3891 = vpop.f32.mrb[0].mxu0
      %v3892 = vadd.f32 0.0, %v3891
      %v3893 = vpop.f32.mrb[0].mxu0
      %3894 = vmatprep.mubr.bf16.mxu0 0
      %3895 = vmatmul.mubr.bf16.gmra.mrb[0].mxu0 %v3815
      %v3896 = vpop.f32.mrb[0].mxu0
      %v3897 = vadd.f32 0.0, %v3896
      %v3898 = vpop.f32.mrb[0].mxu0
      %v3899 = vpop.f32.mrb[0].mxu0
      %v3900 = vadd.f32 0.0, %v3899
      %v3901 = vpop.f32.mrb[0].mxu0
      %3902 = vmatprep.mubr.bf16.mxu0 0
      %3903 = vmatmul.mubr.bf16.gmra.mrb[0].mxu0 %v3818
      %v3904 = vpop.f32.mrb[0].mxu0
      %v3905 = vadd.f32 0.0, %v3904
      %v3906 = vpop.f32.mrb[0].mxu0
      %v3907 = vpop.f32.mrb[0].mxu0
      %v3908 = vadd.f32 0.0, %v3907
      %v3909 = vpop.f32.mrb[0].mxu0
      %3910 = vmatprep.mubr.bf16.mxu0 0
      %3911 = vmatmul.mubr.bf16.gmra.mrb[0].mxu0 %v3821
      %v3912 = vpop.f32.mrb[0].mxu0
      %v3913 = vadd.f32 0.0, %v3912
      %v3914 = vpop.f32.mrb[0].mxu0
      %v3915 = vpop.f32.mrb[0].mxu0
      %v3916 = vadd.f32 0.0, %v3915
      %v3917 = vpop.f32.mrb[0].mxu0
      %3918 = vmatprep.mubr.bf16.mxu0 0
      %3919 = vmatmul.mubr.bf16.gmra.mrb[0].mxu0 %v3824
      %v3920 = vpop.f32.mrb[0].mxu0
      %v3921 = vadd.f32 0.0, %v3920
      %v3922 = vpop.f32.mrb[0].mxu0
      %v3923 = vpop.f32.mrb[0].mxu0
      %v3924 = vadd.f32 0.0, %v3923
      %v3925 = vpop.f32.mrb[0].mxu0
      %3926 = vdwg.mxu0
      %v3928 = vsel %vm857, %v3774, 0
      %v3931 = vsel %vm857, %v3775, 0
      %v3934 = vsel %vm857, %v3776, 0
      %v3937 = vsel %vm857, %v3777, 0
      %v3940 = vsel %vm857, %v3778, 0
      %v3943 = vsel %vm857, %v3779, 0
      %v3946 = vsel %vm857, %v3780, 0
      %v3949 = vsel %vm857, %v3781, 0
      %v3952 = vsel %vm3826, %v3799, 0
      %3954 = vmatprep.subr.bf16.mxu0 0
      %3955 = vmatpush1.bf16.msra.mxu0 %v3952
      %3956 = vmatprep.subr.bf16.mxu0 0
      %3957 = vmatpush1.bf16.msra.mxu0 0
      %3958 = vmatprep.subr.bf16.mxu0 0
      %3959 = vmatpush1.bf16.msra.mxu0 0
      %3960 = vmatprep.subr.bf16.mxu0 0
      %3961 = vmatpush1.bf16.msra.mxu0 0
      %3962 = vmatprep.subr.bf16.mxu0 0
      %3963 = vmatpush1.bf16.msra.mxu0 0
      %3964 = vmatprep.subr.bf16.mxu0 0
      %3965 = vmatpush1.bf16.msra.mxu0 0
      %3966 = vmatprep.subr.bf16.mxu0 0
      %3967 = vmatpush1.bf16.msra.mxu0 0
      %3968 = vmatprep.subr.bf16.mxu0 0
      %3969 = vmatpush1.bf16.msra.mxu0 0
      %3970 = vmatprep.subr.bf16.mxu0 0
      %3971 = vmatpush1.bf16.msra.mxu0 0
      %3972 = vmatprep.subr.bf16.mxu0 0
      %3973 = vmatpush1.bf16.msra.mxu0 0
      %3974 = vmatprep.subr.bf16.mxu0 0
      %3975 = vmatpush1.bf16.msra.mxu0 0
      %3976 = vmatprep.subr.bf16.mxu0 0
      %3977 = vmatpush1.bf16.msra.mxu0 0
      %3978 = vmatprep.subr.bf16.mxu0 0
      %3979 = vmatpush1.bf16.msra.mxu0 0
      %3980 = vmatprep.subr.bf16.mxu0 0
      %3981 = vmatpush1.bf16.msra.mxu0 0
      %3982 = vmatprep.subr.bf16.mxu0 0
      %3983 = vmatpush1.bf16.msra.mxu0 0
      %3984 = vmatprep.subr.bf16.mxu0 0
      %3985 = vmatpush1.bf16.msra.mxu0 0
      %3986 = vmatprep.mubr.bf16.mxu0 0
      %3987 = vmatmul.mubr.bf16.gmra.mrb[0].mxu0 %v3928
      %v3988 = vpop.f32.mrb[0].mxu0
      %v3989 = vadd.f32 0.0, %v3988
      %v3990 = vpop.f32.mrb[0].mxu0
      %v3991 = vpop.f32.mrb[0].mxu0
      %v3992 = vadd.f32 0.0, %v3991
      %v3993 = vpop.f32.mrb[0].mxu0
      %3994 = vmatprep.mubr.bf16.mxu0 0
      %3995 = vmatmul.mubr.bf16.gmra.mrb[0].mxu0 %v3931
      %v3996 = vpop.f32.mrb[0].mxu0
      %v3997 = vadd.f32 0.0, %v3996
      %v3998 = vpop.f32.mrb[0].mxu0
      %v3999 = vpop.f32.mrb[0].mxu0
      %v4000 = vadd.f32 0.0, %v3999
      %v4001 = vpop.f32.mrb[0].mxu0
      %4002 = vmatprep.mubr.bf16.mxu0 0
      %4003 = vmatmul.mubr.bf16.gmra.mrb[0].mxu0 %v3934
      %v4004 = vpop.f32.mrb[0].mxu0
      %v4005 = vadd.f32 0.0, %v4004
      %v4006 = vpop.f32.mrb[0].mxu0
      %v4007 = vpop.f32.mrb[0].mxu0
      %v4008 = vadd.f32 0.0, %v4007
      %v4009 = vpop.f32.mrb[0].mxu0
      %4010 = vmatprep.mubr.bf16.mxu0 0
      %4011 = vmatmul.mubr.bf16.gmra.mrb[0].mxu0 %v3937
      %v4012 = vpop.f32.mrb[0].mxu0
      %v4013 = vadd.f32 0.0, %v4012
      %v4014 = vpop.f32.mrb[0].mxu0
      %v4015 = vpop.f32.mrb[0].mxu0
      %v4016 = vadd.f32 0.0, %v4015
      %v4017 = vpop.f32.mrb[0].mxu0
      %4018 = vmatprep.mubr.bf16.mxu0 0
      %4019 = vmatmul.mubr.bf16.gmra.mrb[0].mxu0 %v3940
      %v4020 = vpop.f32.mrb[0].mxu0
      %v4021 = vadd.f32 0.0, %v4020
      %v4022 = vpop.f32.mrb[0].mxu0
      %v4023 = vpop.f32.mrb[0].mxu0
      %v4024 = vadd.f32 0.0, %v4023
      %v4025 = vpop.f32.mrb[0].mxu0
      %4026 = vmatprep.mubr.bf16.mxu0 0
      %4027 = vmatmul.mubr.bf16.gmra.mrb[0].mxu0 %v3943
      %v4028 = vpop.f32.mrb[0].mxu0
      %v4029 = vadd.f32 0.0, %v4028
      %v4030 = vpop.f32.mrb[0].mxu0
      %v4031 = vpop.f32.mrb[0].mxu0
      %v4032 = vadd.f32 0.0, %v4031
      %v4033 = vpop.f32.mrb[0].mxu0
      %4034 = vmatprep.mubr.bf16.mxu0 0
      %4035 = vmatmul.mubr.bf16.gmra.mrb[0].mxu0 %v3946
      %v4036 = vpop.f32.mrb[0].mxu0
      %v4037 = vadd.f32 0.0, %v4036
      %v4038 = vpop.f32.mrb[0].mxu0
      %v4039 = vpop.f32.mrb[0].mxu0
      %v4040 = vadd.f32 0.0, %v4039
      %v4041 = vpop.f32.mrb[0].mxu0
      %4042 = vmatprep.mubr.bf16.mxu0 0
      %4043 = vmatmul.mubr.bf16.gmra.mrb[0].mxu0 %v3949
      %v4044 = vpop.f32.mrb[0].mxu0
      %v4045 = vadd.f32 0.0, %v4044
      %v4046 = vpop.f32.mrb[0].mxu0
      %v4047 = vpop.f32.mrb[0].mxu0
      %v4048 = vadd.f32 0.0, %v4047
      %v4049 = vpop.f32.mrb[0].mxu0
      %4050 = vdwg.mxu0
      %v4052 = vsel %vm857, %v3782, 0
      %v4055 = vsel %vm857, %v3783, 0
      %v4058 = vsel %vm857, %v3784, 0
      %v4061 = vsel %vm857, %v3785, 0
      %v4064 = vsel %vm857, %v3786, 0
      %v4067 = vsel %vm857, %v3787, 0
      %v4070 = vsel %vm857, %v3788, 0
      %v4073 = vsel %vm857, %v3789, 0
      %v4076 = vsel %vm3826, %v3800, 0
      %4078 = vmatprep.subr.bf16.mxu0 0
      %4079 = vmatpush1.bf16.msra.mxu0 %v4076
      %4080 = vmatprep.subr.bf16.mxu0 0
      %4081 = vmatpush1.bf16.msra.mxu0 0
      %4082 = vmatprep.subr.bf16.mxu0 0
      %4083 = vmatpush1.bf16.msra.mxu0 0
      %4084 = vmatprep.subr.bf16.mxu0 0
      %4085 = vmatpush1.bf16.msra.mxu0 0
      %4086 = vmatprep.subr.bf16.mxu0 0
      %4087 = vmatpush1.bf16.msra.mxu0 0
      %4088 = vmatprep.subr.bf16.mxu0 0
      %4089 = vmatpush1.bf16.msra.mxu0 0
      %4090 = vmatprep.subr.bf16.mxu0 0
      %4091 = vmatpush1.bf16.msra.mxu0 0
      %4092 = vmatprep.subr.bf16.mxu0 0
      %4093 = vmatpush1.bf16.msra.mxu0 0
      %4094 = vmatprep.subr.bf16.mxu0 0
      %4095 = vmatpush1.bf16.msra.mxu0 0
      %4096 = vmatprep.subr.bf16.mxu0 0
      %4097 = vmatpush1.bf16.msra.mxu0 0
      %4098 = vmatprep.subr.bf16.mxu0 0
      %4099 = vmatpush1.bf16.msra.mxu0 0
      %4100 = vmatprep.subr.bf16.mxu0 0
      %4101 = vmatpush1.bf16.msra.mxu0 0
      %4102 = vmatprep.subr.bf16.mxu0 0
      %4103 = vmatpush1.bf16.msra.mxu0 0
      %4104 = vmatprep.subr.bf16.mxu0 0
      %4105 = vmatpush1.bf16.msra.mxu0 0
      %4106 = vmatprep.subr.bf16.mxu0 0
      %4107 = vmatpush1.bf16.msra.mxu0 0
      %4108 = vmatprep.subr.bf16.mxu0 0
      %4109 = vmatpush1.bf16.msra.mxu0 0
      %4110 = vmatprep.mubr.bf16.mxu0 0
      %4111 = vmatmul.mubr.bf16.gmra.mrb[0].mxu0 %v4052
      %v4112 = vpop.f32.mrb[0].mxu0
      %v4113 = vadd.f32 0.0, %v4112
      %v4114 = vpop.f32.mrb[0].mxu0
      %v4115 = vpop.f32.mrb[0].mxu0
      %v4116 = vadd.f32 0.0, %v4115
      %v4117 = vpop.f32.mrb[0].mxu0
      %4118 = vmatprep.mubr.bf16.mxu0 0
      %4119 = vmatmul.mubr.bf16.gmra.mrb[0].mxu0 %v4055
      %v4120 = vpop.f32.mrb[0].mxu0
      %v4121 = vadd.f32 0.0, %v4120
      %v4122 = vpop.f32.mrb[0].mxu0
      %v4123 = vpop.f32.mrb[0].mxu0
      %v4124 = vadd.f32 0.0, %v4123
      %v4125 = vpop.f32.mrb[0].mxu0
      %4126 = vmatprep.mubr.bf16.mxu0 0
      %4127 = vmatmul.mubr.bf16.gmra.mrb[0].mxu0 %v4058
      %v4128 = vpop.f32.mrb[0].mxu0
      %v4129 = vadd.f32 0.0, %v4128
      %v4130 = vpop.f32.mrb[0].mxu0
      %v4131 = vpop.f32.mrb[0].mxu0
      %v4132 = vadd.f32 0.0, %v4131
      %v4133 = vpop.f32.mrb[0].mxu0
      %4134 = vmatprep.mubr.bf16.mxu0 0
      %4135 = vmatmul.mubr.bf16.gmra.mrb[0].mxu0 %v4061
      %v4136 = vpop.f32.mrb[0].mxu0
      %v4137 = vadd.f32 0.0, %v4136
      %v4138 = vpop.f32.mrb[0].mxu0
      %v4139 = vpop.f32.mrb[0].mxu0
      %v4140 = vadd.f32 0.0, %v4139
      %v4141 = vpop.f32.mrb[0].mxu0
      %4142 = vmatprep.mubr.bf16.mxu0 0
      %4143 = vmatmul.mubr.bf16.gmra.mrb[0].mxu0 %v4064
      %v4144 = vpop.f32.mrb[0].mxu0
      %v4145 = vadd.f32 0.0, %v4144
      %v4146 = vpop.f32.mrb[0].mxu0
      %v4147 = vpop.f32.mrb[0].mxu0
      %v4148 = vadd.f32 0.0, %v4147
      %v4149 = vpop.f32.mrb[0].mxu0
      %4150 = vmatprep.mubr.bf16.mxu0 0
      %4151 = vmatmul.mubr.bf16.gmra.mrb[0].mxu0 %v4067
      %v4152 = vpop.f32.mrb[0].mxu0
      %v4153 = vadd.f32 0.0, %v4152
      %v4154 = vpop.f32.mrb[0].mxu0
      %v4155 = vpop.f32.mrb[0].mxu0
      %v4156 = vadd.f32 0.0, %v4155
      %v4157 = vpop.f32.mrb[0].mxu0
      %4158 = vmatprep.mubr.bf16.mxu0 0
      %4159 = vmatmul.mubr.bf16.gmra.mrb[0].mxu0 %v4070
      %v4160 = vpop.f32.mrb[0].mxu0
      %v4161 = vadd.f32 0.0, %v4160
      %v4162 = vpop.f32.mrb[0].mxu0
      %v4163 = vpop.f32.mrb[0].mxu0
      %v4164 = vadd.f32 0.0, %v4163
      %v4165 = vpop.f32.mrb[0].mxu0
      %4166 = vmatprep.mubr.bf16.mxu0 0
      %4167 = vmatmul.mubr.bf16.gmra.mrb[0].mxu0 %v4073
      %v4168 = vpop.f32.mrb[0].mxu0
      %v4169 = vadd.f32 0.0, %v4168
      %v4170 = vpop.f32.mrb[0].mxu0
      %v4171 = vpop.f32.mrb[0].mxu0
      %v4172 = vadd.f32 0.0, %v4171
      %v4173 = vpop.f32.mrb[0].mxu0
      %4174 = vdwg.mxu0
      %v4176 = vsel %vm857, %v3790, 0
      %v4179 = vsel %vm857, %v3791, 0
      %v4182 = vsel %vm857, %v3792, 0
      %v4185 = vsel %vm857, %v3793, 0
      %v4188 = vsel %vm857, %v3794, 0
      %v4191 = vsel %vm857, %v3795, 0
      %v4194 = vsel %vm857, %v3796, 0
      %v4197 = vsel %vm857, %v3797, 0
      %v4200 = vsel %vm3826, %v3801, 0
      %4202 = vmatprep.subr.bf16.mxu0 0
      %4203 = vmatpush1.bf16.msra.mxu0 %v4200
      %4204 = vmatprep.subr.bf16.mxu0 0
      %4205 = vmatpush1.bf16.msra.mxu0 0
      %4206 = vmatprep.subr.bf16.mxu0 0
      %4207 = vmatpush1.bf16.msra.mxu0 0
      %4208 = vmatprep.subr.bf16.mxu0 0
      %4209 = vmatpush1.bf16.msra.mxu0 0
      %4210 = vmatprep.subr.bf16.mxu0 0
      %4211 = vmatpush1.bf16.msra.mxu0 0
      %4212 = vmatprep.subr.bf16.mxu0 0
      %4213 = vmatpush1.bf16.msra.mxu0 0
      %4214 = vmatprep.subr.bf16.mxu0 0
      %4215 = vmatpush1.bf16.msra.mxu0 0
      %4216 = vmatprep.subr.bf16.mxu0 0
      %4217 = vmatpush1.bf16.msra.mxu0 0
      %4218 = vmatprep.subr.bf16.mxu0 0
      %4219 = vmatpush1.bf16.msra.mxu0 0
      %4220 = vmatprep.subr.bf16.mxu0 0
      %4221 = vmatpush1.bf16.msra.mxu0 0
      %4222 = vmatprep.subr.bf16.mxu0 0
      %4223 = vmatpush1.bf16.msra.mxu0 0
      %4224 = vmatprep.subr.bf16.mxu0 0
      %4225 = vmatpush1.bf16.msra.mxu0 0
      %4226 = vmatprep.subr.bf16.mxu0 0
      %4227 = vmatpush1.bf16.msra.mxu0 0
      %4228 = vmatprep.subr.bf16.mxu0 0
      %4229 = vmatpush1.bf16.msra.mxu0 0
      %4230 = vmatprep.subr.bf16.mxu0 0
      %4231 = vmatpush1.bf16.msra.mxu0 0
      %4232 = vmatprep.subr.bf16.mxu0 0
      %4233 = vmatpush1.bf16.msra.mxu0 0
      %4234 = vmatprep.mubr.bf16.mxu0 0
      %4235 = vmatmul.mubr.bf16.gmra.mrb[0].mxu0 %v4176
      %v4236 = vpop.f32.mrb[0].mxu0
      %v4237 = vadd.f32 0.0, %v4236
      %v4238 = vpop.f32.mrb[0].mxu0
      %v4239 = vpop.f32.mrb[0].mxu0
      %v4240 = vadd.f32 0.0, %v4239
      %v4241 = vpop.f32.mrb[0].mxu0
      %4242 = vmatprep.mubr.bf16.mxu0 0
      %4243 = vmatmul.mubr.bf16.gmra.mrb[0].mxu0 %v4179
      %v4244 = vpop.f32.mrb[0].mxu0
      %v4245 = vadd.f32 0.0, %v4244
      %v4246 = vpop.f32.mrb[0].mxu0
      %v4247 = vpop.f32.mrb[0].mxu0
      %v4248 = vadd.f32 0.0, %v4247
      %v4249 = vpop.f32.mrb[0].mxu0
      %4250 = vmatprep.mubr.bf16.mxu0 0
      %4251 = vmatmul.mubr.bf16.gmra.mrb[0].mxu0 %v4182
      %v4252 = vpop.f32.mrb[0].mxu0
      %v4253 = vadd.f32 0.0, %v4252
      %v4254 = vpop.f32.mrb[0].mxu0
      %v4255 = vpop.f32.mrb[0].mxu0
      %v4256 = vadd.f32 0.0, %v4255
      %v4257 = vpop.f32.mrb[0].mxu0
      %4258 = vmatprep.mubr.bf16.mxu0 0
      %4259 = vmatmul.mubr.bf16.gmra.mrb[0].mxu0 %v4185
      %v4260 = vpop.f32.mrb[0].mxu0
      %v4261 = vadd.f32 0.0, %v4260
      %v4262 = vpop.f32.mrb[0].mxu0
      %v4263 = vpop.f32.mrb[0].mxu0
      %v4264 = vadd.f32 0.0, %v4263
      %v4265 = vpop.f32.mrb[0].mxu0
      %4266 = vmatprep.mubr.bf16.mxu0 0
      %4267 = vmatmul.mubr.bf16.gmra.mrb[0].mxu0 %v4188
      %v4268 = vpop.f32.mrb[0].mxu0
      %v4269 = vadd.f32 0.0, %v4268
      %v4270 = vpop.f32.mrb[0].mxu0
      %v4271 = vpop.f32.mrb[0].mxu0
      %v4272 = vadd.f32 0.0, %v4271
      %v4273 = vpop.f32.mrb[0].mxu0
      %4274 = vmatprep.mubr.bf16.mxu0 0
      %4275 = vmatmul.mubr.bf16.gmra.mrb[0].mxu0 %v4191
      %v4276 = vpop.f32.mrb[0].mxu0
      %v4277 = vadd.f32 0.0, %v4276
      %v4278 = vpop.f32.mrb[0].mxu0
      %v4279 = vpop.f32.mrb[0].mxu0
      %v4280 = vadd.f32 0.0, %v4279
      %v4281 = vpop.f32.mrb[0].mxu0
      %4282 = vmatprep.mubr.bf16.mxu0 0
      %4283 = vmatmul.mubr.bf16.gmra.mrb[0].mxu0 %v4194
      %v4284 = vpop.f32.mrb[0].mxu0
      %v4285 = vadd.f32 0.0, %v4284
      %v4286 = vpop.f32.mrb[0].mxu0
      %v4287 = vpop.f32.mrb[0].mxu0
      %v4288 = vadd.f32 0.0, %v4287
      %v4289 = vpop.f32.mrb[0].mxu0
      %4290 = vmatprep.mubr.bf16.mxu0 0
      %4291 = vmatmul.mubr.bf16.gmra.mrb[0].mxu0 %v4197
      %v4292 = vpop.f32.mrb[0].mxu0
      %v4293 = vadd.f32 0.0, %v4292
      %v4294 = vpop.f32.mrb[0].mxu0
      %v4295 = vpop.f32.mrb[0].mxu0
      %v4296 = vadd.f32 0.0, %v4295
      %v4297 = vpop.f32.mrb[0].mxu0
      %4298 = vdwg.mxu0
      %v4299 = vsel %vm381, %v3865, 0.0
      %v4300 = vsel %vm381, %v3989, 0.0
      %v4301 = vadd.f32 %v4299, %v4300
      %v4302 = vsel %vm381, %v4113, 0.0
      %v4303 = vadd.f32 %v4301, %v4302
      %v4304 = vsel %vm381, %v4237, 0.0
      %v4305 = vadd.f32 %v4303, %v4304
      %v4306 = vsel %vm381, %v3868, 0.0
      %v4307 = vsel %vm381, %v3992, 0.0
      %v4308 = vadd.f32 %v4306, %v4307
      %v4309 = vsel %vm381, %v4116, 0.0
      %v4310 = vadd.f32 %v4308, %v4309
      %v4311 = vsel %vm381, %v4240, 0.0
      %v4312 = vadd.f32 %v4310, %v4311
      %v4313 = vsel %vm381, %v3873, 0.0
      %v4314 = vsel %vm381, %v3997, 0.0
      %v4315 = vadd.f32 %v4313, %v4314
      %v4316 = vsel %vm381, %v4121, 0.0
      %v4317 = vadd.f32 %v4315, %v4316
      %v4318 = vsel %vm381, %v4245, 0.0
      %v4319 = vadd.f32 %v4317, %v4318
      %v4320 = vsel %vm381, %v3876, 0.0
      %v4321 = vsel %vm381, %v4000, 0.0
      %v4322 = vadd.f32 %v4320, %v4321
      %v4323 = vsel %vm381, %v4124, 0.0
      %v4324 = vadd.f32 %v4322, %v4323
      %v4325 = vsel %vm381, %v4248, 0.0
      %v4326 = vadd.f32 %v4324, %v4325
      %v4327 = vsel %vm381, %v3881, 0.0
      %v4328 = vsel %vm381, %v4005, 0.0
      %v4329 = vadd.f32 %v4327, %v4328
      %v4330 = vsel %vm381, %v4129, 0.0
      %v4331 = vadd.f32 %v4329, %v4330
      %v4332 = vsel %vm381, %v4253, 0.0
      %v4333 = vadd.f32 %v4331, %v4332
      %v4334 = vsel %vm381, %v3884, 0.0
      %v4335 = vsel %vm381, %v4008, 0.0
      %v4336 = vadd.f32 %v4334, %v4335
      %v4337 = vsel %vm381, %v4132, 0.0
      %v4338 = vadd.f32 %v4336, %v4337
      %v4339 = vsel %vm381, %v4256, 0.0
      %v4340 = vadd.f32 %v4338, %v4339
      %v4341 = vsel %vm381, %v3889, 0.0
      %v4342 = vsel %vm381, %v4013, 0.0
      %v4343 = vadd.f32 %v4341, %v4342
      %v4344 = vsel %vm381, %v4137, 0.0
      %v4345 = vadd.f32 %v4343, %v4344
      %v4346 = vsel %vm381, %v4261, 0.0
      %v4347 = vadd.f32 %v4345, %v4346
      %v4348 = vsel %vm381, %v3892, 0.0
      %v4349 = vsel %vm381, %v4016, 0.0
      %v4350 = vadd.f32 %v4348, %v4349
      %v4351 = vsel %vm381, %v4140, 0.0
      %v4352 = vadd.f32 %v4350, %v4351
      %v4353 = vsel %vm381, %v4264, 0.0
      %v4354 = vadd.f32 %v4352, %v4353
      %v4355 = vsel %vm381, %v3897, 0.0
      %v4356 = vsel %vm381, %v4021, 0.0
      %v4357 = vadd.f32 %v4355, %v4356
      %v4358 = vsel %vm381, %v4145, 0.0
      %v4359 = vadd.f32 %v4357, %v4358
      %v4360 = vsel %vm381, %v4269, 0.0
      %v4361 = vadd.f32 %v4359, %v4360
      %v4362 = vsel %vm381, %v3900, 0.0
      %v4363 = vsel %vm381, %v4024, 0.0
      %v4364 = vadd.f32 %v4362, %v4363
      %v4365 = vsel %vm381, %v4148, 0.0
      %v4366 = vadd.f32 %v4364, %v4365
      %v4367 = vsel %vm381, %v4272, 0.0
      %v4368 = vadd.f32 %v4366, %v4367
      %v4369 = vsel %vm381, %v3905, 0.0
      %v4370 = vsel %vm381, %v4029, 0.0
      %v4371 = vadd.f32 %v4369, %v4370
      %v4372 = vsel %vm381, %v4153, 0.0
      %v4373 = vadd.f32 %v4371, %v4372
      %v4374 = vsel %vm381, %v4277, 0.0
      %v4375 = vadd.f32 %v4373, %v4374
      %v4376 = vsel %vm381, %v3908, 0.0
      %v4377 = vsel %vm381, %v4032, 0.0
      %v4378 = vadd.f32 %v4376, %v4377
      %v4379 = vsel %vm381, %v4156, 0.0
      %v4380 = vadd.f32 %v4378, %v4379
      %v4381 = vsel %vm381, %v4280, 0.0
      %v4382 = vadd.f32 %v4380, %v4381
      %v4383 = vsel %vm381, %v3913, 0.0
      %v4384 = vsel %vm381, %v4037, 0.0
      %v4385 = vadd.f32 %v4383, %v4384
      %v4386 = vsel %vm381, %v4161, 0.0
      %v4387 = vadd.f32 %v4385, %v4386
      %v4388 = vsel %vm381, %v4285, 0.0
      %v4389 = vadd.f32 %v4387, %v4388
      %v4390 = vsel %vm381, %v3916, 0.0
      %v4391 = vsel %vm381, %v4040, 0.0
      %v4392 = vadd.f32 %v4390, %v4391
      %v4393 = vsel %vm381, %v4164, 0.0
      %v4394 = vadd.f32 %v4392, %v4393
      %v4395 = vsel %vm381, %v4288, 0.0
      %v4396 = vadd.f32 %v4394, %v4395
      %v4397 = vsel %vm381, %v3921, 0.0
      %v4398 = vsel %vm381, %v4045, 0.0
      %v4399 = vadd.f32 %v4397, %v4398
      %v4400 = vsel %vm381, %v4169, 0.0
      %v4401 = vadd.f32 %v4399, %v4400
      %v4402 = vsel %vm381, %v4293, 0.0
      %v4403 = vadd.f32 %v4401, %v4402
      %v4404 = vsel %vm381, %v3924, 0.0
      %v4405 = vsel %vm381, %v4048, 0.0
      %v4406 = vadd.f32 %v4404, %v4405
      %v4407 = vsel %vm381, %v4172, 0.0
      %v4408 = vadd.f32 %v4406, %v4407
      %v4409 = vsel %vm381, %v4296, 0.0
      %v4410 = vadd.f32 %v4408, %v4409
      %v4411 = vld [vmem:[%s8] sm:$0x1]
      %v4413 = vlaneseq
      %v4414 = vshrl.u32 %v4413, 7
      %v4415 = vsub.s32 0, %v4414
      %v4416 = vrot.slane %v4411, %v4415
      %v4418 = vadd.f32 %v4305, %v4416
      %v4419 = vadd.f32 %v4312, %v4416
      %v4420 = vadd.f32 %v4319, %v4416
      %v4421 = vadd.f32 %v4326, %v4416
      %v4422 = vadd.f32 %v4333, %v4416
      %v4423 = vadd.f32 %v4340, %v4416
      %v4424 = vadd.f32 %v4347, %v4416
      %v4425 = vadd.f32 %v4354, %v4416
      %v4426 = vadd.f32 %v4361, %v4416
      %v4427 = vadd.f32 %v4368, %v4416
      %v4428 = vadd.f32 %v4375, %v4416
      %v4429 = vadd.f32 %v4382, %v4416
      %v4430 = vadd.f32 %v4389, %v4416
      %v4431 = vadd.f32 %v4396, %v4416
      %v4432 = vadd.f32 %v4403, %v4416
      %v4433 = vadd.f32 %v4410, %v4416
      %v4434 = vpack.c.bf16 %v4419, %v4418
      %v4435 = vpack.c.bf16 %v4421, %v4420
      %v4436 = vpack.c.bf16 %v4423, %v4422
      %v4437 = vpack.c.bf16 %v4425, %v4424
      %v4438 = vpack.c.bf16 %v4427, %v4426
      %v4439 = vpack.c.bf16 %v4429, %v4428
      %v4440 = vpack.c.bf16 %v4431, %v4430
      %v4441 = vpack.c.bf16 %v4433, %v4432
      %v4450 = vunpack.c.l.b16 %v4434
      %v4451 = vunpack.c.h.b16 %v4434
      %v4452 = vunpack.c.l.b16 %v4435
      %v4453 = vunpack.c.h.b16 %v4435
      %v4454 = vunpack.c.l.b16 %v4436
      %v4455 = vunpack.c.h.b16 %v4436
      %v4456 = vunpack.c.l.b16 %v4437
      %v4457 = vunpack.c.h.b16 %v4437
      %v4458 = vunpack.c.l.b16 %v4438
      %v4459 = vunpack.c.h.b16 %v4438
      %v4460 = vunpack.c.l.b16 %v4439
      %v4461 = vunpack.c.h.b16 %v4439
      %v4462 = vunpack.c.l.b16 %v4440
      %v4463 = vunpack.c.h.b16 %v4440
      %v4464 = vunpack.c.l.b16 %v4441
      %v4465 = vunpack.c.h.b16 %v4441
      %v4466 = vpack.c.b16 %v4450, %v4450
      %v4467 = vpack.c.b16 %v4451, %v4451
      %v4468 = vpack.c.b16 %v4452, %v4452
      %v4469 = vpack.c.b16 %v4453, %v4453
      %v4470 = vpack.c.b16 %v4454, %v4454
      %v4471 = vpack.c.b16 %v4455, %v4455
      %v4472 = vpack.c.b16 %v4456, %v4456
      %v4473 = vpack.c.b16 %v4457, %v4457
      %v4474 = vpack.c.b16 %v4458, %v4458
      %v4475 = vpack.c.b16 %v4459, %v4459
      %v4476 = vpack.c.b16 %v4460, %v4460
      %v4477 = vpack.c.b16 %v4461, %v4461
      %v4478 = vpack.c.b16 %v4462, %v4462
      %v4479 = vpack.c.b16 %v4463, %v4463
      %v4480 = vpack.c.b16 %v4464, %v4464
      %v4481 = vpack.c.b16 %v4465, %v4465
      %vm4498 = vcmask 257024
      %4499 = vst.msk [vmem:[%s346] sm:$0xf] %vm4498, %v4466
      %4500 = vst.msk [vmem:[%s346 + $0x4] sm:$0xf] %vm4498, %v4467
      %4501 = vst.msk [vmem:[%s346 + $0x8] sm:$0xf] %vm4498, %v4468
      %4502 = vst.msk [vmem:[%s346 + $0xc] sm:$0xf] %vm4498, %v4469
      %4503 = vst.msk [vmem:[%s346 + $0x10] sm:$0xf] %vm4498, %v4470
      %4504 = vst.msk [vmem:[%s346 + $0x14] sm:$0xf] %vm4498, %v4471
      %4505 = vst.msk [vmem:[%s346 + $0x18] sm:$0xf] %vm4498, %v4472
      %4506 = vst.msk [vmem:[%s346 + $0x1c] sm:$0xf] %vm4498, %v4473
      %4507 = vst.msk [vmem:[%s346 + $0x20] sm:$0xf] %vm4498, %v4474
      %4508 = vst.msk [vmem:[%s346 + $0x24] sm:$0xf] %vm4498, %v4475
      %4509 = vst.msk [vmem:[%s346 + $0x28] sm:$0xf] %vm4498, %v4476
      %4510 = vst.msk [vmem:[%s346 + $0x2c] sm:$0xf] %vm4498, %v4477
      %4511 = vst.msk [vmem:[%s346 + $0x30] sm:$0xf] %vm4498, %v4478
      %4512 = vst.msk [vmem:[%s346 + $0x34] sm:$0xf] %vm4498, %v4479
      %4513 = vst.msk [vmem:[%s346 + $0x38] sm:$0xf] %vm4498, %v4480
      %4514 = vst.msk [vmem:[%s346 + $0x3c] sm:$0xf] %vm4498, %v4481
      %s4515 = smul.u32 4, %s26
      %p4516 = scmp.lt.s32.totalorder %s4515, 15
      %s4517 = scalar_select %p4516, %s4515, 15
      %s4518 = smul.addr %s4517, 4
      %s4519 = smul.addr %s4518, 4
      %s4520 = scalar_lea.vmem %s9, %s4519
      // Predicated region
      $region53: #{earth_specific_layer.4} parent=51 // pred_check
        %p4521 = pneg %p224
      $region54: #{earth_specific_layer.4} parent=51 // pred_check_branch
        %4523 = sbr.rel (%p4521) target = $region56
      $region55: #{earth_specific_layer.4} parent=51 // pred_region
        %s4524 = smul.u32 4, %s26
      $region56: #{earth_specific_layer.4} parent=51 // pred_fallthru
        _
    $region52: #{earth_specific_layer.4} parent=5 // pred_fallthru
      _
    %p4525 = scmp.le.s32.totalorder 2, %s21
    // Predicated region
    $region57: #{earth_specific_layer.4} parent=5 // pred_check
      %p4526 = pneg %p4525
    $region58: #{earth_specific_layer.4} parent=5 // pred_check_branch
      %4528 = sbr.rel (%p4526) target = $region60
    $region59: #{earth_specific_layer.4} parent=5 // pred_region
      %s4529 = ssub.s32 %s21, 2
      // Predicated region
      $region61: #{earth_specific_layer.4} parent=59 // pred_check
        %p4530 = pneg %p230
      $region62: #{earth_specific_layer.4} parent=59 // pred_check_branch
        %4532 = sbr.rel (%p4530) target = $region64
      $region63: #{earth_specific_layer.4} parent=59 // pred_region
        %s4533 = smul.u32 4, %s27
        %p4534 = scmp.lt.s32.totalorder %s4533, 15
        %s4535 = scalar_select %p4534, %s4533, 15
        %s4536 = smul.addr %s4535, 4
        %s4537 = smul.addr %s4536, 4
        %s4538 = scalar_lea.vmem %s9, %s4537
      $region64: #{earth_specific_layer.4} parent=59 // pred_fallthru
        _
    $region60: #{earth_specific_layer.4} parent=5 // pred_fallthru
      _
  $region6: #{earth_specific_layer.4} parent=0 // loop_footer
    %s25 = sadd.s32 1, %s21
  $region7: #{earth_specific_layer.4} parent=0 // loop_footer_branch
    %20 = sbr.rel target = $region3
  $region8: #{earth_specific_layer.4} parent=0 // loop_exit
    _

// kernel: earth_specific_layer.6
$region0: #{earth_specific_layer.6}
  #allocation0 [shape = 'u32[]', space=smem, size = 0x4, offset = 0x4, fixed_abs, tag = 'smem constant byte address 0x4 - core index']
  #allocation1 [shape = 'u32[144,128]{1,0:T(1,128)}', space=vmem, size = 0x12000, scoped, tag = 'internal scratch']
  #allocation2 [shape = 's32[1]{0}', space=sflag, size = 0x4, scoped, tag = 'scoped memory for earth_specific_layer.6']
  #allocation3 [shape = 'u8[512]{0}', space=smem, size = 0x200, scoped, tag = 'prefetched SMEM operand 0']
  %s0 = inlined_call_operand.vmem [shape: s32[4], index: 0, kind: input, shape index: {}]
  %s1 = inlined_call_operand.vmem [shape: bf16[16,32,32], index: 1, kind: input, shape index: {}]
  %s2 = inlined_call_operand.vmem [shape: f32[1,32], index: 2, kind: input, shape index: {}]
  %s3 = inlined_call_operand.vmem [shape: f32[1,32], index: 3, kind: input, shape index: {}]
  %s4 = inlined_call_operand.vmem [shape: bf16[32,96], index: 4, kind: input, shape index: {}]
  %s5 = inlined_call_operand.vmem [shape: f32[1,96], index: 5, kind: input, shape index: {}]
  %s6 = inlined_call_operand.vmem [shape: bf16[4,4,32,32], index: 6, kind: input, shape index: {}]
  %s7 = inlined_call_operand.vmem [shape: bf16[4,8,32], index: 7, kind: input, shape index: {}]
  %s8 = inlined_call_operand.vmem [shape: f32[1,32], index: 8, kind: input, shape index: {}]
  %s9 = inlined_call_operand.vmem [shape: bf16[16,32,32], index: 9, kind: output, shape index: {}]
  %s10 = sld [smem:[#allocation0]]
  $region65: #{earth_specific_layer.6} parent=0
    _
  %s12 = ssub.s32 1, %s10
  %s13 = scalar_select 0, %s12, %s10
  %s14 = sshll.u32 %s0, 4
  %s15 = int_to_ptr.vmem [resolvable:$true] %s14
  %17 = dma.vmem_to_smem %s15, 16, [#allocation3], [#allocation2]
  %18 = dma.done [#allocation2], 16
  %19 = sfence
  loop: start=0, step=1, limit=6
  $region2: #{earth_specific_layer.6} parent=0 // loop_pre_header
    _
  $region3: #{earth_specific_layer.6} parent=0 // loop_header
    %s21 = sphi 0, %s25
    %p22 = scmp.ge.s32.totalorder %s21, 6
    %s31 = sphi 0, %s33
    %s34 = sphi 0, %s31
    %s35 = sphi 0, %s34
    %s51 = sphi 0, %s35
    %s55 = sphi 0, %s55
    %s57 = sphi 0, %s55
    %s58 = sphi 0, %s57
    %s72 = sphi 0, %s58
    %s76 = sphi 0, %s76
    %s78 = sphi 0, %s76
    %s79 = sphi 0, %s78
    %s93 = sphi 0, %s79
    %s97 = sphi 0, %s97
    %s99 = sphi 0, %s97
    %s100 = sphi 0, %s99
    %s114 = sphi 0, %s100
    %s118 = sphi 0, %s118
    %s120 = sphi 0, %s118
    %s121 = sphi 0, %s120
    %s135 = sphi 0, %s121
    %s143 = sphi 0, %s145
    %s146 = sphi 0, %s143
    %s147 = sphi 0, %s146
    %s163 = sphi 0, %s147
    %s167 = sphi 0, %s167
    %s169 = sphi 0, %s167
    %s170 = sphi 0, %s169
    %s184 = sphi 0, %s170
    %s188 = sphi 0, %s188
    %s190 = sphi 0, %s188
    %s191 = sphi 0, %s190
    %s205 = sphi 0, %s191
    %s211 = sphi 0, %s213
    %s214 = sphi 0, %s211
    %s215 = sphi 0, %s214
    %s231 = sphi 0, %s215
  $region4: #{earth_specific_layer.6} parent=0 // loop_header_branch
    %24 = sbr.rel (%p22) target = $region8
  $region5: #{earth_specific_layer.6} parent=0 // loop_body
    %s26 = ssub.s32 %s21, 1
    %s27 = ssub.s32 %s21, 2
    %s28 = sadd.s32 %s21, 1
    %s29 = ssub.s32 %s21, %s28
    %p30 = scmp.eq.s32.totalorder %s29, 0
    %s32 = sadd.s32 %s31, 1
    %s33 = scalar_select %p30, %s31, %s32
    %p36 = pneg %p30
    %p37 = scmp.eq.s32.totalorder %s21, 3
    %p38 = por %p36, %p37
    %p39 = scmp.ne.s32.totalorder %s31, %s34
    %p40 = scmp.eq.s32.totalorder %s21, 0
    %p41 = por %p39, %p40
    %p42 = scmp.ne.s32.totalorder %s31, %s34
    %p43 = scmp.eq.s32.totalorder %s26, 3
    %p44 = por %p42, %p43
    %p45 = scmp.ne.s32.totalorder %s34, %s35
    %p46 = scmp.eq.s32.totalorder %s26, 0
    %p47 = por %p45, %p46
    %p48 = scmp.ne.s32.totalorder %s34, %s35
    %p49 = scmp.eq.s32.totalorder %s27, 3
    %p50 = por %p48, %p49
    %p52 = scmp.ne.s32.totalorder %s35, %s51
    %p53 = scmp.eq.s32.totalorder %s27, 0
    %p54 = por %p52, %p53
    %s56 = sadd.s32 %s55, 1
    %p59 = scmp.eq.s32.totalorder %s21, 3
    %p60 = scmp.ne.s32.totalorder %s55, %s57
    %p61 = scmp.eq.s32.totalorder %s21, 0
    %p62 = por %p60, %p61
    %p63 = scmp.ne.s32.totalorder %s55, %s57
    %p64 = scmp.eq.s32.totalorder %s26, 3
    %p65 = por %p63, %p64
    %p66 = scmp.ne.s32.totalorder %s57, %s58
    %p67 = scmp.eq.s32.totalorder %s26, 0
    %p68 = por %p66, %p67
    %p69 = scmp.ne.s32.totalorder %s57, %s58
    %p70 = scmp.eq.s32.totalorder %s27, 3
    %p71 = por %p69, %p70
    %p73 = scmp.ne.s32.totalorder %s58, %s72
    %p74 = scmp.eq.s32.totalorder %s27, 0
    %p75 = por %p73, %p74
    %s77 = sadd.s32 %s76, 1
    %p80 = scmp.eq.s32.totalorder %s21, 3
    %p81 = scmp.ne.s32.totalorder %s76, %s78
    %p82 = scmp.eq.s32.totalorder %s21, 0
    %p83 = por %p81, %p82
    %p84 = scmp.ne.s32.totalorder %s76, %s78
    %p85 = scmp.eq.s32.totalorder %s26, 3
    %p86 = por %p84, %p85
    %p87 = scmp.ne.s32.totalorder %s78, %s79
    %p88 = scmp.eq.s32.totalorder %s26, 0
    %p89 = por %p87, %p88
    %p90 = scmp.ne.s32.totalorder %s78, %s79
    %p91 = scmp.eq.s32.totalorder %s27, 3
    %p92 = por %p90, %p91
    %p94 = scmp.ne.s32.totalorder %s79, %s93
    %p95 = scmp.eq.s32.totalorder %s27, 0
    %p96 = por %p94, %p95
    %s98 = sadd.s32 %s97, 1
    %p101 = scmp.eq.s32.totalorder %s21, 3
    %p102 = scmp.ne.s32.totalorder %s97, %s99
    %p103 = scmp.eq.s32.totalorder %s21, 0
    %p104 = por %p102, %p103
    %p105 = scmp.ne.s32.totalorder %s97, %s99
    %p106 = scmp.eq.s32.totalorder %s26, 3
    %p107 = por %p105, %p106
    %p108 = scmp.ne.s32.totalorder %s99, %s100
    %p109 = scmp.eq.s32.totalorder %s26, 0
    %p110 = por %p108, %p109
    %p111 = scmp.ne.s32.totalorder %s99, %s100
    %p112 = scmp.eq.s32.totalorder %s27, 3
    %p113 = por %p111, %p112
    %p115 = scmp.ne.s32.totalorder %s100, %s114
    %p116 = scmp.eq.s32.totalorder %s27, 0
    %p117 = por %p115, %p116
    %s119 = sadd.s32 %s118, 1
    %p122 = scmp.eq.s32.totalorder %s21, 3
    %p123 = scmp.ne.s32.totalorder %s118, %s120
    %p124 = scmp.eq.s32.totalorder %s21, 0
    %p125 = por %p123, %p124
    %p126 = scmp.ne.s32.totalorder %s118, %s120
    %p127 = scmp.eq.s32.totalorder %s26, 3
    %p128 = por %p126, %p127
    %p129 = scmp.ne.s32.totalorder %s120, %s121
    %p130 = scmp.eq.s32.totalorder %s26, 0
    %p131 = por %p129, %p130
    %p132 = scmp.ne.s32.totalorder %s120, %s121
    %p133 = scmp.eq.s32.totalorder %s27, 3
    %p134 = por %p132, %p133
    %p136 = scmp.ne.s32.totalorder %s121, %s135
    %p137 = scmp.eq.s32.totalorder %s27, 0
    %p138 = por %p136, %p137
    %s139 = sld [smem:[#allocation3 + %s21]]
    %s140 = sld [smem:[#allocation3 + %s28]]
    %s141 = ssub.s32 %s139, %s140
    %p142 = scmp.eq.s32.totalorder %s141, 0
    %s144 = sadd.s32 %s143, 1
    %s145 = scalar_select %p142, %s143, %s144
    %p148 = pneg %p142
    %p149 = scmp.eq.s32.totalorder %s21, 3
    %p150 = por %p148, %p149
    %p151 = scmp.ne.s32.totalorder %s143, %s146
    %p152 = scmp.eq.s32.totalorder %s21, 0
    %p153 = por %p151, %p152
    %p154 = scmp.ne.s32.totalorder %s143, %s146
    %p155 = scmp.eq.s32.totalorder %s26, 3
    %p156 = por %p154, %p155
    %p157 = scmp.ne.s32.totalorder %s146, %s147
    %p158 = scmp.eq.s32.totalorder %s26, 0
    %p159 = por %p157, %p158
    %p160 = scmp.ne.s32.totalorder %s146, %s147
    %p161 = scmp.eq.s32.totalorder %s27, 3
    %p162 = por %p160, %p161
    %p164 = scmp.ne.s32.totalorder %s147, %s163
    %p165 = scmp.eq.s32.totalorder %s27, 0
    %p166 = por %p164, %p165
    %s168 = sadd.s32 %s167, 1
    %p171 = scmp.eq.s32.totalorder %s21, 3
    %p172 = scmp.ne.s32.totalorder %s167, %s169
    %p173 = scmp.eq.s32.totalorder %s21, 0
    %p174 = por %p172, %p173
    %p175 = scmp.ne.s32.totalorder %s167, %s169
    %p176 = scmp.eq.s32.totalorder %s26, 3
    %p177 = por %p175, %p176
    %p178 = scmp.ne.s32.totalorder %s169, %s170
    %p179 = scmp.eq.s32.totalorder %s26, 0
    %p180 = por %p178, %p179
    %p181 = scmp.ne.s32.totalorder %s169, %s170
    %p182 = scmp.eq.s32.totalorder %s27, 3
    %p183 = por %p181, %p182
    %p185 = scmp.ne.s32.totalorder %s170, %s184
    %p186 = scmp.eq.s32.totalorder %s27, 0
    %p187 = por %p185, %p186
    %s189 = sadd.s32 %s188, 1
    %p192 = scmp.eq.s32.totalorder %s21, 3
    %p193 = scmp.ne.s32.totalorder %s188, %s190
    %p194 = scmp.eq.s32.totalorder %s21, 0
    %p195 = por %p193, %p194
    %p196 = scmp.ne.s32.totalorder %s188, %s190
    %p197 = scmp.eq.s32.totalorder %s26, 3
    %p198 = por %p196, %p197
    %p199 = scmp.ne.s32.totalorder %s190, %s191
    %p200 = scmp.eq.s32.totalorder %s26, 0
    %p201 = por %p199, %p200
    %p202 = scmp.ne.s32.totalorder %s190, %s191
    %p203 = scmp.eq.s32.totalorder %s27, 3
    %p204 = por %p202, %p203
    %p206 = scmp.ne.s32.totalorder %s191, %s205
    %p207 = scmp.eq.s32.totalorder %s27, 0
    %p208 = por %p206, %p207
    %s209 = ssub.s32 %s21, %s28
    %p210 = scmp.eq.s32.totalorder %s209, 0
    %s212 = sadd.s32 %s211, 1
    %s213 = scalar_select %p210, %s211, %s212
    %p216 = pneg %p210
    %p217 = scmp.eq.s32.totalorder %s21, 3
    %p218 = por %p216, %p217
    %p219 = scmp.ne.s32.totalorder %s211, %s214
    %p220 = scmp.eq.s32.totalorder %s21, 0
    %p221 = por %p219, %p220
    %p222 = scmp.ne.s32.totalorder %s211, %s214
    %p223 = scmp.eq.s32.totalorder %s26, 3
    %p224 = por %p222, %p223
    %p225 = scmp.ne.s32.totalorder %s214, %s215
    %p226 = scmp.eq.s32.totalorder %s26, 0
    %p227 = por %p225, %p226
    %p228 = scmp.ne.s32.totalorder %s214, %s215
    %p229 = scmp.eq.s32.totalorder %s27, 3
    %p230 = por %p228, %p229
    %p232 = scmp.ne.s32.totalorder %s215, %s231
    %p233 = scmp.eq.s32.totalorder %s27, 0
    %p234 = por %p232, %p233
    %p235 = scmp.le.s32.totalorder 1, %s21
    %p236 = scmp.lt.s32.totalorder %s21, 5
    %p237 = pnand %p235, %p236
    %p238 = pneg %p237
    // Predicated region
    $region9: #{earth_specific_layer.6} parent=5 // pred_check
      _
    $region10: #{earth_specific_layer.6} parent=5 // pred_check_branch
      %240 = sbr.rel (%p237) target = $region12
    $region11: #{earth_specific_layer.6} parent=5 // pred_region
      %s241 = ssub.s32 %s21, 1
      // Predicated region
      $region13: #{earth_specific_layer.6} parent=11 // pred_check
        %p242 = pneg %p68
      $region14: #{earth_specific_layer.6} parent=11 // pred_check_branch
        %244 = sbr.rel (%p242) target = $region16
      $region15: #{earth_specific_layer.6} parent=11 // pred_region
        _
      $region16: #{earth_specific_layer.6} parent=11 // pred_fallthru
        _
      // Predicated region
      $region17: #{earth_specific_layer.6} parent=11 // pred_check
        %p245 = pneg %p89
      $region18: #{earth_specific_layer.6} parent=11 // pred_check_branch
        %247 = sbr.rel (%p245) target = $region20
      $region19: #{earth_specific_layer.6} parent=11 // pred_region
        _
      $region20: #{earth_specific_layer.6} parent=11 // pred_fallthru
        _
      // Predicated region
      $region21: #{earth_specific_layer.6} parent=11 // pred_check
        %p248 = pneg %p110
      $region22: #{earth_specific_layer.6} parent=11 // pred_check_branch
        %250 = sbr.rel (%p248) target = $region24
      $region23: #{earth_specific_layer.6} parent=11 // pred_region
        _
      $region24: #{earth_specific_layer.6} parent=11 // pred_fallthru
        _
      // Predicated region
      $region25: #{earth_specific_layer.6} parent=11 // pred_check
        %p251 = pneg %p131
      $region26: #{earth_specific_layer.6} parent=11 // pred_check_branch
        %253 = sbr.rel (%p251) target = $region28
      $region27: #{earth_specific_layer.6} parent=11 // pred_region
        _
      $region28: #{earth_specific_layer.6} parent=11 // pred_fallthru
        _
      // Predicated region
      $region29: #{earth_specific_layer.6} parent=11 // pred_check
        %p254 = pneg %p180
      $region30: #{earth_specific_layer.6} parent=11 // pred_check_branch
        %256 = sbr.rel (%p254) target = $region32
      $region31: #{earth_specific_layer.6} parent=11 // pred_region
        _
      $region32: #{earth_specific_layer.6} parent=11 // pred_fallthru
        _
      // Predicated region
      $region33: #{earth_specific_layer.6} parent=11 // pred_check
        %p257 = pneg %p201
      $region34: #{earth_specific_layer.6} parent=11 // pred_check_branch
        %259 = sbr.rel (%p257) target = $region36
      $region35: #{earth_specific_layer.6} parent=11 // pred_region
        _
      $region36: #{earth_specific_layer.6} parent=11 // pred_fallthru
        _
    $region12: #{earth_specific_layer.6} parent=5 // pred_fallthru
      _
    %p260 = scmp.lt.s32.totalorder %s21, 4
    // Predicated region
    $region37: #{earth_specific_layer.6} parent=5 // pred_check
      %p261 = pneg %p260
    $region38: #{earth_specific_layer.6} parent=5 // pred_check_branch
      %263 = sbr.rel (%p261) target = $region40
    $region39: #{earth_specific_layer.6} parent=5 // pred_region
      // Predicated region
      $region41: #{earth_specific_layer.6} parent=39 // pred_check
        %p264 = pneg %p41
      $region42: #{earth_specific_layer.6} parent=39 // pred_check_branch
        %266 = sbr.rel (%p264) target = $region44
      $region43: #{earth_specific_layer.6} parent=39 // pred_region
        %s267 = smul.u32 4, %s21
        %p268 = scmp.lt.s32.totalorder %s267, 15
        %s269 = scalar_select %p268, %s267, 15
        %s270 = smul.addr %s269, 4
        %s271 = smul.addr %s270, 4
        %s272 = scalar_lea.vmem %s1, %s271
        %s273 = smul.u32 4, %s21
      $region44: #{earth_specific_layer.6} parent=39 // pred_fallthru
        _
      // Predicated region
      $region45: #{earth_specific_layer.6} parent=39 // pred_check
        %p274 = pneg %p153
      $region46: #{earth_specific_layer.6} parent=39 // pred_check_branch
        %276 = sbr.rel (%p274) target = $region48
      $region47: #{earth_specific_layer.6} parent=39 // pred_region
        %s277 = sld [smem:[#allocation3 + %s21]]
        %p278 = scmp.lt.s32.totalorder %s277, 3
        %s279 = scalar_select %p278, %s277, 3
        %s280 = smul.addr %s279, 16
        %s281 = smul.addr %s280, 4
        %s282 = scalar_lea.vmem %s6, %s281
        %s283 = sld [smem:[#allocation3 + %s21]]
      $region48: #{earth_specific_layer.6} parent=39 // pred_fallthru
        _
    $region40: #{earth_specific_layer.6} parent=5 // pred_fallthru
      _
    %p284 = scmp.le.s32.totalorder 1, %s21
    %p285 = scmp.lt.s32.totalorder %s21, 5
    %p286 = pnand %p284, %p285
    %p287 = pneg %p286
    // Predicated region
    $region49: #{earth_specific_layer.6} parent=5 // pred_check
      _
    $region50: #{earth_specific_layer.6} parent=5 // pred_check_branch
      %289 = sbr.rel (%p286) target = $region52
    $region51: #{earth_specific_layer.6} parent=5 // pred_region
      %s290 = ssub.s32 %s21, 1
      %s291 = smul.u32 4, %s26
      %p292 = scmp.lt.s32.totalorder %s291, 15
      %s293 = scalar_select %p292, %s291, 15
      %s294 = smul.addr %s293, 4
      %s295 = smul.addr %s294, 4
      %s296 = scalar_lea.vmem %s1, %s295
      %p297 = pneg %p47
      %p298 = pneg %p44
      %p299 = pneg %p68
      %p300 = pneg %p65
      %p301 = pneg %p89
      %p302 = pneg %p86
      %p303 = pneg %p110
      %p304 = pneg %p107
      %p305 = pneg %p131
      %p306 = pneg %p128
      %s307 = sld [smem:[#allocation3 + %s26]]
      %p308 = scmp.lt.s32.totalorder %s307, 3
      %s309 = scalar_select %p308, %s307, 3
      %s310 = smul.addr %s309, 16
      %s311 = smul.addr %s310, 4
      %s312 = scalar_lea.vmem %s6, %s311
      %p313 = pneg %p159
      %p314 = pneg %p156
      %p315 = pneg %p180
      %p316 = pneg %p177
      %p317 = pneg %p201
      %p318 = pneg %p198
      %p319 = pneg %p227
      %p320 = pneg %p224
      %s321 = smul.u32 4, %s26
      %p322 = scmp.lt.s32.totalorder %s321, 15
      %s323 = scalar_select %p322, %s321, 15
      %s324 = smul.addr %s323, 4
      %s325 = smul.addr %s324, 4
      %s326 = scalar_lea.vmem %s9, %s325
      %s327 = smul.u32 4, %s26
      %p328 = scmp.lt.s32.totalorder %s327, 15
      %s329 = scalar_select %p328, %s327, 15
      %s330 = smul.addr %s329, 4
      %s331 = smul.addr %s330, 4
      %s332 = scalar_lea.vmem %s1, %s331
      %s333 = smul.u32 4, %s26
      %s334 = sld [smem:[#allocation3 + %s26]]
      %p335 = scmp.lt.s32.totalorder %s334, 3
      %s336 = scalar_select %p335, %s334, 3
      %s337 = smul.addr %s336, 16
      %s338 = smul.addr %s337, 4
      %s339 = scalar_lea.vmem %s6, %s338
      %s340 = sld [smem:[#allocation3 + %s26]]
      %s341 = smul.u32 4, %s26
      %p342 = scmp.lt.s32.totalorder %s341, 15
      %s343 = scalar_select %p342, %s341, 15
      %s344 = smul.addr %s343, 4
      %s345 = smul.addr %s344, 4
      %s346 = scalar_lea.vmem %s9, %s345
      %s347 = smul.u32 4, %s26
      %v349 = vld [vmem:[%s332] sm:$0xf]
      %v350 = vld [vmem:[%s332 + $0x4] sm:$0xf]
      %v351 = vld [vmem:[%s332 + $0x8] sm:$0xf]
      %v352 = vld [vmem:[%s332 + $0xc] sm:$0xf]
      %v353 = vld [vmem:[%s332 + $0x10] sm:$0xf]
      %v354 = vld [vmem:[%s332 + $0x14] sm:$0xf]
      %v355 = vld [vmem:[%s332 + $0x18] sm:$0xf]
      %v356 = vld [vmem:[%s332 + $0x1c] sm:$0xf]
      %v357 = vld [vmem:[%s332 + $0x20] sm:$0xf]
      %v358 = vld [vmem:[%s332 + $0x24] sm:$0xf]
      %v359 = vld [vmem:[%s332 + $0x28] sm:$0xf]
      %v360 = vld [vmem:[%s332 + $0x2c] sm:$0xf]
      %v361 = vld [vmem:[%s332 + $0x30] sm:$0xf]
      %v362 = vld [vmem:[%s332 + $0x34] sm:$0xf]
      %v363 = vld [vmem:[%s332 + $0x38] sm:$0xf]
      %v364 = vld [vmem:[%s332 + $0x3c] sm:$0xf]
      %v365 = vunpack.c.l.bf16 %v349
      %v366 = vunpack.c.l.bf16 %v350
      %v367 = vunpack.c.l.bf16 %v351
      %v368 = vunpack.c.l.bf16 %v352
      %v369 = vunpack.c.l.bf16 %v353
      %v370 = vunpack.c.l.bf16 %v354
      %v371 = vunpack.c.l.bf16 %v355
      %v372 = vunpack.c.l.bf16 %v356
      %v373 = vunpack.c.l.bf16 %v357
      %v374 = vunpack.c.l.bf16 %v358
      %v375 = vunpack.c.l.bf16 %v359
      %v376 = vunpack.c.l.bf16 %v360
      %v377 = vunpack.c.l.bf16 %v361
      %v378 = vunpack.c.l.bf16 %v362
      %v379 = vunpack.c.l.bf16 %v363
      %v380 = vunpack.c.l.bf16 %v364
      %vm381 = vcmask 261120
      %v382 = vsel %vm381, %v365, 0.0
      %383 = vadd.xlane.f32.xlu0 %v382
      %v384 = vpop.xlane.xlu0 %383
      %v385 = vsel %vm381, %v366, 0.0
      %386 = vadd.xlane.f32.xlu0 %v385
      %v387 = vpop.xlane.xlu0 %386
      %v388 = vsel %vm381, %v367, 0.0
      %389 = vadd.xlane.f32.xlu0 %v388
      %v390 = vpop.xlane.xlu0 %389
      %v391 = vsel %vm381, %v368, 0.0
      %392 = vadd.xlane.f32.xlu0 %v391
      %v393 = vpop.xlane.xlu0 %392
      %v394 = vsel %vm381, %v369, 0.0
      %395 = vadd.xlane.f32.xlu0 %v394
      %v396 = vpop.xlane.xlu0 %395
      %v397 = vsel %vm381, %v370, 0.0
      %398 = vadd.xlane.f32.xlu0 %v397
      %v399 = vpop.xlane.xlu0 %398
      %v400 = vsel %vm381, %v371, 0.0
      %401 = vadd.xlane.f32.xlu0 %v400
      %v402 = vpop.xlane.xlu0 %401
      %v403 = vsel %vm381, %v372, 0.0
      %404 = vadd.xlane.f32.xlu0 %v403
      %v405 = vpop.xlane.xlu0 %404
      %v406 = vsel %vm381, %v373, 0.0
      %407 = vadd.xlane.f32.xlu0 %v406
      %v408 = vpop.xlane.xlu0 %407
      %v409 = vsel %vm381, %v374, 0.0
      %410 = vadd.xlane.f32.xlu0 %v409
      %v411 = vpop.xlane.xlu0 %410
      %v412 = vsel %vm381, %v375, 0.0
      %413 = vadd.xlane.f32.xlu0 %v412
      %v414 = vpop.xlane.xlu0 %413
      %v415 = vsel %vm381, %v376, 0.0
      %416 = vadd.xlane.f32.xlu0 %v415
      %v417 = vpop.xlane.xlu0 %416
      %v418 = vsel %vm381, %v377, 0.0
      %419 = vadd.xlane.f32.xlu0 %v418
      %v420 = vpop.xlane.xlu0 %419
      %v421 = vsel %vm381, %v378, 0.0
      %422 = vadd.xlane.f32.xlu0 %v421
      %v423 = vpop.xlane.xlu0 %422
      %v424 = vsel %vm381, %v379, 0.0
      %425 = vadd.xlane.f32.xlu0 %v424
      %v426 = vpop.xlane.xlu0 %425
      %v427 = vsel %vm381, %v380, 0.0
      %428 = vadd.xlane.f32.xlu0 %v427
      %v429 = vpop.xlane.xlu0 %428
      %v430 = vrcp.pop 32.0
      %v431 = vmul.f32 %v384, %v430
      %v432 = vmul.f32 %v387, %v430
      %v433 = vmul.f32 %v390, %v430
      %v434 = vmul.f32 %v393, %v430
      %v435 = vmul.f32 %v396, %v430
      %v436 = vmul.f32 %v399, %v430
      %v437 = vmul.f32 %v402, %v430
      %v438 = vmul.f32 %v405, %v430
      %v439 = vmul.f32 %v408, %v430
      %v440 = vmul.f32 %v411, %v430
      %v441 = vmul.f32 %v414, %v430
      %v442 = vmul.f32 %v417, %v430
      %v443 = vmul.f32 %v420, %v430
      %v444 = vmul.f32 %v423, %v430
      %v445 = vmul.f32 %v426, %v430
      %v446 = vmul.f32 %v429, %v430
      %v447 = vsub.f32 %v365, %v431
      %v448 = vsub.f32 %v366, %v432
      %v449 = vsub.f32 %v367, %v433
      %v450 = vsub.f32 %v368, %v434
      %v451 = vsub.f32 %v369, %v435
      %v452 = vsub.f32 %v370, %v436
      %v453 = vsub.f32 %v371, %v437
      %v454 = vsub.f32 %v372, %v438
      %v455 = vsub.f32 %v373, %v439
      %v456 = vsub.f32 %v374, %v440
      %v457 = vsub.f32 %v375, %v441
      %v458 = vsub.f32 %v376, %v442
      %v459 = vsub.f32 %v377, %v443
      %v460 = vsub.f32 %v378, %v444
      %v461 = vsub.f32 %v379, %v445
      %v462 = vsub.f32 %v380, %v446
      %v463 = vmul.f32 %v447, %v447
      %v464 = vmul.f32 %v448, %v448
      %v465 = vmul.f32 %v449, %v449
      %v466 = vmul.f32 %v450, %v450
      %v467 = vmul.f32 %v451, %v451
      %v468 = vmul.f32 %v452, %v452
      %v469 = vmul.f32 %v453, %v453
      %v470 = vmul.f32 %v454, %v454
      %v471 = vmul.f32 %v455, %v455
      %v472 = vmul.f32 %v456, %v456
      %v473 = vmul.f32 %v457, %v457
      %v474 = vmul.f32 %v458, %v458
      %v475 = vmul.f32 %v459, %v459
      %v476 = vmul.f32 %v460, %v460
      %v477 = vmul.f32 %v461, %v461
      %v478 = vmul.f32 %v462, %v462
      %v479 = vsel %vm381, %v463, 0.0
      %480 = vadd.xlane.f32.xlu0 %v479
      %v481 = vpop.xlane.xlu0 %480
      %v482 = vsel %vm381, %v464, 0.0
      %483 = vadd.xlane.f32.xlu0 %v482
      %v484 = vpop.xlane.xlu0 %483
      %v485 = vsel %vm381, %v465, 0.0
      %486 = vadd.xlane.f32.xlu0 %v485
      %v487 = vpop.xlane.xlu0 %486
      %v488 = vsel %vm381, %v466, 0.0
      %489 = vadd.xlane.f32.xlu0 %v488
      %v490 = vpop.xlane.xlu0 %489
      %v491 = vsel %vm381, %v467, 0.0
      %492 = vadd.xlane.f32.xlu0 %v491
      %v493 = vpop.xlane.xlu0 %492
      %v494 = vsel %vm381, %v468, 0.0
      %495 = vadd.xlane.f32.xlu0 %v494
      %v496 = vpop.xlane.xlu0 %495
      %v497 = vsel %vm381, %v469, 0.0
      %498 = vadd.xlane.f32.xlu0 %v497
      %v499 = vpop.xlane.xlu0 %498
      %v500 = vsel %vm381, %v470, 0.0
      %501 = vadd.xlane.f32.xlu0 %v500
      %v502 = vpop.xlane.xlu0 %501
      %v503 = vsel %vm381, %v471, 0.0
      %504 = vadd.xlane.f32.xlu0 %v503
      %v505 = vpop.xlane.xlu0 %504
      %v506 = vsel %vm381, %v472, 0.0
      %507 = vadd.xlane.f32.xlu0 %v506
      %v508 = vpop.xlane.xlu0 %507
      %v509 = vsel %vm381, %v473, 0.0
      %510 = vadd.xlane.f32.xlu0 %v509
      %v511 = vpop.xlane.xlu0 %510
      %v512 = vsel %vm381, %v474, 0.0
      %513 = vadd.xlane.f32.xlu0 %v512
      %v514 = vpop.xlane.xlu0 %513
      %v515 = vsel %vm381, %v475, 0.0
      %516 = vadd.xlane.f32.xlu0 %v515
      %v517 = vpop.xlane.xlu0 %516
      %v518 = vsel %vm381, %v476, 0.0
      %519 = vadd.xlane.f32.xlu0 %v518
      %v520 = vpop.xlane.xlu0 %519
      %v521 = vsel %vm381, %v477, 0.0
      %522 = vadd.xlane.f32.xlu0 %v521
      %v523 = vpop.xlane.xlu0 %522
      %v524 = vsel %vm381, %v478, 0.0
      %525 = vadd.xlane.f32.xlu0 %v524
      %v526 = vpop.xlane.xlu0 %525
      %v527 = vmul.f32 %v481, %v430
      %v528 = vmul.f32 %v484, %v430
      %v529 = vmul.f32 %v487, %v430
      %v530 = vmul.f32 %v490, %v430
      %v531 = vmul.f32 %v493, %v430
      %v532 = vmul.f32 %v496, %v430
      %v533 = vmul.f32 %v499, %v430
      %v534 = vmul.f32 %v502, %v430
      %v535 = vmul.f32 %v505, %v430
      %v536 = vmul.f32 %v508, %v430
      %v537 = vmul.f32 %v511, %v430
      %v538 = vmul.f32 %v514, %v430
      %v539 = vmul.f32 %v517, %v430
      %v540 = vmul.f32 %v520, %v430
      %v541 = vmul.f32 %v523, %v430
      %v542 = vmul.f32 %v526, %v430
      %v543 = vadd.f32 %v527, 1e-05
      %v544 = vadd.f32 %v528, 1e-05
      %v545 = vadd.f32 %v529, 1e-05
      %v546 = vadd.f32 %v530, 1e-05
      %v547 = vadd.f32 %v531, 1e-05
      %v548 = vadd.f32 %v532, 1e-05
      %v549 = vadd.f32 %v533, 1e-05
      %v550 = vadd.f32 %v534, 1e-05
      %v551 = vadd.f32 %v535, 1e-05
      %v552 = vadd.f32 %v536, 1e-05
      %v553 = vadd.f32 %v537, 1e-05
      %v554 = vadd.f32 %v538, 1e-05
      %v555 = vadd.f32 %v539, 1e-05
      %v556 = vadd.f32 %v540, 1e-05
      %v557 = vadd.f32 %v541, 1e-05
      %v558 = vadd.f32 %v542, 1e-05
      %v559 = vrsqrt.pop %v543
      %v560 = vrsqrt.pop %v544
      %v561 = vrsqrt.pop %v545
      %v562 = vrsqrt.pop %v546
      %v563 = vrsqrt.pop %v547
      %v564 = vrsqrt.pop %v548
      %v565 = vrsqrt.pop %v549
      %v566 = vrsqrt.pop %v550
      %v567 = vrsqrt.pop %v551
      %v568 = vrsqrt.pop %v552
      %v569 = vrsqrt.pop %v553
      %v570 = vrsqrt.pop %v554
      %v571 = vrsqrt.pop %v555
      %v572 = vrsqrt.pop %v556
      %v573 = vrsqrt.pop %v557
      %v574 = vrsqrt.pop %v558
      %v575 = vmul.f32 %v447, %v559
      %v576 = vmul.f32 %v448, %v560
      %v577 = vmul.f32 %v449, %v561
      %v578 = vmul.f32 %v450, %v562
      %v579 = vmul.f32 %v451, %v563
      %v580 = vmul.f32 %v452, %v564
      %v581 = vmul.f32 %v453, %v565
      %v582 = vmul.f32 %v454, %v566
      %v583 = vmul.f32 %v455, %v567
      %v584 = vmul.f32 %v456, %v568
      %v585 = vmul.f32 %v457, %v569
      %v586 = vmul.f32 %v458, %v570
      %v587 = vmul.f32 %v459, %v571
      %v588 = vmul.f32 %v460, %v572
      %v589 = vmul.f32 %v461, %v573
      %v590 = vmul.f32 %v462, %v574
      %v591 = vld [vmem:[%s2] sm:$0x1]
      %v593 = vlaneseq
      %v594 = vshrl.u32 %v593, 7
      %v595 = vsub.s32 0, %v594
      %v596 = vrot.slane %v591, %v595
      %v598 = vmul.f32 %v575, %v596
      %v599 = vmul.f32 %v576, %v596
      %v600 = vmul.f32 %v577, %v596
      %v601 = vmul.f32 %v578, %v596
      %v602 = vmul.f32 %v579, %v596
      %v603 = vmul.f32 %v580, %v596
      %v604 = vmul.f32 %v581, %v596
      %v605 = vmul.f32 %v582, %v596
      %v606 = vmul.f32 %v583, %v596
      %v607 = vmul.f32 %v584, %v596
      %v608 = vmul.f32 %v585, %v596
      %v609 = vmul.f32 %v586, %v596
      %v610 = vmul.f32 %v587, %v596
      %v611 = vmul.f32 %v588, %v596
      %v612 = vmul.f32 %v589, %v596
      %v613 = vmul.f32 %v590, %v596
      %v614 = vld [vmem:[%s3] sm:$0x1]
      %v616 = vlaneseq
      %v617 = vshrl.u32 %v616, 7
      %v618 = vsub.s32 0, %v617
      %v619 = vrot.slane %v614, %v618
      %v621 = vadd.f32 %v598, %v619
      %v622 = vadd.f32 %v599, %v619
      %v623 = vadd.f32 %v600, %v619
      %v624 = vadd.f32 %v601, %v619
      %v625 = vadd.f32 %v602, %v619
      %v626 = vadd.f32 %v603, %v619
      %v627 = vadd.f32 %v604, %v619
      %v628 = vadd.f32 %v605, %v619
      %v629 = vadd.f32 %v606, %v619
      %v630 = vadd.f32 %v607, %v619
      %v631 = vadd.f32 %v608, %v619
      %v632 = vadd.f32 %v609, %v619
      %v633 = vadd.f32 %v610, %v619
      %v634 = vadd.f32 %v611, %v619
      %v635 = vadd.f32 %v612, %v619
      %v636 = vadd.f32 %v613, %v619
      %v637 = vpack.c.bf16 %v622, %v621
      %v638 = vpack.c.bf16 %v624, %v623
      %v639 = vpack.c.bf16 %v626, %v625
      %v640 = vpack.c.bf16 %v628, %v627
      %v641 = vpack.c.bf16 %v630, %v629
      %v642 = vpack.c.bf16 %v632, %v631
      %v643 = vpack.c.bf16 %v634, %v633
      %v644 = vpack.c.bf16 %v636, %v635
      %v645 = vld [vmem:[%s4] sm:$0xf]
      %v646 = vld [vmem:[%s4 + $0x4] sm:$0xf]
      %v647 = vld [vmem:[%s4 + $0x8] sm:$0xf]
      %v648 = vld [vmem:[%s4 + $0xc] sm:$0xf]
      %v649 = vld [vmem:[%s5] sm:$0x1]
      %v651 = vlaneseq
      %v652 = vshrl.u32 %v651, 7
      %v653 = vsub.s32 0, %v652
      %v654 = vrot.slane %v649, %v653
      %v660 = vunpack.c.l.b16 %v645
      %v661 = vunpack.c.l.b16 %v646
      %v662 = vunpack.c.l.b16 %v647
      %v663 = vunpack.c.l.b16 %v648
      %v664 = vpack.c.b16 %v661, %v660
      %v665 = vpack.c.b16 %v663, %v662
      %v669 = vsel %vm381, %v637, 0
      %v672 = vsel %vm381, %v638, 0
      %v675 = vsel %vm381, %v639, 0
      %v678 = vsel %vm381, %v640, 0
      %v681 = vsel %vm381, %v641, 0
      %v684 = vsel %vm381, %v642, 0
      %v687 = vsel %vm381, %v643, 0
      %v690 = vsel %vm381, %v644, 0
      %692 = vmatprep.subr.bf16.mxu0 0
      %693 = vmatpush1.bf16.msra.mxu0 %v664
      %694 = vmatprep.subr.bf16.mxu0 0
      %695 = vmatpush1.bf16.msra.mxu0 %v665
      %696 = vmatprep.subr.bf16.mxu0 0
      %697 = vmatpush1.bf16.msra.mxu0 0
      %698 = vmatprep.subr.bf16.mxu0 0
      %699 = vmatpush1.bf16.msra.mxu0 0
      %700 = vmatprep.subr.bf16.mxu0 0
      %701 = vmatpush1.bf16.msra.mxu0 0
      %702 = vmatprep.subr.bf16.mxu0 0
      %703 = vmatpush1.bf16.msra.mxu0 0
      %704 = vmatprep.subr.bf16.mxu0 0
      %705 = vmatpush1.bf16.msra.mxu0 0
      %706 = vmatprep.subr.bf16.mxu0 0
      %707 = vmatpush1.bf16.msra.mxu0 0
      %708 = vmatprep.subr.bf16.mxu0 0
      %709 = vmatpush1.bf16.msra.mxu0 0
      %710 = vmatprep.subr.bf16.mxu0 0
      %711 = vmatpush1.bf16.msra.mxu0 0
      %712 = vmatprep.subr.bf16.mxu0 0
      %713 = vmatpush1.bf16.msra.mxu0 0
      %714 = vmatprep.subr.bf16.mxu0 0
      %715 = vmatpush1.bf16.msra.mxu0 0
      %716 = vmatprep.subr.bf16.mxu0 0
      %717 = vmatpush1.bf16.msra.mxu0 0
      %718 = vmatprep.subr.bf16.mxu0 0
      %719 = vmatpush1.bf16.msra.mxu0 0
      %720 = vmatprep.subr.bf16.mxu0 0
      %721 = vmatpush1.bf16.msra.mxu0 0
      %722 = vmatprep.subr.bf16.mxu0 0
      %723 = vmatpush1.bf16.msra.mxu0 0
      %724 = vmatprep.mubr.bf16.mxu0 0
      %725 = vmatmul.mubr.bf16.gmra.mrb[0].mxu0 %v669
      %v726 = vpop.f32.mrb[0].mxu0
      %v727 = vadd.f32 %v654, %v726
      %v728 = vpop.f32.mrb[0].mxu0
      %v729 = vpop.f32.mrb[0].mxu0
      %v730 = vadd.f32 %v654, %v729
      %v731 = vpop.f32.mrb[0].mxu0
      %732 = vmatprep.mubr.bf16.mxu0 0
      %733 = vmatmul.mubr.bf16.gmra.mrb[0].mxu0 %v672
      %v734 = vpop.f32.mrb[0].mxu0
      %v735 = vadd.f32 %v654, %v734
      %v736 = vpop.f32.mrb[0].mxu0
      %v737 = vpop.f32.mrb[0].mxu0
      %v738 = vadd.f32 %v654, %v737
      %v739 = vpop.f32.mrb[0].mxu0
      %740 = vmatprep.mubr.bf16.mxu0 0
      %741 = vmatmul.mubr.bf16.gmra.mrb[0].mxu0 %v675
      %v742 = vpop.f32.mrb[0].mxu0
      %v743 = vadd.f32 %v654, %v742
      %v744 = vpop.f32.mrb[0].mxu0
      %v745 = vpop.f32.mrb[0].mxu0
      %v746 = vadd.f32 %v654, %v745
      %v747 = vpop.f32.mrb[0].mxu0
      %748 = vmatprep.mubr.bf16.mxu0 0
      %749 = vmatmul.mubr.bf16.gmra.mrb[0].mxu0 %v678
      %v750 = vpop.f32.mrb[0].mxu0
      %v751 = vadd.f32 %v654, %v750
      %v752 = vpop.f32.mrb[0].mxu0
      %v753 = vpop.f32.mrb[0].mxu0
      %v754 = vadd.f32 %v654, %v753
      %v755 = vpop.f32.mrb[0].mxu0
      %756 = vmatprep.mubr.bf16.mxu0 0
      %757 = vmatmul.mubr.bf16.gmra.mrb[0].mxu0 %v681
      %v758 = vpop.f32.mrb[0].mxu0
      %v759 = vadd.f32 %v654, %v758
      %v760 = vpop.f32.mrb[0].mxu0
      %v761 = vpop.f32.mrb[0].mxu0
      %v762 = vadd.f32 %v654, %v761
      %v763 = vpop.f32.mrb[0].mxu0
      %764 = vmatprep.mubr.bf16.mxu0 0
      %765 = vmatmul.mubr.bf16.gmra.mrb[0].mxu0 %v684
      %v766 = vpop.f32.mrb[0].mxu0
      %v767 = vadd.f32 %v654, %v766
      %v768 = vpop.f32.mrb[0].mxu0
      %v769 = vpop.f32.mrb[0].mxu0
      %v770 = vadd.f32 %v654, %v769
      %v771 = vpop.f32.mrb[0].mxu0
      %772 = vmatprep.mubr.bf16.mxu0 0
      %773 = vmatmul.mubr.bf16.gmra.mrb[0].mxu0 %v687
      %v774 = vpop.f32.mrb[0].mxu0
      %v775 = vadd.f32 %v654, %v774
      %v776 = vpop.f32.mrb[0].mxu0
      %v777 = vpop.f32.mrb[0].mxu0
      %v778 = vadd.f32 %v654, %v777
      %v779 = vpop.f32.mrb[0].mxu0
      %780 = vmatprep.mubr.bf16.mxu0 0
      %781 = vmatmul.mubr.bf16.gmra.mrb[0].mxu0 %v690
      %v782 = vpop.f32.mrb[0].mxu0
      %v783 = vadd.f32 %v654, %v782
      %v784 = vpop.f32.mrb[0].mxu0
      %v785 = vpop.f32.mrb[0].mxu0
      %v786 = vadd.f32 %v654, %v785
      %v787 = vpop.f32.mrb[0].mxu0
      %788 = vdwg.mxu0
      %v789 = vpack.c.bf16 %v730, %v727
      %v790 = vpack.c.bf16 %v738, %v735
      %v791 = vpack.c.bf16 %v746, %v743
      %v792 = vpack.c.bf16 %v754, %v751
      %v793 = vpack.c.bf16 %v762, %v759
      %v794 = vpack.c.bf16 %v770, %v767
      %v795 = vpack.c.bf16 %v778, %v775
      %v796 = vpack.c.bf16 %v786, %v783
      %805 = vrot.lane.b32.xlu0 %v789, 120
      %v806 = vpop.permute.xlu0 %805
      %807 = vrot.lane.b32.xlu0 %v790, 120
      %v808 = vpop.permute.xlu0 %807
      %809 = vrot.lane.b32.xlu0 %v791, 120
      %v810 = vpop.permute.xlu0 %809
      %811 = vrot.lane.b32.xlu0 %v792, 120
      %v812 = vpop.permute.xlu0 %811
      %813 = vrot.lane.b32.xlu0 %v793, 120
      %v814 = vpop.permute.xlu0 %813
      %815 = vrot.lane.b32.xlu0 %v794, 120
      %v816 = vpop.permute.xlu0 %815
      %817 = vrot.lane.b32.xlu0 %v795, 120
      %v818 = vpop.permute.xlu0 %817
      %819 = vrot.lane.b32.xlu0 %v796, 120
      %v820 = vpop.permute.xlu0 %819
      %821 = vrot.lane.b32.xlu0 %v789, 112
      %v822 = vpop.permute.xlu0 %821
      %823 = vrot.lane.b32.xlu0 %v790, 112
      %v824 = vpop.permute.xlu0 %823
      %825 = vrot.lane.b32.xlu0 %v791, 112
      %v826 = vpop.permute.xlu0 %825
      %827 = vrot.lane.b32.xlu0 %v792, 112
      %v828 = vpop.permute.xlu0 %827
      %829 = vrot.lane.b32.xlu0 %v793, 112
      %v830 = vpop.permute.xlu0 %829
      %831 = vrot.lane.b32.xlu0 %v794, 112
      %v832 = vpop.permute.xlu0 %831
      %833 = vrot.lane.b32.xlu0 %v795, 112
      %v834 = vpop.permute.xlu0 %833
      %835 = vrot.lane.b32.xlu0 %v796, 112
      %v836 = vpop.permute.xlu0 %835
      %837 = vrot.lane.b32.xlu0 %v789, 104
      %v838 = vpop.permute.xlu0 %837
      %839 = vrot.lane.b32.xlu0 %v790, 104
      %v840 = vpop.permute.xlu0 %839
      %841 = vrot.lane.b32.xlu0 %v791, 104
      %v842 = vpop.permute.xlu0 %841
      %843 = vrot.lane.b32.xlu0 %v792, 104
      %v844 = vpop.permute.xlu0 %843
      %845 = vrot.lane.b32.xlu0 %v793, 104
      %v846 = vpop.permute.xlu0 %845
      %847 = vrot.lane.b32.xlu0 %v794, 104
      %v848 = vpop.permute.xlu0 %847
      %849 = vrot.lane.b32.xlu0 %v795, 104
      %v850 = vpop.permute.xlu0 %849
      %851 = vrot.lane.b32.xlu0 %v796, 104
      %v852 = vpop.permute.xlu0 %851
      %853 = vrot.lane.b32.xlu0 %v789, 96
      %v854 = vpop.permute.xlu0 %853
      %855 = vrot.lane.b32.xlu0 %v790, 96
      %v856 = vpop.permute.xlu0 %855
      %vm857 = vcmask 64512
      %v859 = vsel %vm857, %v789, 0
      %v862 = vsel %vm857, %v790, 0
      %v865 = vsel %vm857, %v854, 0
      %v868 = vsel %vm857, %v856, 0
      %870 = vmatprep.subr.bf16.mxu0 0
      %871 = vmatpush1.bf16.xpose.msra.mxu0 %v865
      %872 = vmatprep.subr.bf16.mxu0 0
      %873 = vmatpush1.bf16.xpose.msra.mxu0 %v868
      %874 = vmatprep.subr.bf16.mxu0 0
      %875 = vmatpush1.bf16.xpose.msra.mxu0 0
      %876 = vmatprep.subr.bf16.mxu0 0
      %877 = vmatpush1.bf16.xpose.msra.mxu0 0
      %878 = vmatprep.subr.bf16.mxu0 0
      %879 = vmatpush1.bf16.xpose.msra.mxu0 0
      %880 = vmatprep.subr.bf16.mxu0 0
      %881 = vmatpush1.bf16.xpose.msra.mxu0 0
      %882 = vmatprep.subr.bf16.mxu0 0
      %883 = vmatpush1.bf16.xpose.msra.mxu0 0
      %884 = vmatprep.subr.bf16.mxu0 0
      %885 = vmatpush1.bf16.xpose.msra.mxu0 0
      %886 = vmatprep.subr.bf16.mxu0 0
      %887 = vmatpush1.bf16.xpose.msra.mxu0 0
      %888 = vmatprep.subr.bf16.mxu0 0
      %889 = vmatpush1.bf16.xpose.msra.mxu0 0
      %890 = vmatprep.subr.bf16.mxu0 0
      %891 = vmatpush1.bf16.xpose.msra.mxu0 0
      %892 = vmatprep.subr.bf16.mxu0 0
      %893 = vmatpush1.bf16.xpose.msra.mxu0 0
      %894 = vmatprep.subr.bf16.mxu0 0
      %895 = vmatpush1.bf16.xpose.msra.mxu0 0
      %896 = vmatprep.subr.bf16.mxu0 0
      %897 = vmatpush1.bf16.xpose.msra.mxu0 0
      %898 = vmatprep.subr.bf16.mxu0 0
      %899 = vmatpush1.bf16.xpose.msra.mxu0 0
      %900 = vmatprep.subr.bf16.mxu0 0
      %901 = vmatpush1.bf16.xpose.msra.mxu0 0
      %902 = vmatprep.mubr.bf16.mxu0 0
      %903 = vmatmul.mubr.bf16.gmra.mrb[0].mxu0 %v859
      %v904 = vpop.f32.mrb[0].mxu0
      %v905 = vadd.f32 0.0, %v904
      %v906 = vpop.f32.mrb[0].mxu0
      %v907 = vpop.f32.mrb[0].mxu0
      %v908 = vadd.f32 0.0, %v907
      %v909 = vpop.f32.mrb[0].mxu0
      %910 = vmatprep.mubr.bf16.mxu0 0
      %911 = vmatmul.mubr.bf16.gmra.mrb[0].mxu0 %v862
      %v912 = vpop.f32.mrb[0].mxu0
      %v913 = vadd.f32 0.0, %v912
      %v914 = vpop.f32.mrb[0].mxu0
      %v915 = vpop.f32.mrb[0].mxu0
      %v916 = vadd.f32 0.0, %v915
      %v917 = vpop.f32.mrb[0].mxu0
      %918 = vdwg.mxu0
      %919 = vrot.lane.b32.xlu0 %v791, 96
      %v920 = vpop.permute.xlu0 %919
      %921 = vrot.lane.b32.xlu0 %v792, 96
      %v922 = vpop.permute.xlu0 %921
      %v924 = vsel %vm857, %v791, 0
      %v927 = vsel %vm857, %v792, 0
      %v930 = vsel %vm857, %v920, 0
      %v933 = vsel %vm857, %v922, 0
      %935 = vmatprep.subr.bf16.mxu0 0
      %936 = vmatpush1.bf16.xpose.msra.mxu0 %v930
      %937 = vmatprep.subr.bf16.mxu0 0
      %938 = vmatpush1.bf16.xpose.msra.mxu0 %v933
      %939 = vmatprep.subr.bf16.mxu0 0
      %940 = vmatpush1.bf16.xpose.msra.mxu0 0
      %941 = vmatprep.subr.bf16.mxu0 0
      %942 = vmatpush1.bf16.xpose.msra.mxu0 0
      %943 = vmatprep.subr.bf16.mxu0 0
      %944 = vmatpush1.bf16.xpose.msra.mxu0 0
      %945 = vmatprep.subr.bf16.mxu0 0
      %946 = vmatpush1.bf16.xpose.msra.mxu0 0
      %947 = vmatprep.subr.bf16.mxu0 0
      %948 = vmatpush1.bf16.xpose.msra.mxu0 0
      %949 = vmatprep.subr.bf16.mxu0 0
      %950 = vmatpush1.bf16.xpose.msra.mxu0 0
      %951 = vmatprep.subr.bf16.mxu0 0
      %952 = vmatpush1.bf16.xpose.msra.mxu0 0
      %953 = vmatprep.subr.bf16.mxu0 0
      %954 = vmatpush1.bf16.xpose.msra.mxu0 0
      %955 = vmatprep.subr.bf16.mxu0 0
      %956 = vmatpush1.bf16.xpose.msra.mxu0 0
      %957 = vmatprep.subr.bf16.mxu0 0
      %958 = vmatpush1.bf16.xpose.msra.mxu0 0
      %959 = vmatprep.subr.bf16.mxu0 0
      %960 = vmatpush1.bf16.xpose.msra.mxu0 0
      %961 = vmatprep.subr.bf16.mxu0 0
      %962 = vmatpush1.bf16.xpose.msra.mxu0 0
      %963 = vmatprep.subr.bf16.mxu0 0
      %964 = vmatpush1.bf16.xpose.msra.mxu0 0
      %965 = vmatprep.subr.bf16.mxu0 0
      %966 = vmatpush1.bf16.xpose.msra.mxu0 0
      %967 = vmatprep.mubr.bf16.mxu0 0
      %968 = vmatmul.mubr.bf16.gmra.mrb[0].mxu0 %v924
      %v969 = vpop.f32.mrb[0].mxu0
      %v970 = vadd.f32 0.0, %v969
      %v971 = vpop.f32.mrb[0].mxu0
      %v972 = vpop.f32.mrb[0].mxu0
      %v973 = vadd.f32 0.0, %v972
      %v974 = vpop.f32.mrb[0].mxu0
      %975 = vmatprep.mubr.bf16.mxu0 0
      %976 = vmatmul.mubr.bf16.gmra.mrb[0].mxu0 %v927
      %v977 = vpop.f32.mrb[0].mxu0
      %v978 = vadd.f32 0.0, %v977
      %v979 = vpop.f32.mrb[0].mxu0
      %v980 = vpop.f32.mrb[0].mxu0
      %v981 = vadd.f32 0.0, %v980
      %v982 = vpop.f32.mrb[0].mxu0
      %983 = vdwg.mxu0
      %984 = vrot.lane.b32.xlu0 %v793, 96
      %v985 = vpop.permute.xlu0 %984
      %986 = vrot.lane.b32.xlu0 %v794, 96
      %v987 = vpop.permute.xlu0 %986
      %v989 = vsel %vm857, %v793, 0
      %v992 = vsel %vm857, %v794, 0
      %v995 = vsel %vm857, %v985, 0
      %v998 = vsel %vm857, %v987, 0
      %1000 = vmatprep.subr.bf16.mxu0 0
      %1001 = vmatpush1.bf16.xpose.msra.mxu0 %v995
      %1002 = vmatprep.subr.bf16.mxu0 0
      %1003 = vmatpush1.bf16.xpose.msra.mxu0 %v998
      %1004 = vmatprep.subr.bf16.mxu0 0
      %1005 = vmatpush1.bf16.xpose.msra.mxu0 0
      %1006 = vmatprep.subr.bf16.mxu0 0
      %1007 = vmatpush1.bf16.xpose.msra.mxu0 0
      %1008 = vmatprep.subr.bf16.mxu0 0
      %1009 = vmatpush1.bf16.xpose.msra.mxu0 0
      %1010 = vmatprep.subr.bf16.mxu0 0
      %1011 = vmatpush1.bf16.xpose.msra.mxu0 0
      %1012 = vmatprep.subr.bf16.mxu0 0
      %1013 = vmatpush1.bf16.xpose.msra.mxu0 0
      %1014 = vmatprep.subr.bf16.mxu0 0
      %1015 = vmatpush1.bf16.xpose.msra.mxu0 0
      %1016 = vmatprep.subr.bf16.mxu0 0
      %1017 = vmatpush1.bf16.xpose.msra.mxu0 0
      %1018 = vmatprep.subr.bf16.mxu0 0
      %1019 = vmatpush1.bf16.xpose.msra.mxu0 0
      %1020 = vmatprep.subr.bf16.mxu0 0
      %1021 = vmatpush1.bf16.xpose.msra.mxu0 0
      %1022 = vmatprep.subr.bf16.mxu0 0
      %1023 = vmatpush1.bf16.xpose.msra.mxu0 0
      %1024 = vmatprep.subr.bf16.mxu0 0
      %1025 = vmatpush1.bf16.xpose.msra.mxu0 0
      %1026 = vmatprep.subr.bf16.mxu0 0
      %1027 = vmatpush1.bf16.xpose.msra.mxu0 0
      %1028 = vmatprep.subr.bf16.mxu0 0
      %1029 = vmatpush1.bf16.xpose.msra.mxu0 0
      %1030 = vmatprep.subr.bf16.mxu0 0
      %1031 = vmatpush1.bf16.xpose.msra.mxu0 0
      %1032 = vmatprep.mubr.bf16.mxu0 0
      %1033 = vmatmul.mubr.bf16.gmra.mrb[0].mxu0 %v989
      %v1034 = vpop.f32.mrb[0].mxu0
      %v1035 = vadd.f32 0.0, %v1034
      %v1036 = vpop.f32.mrb[0].mxu0
      %v1037 = vpop.f32.mrb[0].mxu0
      %v1038 = vadd.f32 0.0, %v1037
      %v1039 = vpop.f32.mrb[0].mxu0
      %1040 = vmatprep.mubr.bf16.mxu0 0
      %1041 = vmatmul.mubr.bf16.gmra.mrb[0].mxu0 %v992
      %v1042 = vpop.f32.mrb[0].mxu0
      %v1043 = vadd.f32 0.0, %v1042
      %v1044 = vpop.f32.mrb[0].mxu0
      %v1045 = vpop.f32.mrb[0].mxu0
      %v1046 = vadd.f32 0.0, %v1045
      %v1047 = vpop.f32.mrb[0].mxu0
      %1048 = vdwg.mxu0
      %1049 = vrot.lane.b32.xlu0 %v795, 96
      %v1050 = vpop.permute.xlu0 %1049
      %1051 = vrot.lane.b32.xlu0 %v796, 96
      %v1052 = vpop.permute.xlu0 %1051
      %v1054 = vsel %vm857, %v795, 0
      %v1057 = vsel %vm857, %v796, 0
      %v1060 = vsel %vm857, %v1050, 0
      %v1063 = vsel %vm857, %v1052, 0
      %1065 = vmatprep.subr.bf16.mxu0 0
      %1066 = vmatpush1.bf16.xpose.msra.mxu0 %v1060
      %1067 = vmatprep.subr.bf16.mxu0 0
      %1068 = vmatpush1.bf16.xpose.msra.mxu0 %v1063
      %1069 = vmatprep.subr.bf16.mxu0 0
      %1070 = vmatpush1.bf16.xpose.msra.mxu0 0
      %1071 = vmatprep.subr.bf16.mxu0 0
      %1072 = vmatpush1.bf16.xpose.msra.mxu0 0
      %1073 = vmatprep.subr.bf16.mxu0 0
      %1074 = vmatpush1.bf16.xpose.msra.mxu0 0
      %1075 = vmatprep.subr.bf16.mxu0 0
      %1076 = vmatpush1.bf16.xpose.msra.mxu0 0
      %1077 = vmatprep.subr.bf16.mxu0 0
      %1078 = vmatpush1.bf16.xpose.msra.mxu0 0
      %1079 = vmatprep.subr.bf16.mxu0 0
      %1080 = vmatpush1.bf16.xpose.msra.mxu0 0
      %1081 = vmatprep.subr.bf16.mxu0 0
      %1082 = vmatpush1.bf16.xpose.msra.mxu0 0
      %1083 = vmatprep.subr.bf16.mxu0 0
      %1084 = vmatpush1.bf16.xpose.msra.mxu0 0
      %1085 = vmatprep.subr.bf16.mxu0 0
      %1086 = vmatpush1.bf16.xpose.msra.mxu0 0
      %1087 = vmatprep.subr.bf16.mxu0 0
      %1088 = vmatpush1.bf16.xpose.msra.mxu0 0
      %1089 = vmatprep.subr.bf16.mxu0 0
      %1090 = vmatpush1.bf16.xpose.msra.mxu0 0
      %1091 = vmatprep.subr.bf16.mxu0 0
      %1092 = vmatpush1.bf16.xpose.msra.mxu0 0
      %1093 = vmatprep.subr.bf16.mxu0 0
      %1094 = vmatpush1.bf16.xpose.msra.mxu0 0
      %1095 = vmatprep.subr.bf16.mxu0 0
      %1096 = vmatpush1.bf16.xpose.msra.mxu0 0
      %1097 = vmatprep.mubr.bf16.mxu0 0
      %1098 = vmatmul.mubr.bf16.gmra.mrb[0].mxu0 %v1054
      %v1099 = vpop.f32.mrb[0].mxu0
      %v1100 = vadd.f32 0.0, %v1099
      %v1101 = vpop.f32.mrb[0].mxu0
      %v1102 = vpop.f32.mrb[0].mxu0
      %v1103 = vadd.f32 0.0, %v1102
      %v1104 = vpop.f32.mrb[0].mxu0
      %1105 = vmatprep.mubr.bf16.mxu0 0
      %1106 = vmatmul.mubr.bf16.gmra.mrb[0].mxu0 %v1057
      %v1107 = vpop.f32.mrb[0].mxu0
      %v1108 = vadd.f32 0.0, %v1107
      %v1109 = vpop.f32.mrb[0].mxu0
      %v1110 = vpop.f32.mrb[0].mxu0
      %v1111 = vadd.f32 0.0, %v1110
      %v1112 = vpop.f32.mrb[0].mxu0
      %1113 = vdwg.mxu0
      %1114 = vrot.lane.b32.xlu0 %v806, 96
      %v1115 = vpop.permute.xlu0 %1114
      %1116 = vrot.lane.b32.xlu0 %v808, 96
      %v1117 = vpop.permute.xlu0 %1116
      %v1119 = vsel %vm857, %v806, 0
      %v1122 = vsel %vm857, %v808, 0
      %v1125 = vsel %vm857, %v1115, 0
      %v1128 = vsel %vm857, %v1117, 0
      %1130 = vmatprep.subr.bf16.mxu0 0
      %1131 = vmatpush1.bf16.xpose.msra.mxu0 %v1125
      %1132 = vmatprep.subr.bf16.mxu0 0
      %1133 = vmatpush1.bf16.xpose.msra.mxu0 %v1128
      %1134 = vmatprep.subr.bf16.mxu0 0
      %1135 = vmatpush1.bf16.xpose.msra.mxu0 0
      %1136 = vmatprep.subr.bf16.mxu0 0
      %1137 = vmatpush1.bf16.xpose.msra.mxu0 0
      %1138 = vmatprep.subr.bf16.mxu0 0
      %1139 = vmatpush1.bf16.xpose.msra.mxu0 0
      %1140 = vmatprep.subr.bf16.mxu0 0
      %1141 = vmatpush1.bf16.xpose.msra.mxu0 0
      %1142 = vmatprep.subr.bf16.mxu0 0
      %1143 = vmatpush1.bf16.xpose.msra.mxu0 0
      %1144 = vmatprep.subr.bf16.mxu0 0
      %1145 = vmatpush1.bf16.xpose.msra.mxu0 0
      %1146 = vmatprep.subr.bf16.mxu0 0
      %1147 = vmatpush1.bf16.xpose.msra.mxu0 0
      %1148 = vmatprep.subr.bf16.mxu0 0
      %1149 = vmatpush1.bf16.xpose.msra.mxu0 0
      %1150 = vmatprep.subr.bf16.mxu0 0
      %1151 = vmatpush1.bf16.xpose.msra.mxu0 0
      %1152 = vmatprep.subr.bf16.mxu0 0
      %1153 = vmatpush1.bf16.xpose.msra.mxu0 0
      %1154 = vmatprep.subr.bf16.mxu0 0
      %1155 = vmatpush1.bf16.xpose.msra.mxu0 0
      %1156 = vmatprep.subr.bf16.mxu0 0
      %1157 = vmatpush1.bf16.xpose.msra.mxu0 0
      %1158 = vmatprep.subr.bf16.mxu0 0
      %1159 = vmatpush1.bf16.xpose.msra.mxu0 0
      %1160 = vmatprep.subr.bf16.mxu0 0
      %1161 = vmatpush1.bf16.xpose.msra.mxu0 0
      %1162 = vmatprep.mubr.bf16.mxu0 0
      %1163 = vmatmul.mubr.bf16.gmra.mrb[0].mxu0 %v1119
      %v1164 = vpop.f32.mrb[0].mxu0
      %v1165 = vadd.f32 0.0, %v1164
      %v1166 = vpop.f32.mrb[0].mxu0
      %v1167 = vpop.f32.mrb[0].mxu0
      %v1168 = vadd.f32 0.0, %v1167
      %v1169 = vpop.f32.mrb[0].mxu0
      %1170 = vmatprep.mubr.bf16.mxu0 0
      %1171 = vmatmul.mubr.bf16.gmra.mrb[0].mxu0 %v1122
      %v1172 = vpop.f32.mrb[0].mxu0
      %v1173 = vadd.f32 0.0, %v1172
      %v1174 = vpop.f32.mrb[0].mxu0
      %v1175 = vpop.f32.mrb[0].mxu0
      %v1176 = vadd.f32 0.0, %v1175
      %v1177 = vpop.f32.mrb[0].mxu0
      %1178 = vdwg.mxu0
      %1179 = vrot.lane.b32.xlu0 %v810, 96
      %v1180 = vpop.permute.xlu0 %1179
      %1181 = vrot.lane.b32.xlu0 %v812, 96
      %v1182 = vpop.permute.xlu0 %1181
      %v1184 = vsel %vm857, %v810, 0
      %v1187 = vsel %vm857, %v812, 0
      %v1190 = vsel %vm857, %v1180, 0
      %v1193 = vsel %vm857, %v1182, 0
      %1195 = vmatprep.subr.bf16.mxu0 0
      %1196 = vmatpush1.bf16.xpose.msra.mxu0 %v1190
      %1197 = vmatprep.subr.bf16.mxu0 0
      %1198 = vmatpush1.bf16.xpose.msra.mxu0 %v1193
      %1199 = vmatprep.subr.bf16.mxu0 0
      %1200 = vmatpush1.bf16.xpose.msra.mxu0 0
      %1201 = vmatprep.subr.bf16.mxu0 0
      %1202 = vmatpush1.bf16.xpose.msra.mxu0 0
      %1203 = vmatprep.subr.bf16.mxu0 0
      %1204 = vmatpush1.bf16.xpose.msra.mxu0 0
      %1205 = vmatprep.subr.bf16.mxu0 0
      %1206 = vmatpush1.bf16.xpose.msra.mxu0 0
      %1207 = vmatprep.subr.bf16.mxu0 0
      %1208 = vmatpush1.bf16.xpose.msra.mxu0 0
      %1209 = vmatprep.subr.bf16.mxu0 0
      %1210 = vmatpush1.bf16.xpose.msra.mxu0 0
      %1211 = vmatprep.subr.bf16.mxu0 0
      %1212 = vmatpush1.bf16.xpose.msra.mxu0 0
      %1213 = vmatprep.subr.bf16.mxu0 0
      %1214 = vmatpush1.bf16.xpose.msra.mxu0 0
      %1215 = vmatprep.subr.bf16.mxu0 0
      %1216 = vmatpush1.bf16.xpose.msra.mxu0 0
      %1217 = vmatprep.subr.bf16.mxu0 0
      %1218 = vmatpush1.bf16.xpose.msra.mxu0 0
      %1219 = vmatprep.subr.bf16.mxu0 0
      %1220 = vmatpush1.bf16.xpose.msra.mxu0 0
      %1221 = vmatprep.subr.bf16.mxu0 0
      %1222 = vmatpush1.bf16.xpose.msra.mxu0 0
      %1223 = vmatprep.subr.bf16.mxu0 0
      %1224 = vmatpush1.bf16.xpose.msra.mxu0 0
      %1225 = vmatprep.subr.bf16.mxu0 0
      %1226 = vmatpush1.bf16.xpose.msra.mxu0 0
      %1227 = vmatprep.mubr.bf16.mxu0 0
      %1228 = vmatmul.mubr.bf16.gmra.mrb[0].mxu0 %v1184
      %v1229 = vpop.f32.mrb[0].mxu0
      %v1230 = vadd.f32 0.0, %v1229
      %v1231 = vpop.f32.mrb[0].mxu0
      %v1232 = vpop.f32.mrb[0].mxu0
      %v1233 = vadd.f32 0.0, %v1232
      %v1234 = vpop.f32.mrb[0].mxu0
      %1235 = vmatprep.mubr.bf16.mxu0 0
      %1236 = vmatmul.mubr.bf16.gmra.mrb[0].mxu0 %v1187
      %v1237 = vpop.f32.mrb[0].mxu0
      %v1238 = vadd.f32 0.0, %v1237
      %v1239 = vpop.f32.mrb[0].mxu0
      %v1240 = vpop.f32.mrb[0].mxu0
      %v1241 = vadd.f32 0.0, %v1240
      %v1242 = vpop.f32.mrb[0].mxu0
      %1243 = vdwg.mxu0
      %1244 = vrot.lane.b32.xlu0 %v814, 96
      %v1245 = vpop.permute.xlu0 %1244
      %1246 = vrot.lane.b32.xlu0 %v816, 96
      %v1247 = vpop.permute.xlu0 %1246
      %v1249 = vsel %vm857, %v814, 0
      %v1252 = vsel %vm857, %v816, 0
      %v1255 = vsel %vm857, %v1245, 0
      %v1258 = vsel %vm857, %v1247, 0
      %1260 = vmatprep.subr.bf16.mxu0 0
      %1261 = vmatpush1.bf16.xpose.msra.mxu0 %v1255
      %1262 = vmatprep.subr.bf16.mxu0 0
      %1263 = vmatpush1.bf16.xpose.msra.mxu0 %v1258
      %1264 = vmatprep.subr.bf16.mxu0 0
      %1265 = vmatpush1.bf16.xpose.msra.mxu0 0
      %1266 = vmatprep.subr.bf16.mxu0 0
      %1267 = vmatpush1.bf16.xpose.msra.mxu0 0
      %1268 = vmatprep.subr.bf16.mxu0 0
      %1269 = vmatpush1.bf16.xpose.msra.mxu0 0
      %1270 = vmatprep.subr.bf16.mxu0 0
      %1271 = vmatpush1.bf16.xpose.msra.mxu0 0
      %1272 = vmatprep.subr.bf16.mxu0 0
      %1273 = vmatpush1.bf16.xpose.msra.mxu0 0
      %1274 = vmatprep.subr.bf16.mxu0 0
      %1275 = vmatpush1.bf16.xpose.msra.mxu0 0
      %1276 = vmatprep.subr.bf16.mxu0 0
      %1277 = vmatpush1.bf16.xpose.msra.mxu0 0
      %1278 = vmatprep.subr.bf16.mxu0 0
      %1279 = vmatpush1.bf16.xpose.msra.mxu0 0
      %1280 = vmatprep.subr.bf16.mxu0 0
      %1281 = vmatpush1.bf16.xpose.msra.mxu0 0
      %1282 = vmatprep.subr.bf16.mxu0 0
      %1283 = vmatpush1.bf16.xpose.msra.mxu0 0
      %1284 = vmatprep.subr.bf16.mxu0 0
      %1285 = vmatpush1.bf16.xpose.msra.mxu0 0
      %1286 = vmatprep.subr.bf16.mxu0 0
      %1287 = vmatpush1.bf16.xpose.msra.mxu0 0
      %1288 = vmatprep.subr.bf16.mxu0 0
      %1289 = vmatpush1.bf16.xpose.msra.mxu0 0
      %1290 = vmatprep.subr.bf16.mxu0 0
      %1291 = vmatpush1.bf16.xpose.msra.mxu0 0
      %1292 = vmatprep.mubr.bf16.mxu0 0
      %1293 = vmatmul.mubr.bf16.gmra.mrb[0].mxu0 %v1249
      %v1294 = vpop.f32.mrb[0].mxu0
      %v1295 = vadd.f32 0.0, %v1294
      %v1296 = vpop.f32.mrb[0].mxu0
      %v1297 = vpop.f32.mrb[0].mxu0
      %v1298 = vadd.f32 0.0, %v1297
      %v1299 = vpop.f32.mrb[0].mxu0
      %1300 = vmatprep.mubr.bf16.mxu0 0
      %1301 = vmatmul.mubr.bf16.gmra.mrb[0].mxu0 %v1252
      %v1302 = vpop.f32.mrb[0].mxu0
      %v1303 = vadd.f32 0.0, %v1302
      %v1304 = vpop.f32.mrb[0].mxu0
      %v1305 = vpop.f32.mrb[0].mxu0
      %v1306 = vadd.f32 0.0, %v1305
      %v1307 = vpop.f32.mrb[0].mxu0
      %1308 = vdwg.mxu0
      %1309 = vrot.lane.b32.xlu0 %v818, 96
      %v1310 = vpop.permute.xlu0 %1309
      %1311 = vrot.lane.b32.xlu0 %v820, 96
      %v1312 = vpop.permute.xlu0 %1311
      %v1314 = vsel %vm857, %v818, 0
      %v1317 = vsel %vm857, %v820, 0
      %v1320 = vsel %vm857, %v1310, 0
      %v1323 = vsel %vm857, %v1312, 0
      %1325 = vmatprep.subr.bf16.mxu0 0
      %1326 = vmatpush1.bf16.xpose.msra.mxu0 %v1320
      %1327 = vmatprep.subr.bf16.mxu0 0
      %1328 = vmatpush1.bf16.xpose.msra.mxu0 %v1323
      %1329 = vmatprep.subr.bf16.mxu0 0
      %1330 = vmatpush1.bf16.xpose.msra.mxu0 0
      %1331 = vmatprep.subr.bf16.mxu0 0
      %1332 = vmatpush1.bf16.xpose.msra.mxu0 0
      %1333 = vmatprep.subr.bf16.mxu0 0
      %1334 = vmatpush1.bf16.xpose.msra.mxu0 0
      %1335 = vmatprep.subr.bf16.mxu0 0
      %1336 = vmatpush1.bf16.xpose.msra.mxu0 0
      %1337 = vmatprep.subr.bf16.mxu0 0
      %1338 = vmatpush1.bf16.xpose.msra.mxu0 0
      %1339 = vmatprep.subr.bf16.mxu0 0
      %1340 = vmatpush1.bf16.xpose.msra.mxu0 0
      %1341 = vmatprep.subr.bf16.mxu0 0
      %1342 = vmatpush1.bf16.xpose.msra.mxu0 0
      %1343 = vmatprep.subr.bf16.mxu0 0
      %1344 = vmatpush1.bf16.xpose.msra.mxu0 0
      %1345 = vmatprep.subr.bf16.mxu0 0
      %1346 = vmatpush1.bf16.xpose.msra.mxu0 0
      %1347 = vmatprep.subr.bf16.mxu0 0
      %1348 = vmatpush1.bf16.xpose.msra.mxu0 0
      %1349 = vmatprep.subr.bf16.mxu0 0
      %1350 = vmatpush1.bf16.xpose.msra.mxu0 0
      %1351 = vmatprep.subr.bf16.mxu0 0
      %1352 = vmatpush1.bf16.xpose.msra.mxu0 0
      %1353 = vmatprep.subr.bf16.mxu0 0
      %1354 = vmatpush1.bf16.xpose.msra.mxu0 0
      %1355 = vmatprep.subr.bf16.mxu0 0
      %1356 = vmatpush1.bf16.xpose.msra.mxu0 0
      %1357 = vmatprep.mubr.bf16.mxu0 0
      %1358 = vmatmul.mubr.bf16.gmra.mrb[0].mxu0 %v1314
      %v1359 = vpop.f32.mrb[0].mxu0
      %v1360 = vadd.f32 0.0, %v1359
      %v1361 = vpop.f32.mrb[0].mxu0
      %v1362 = vpop.f32.mrb[0].mxu0
      %v1363 = vadd.f32 0.0, %v1362
      %v1364 = vpop.f32.mrb[0].mxu0
      %1365 = vmatprep.mubr.bf16.mxu0 0
      %1366 = vmatmul.mubr.bf16.gmra.mrb[0].mxu0 %v1317
      %v1367 = vpop.f32.mrb[0].mxu0
      %v1368 = vadd.f32 0.0, %v1367
      %v1369 = vpop.f32.mrb[0].mxu0
      %v1370 = vpop.f32.mrb[0].mxu0
      %v1371 = vadd.f32 0.0, %v1370
      %v1372 = vpop.f32.mrb[0].mxu0
      %1373 = vdwg.mxu0
      %1374 = vrot.lane.b32.xlu0 %v822, 96
      %v1375 = vpop.permute.xlu0 %1374
      %1376 = vrot.lane.b32.xlu0 %v824, 96
      %v1377 = vpop.permute.xlu0 %1376
      %v1379 = vsel %vm857, %v822, 0
      %v1382 = vsel %vm857, %v824, 0
      %v1385 = vsel %vm857, %v1375, 0
      %v1388 = vsel %vm857, %v1377, 0
      %1390 = vmatprep.subr.bf16.mxu0 0
      %1391 = vmatpush1.bf16.xpose.msra.mxu0 %v1385
      %1392 = vmatprep.subr.bf16.mxu0 0
      %1393 = vmatpush1.bf16.xpose.msra.mxu0 %v1388
      %1394 = vmatprep.subr.bf16.mxu0 0
      %1395 = vmatpush1.bf16.xpose.msra.mxu0 0
      %1396 = vmatprep.subr.bf16.mxu0 0
      %1397 = vmatpush1.bf16.xpose.msra.mxu0 0
      %1398 = vmatprep.subr.bf16.mxu0 0
      %1399 = vmatpush1.bf16.xpose.msra.mxu0 0
      %1400 = vmatprep.subr.bf16.mxu0 0
      %1401 = vmatpush1.bf16.xpose.msra.mxu0 0
      %1402 = vmatprep.subr.bf16.mxu0 0
      %1403 = vmatpush1.bf16.xpose.msra.mxu0 0
      %1404 = vmatprep.subr.bf16.mxu0 0
      %1405 = vmatpush1.bf16.xpose.msra.mxu0 0
      %1406 = vmatprep.subr.bf16.mxu0 0
      %1407 = vmatpush1.bf16.xpose.msra.mxu0 0
      %1408 = vmatprep.subr.bf16.mxu0 0
      %1409 = vmatpush1.bf16.xpose.msra.mxu0 0
      %1410 = vmatprep.subr.bf16.mxu0 0
      %1411 = vmatpush1.bf16.xpose.msra.mxu0 0
      %1412 = vmatprep.subr.bf16.mxu0 0
      %1413 = vmatpush1.bf16.xpose.msra.mxu0 0
      %1414 = vmatprep.subr.bf16.mxu0 0
      %1415 = vmatpush1.bf16.xpose.msra.mxu0 0
      %1416 = vmatprep.subr.bf16.mxu0 0
      %1417 = vmatpush1.bf16.xpose.msra.mxu0 0
      %1418 = vmatprep.subr.bf16.mxu0 0
      %1419 = vmatpush1.bf16.xpose.msra.mxu0 0
      %1420 = vmatprep.subr.bf16.mxu0 0
      %1421 = vmatpush1.bf16.xpose.msra.mxu0 0
      %1422 = vmatprep.mubr.bf16.mxu0 0
      %1423 = vmatmul.mubr.bf16.gmra.mrb[0].mxu0 %v1379
      %v1424 = vpop.f32.mrb[0].mxu0
      %v1425 = vadd.f32 0.0, %v1424
      %v1426 = vpop.f32.mrb[0].mxu0
      %v1427 = vpop.f32.mrb[0].mxu0
      %v1428 = vadd.f32 0.0, %v1427
      %v1429 = vpop.f32.mrb[0].mxu0
      %1430 = vmatprep.mubr.bf16.mxu0 0
      %1431 = vmatmul.mubr.bf16.gmra.mrb[0].mxu0 %v1382
      %v1432 = vpop.f32.mrb[0].mxu0
      %v1433 = vadd.f32 0.0, %v1432
      %v1434 = vpop.f32.mrb[0].mxu0
      %v1435 = vpop.f32.mrb[0].mxu0
      %v1436 = vadd.f32 0.0, %v1435
      %v1437 = vpop.f32.mrb[0].mxu0
      %1438 = vdwg.mxu0
      %1439 = vrot.lane.b32.xlu0 %v826, 96
      %v1440 = vpop.permute.xlu0 %1439
      %1441 = vrot.lane.b32.xlu0 %v828, 96
      %v1442 = vpop.permute.xlu0 %1441
      %v1444 = vsel %vm857, %v826, 0
      %v1447 = vsel %vm857, %v828, 0
      %v1450 = vsel %vm857, %v1440, 0
      %v1453 = vsel %vm857, %v1442, 0
      %1455 = vmatprep.subr.bf16.mxu0 0
      %1456 = vmatpush1.bf16.xpose.msra.mxu0 %v1450
      %1457 = vmatprep.subr.bf16.mxu0 0
      %1458 = vmatpush1.bf16.xpose.msra.mxu0 %v1453
      %1459 = vmatprep.subr.bf16.mxu0 0
      %1460 = vmatpush1.bf16.xpose.msra.mxu0 0
      %1461 = vmatprep.subr.bf16.mxu0 0
      %1462 = vmatpush1.bf16.xpose.msra.mxu0 0
      %1463 = vmatprep.subr.bf16.mxu0 0
      %1464 = vmatpush1.bf16.xpose.msra.mxu0 0
      %1465 = vmatprep.subr.bf16.mxu0 0
      %1466 = vmatpush1.bf16.xpose.msra.mxu0 0
      %1467 = vmatprep.subr.bf16.mxu0 0
      %1468 = vmatpush1.bf16.xpose.msra.mxu0 0
      %1469 = vmatprep.subr.bf16.mxu0 0
      %1470 = vmatpush1.bf16.xpose.msra.mxu0 0
      %1471 = vmatprep.subr.bf16.mxu0 0
      %1472 = vmatpush1.bf16.xpose.msra.mxu0 0
      %1473 = vmatprep.subr.bf16.mxu0 0
      %1474 = vmatpush1.bf16.xpose.msra.mxu0 0
      %1475 = vmatprep.subr.bf16.mxu0 0
      %1476 = vmatpush1.bf16.xpose.msra.mxu0 0
      %1477 = vmatprep.subr.bf16.mxu0 0
      %1478 = vmatpush1.bf16.xpose.msra.mxu0 0
      %1479 = vmatprep.subr.bf16.mxu0 0
      %1480 = vmatpush1.bf16.xpose.msra.mxu0 0
      %1481 = vmatprep.subr.bf16.mxu0 0
      %1482 = vmatpush1.bf16.xpose.msra.mxu0 0
      %1483 = vmatprep.subr.bf16.mxu0 0
      %1484 = vmatpush1.bf16.xpose.msra.mxu0 0
      %1485 = vmatprep.subr.bf16.mxu0 0
      %1486 = vmatpush1.bf16.xpose.msra.mxu0 0
      %1487 = vmatprep.mubr.bf16.mxu0 0
      %1488 = vmatmul.mubr.bf16.gmra.mrb[0].mxu0 %v1444
      %v1489 = vpop.f32.mrb[0].mxu0
      %v1490 = vadd.f32 0.0, %v1489
      %v1491 = vpop.f32.mrb[0].mxu0
      %v1492 = vpop.f32.mrb[0].mxu0
      %v1493 = vadd.f32 0.0, %v1492
      %v1494 = vpop.f32.mrb[0].mxu0
      %1495 = vmatprep.mubr.bf16.mxu0 0
      %1496 = vmatmul.mubr.bf16.gmra.mrb[0].mxu0 %v1447
      %v1497 = vpop.f32.mrb[0].mxu0
      %v1498 = vadd.f32 0.0, %v1497
      %v1499 = vpop.f32.mrb[0].mxu0
      %v1500 = vpop.f32.mrb[0].mxu0
      %v1501 = vadd.f32 0.0, %v1500
      %v1502 = vpop.f32.mrb[0].mxu0
      %1503 = vdwg.mxu0
      %1504 = vrot.lane.b32.xlu0 %v830, 96
      %v1505 = vpop.permute.xlu0 %1504
      %1506 = vrot.lane.b32.xlu0 %v832, 96
      %v1507 = vpop.permute.xlu0 %1506
      %v1509 = vsel %vm857, %v830, 0
      %v1512 = vsel %vm857, %v832, 0
      %v1515 = vsel %vm857, %v1505, 0
      %v1518 = vsel %vm857, %v1507, 0
      %1520 = vmatprep.subr.bf16.mxu0 0
      %1521 = vmatpush1.bf16.xpose.msra.mxu0 %v1515
      %1522 = vmatprep.subr.bf16.mxu0 0
      %1523 = vmatpush1.bf16.xpose.msra.mxu0 %v1518
      %1524 = vmatprep.subr.bf16.mxu0 0
      %1525 = vmatpush1.bf16.xpose.msra.mxu0 0
      %1526 = vmatprep.subr.bf16.mxu0 0
      %1527 = vmatpush1.bf16.xpose.msra.mxu0 0
      %1528 = vmatprep.subr.bf16.mxu0 0
      %1529 = vmatpush1.bf16.xpose.msra.mxu0 0
      %1530 = vmatprep.subr.bf16.mxu0 0
      %1531 = vmatpush1.bf16.xpose.msra.mxu0 0
      %1532 = vmatprep.subr.bf16.mxu0 0
      %1533 = vmatpush1.bf16.xpose.msra.mxu0 0
      %1534 = vmatprep.subr.bf16.mxu0 0
      %1535 = vmatpush1.bf16.xpose.msra.mxu0 0
      %1536 = vmatprep.subr.bf16.mxu0 0
      %1537 = vmatpush1.bf16.xpose.msra.mxu0 0
      %1538 = vmatprep.subr.bf16.mxu0 0
      %1539 = vmatpush1.bf16.xpose.msra.mxu0 0
      %1540 = vmatprep.subr.bf16.mxu0 0
      %1541 = vmatpush1.bf16.xpose.msra.mxu0 0
      %1542 = vmatprep.subr.bf16.mxu0 0
      %1543 = vmatpush1.bf16.xpose.msra.mxu0 0
      %1544 = vmatprep.subr.bf16.mxu0 0
      %1545 = vmatpush1.bf16.xpose.msra.mxu0 0
      %1546 = vmatprep.subr.bf16.mxu0 0
      %1547 = vmatpush1.bf16.xpose.msra.mxu0 0
      %1548 = vmatprep.subr.bf16.mxu0 0
      %1549 = vmatpush1.bf16.xpose.msra.mxu0 0
      %1550 = vmatprep.subr.bf16.mxu0 0
      %1551 = vmatpush1.bf16.xpose.msra.mxu0 0
      %1552 = vmatprep.mubr.bf16.mxu0 0
      %1553 = vmatmul.mubr.bf16.gmra.mrb[0].mxu0 %v1509
      %v1554 = vpop.f32.mrb[0].mxu0
      %v1555 = vadd.f32 0.0, %v1554
      %v1556 = vpop.f32.mrb[0].mxu0
      %v1557 = vpop.f32.mrb[0].mxu0
      %v1558 = vadd.f32 0.0, %v1557
      %v1559 = vpop.f32.mrb[0].mxu0
      %1560 = vmatprep.mubr.bf16.mxu0 0
      %1561 = vmatmul.mubr.bf16.gmra.mrb[0].mxu0 %v1512
      %v1562 = vpop.f32.mrb[0].mxu0
      %v1563 = vadd.f32 0.0, %v1562
      %v1564 = vpop.f32.mrb[0].mxu0
      %v1565 = vpop.f32.mrb[0].mxu0
      %v1566 = vadd.f32 0.0, %v1565
      %v1567 = vpop.f32.mrb[0].mxu0
      %1568 = vdwg.mxu0
      %1569 = vrot.lane.b32.xlu0 %v834, 96
      %v1570 = vpop.permute.xlu0 %1569
      %1571 = vrot.lane.b32.xlu0 %v836, 96
      %v1572 = vpop.permute.xlu0 %1571
      %v1574 = vsel %vm857, %v834, 0
      %v1577 = vsel %vm857, %v836, 0
      %v1580 = vsel %vm857, %v1570, 0
      %v1583 = vsel %vm857, %v1572, 0
      %1585 = vmatprep.subr.bf16.mxu0 0
      %1586 = vmatpush1.bf16.xpose.msra.mxu0 %v1580
      %1587 = vmatprep.subr.bf16.mxu0 0
      %1588 = vmatpush1.bf16.xpose.msra.mxu0 %v1583
      %1589 = vmatprep.subr.bf16.mxu0 0
      %1590 = vmatpush1.bf16.xpose.msra.mxu0 0
      %1591 = vmatprep.subr.bf16.mxu0 0
      %1592 = vmatpush1.bf16.xpose.msra.mxu0 0
      %1593 = vmatprep.subr.bf16.mxu0 0
      %1594 = vmatpush1.bf16.xpose.msra.mxu0 0
      %1595 = vmatprep.subr.bf16.mxu0 0
      %1596 = vmatpush1.bf16.xpose.msra.mxu0 0
      %1597 = vmatprep.subr.bf16.mxu0 0
      %1598 = vmatpush1.bf16.xpose.msra.mxu0 0
      %1599 = vmatprep.subr.bf16.mxu0 0
      %1600 = vmatpush1.bf16.xpose.msra.mxu0 0
      %1601 = vmatprep.subr.bf16.mxu0 0
      %1602 = vmatpush1.bf16.xpose.msra.mxu0 0
      %1603 = vmatprep.subr.bf16.mxu0 0
      %1604 = vmatpush1.bf16.xpose.msra.mxu0 0
      %1605 = vmatprep.subr.bf16.mxu0 0
      %1606 = vmatpush1.bf16.xpose.msra.mxu0 0
      %1607 = vmatprep.subr.bf16.mxu0 0
      %1608 = vmatpush1.bf16.xpose.msra.mxu0 0
      %1609 = vmatprep.subr.bf16.mxu0 0
      %1610 = vmatpush1.bf16.xpose.msra.mxu0 0
      %1611 = vmatprep.subr.bf16.mxu0 0
      %1612 = vmatpush1.bf16.xpose.msra.mxu0 0
      %1613 = vmatprep.subr.bf16.mxu0 0
      %1614 = vmatpush1.bf16.xpose.msra.mxu0 0
      %1615 = vmatprep.subr.bf16.mxu0 0
      %1616 = vmatpush1.bf16.xpose.msra.mxu0 0
      %1617 = vmatprep.mubr.bf16.mxu0 0
      %1618 = vmatmul.mubr.bf16.gmra.mrb[0].mxu0 %v1574
      %v1619 = vpop.f32.mrb[0].mxu0
      %v1620 = vadd.f32 0.0, %v1619
      %v1621 = vpop.f32.mrb[0].mxu0
      %v1622 = vpop.f32.mrb[0].mxu0
      %v1623 = vadd.f32 0.0, %v1622
      %v1624 = vpop.f32.mrb[0].mxu0
      %1625 = vmatprep.mubr.bf16.mxu0 0
      %1626 = vmatmul.mubr.bf16.gmra.mrb[0].mxu0 %v1577
      %v1627 = vpop.f32.mrb[0].mxu0
      %v1628 = vadd.f32 0.0, %v1627
      %v1629 = vpop.f32.mrb[0].mxu0
      %v1630 = vpop.f32.mrb[0].mxu0
      %v1631 = vadd.f32 0.0, %v1630
      %v1632 = vpop.f32.mrb[0].mxu0
      %1633 = vdwg.mxu0
      %1634 = vrot.lane.b32.xlu0 %v838, 96
      %v1635 = vpop.permute.xlu0 %1634
      %1636 = vrot.lane.b32.xlu0 %v840, 96
      %v1637 = vpop.permute.xlu0 %1636
      %v1639 = vsel %vm857, %v838, 0
      %v1642 = vsel %vm857, %v840, 0
      %v1645 = vsel %vm857, %v1635, 0
      %v1648 = vsel %vm857, %v1637, 0
      %1650 = vmatprep.subr.bf16.mxu0 0
      %1651 = vmatpush1.bf16.xpose.msra.mxu0 %v1645
      %1652 = vmatprep.subr.bf16.mxu0 0
      %1653 = vmatpush1.bf16.xpose.msra.mxu0 %v1648
      %1654 = vmatprep.subr.bf16.mxu0 0
      %1655 = vmatpush1.bf16.xpose.msra.mxu0 0
      %1656 = vmatprep.subr.bf16.mxu0 0
      %1657 = vmatpush1.bf16.xpose.msra.mxu0 0
      %1658 = vmatprep.subr.bf16.mxu0 0
      %1659 = vmatpush1.bf16.xpose.msra.mxu0 0
      %1660 = vmatprep.subr.bf16.mxu0 0
      %1661 = vmatpush1.bf16.xpose.msra.mxu0 0
      %1662 = vmatprep.subr.bf16.mxu0 0
      %1663 = vmatpush1.bf16.xpose.msra.mxu0 0
      %1664 = vmatprep.subr.bf16.mxu0 0
      %1665 = vmatpush1.bf16.xpose.msra.mxu0 0
      %1666 = vmatprep.subr.bf16.mxu0 0
      %1667 = vmatpush1.bf16.xpose.msra.mxu0 0
      %1668 = vmatprep.subr.bf16.mxu0 0
      %1669 = vmatpush1.bf16.xpose.msra.mxu0 0
      %1670 = vmatprep.subr.bf16.mxu0 0
      %1671 = vmatpush1.bf16.xpose.msra.mxu0 0
      %1672 = vmatprep.subr.bf16.mxu0 0
      %1673 = vmatpush1.bf16.xpose.msra.mxu0 0
      %1674 = vmatprep.subr.bf16.mxu0 0
      %1675 = vmatpush1.bf16.xpose.msra.mxu0 0
      %1676 = vmatprep.subr.bf16.mxu0 0
      %1677 = vmatpush1.bf16.xpose.msra.mxu0 0
      %1678 = vmatprep.subr.bf16.mxu0 0
      %1679 = vmatpush1.bf16.xpose.msra.mxu0 0
      %1680 = vmatprep.subr.bf16.mxu0 0
      %1681 = vmatpush1.bf16.xpose.msra.mxu0 0
      %1682 = vmatprep.mubr.bf16.mxu0 0
      %1683 = vmatmul.mubr.bf16.gmra.mrb[0].mxu0 %v1639
      %v1684 = vpop.f32.mrb[0].mxu0
      %v1685 = vadd.f32 0.0, %v1684
      %v1686 = vpop.f32.mrb[0].mxu0
      %v1687 = vpop.f32.mrb[0].mxu0
      %v1688 = vadd.f32 0.0, %v1687
      %v1689 = vpop.f32.mrb[0].mxu0
      %1690 = vmatprep.mubr.bf16.mxu0 0
      %1691 = vmatmul.mubr.bf16.gmra.mrb[0].mxu0 %v1642
      %v1692 = vpop.f32.mrb[0].mxu0
      %v1693 = vadd.f32 0.0, %v1692
      %v1694 = vpop.f32.mrb[0].mxu0
      %v1695 = vpop.f32.mrb[0].mxu0
      %v1696 = vadd.f32 0.0, %v1695
      %v1697 = vpop.f32.mrb[0].mxu0
      %1698 = vdwg.mxu0
      %1699 = vrot.lane.b32.xlu0 %v842, 96
      %v1700 = vpop.permute.xlu0 %1699
      %1701 = vrot.lane.b32.xlu0 %v844, 96
      %v1702 = vpop.permute.xlu0 %1701
      %v1704 = vsel %vm857, %v842, 0
      %v1707 = vsel %vm857, %v844, 0
      %v1710 = vsel %vm857, %v1700, 0
      %v1713 = vsel %vm857, %v1702, 0
      %1715 = vmatprep.subr.bf16.mxu0 0
      %1716 = vmatpush1.bf16.xpose.msra.mxu0 %v1710
      %1717 = vmatprep.subr.bf16.mxu0 0
      %1718 = vmatpush1.bf16.xpose.msra.mxu0 %v1713
      %1719 = vmatprep.subr.bf16.mxu0 0
      %1720 = vmatpush1.bf16.xpose.msra.mxu0 0
      %1721 = vmatprep.subr.bf16.mxu0 0
      %1722 = vmatpush1.bf16.xpose.msra.mxu0 0
      %1723 = vmatprep.subr.bf16.mxu0 0
      %1724 = vmatpush1.bf16.xpose.msra.mxu0 0
      %1725 = vmatprep.subr.bf16.mxu0 0
      %1726 = vmatpush1.bf16.xpose.msra.mxu0 0
      %1727 = vmatprep.subr.bf16.mxu0 0
      %1728 = vmatpush1.bf16.xpose.msra.mxu0 0
      %1729 = vmatprep.subr.bf16.mxu0 0
      %1730 = vmatpush1.bf16.xpose.msra.mxu0 0
      %1731 = vmatprep.subr.bf16.mxu0 0
      %1732 = vmatpush1.bf16.xpose.msra.mxu0 0
      %1733 = vmatprep.subr.bf16.mxu0 0
      %1734 = vmatpush1.bf16.xpose.msra.mxu0 0
      %1735 = vmatprep.subr.bf16.mxu0 0
      %1736 = vmatpush1.bf16.xpose.msra.mxu0 0
      %1737 = vmatprep.subr.bf16.mxu0 0
      %1738 = vmatpush1.bf16.xpose.msra.mxu0 0
      %1739 = vmatprep.subr.bf16.mxu0 0
      %1740 = vmatpush1.bf16.xpose.msra.mxu0 0
      %1741 = vmatprep.subr.bf16.mxu0 0
      %1742 = vmatpush1.bf16.xpose.msra.mxu0 0
      %1743 = vmatprep.subr.bf16.mxu0 0
      %1744 = vmatpush1.bf16.xpose.msra.mxu0 0
      %1745 = vmatprep.subr.bf16.mxu0 0
      %1746 = vmatpush1.bf16.xpose.msra.mxu0 0
      %1747 = vmatprep.mubr.bf16.mxu0 0
      %1748 = vmatmul.mubr.bf16.gmra.mrb[0].mxu0 %v1704
      %v1749 = vpop.f32.mrb[0].mxu0
      %v1750 = vadd.f32 0.0, %v1749
      %v1751 = vpop.f32.mrb[0].mxu0
      %v1752 = vpop.f32.mrb[0].mxu0
      %v1753 = vadd.f32 0.0, %v1752
      %v1754 = vpop.f32.mrb[0].mxu0
      %1755 = vmatprep.mubr.bf16.mxu0 0
      %1756 = vmatmul.mubr.bf16.gmra.mrb[0].mxu0 %v1707
      %v1757 = vpop.f32.mrb[0].mxu0
      %v1758 = vadd.f32 0.0, %v1757
      %v1759 = vpop.f32.mrb[0].mxu0
      %v1760 = vpop.f32.mrb[0].mxu0
      %v1761 = vadd.f32 0.0, %v1760
      %v1762 = vpop.f32.mrb[0].mxu0
      %1763 = vdwg.mxu0
      %1764 = vrot.lane.b32.xlu0 %v846, 96
      %v1765 = vpop.permute.xlu0 %1764
      %1766 = vrot.lane.b32.xlu0 %v848, 96
      %v1767 = vpop.permute.xlu0 %1766
      %v1769 = vsel %vm857, %v846, 0
      %v1772 = vsel %vm857, %v848, 0
      %v1775 = vsel %vm857, %v1765, 0
      %v1778 = vsel %vm857, %v1767, 0
      %1780 = vmatprep.subr.bf16.mxu0 0
      %1781 = vmatpush1.bf16.xpose.msra.mxu0 %v1775
      %1782 = vmatprep.subr.bf16.mxu0 0
      %1783 = vmatpush1.bf16.xpose.msra.mxu0 %v1778
      %1784 = vmatprep.subr.bf16.mxu0 0
      %1785 = vmatpush1.bf16.xpose.msra.mxu0 0
      %1786 = vmatprep.subr.bf16.mxu0 0
      %1787 = vmatpush1.bf16.xpose.msra.mxu0 0
      %1788 = vmatprep.subr.bf16.mxu0 0
      %1789 = vmatpush1.bf16.xpose.msra.mxu0 0
      %1790 = vmatprep.subr.bf16.mxu0 0
      %1791 = vmatpush1.bf16.xpose.msra.mxu0 0
      %1792 = vmatprep.subr.bf16.mxu0 0
      %1793 = vmatpush1.bf16.xpose.msra.mxu0 0
      %1794 = vmatprep.subr.bf16.mxu0 0
      %1795 = vmatpush1.bf16.xpose.msra.mxu0 0
      %1796 = vmatprep.subr.bf16.mxu0 0
      %1797 = vmatpush1.bf16.xpose.msra.mxu0 0
      %1798 = vmatprep.subr.bf16.mxu0 0
      %1799 = vmatpush1.bf16.xpose.msra.mxu0 0
      %1800 = vmatprep.subr.bf16.mxu0 0
      %1801 = vmatpush1.bf16.xpose.msra.mxu0 0
      %1802 = vmatprep.subr.bf16.mxu0 0
      %1803 = vmatpush1.bf16.xpose.msra.mxu0 0
      %1804 = vmatprep.subr.bf16.mxu0 0
      %1805 = vmatpush1.bf16.xpose.msra.mxu0 0
      %1806 = vmatprep.subr.bf16.mxu0 0
      %1807 = vmatpush1.bf16.xpose.msra.mxu0 0
      %1808 = vmatprep.subr.bf16.mxu0 0
      %1809 = vmatpush1.bf16.xpose.msra.mxu0 0
      %1810 = vmatprep.subr.bf16.mxu0 0
      %1811 = vmatpush1.bf16.xpose.msra.mxu0 0
      %1812 = vmatprep.mubr.bf16.mxu0 0
      %1813 = vmatmul.mubr.bf16.gmra.mrb[0].mxu0 %v1769
      %v1814 = vpop.f32.mrb[0].mxu0
      %v1815 = vadd.f32 0.0, %v1814
      %v1816 = vpop.f32.mrb[0].mxu0
      %v1817 = vpop.f32.mrb[0].mxu0
      %v1818 = vadd.f32 0.0, %v1817
      %v1819 = vpop.f32.mrb[0].mxu0
      %1820 = vmatprep.mubr.bf16.mxu0 0
      %1821 = vmatmul.mubr.bf16.gmra.mrb[0].mxu0 %v1772
      %v1822 = vpop.f32.mrb[0].mxu0
      %v1823 = vadd.f32 0.0, %v1822
      %v1824 = vpop.f32.mrb[0].mxu0
      %v1825 = vpop.f32.mrb[0].mxu0
      %v1826 = vadd.f32 0.0, %v1825
      %v1827 = vpop.f32.mrb[0].mxu0
      %1828 = vdwg.mxu0
      %1829 = vrot.lane.b32.xlu0 %v850, 96
      %v1830 = vpop.permute.xlu0 %1829
      %1831 = vrot.lane.b32.xlu0 %v852, 96
      %v1832 = vpop.permute.xlu0 %1831
      %v1834 = vsel %vm857, %v850, 0
      %v1837 = vsel %vm857, %v852, 0
      %v1840 = vsel %vm857, %v1830, 0
      %v1843 = vsel %vm857, %v1832, 0
      %1845 = vmatprep.subr.bf16.mxu0 0
      %1846 = vmatpush1.bf16.xpose.msra.mxu0 %v1840
      %1847 = vmatprep.subr.bf16.mxu0 0
      %1848 = vmatpush1.bf16.xpose.msra.mxu0 %v1843
      %1849 = vmatprep.subr.bf16.mxu0 0
      %1850 = vmatpush1.bf16.xpose.msra.mxu0 0
      %1851 = vmatprep.subr.bf16.mxu0 0
      %1852 = vmatpush1.bf16.xpose.msra.mxu0 0
      %1853 = vmatprep.subr.bf16.mxu0 0
      %1854 = vmatpush1.bf16.xpose.msra.mxu0 0
      %1855 = vmatprep.subr.bf16.mxu0 0
      %1856 = vmatpush1.bf16.xpose.msra.mxu0 0
      %1857 = vmatprep.subr.bf16.mxu0 0
      %1858 = vmatpush1.bf16.xpose.msra.mxu0 0
      %1859 = vmatprep.subr.bf16.mxu0 0
      %1860 = vmatpush1.bf16.xpose.msra.mxu0 0
      %1861 = vmatprep.subr.bf16.mxu0 0
      %1862 = vmatpush1.bf16.xpose.msra.mxu0 0
      %1863 = vmatprep.subr.bf16.mxu0 0
      %1864 = vmatpush1.bf16.xpose.msra.mxu0 0
      %1865 = vmatprep.subr.bf16.mxu0 0
      %1866 = vmatpush1.bf16.xpose.msra.mxu0 0
      %1867 = vmatprep.subr.bf16.mxu0 0
      %1868 = vmatpush1.bf16.xpose.msra.mxu0 0
      %1869 = vmatprep.subr.bf16.mxu0 0
      %1870 = vmatpush1.bf16.xpose.msra.mxu0 0
      %1871 = vmatprep.subr.bf16.mxu0 0
      %1872 = vmatpush1.bf16.xpose.msra.mxu0 0
      %1873 = vmatprep.subr.bf16.mxu0 0
      %1874 = vmatpush1.bf16.xpose.msra.mxu0 0
      %1875 = vmatprep.subr.bf16.mxu0 0
      %1876 = vmatpush1.bf16.xpose.msra.mxu0 0
      %1877 = vmatprep.mubr.bf16.mxu0 0
      %1878 = vmatmul.mubr.bf16.gmra.mrb[0].mxu0 %v1834
      %v1879 = vpop.f32.mrb[0].mxu0
      %v1880 = vadd.f32 0.0, %v1879
      %v1881 = vpop.f32.mrb[0].mxu0
      %v1882 = vpop.f32.mrb[0].mxu0
      %v1883 = vadd.f32 0.0, %v1882
      %v1884 = vpop.f32.mrb[0].mxu0
      %1885 = vmatprep.mubr.bf16.mxu0 0
      %1886 = vmatmul.mubr.bf16.gmra.mrb[0].mxu0 %v1837
      %v1887 = vpop.f32.mrb[0].mxu0
      %v1888 = vadd.f32 0.0, %v1887
      %v1889 = vpop.f32.mrb[0].mxu0
      %v1890 = vpop.f32.mrb[0].mxu0
      %v1891 = vadd.f32 0.0, %v1890
      %v1892 = vpop.f32.mrb[0].mxu0
      %1893 = vdwg.mxu0
      %v1894 = vmul.f32 %v905, 0.35355338
      %v1895 = vmul.f32 %v908, 0.35355338
      %v1896 = vmul.f32 %v913, 0.35355338
      %v1897 = vmul.f32 %v916, 0.35355338
      %v1898 = vmul.f32 %v970, 0.35355338
      %v1899 = vmul.f32 %v973, 0.35355338
      %v1900 = vmul.f32 %v978, 0.35355338
      %v1901 = vmul.f32 %v981, 0.35355338
      %v1902 = vmul.f32 %v1035, 0.35355338
      %v1903 = vmul.f32 %v1038, 0.35355338
      %v1904 = vmul.f32 %v1043, 0.35355338
      %v1905 = vmul.f32 %v1046, 0.35355338
      %v1906 = vmul.f32 %v1100, 0.35355338
      %v1907 = vmul.f32 %v1103, 0.35355338
      %v1908 = vmul.f32 %v1108, 0.35355338
      %v1909 = vmul.f32 %v1111, 0.35355338
      %v1910 = vmul.f32 %v1165, 0.35355338
      %v1911 = vmul.f32 %v1168, 0.35355338
      %v1912 = vmul.f32 %v1173, 0.35355338
      %v1913 = vmul.f32 %v1176, 0.35355338
      %v1914 = vmul.f32 %v1230, 0.35355338
      %v1915 = vmul.f32 %v1233, 0.35355338
      %v1916 = vmul.f32 %v1238, 0.35355338
      %v1917 = vmul.f32 %v1241, 0.35355338
      %v1918 = vmul.f32 %v1295, 0.35355338
      %v1919 = vmul.f32 %v1298, 0.35355338
      %v1920 = vmul.f32 %v1303, 0.35355338
      %v1921 = vmul.f32 %v1306, 0.35355338
      %v1922 = vmul.f32 %v1360, 0.35355338
      %v1923 = vmul.f32 %v1363, 0.35355338
      %v1924 = vmul.f32 %v1368, 0.35355338
      %v1925 = vmul.f32 %v1371, 0.35355338
      %v1926 = vmul.f32 %v1425, 0.35355338
      %v1927 = vmul.f32 %v1428, 0.35355338
      %v1928 = vmul.f32 %v1433, 0.35355338
      %v1929 = vmul.f32 %v1436, 0.35355338
      %v1930 = vmul.f32 %v1490, 0.35355338
      %v1931 = vmul.f32 %v1493, 0.35355338
      %v1932 = vmul.f32 %v1498, 0.35355338
      %v1933 = vmul.f32 %v1501, 0.35355338
      %v1934 = vmul.f32 %v1555, 0.35355338
      %v1935 = vmul.f32 %v1558, 0.35355338
      %v1936 = vmul.f32 %v1563, 0.35355338
      %v1937 = vmul.f32 %v1566, 0.35355338
      %v1938 = vmul.f32 %v1620, 0.35355338
      %v1939 = vmul.f32 %v1623, 0.35355338
      %v1940 = vmul.f32 %v1628, 0.35355338
      %v1941 = vmul.f32 %v1631, 0.35355338
      %v1942 = vmul.f32 %v1685, 0.35355338
      %v1943 = vmul.f32 %v1688, 0.35355338
      %v1944 = vmul.f32 %v1693, 0.35355338
      %v1945 = vmul.f32 %v1696, 0.35355338
      %v1946 = vmul.f32 %v1750, 0.35355338
      %v1947 = vmul.f32 %v1753, 0.35355338
      %v1948 = vmul.f32 %v1758, 0.35355338
      %v1949 = vmul.f32 %v1761, 0.35355338
      %v1950 = vmul.f32 %v1815, 0.35355338
      %v1951 = vmul.f32 %v1818, 0.35355338
      %v1952 = vmul.f32 %v1823, 0.35355338
      %v1953 = vmul.f32 %v1826, 0.35355338
      %v1954 = vmul.f32 %v1880, 0.35355338
      %v1955 = vmul.f32 %v1883, 0.35355338
      %v1956 = vmul.f32 %v1888, 0.35355338
      %v1957 = vmul.f32 %v1891, 0.35355338
      %v1958 = vld [vmem:[%s339] sm:$0xf]
      %v1959 = vld [vmem:[%s339 + $0x4] sm:$0xf]
      %v1960 = vld [vmem:[%s339 + $0x8] sm:$0xf]
      %v1961 = vld [vmem:[%s339 + $0xc] sm:$0xf]
      %v1962 = vld [vmem:[%s339 + $0x10] sm:$0xf]
      %v1963 = vld [vmem:[%s339 + $0x14] sm:$0xf]
      %v1964 = vld [vmem:[%s339 + $0x18] sm:$0xf]
      %v1965 = vld [vmem:[%s339 + $0x1c] sm:$0xf]
      %v1966 = vld [vmem:[%s339 + $0x20] sm:$0xf]
      %v1967 = vld [vmem:[%s339 + $0x24] sm:$0xf]
      %v1968 = vld [vmem:[%s339 + $0x28] sm:$0xf]
      %v1969 = vld [vmem:[%s339 + $0x2c] sm:$0xf]
      %v1970 = vld [vmem:[%s339 + $0x30] sm:$0xf]
      %v1971 = vld [vmem:[%s339 + $0x34] sm:$0xf]
      %v1972 = vld [vmem:[%s339 + $0x38] sm:$0xf]
      %v1973 = vld [vmem:[%s339 + $0x3c] sm:$0xf]
      %v1974 = vunpack.c.l.bf16 %v1958
      %v1975 = vunpack.c.l.bf16 %v1959
      %v1976 = vunpack.c.l.bf16 %v1960
      %v1977 = vunpack.c.l.bf16 %v1961
      %v1978 = vunpack.c.l.bf16 %v1962
      %v1979 = vunpack.c.l.bf16 %v1963
      %v1980 = vunpack.c.l.bf16 %v1964
      %v1981 = vunpack.c.l.bf16 %v1965
      %v1982 = vunpack.c.l.bf16 %v1966
      %v1983 = vunpack.c.l.bf16 %v1967
      %v1984 = vunpack.c.l.bf16 %v1968
      %v1985 = vunpack.c.l.bf16 %v1969
      %v1986 = vunpack.c.l.bf16 %v1970
      %v1987 = vunpack.c.l.bf16 %v1971
      %v1988 = vunpack.c.l.bf16 %v1972
      %v1989 = vunpack.c.l.bf16 %v1973
      %v1990 = vadd.f32 %v1894, %v1974
      %v1991 = vadd.f32 %v1895, %v1975
      %v1992 = vadd.f32 %v1896, %v1976
      %v1993 = vadd.f32 %v1897, %v1977
      %v1994 = vadd.f32 %v1898, %v1974
      %v1995 = vadd.f32 %v1899, %v1975
      %v1996 = vadd.f32 %v1900, %v1976
      %v1997 = vadd.f32 %v1901, %v1977
      %v1998 = vadd.f32 %v1902, %v1974
      %v1999 = vadd.f32 %v1903, %v1975
      %v2000 = vadd.f32 %v1904, %v1976
      %v2001 = vadd.f32 %v1905, %v1977
      %v2002 = vadd.f32 %v1906, %v1974
      %v2003 = vadd.f32 %v1907, %v1975
      %v2004 = vadd.f32 %v1908, %v1976
      %v2005 = vadd.f32 %v1909, %v1977
      %v2006 = vadd.f32 %v1910, %v1978
      %v2007 = vadd.f32 %v1911, %v1979
      %v2008 = vadd.f32 %v1912, %v1980
      %v2009 = vadd.f32 %v1913, %v1981
      %v2010 = vadd.f32 %v1914, %v1978
      %v2011 = vadd.f32 %v1915, %v1979
      %v2012 = vadd.f32 %v1916, %v1980
      %v2013 = vadd.f32 %v1917, %v1981
      %v2014 = vadd.f32 %v1918, %v1978
      %v2015 = vadd.f32 %v1919, %v1979
      %v2016 = vadd.f32 %v1920, %v1980
      %v2017 = vadd.f32 %v1921, %v1981
      %v2018 = vadd.f32 %v1922, %v1978
      %v2019 = vadd.f32 %v1923, %v1979
      %v2020 = vadd.f32 %v1924, %v1980
      %v2021 = vadd.f32 %v1925, %v1981
      %v2022 = vadd.f32 %v1926, %v1982
      %v2023 = vadd.f32 %v1927, %v1983
      %v2024 = vadd.f32 %v1928, %v1984
      %v2025 = vadd.f32 %v1929, %v1985
      %v2026 = vadd.f32 %v1930, %v1982
      %v2027 = vadd.f32 %v1931, %v1983
      %v2028 = vadd.f32 %v1932, %v1984
      %v2029 = vadd.f32 %v1933, %v1985
      %v2030 = vadd.f32 %v1934, %v1982
      %v2031 = vadd.f32 %v1935, %v1983
      %v2032 = vadd.f32 %v1936, %v1984
      %v2033 = vadd.f32 %v1937, %v1985
      %v2034 = vadd.f32 %v1938, %v1982
      %v2035 = vadd.f32 %v1939, %v1983
      %v2036 = vadd.f32 %v1940, %v1984
      %v2037 = vadd.f32 %v1941, %v1985
      %v2038 = vadd.f32 %v1942, %v1986
      %v2039 = vadd.f32 %v1943, %v1987
      %v2040 = vadd.f32 %v1944, %v1988
      %v2041 = vadd.f32 %v1945, %v1989
      %v2042 = vadd.f32 %v1946, %v1986
      %v2043 = vadd.f32 %v1947, %v1987
      %v2044 = vadd.f32 %v1948, %v1988
      %v2045 = vadd.f32 %v1949, %v1989
      %v2046 = vadd.f32 %v1950, %v1986
      %v2047 = vadd.f32 %v1951, %v1987
      %v2048 = vadd.f32 %v1952, %v1988
      %v2049 = vadd.f32 %v1953, %v1989
      %v2050 = vadd.f32 %v1954, %v1986
      %v2051 = vadd.f32 %v1955, %v1987
      %v2052 = vadd.f32 %v1956, %v1988
      %v2053 = vadd.f32 %v1957, %v1989
      %v2054 = vsel %vm381, %v1990, -inf
      %2055 = vmax.xlane.f32.xlu0 %v2054
      %v2056 = vpop.xlane.xlu0 %2055
      %v2057 = vsel %vm381, %v1991, -inf
      %2058 = vmax.xlane.f32.xlu0 %v2057
      %v2059 = vpop.xlane.xlu0 %2058
      %v2060 = vsel %vm381, %v1992, -inf
      %2061 = vmax.xlane.f32.xlu0 %v2060
      %v2062 = vpop.xlane.xlu0 %2061
      %v2063 = vsel %vm381, %v1993, -inf
      %2064 = vmax.xlane.f32.xlu0 %v2063
      %v2065 = vpop.xlane.xlu0 %2064
      %v2066 = vsel %vm381, %v1994, -inf
      %2067 = vmax.xlane.f32.xlu0 %v2066
      %v2068 = vpop.xlane.xlu0 %2067
      %v2069 = vsel %vm381, %v1995, -inf
      %2070 = vmax.xlane.f32.xlu0 %v2069
      %v2071 = vpop.xlane.xlu0 %2070
      %v2072 = vsel %vm381, %v1996, -inf
      %2073 = vmax.xlane.f32.xlu0 %v2072
      %v2074 = vpop.xlane.xlu0 %2073
      %v2075 = vsel %vm381, %v1997, -inf
      %2076 = vmax.xlane.f32.xlu0 %v2075
      %v2077 = vpop.xlane.xlu0 %2076
      %v2078 = vsel %vm381, %v1998, -inf
      %2079 = vmax.xlane.f32.xlu0 %v2078
      %v2080 = vpop.xlane.xlu0 %2079
      %v2081 = vsel %vm381, %v1999, -inf
      %2082 = vmax.xlane.f32.xlu0 %v2081
      %v2083 = vpop.xlane.xlu0 %2082
      %v2084 = vsel %vm381, %v2000, -inf
      %2085 = vmax.xlane.f32.xlu0 %v2084
      %v2086 = vpop.xlane.xlu0 %2085
      %v2087 = vsel %vm381, %v2001, -inf
      %2088 = vmax.xlane.f32.xlu0 %v2087
      %v2089 = vpop.xlane.xlu0 %2088
      %v2090 = vsel %vm381, %v2002, -inf
      %2091 = vmax.xlane.f32.xlu0 %v2090
      %v2092 = vpop.xlane.xlu0 %2091
      %v2093 = vsel %vm381, %v2003, -inf
      %2094 = vmax.xlane.f32.xlu0 %v2093
      %v2095 = vpop.xlane.xlu0 %2094
      %v2096 = vsel %vm381, %v2004, -inf
      %2097 = vmax.xlane.f32.xlu0 %v2096
      %v2098 = vpop.xlane.xlu0 %2097
      %v2099 = vsel %vm381, %v2005, -inf
      %2100 = vmax.xlane.f32.xlu0 %v2099
      %v2101 = vpop.xlane.xlu0 %2100
      %v2102 = vsel %vm381, %v2006, -inf
      %2103 = vmax.xlane.f32.xlu0 %v2102
      %v2104 = vpop.xlane.xlu0 %2103
      %v2105 = vsel %vm381, %v2007, -inf
      %2106 = vmax.xlane.f32.xlu0 %v2105
      %v2107 = vpop.xlane.xlu0 %2106
      %v2108 = vsel %vm381, %v2008, -inf
      %2109 = vmax.xlane.f32.xlu0 %v2108
      %v2110 = vpop.xlane.xlu0 %2109
      %v2111 = vsel %vm381, %v2009, -inf
      %2112 = vmax.xlane.f32.xlu0 %v2111
      %v2113 = vpop.xlane.xlu0 %2112
      %v2114 = vsel %vm381, %v2010, -inf
      %2115 = vmax.xlane.f32.xlu0 %v2114
      %v2116 = vpop.xlane.xlu0 %2115
      %v2117 = vsel %vm381, %v2011, -inf
      %2118 = vmax.xlane.f32.xlu0 %v2117
      %v2119 = vpop.xlane.xlu0 %2118
      %v2120 = vsel %vm381, %v2012, -inf
      %2121 = vmax.xlane.f32.xlu0 %v2120
      %v2122 = vpop.xlane.xlu0 %2121
      %v2123 = vsel %vm381, %v2013, -inf
      %2124 = vmax.xlane.f32.xlu0 %v2123
      %v2125 = vpop.xlane.xlu0 %2124
      %v2126 = vsel %vm381, %v2014, -inf
      %2127 = vmax.xlane.f32.xlu0 %v2126
      %v2128 = vpop.xlane.xlu0 %2127
      %v2129 = vsel %vm381, %v2015, -inf
      %2130 = vmax.xlane.f32.xlu0 %v2129
      %v2131 = vpop.xlane.xlu0 %2130
      %v2132 = vsel %vm381, %v2016, -inf
      %2133 = vmax.xlane.f32.xlu0 %v2132
      %v2134 = vpop.xlane.xlu0 %2133
      %v2135 = vsel %vm381, %v2017, -inf
      %2136 = vmax.xlane.f32.xlu0 %v2135
      %v2137 = vpop.xlane.xlu0 %2136
      %v2138 = vsel %vm381, %v2018, -inf
      %2139 = vmax.xlane.f32.xlu0 %v2138
      %v2140 = vpop.xlane.xlu0 %2139
      %v2141 = vsel %vm381, %v2019, -inf
      %2142 = vmax.xlane.f32.xlu0 %v2141
      %v2143 = vpop.xlane.xlu0 %2142
      %v2144 = vsel %vm381, %v2020, -inf
      %2145 = vmax.xlane.f32.xlu0 %v2144
      %v2146 = vpop.xlane.xlu0 %2145
      %v2147 = vsel %vm381, %v2021, -inf
      %2148 = vmax.xlane.f32.xlu0 %v2147
      %v2149 = vpop.xlane.xlu0 %2148
      %v2150 = vsel %vm381, %v2022, -inf
      %2151 = vmax.xlane.f32.xlu0 %v2150
      %v2152 = vpop.xlane.xlu0 %2151
      %v2153 = vsel %vm381, %v2023, -inf
      %2154 = vmax.xlane.f32.xlu0 %v2153
      %v2155 = vpop.xlane.xlu0 %2154
      %v2156 = vsel %vm381, %v2024, -inf
      %2157 = vmax.xlane.f32.xlu0 %v2156
      %v2158 = vpop.xlane.xlu0 %2157
      %v2159 = vsel %vm381, %v2025, -inf
      %2160 = vmax.xlane.f32.xlu0 %v2159
      %v2161 = vpop.xlane.xlu0 %2160
      %v2162 = vsel %vm381, %v2026, -inf
      %2163 = vmax.xlane.f32.xlu0 %v2162
      %v2164 = vpop.xlane.xlu0 %2163
      %v2165 = vsel %vm381, %v2027, -inf
      %2166 = vmax.xlane.f32.xlu0 %v2165
      %v2167 = vpop.xlane.xlu0 %2166
      %v2168 = vsel %vm381, %v2028, -inf
      %2169 = vmax.xlane.f32.xlu0 %v2168
      %v2170 = vpop.xlane.xlu0 %2169
      %v2171 = vsel %vm381, %v2029, -inf
      %2172 = vmax.xlane.f32.xlu0 %v2171
      %v2173 = vpop.xlane.xlu0 %2172
      %v2174 = vsel %vm381, %v2030, -inf
      %2175 = vmax.xlane.f32.xlu0 %v2174
      %v2176 = vpop.xlane.xlu0 %2175
      %v2177 = vsel %vm381, %v2031, -inf
      %2178 = vmax.xlane.f32.xlu0 %v2177
      %v2179 = vpop.xlane.xlu0 %2178
      %v2180 = vsel %vm381, %v2032, -inf
      %2181 = vmax.xlane.f32.xlu0 %v2180
      %v2182 = vpop.xlane.xlu0 %2181
      %v2183 = vsel %vm381, %v2033, -inf
      %2184 = vmax.xlane.f32.xlu0 %v2183
      %v2185 = vpop.xlane.xlu0 %2184
      %v2186 = vsel %vm381, %v2034, -inf
      %2187 = vmax.xlane.f32.xlu0 %v2186
      %v2188 = vpop.xlane.xlu0 %2187
      %v2189 = vsel %vm381, %v2035, -inf
      %2190 = vmax.xlane.f32.xlu0 %v2189
      %v2191 = vpop.xlane.xlu0 %2190
      %v2192 = vsel %vm381, %v2036, -inf
      %2193 = vmax.xlane.f32.xlu0 %v2192
      %v2194 = vpop.xlane.xlu0 %2193
      %v2195 = vsel %vm381, %v2037, -inf
      %2196 = vmax.xlane.f32.xlu0 %v2195
      %v2197 = vpop.xlane.xlu0 %2196
      %v2198 = vsel %vm381, %v2038, -inf
      %2199 = vmax.xlane.f32.xlu0 %v2198
      %v2200 = vpop.xlane.xlu0 %2199
      %v2201 = vsel %vm381, %v2039, -inf
      %2202 = vmax.xlane.f32.xlu0 %v2201
      %v2203 = vpop.xlane.xlu0 %2202
      %v2204 = vsel %vm381, %v2040, -inf
      %2205 = vmax.xlane.f32.xlu0 %v2204
      %v2206 = vpop.xlane.xlu0 %2205
      %v2207 = vsel %vm381, %v2041, -inf
      %2208 = vmax.xlane.f32.xlu0 %v2207
      %v2209 = vpop.xlane.xlu0 %2208
      %v2210 = vsel %vm381, %v2042, -inf
      %2211 = vmax.xlane.f32.xlu0 %v2210
      %v2212 = vpop.xlane.xlu0 %2211
      %v2213 = vsel %vm381, %v2043, -inf
      %2214 = vmax.xlane.f32.xlu0 %v2213
      %v2215 = vpop.xlane.xlu0 %2214
      %v2216 = vsel %vm381, %v2044, -inf
      %2217 = vmax.xlane.f32.xlu0 %v2216
      %v2218 = vpop.xlane.xlu0 %2217
      %v2219 = vsel %vm381, %v2045, -inf
      %2220 = vmax.xlane.f32.xlu0 %v2219
      %v2221 = vpop.xlane.xlu0 %2220
      %v2222 = vsel %vm381, %v2046, -inf
      %2223 = vmax.xlane.f32.xlu0 %v2222
      %v2224 = vpop.xlane.xlu0 %2223
      %v2225 = vsel %vm381, %v2047, -inf
      %2226 = vmax.xlane.f32.xlu0 %v2225
      %v2227 = vpop.xlane.xlu0 %2226
      %v2228 = vsel %vm381, %v2048, -inf
      %2229 = vmax.xlane.f32.xlu0 %v2228
      %v2230 = vpop.xlane.xlu0 %2229
      %v2231 = vsel %vm381, %v2049, -inf
      %2232 = vmax.xlane.f32.xlu0 %v2231
      %v2233 = vpop.xlane.xlu0 %2232
      %v2234 = vsel %vm381, %v2050, -inf
      %2235 = vmax.xlane.f32.xlu0 %v2234
      %v2236 = vpop.xlane.xlu0 %2235
      %v2237 = vsel %vm381, %v2051, -inf
      %2238 = vmax.xlane.f32.xlu0 %v2237
      %v2239 = vpop.xlane.xlu0 %2238
      %v2240 = vsel %vm381, %v2052, -inf
      %2241 = vmax.xlane.f32.xlu0 %v2240
      %v2242 = vpop.xlane.xlu0 %2241
      %v2243 = vsel %vm381, %v2053, -inf
      %2244 = vmax.xlane.f32.xlu0 %v2243
      %v2245 = vpop.xlane.xlu0 %2244
      %v2246 = vsub.f32 %v1990, %v2056
      %v2247 = vsub.f32 %v1991, %v2059
      %v2248 = vsub.f32 %v1992, %v2062
      %v2249 = vsub.f32 %v1993, %v2065
      %v2250 = vsub.f32 %v1994, %v2068
      %v2251 = vsub.f32 %v1995, %v2071
      %v2252 = vsub.f32 %v1996, %v2074
      %v2253 = vsub.f32 %v1997, %v2077
      %v2254 = vsub.f32 %v1998, %v2080
      %v2255 = vsub.f32 %v1999, %v2083
      %v2256 = vsub.f32 %v2000, %v2086
      %v2257 = vsub.f32 %v2001, %v2089
      %v2258 = vsub.f32 %v2002, %v2092
      %v2259 = vsub.f32 %v2003, %v2095
      %v2260 = vsub.f32 %v2004, %v2098
      %v2261 = vsub.f32 %v2005, %v2101
      %v2262 = vsub.f32 %v2006, %v2104
      %v2263 = vsub.f32 %v2007, %v2107
      %v2264 = vsub.f32 %v2008, %v2110
      %v2265 = vsub.f32 %v2009, %v2113
      %v2266 = vsub.f32 %v2010, %v2116
      %v2267 = vsub.f32 %v2011, %v2119
      %v2268 = vsub.f32 %v2012, %v2122
      %v2269 = vsub.f32 %v2013, %v2125
      %v2270 = vsub.f32 %v2014, %v2128
      %v2271 = vsub.f32 %v2015, %v2131
      %v2272 = vsub.f32 %v2016, %v2134
      %v2273 = vsub.f32 %v2017, %v2137
      %v2274 = vsub.f32 %v2018, %v2140
      %v2275 = vsub.f32 %v2019, %v2143
      %v2276 = vsub.f32 %v2020, %v2146
      %v2277 = vsub.f32 %v2021, %v2149
      %v2278 = vsub.f32 %v2022, %v2152
      %v2279 = vsub.f32 %v2023, %v2155
      %v2280 = vsub.f32 %v2024, %v2158
      %v2281 = vsub.f32 %v2025, %v2161
      %v2282 = vsub.f32 %v2026, %v2164
      %v2283 = vsub.f32 %v2027, %v2167
      %v2284 = vsub.f32 %v2028, %v2170
      %v2285 = vsub.f32 %v2029, %v2173
      %v2286 = vsub.f32 %v2030, %v2176
      %v2287 = vsub.f32 %v2031, %v2179
      %v2288 = vsub.f32 %v2032, %v2182
      %v2289 = vsub.f32 %v2033, %v2185
      %v2290 = vsub.f32 %v2034, %v2188
      %v2291 = vsub.f32 %v2035, %v2191
      %v2292 = vsub.f32 %v2036, %v2194
      %v2293 = vsub.f32 %v2037, %v2197
      %v2294 = vsub.f32 %v2038, %v2200
      %v2295 = vsub.f32 %v2039, %v2203
      %v2296 = vsub.f32 %v2040, %v2206
      %v2297 = vsub.f32 %v2041, %v2209
      %v2298 = vsub.f32 %v2042, %v2212
      %v2299 = vsub.f32 %v2043, %v2215
      %v2300 = vsub.f32 %v2044, %v2218
      %v2301 = vsub.f32 %v2045, %v2221
      %v2302 = vsub.f32 %v2046, %v2224
      %v2303 = vsub.f32 %v2047, %v2227
      %v2304 = vsub.f32 %v2048, %v2230
      %v2305 = vsub.f32 %v2049, %v2233
      %v2306 = vsub.f32 %v2050, %v2236
      %v2307 = vsub.f32 %v2051, %v2239
      %v2308 = vsub.f32 %v2052, %v2242
      %v2309 = vsub.f32 %v2053, %v2245
      %v2310 = vmul.f32 %v2246, 1.442695
      %v2311 = vpow.pop %v2310
      %v2312 = vmul.f32 %v2247, 1.442695
      %v2313 = vpow.pop %v2312
      %v2314 = vmul.f32 %v2248, 1.442695
      %v2315 = vpow.pop %v2314
      %v2316 = vmul.f32 %v2249, 1.442695
      %v2317 = vpow.pop %v2316
      %v2318 = vmul.f32 %v2250, 1.442695
      %v2319 = vpow.pop %v2318
      %v2320 = vmul.f32 %v2251, 1.442695
      %v2321 = vpow.pop %v2320
      %v2322 = vmul.f32 %v2252, 1.442695
      %v2323 = vpow.pop %v2322
      %v2324 = vmul.f32 %v2253, 1.442695
      %v2325 = vpow.pop %v2324
      %v2326 = vmul.f32 %v2254, 1.442695
      %v2327 = vpow.pop %v2326
      %v2328 = vmul.f32 %v2255, 1.442695
      %v2329 = vpow.pop %v2328
      %v2330 = vmul.f32 %v2256, 1.442695
      %v2331 = vpow.pop %v2330
      %v2332 = vmul.f32 %v2257, 1.442695
      %v2333 = vpow.pop %v2332
      %v2334 = vmul.f32 %v2258, 1.442695
      %v2335 = vpow.pop %v2334
      %v2336 = vmul.f32 %v2259, 1.442695
      %v2337 = vpow.pop %v2336
      %v2338 = vmul.f32 %v2260, 1.442695
      %v2339 = vpow.pop %v2338
      %v2340 = vmul.f32 %v2261, 1.442695
      %v2341 = vpow.pop %v2340
      %v2342 = vmul.f32 %v2262, 1.442695
      %v2343 = vpow.pop %v2342
      %v2344 = vmul.f32 %v2263, 1.442695
      %v2345 = vpow.pop %v2344
      %v2346 = vmul.f32 %v2264, 1.442695
      %v2347 = vpow.pop %v2346
      %v2348 = vmul.f32 %v2265, 1.442695
      %v2349 = vpow.pop %v2348
      %v2350 = vmul.f32 %v2266, 1.442695
      %v2351 = vpow.pop %v2350
      %v2352 = vmul.f32 %v2267, 1.442695
      %v2353 = vpow.pop %v2352
      %v2354 = vmul.f32 %v2268, 1.442695
      %v2355 = vpow.pop %v2354
      %v2356 = vmul.f32 %v2269, 1.442695
      %v2357 = vpow.pop %v2356
      %v2358 = vmul.f32 %v2270, 1.442695
      %v2359 = vpow.pop %v2358
      %v2360 = vmul.f32 %v2271, 1.442695
      %v2361 = vpow.pop %v2360
      %v2362 = vmul.f32 %v2272, 1.442695
      %v2363 = vpow.pop %v2362
      %v2364 = vmul.f32 %v2273, 1.442695
      %v2365 = vpow.pop %v2364
      %v2366 = vmul.f32 %v2274, 1.442695
      %v2367 = vpow.pop %v2366
      %v2368 = vmul.f32 %v2275, 1.442695
      %v2369 = vpow.pop %v2368
      %v2370 = vmul.f32 %v2276, 1.442695
      %v2371 = vpow.pop %v2370
      %v2372 = vmul.f32 %v2277, 1.442695
      %v2373 = vpow.pop %v2372
      %v2374 = vmul.f32 %v2278, 1.442695
      %v2375 = vpow.pop %v2374
      %v2376 = vmul.f32 %v2279, 1.442695
      %v2377 = vpow.pop %v2376
      %v2378 = vmul.f32 %v2280, 1.442695
      %v2379 = vpow.pop %v2378
      %v2380 = vmul.f32 %v2281, 1.442695
      %v2381 = vpow.pop %v2380
      %v2382 = vmul.f32 %v2282, 1.442695
      %v2383 = vpow.pop %v2382
      %v2384 = vmul.f32 %v2283, 1.442695
      %v2385 = vpow.pop %v2384
      %v2386 = vmul.f32 %v2284, 1.442695
      %v2387 = vpow.pop %v2386
      %v2388 = vmul.f32 %v2285, 1.442695
      %v2389 = vpow.pop %v2388
      %v2390 = vmul.f32 %v2286, 1.442695
      %v2391 = vpow.pop %v2390
      %v2392 = vmul.f32 %v2287, 1.442695
      %v2393 = vpow.pop %v2392
      %v2394 = vmul.f32 %v2288, 1.442695
      %v2395 = vpow.pop %v2394
      %v2396 = vmul.f32 %v2289, 1.442695
      %v2397 = vpow.pop %v2396
      %v2398 = vmul.f32 %v2290, 1.442695
      %v2399 = vpow.pop %v2398
      %v2400 = vmul.f32 %v2291, 1.442695
      %v2401 = vpow.pop %v2400
      %v2402 = vmul.f32 %v2292, 1.442695
      %v2403 = vpow.pop %v2402
      %v2404 = vmul.f32 %v2293, 1.442695
      %v2405 = vpow.pop %v2404
      %v2406 = vmul.f32 %v2294, 1.442695
      %v2407 = vpow.pop %v2406
      %v2408 = vmul.f32 %v2295, 1.442695
      %v2409 = vpow.pop %v2408
      %v2410 = vmul.f32 %v2296, 1.442695
      %v2411 = vpow.pop %v2410
      %v2412 = vmul.f32 %v2297, 1.442695
      %v2413 = vpow.pop %v2412
      %v2414 = vmul.f32 %v2298, 1.442695
      %v2415 = vpow.pop %v2414
      %v2416 = vmul.f32 %v2299, 1.442695
      %v2417 = vpow.pop %v2416
      %v2418 = vmul.f32 %v2300, 1.442695
      %v2419 = vpow.pop %v2418
      %v2420 = vmul.f32 %v2301, 1.442695
      %v2421 = vpow.pop %v2420
      %v2422 = vmul.f32 %v2302, 1.442695
      %v2423 = vpow.pop %v2422
      %v2424 = vmul.f32 %v2303, 1.442695
      %v2425 = vpow.pop %v2424
      %v2426 = vmul.f32 %v2304, 1.442695
      %v2427 = vpow.pop %v2426
      %v2428 = vmul.f32 %v2305, 1.442695
      %v2429 = vpow.pop %v2428
      %v2430 = vmul.f32 %v2306, 1.442695
      %v2431 = vpow.pop %v2430
      %v2432 = vmul.f32 %v2307, 1.442695
      %v2433 = vpow.pop %v2432
      %v2434 = vmul.f32 %v2308, 1.442695
      %v2435 = vpow.pop %v2434
      %v2436 = vmul.f32 %v2309, 1.442695
      %v2437 = vpow.pop %v2436
      %v2438 = vsel %vm381, %v2311, 0.0
      %2439 = vadd.xlane.f32.xlu0 %v2438
      %v2440 = vpop.xlane.xlu0 %2439
      %v2441 = vsel %vm381, %v2313, 0.0
      %2442 = vadd.xlane.f32.xlu0 %v2441
      %v2443 = vpop.xlane.xlu0 %2442
      %v2444 = vsel %vm381, %v2315, 0.0
      %2445 = vadd.xlane.f32.xlu0 %v2444
      %v2446 = vpop.xlane.xlu0 %2445
      %v2447 = vsel %vm381, %v2317, 0.0
      %2448 = vadd.xlane.f32.xlu0 %v2447
      %v2449 = vpop.xlane.xlu0 %2448
      %v2450 = vsel %vm381, %v2319, 0.0
      %2451 = vadd.xlane.f32.xlu0 %v2450
      %v2452 = vpop.xlane.xlu0 %2451
      %v2453 = vsel %vm381, %v2321, 0.0
      %2454 = vadd.xlane.f32.xlu0 %v2453
      %v2455 = vpop.xlane.xlu0 %2454
      %v2456 = vsel %vm381, %v2323, 0.0
      %2457 = vadd.xlane.f32.xlu0 %v2456
      %v2458 = vpop.xlane.xlu0 %2457
      %v2459 = vsel %vm381, %v2325, 0.0
      %2460 = vadd.xlane.f32.xlu0 %v2459
      %v2461 = vpop.xlane.xlu0 %2460
      %v2462 = vsel %vm381, %v2327, 0.0
      %2463 = vadd.xlane.f32.xlu0 %v2462
      %v2464 = vpop.xlane.xlu0 %2463
      %v2465 = vsel %vm381, %v2329, 0.0
      %2466 = vadd.xlane.f32.xlu0 %v2465
      %v2467 = vpop.xlane.xlu0 %2466
      %v2468 = vsel %vm381, %v2331, 0.0
      %2469 = vadd.xlane.f32.xlu0 %v2468
      %v2470 = vpop.xlane.xlu0 %2469
      %v2471 = vsel %vm381, %v2333, 0.0
      %2472 = vadd.xlane.f32.xlu0 %v2471
      %v2473 = vpop.xlane.xlu0 %2472
      %v2474 = vsel %vm381, %v2335, 0.0
      %2475 = vadd.xlane.f32.xlu0 %v2474
      %v2476 = vpop.xlane.xlu0 %2475
      %v2477 = vsel %vm381, %v2337, 0.0
      %2478 = vadd.xlane.f32.xlu0 %v2477
      %v2479 = vpop.xlane.xlu0 %2478
      %v2480 = vsel %vm381, %v2339, 0.0
      %2481 = vadd.xlane.f32.xlu0 %v2480
      %v2482 = vpop.xlane.xlu0 %2481
      %v2483 = vsel %vm381, %v2341, 0.0
      %2484 = vadd.xlane.f32.xlu0 %v2483
      %v2485 = vpop.xlane.xlu0 %2484
      %v2486 = vsel %vm381, %v2343, 0.0
      %2487 = vadd.xlane.f32.xlu0 %v2486
      %v2488 = vpop.xlane.xlu0 %2487
      %v2489 = vsel %vm381, %v2345, 0.0
      %2490 = vadd.xlane.f32.xlu0 %v2489
      %v2491 = vpop.xlane.xlu0 %2490
      %v2492 = vsel %vm381, %v2347, 0.0
      %2493 = vadd.xlane.f32.xlu0 %v2492
      %v2494 = vpop.xlane.xlu0 %2493
      %v2495 = vsel %vm381, %v2349, 0.0
      %2496 = vadd.xlane.f32.xlu0 %v2495
      %v2497 = vpop.xlane.xlu0 %2496
      %v2498 = vsel %vm381, %v2351, 0.0
      %2499 = vadd.xlane.f32.xlu0 %v2498
      %v2500 = vpop.xlane.xlu0 %2499
      %v2501 = vsel %vm381, %v2353, 0.0
      %2502 = vadd.xlane.f32.xlu0 %v2501
      %v2503 = vpop.xlane.xlu0 %2502
      %v2504 = vsel %vm381, %v2355, 0.0
      %2505 = vadd.xlane.f32.xlu0 %v2504
      %v2506 = vpop.xlane.xlu0 %2505
      %v2507 = vsel %vm381, %v2357, 0.0
      %2508 = vadd.xlane.f32.xlu0 %v2507
      %v2509 = vpop.xlane.xlu0 %2508
      %v2510 = vsel %vm381, %v2359, 0.0
      %2511 = vadd.xlane.f32.xlu0 %v2510
      %v2512 = vpop.xlane.xlu0 %2511
      %v2513 = vsel %vm381, %v2361, 0.0
      %2514 = vadd.xlane.f32.xlu0 %v2513
      %v2515 = vpop.xlane.xlu0 %2514
      %v2516 = vsel %vm381, %v2363, 0.0
      %2517 = vadd.xlane.f32.xlu0 %v2516
      %v2518 = vpop.xlane.xlu0 %2517
      %v2519 = vsel %vm381, %v2365, 0.0
      %2520 = vadd.xlane.f32.xlu0 %v2519
      %v2521 = vpop.xlane.xlu0 %2520
      %v2522 = vsel %vm381, %v2367, 0.0
      %2523 = vadd.xlane.f32.xlu0 %v2522
      %v2524 = vpop.xlane.xlu0 %2523
      %v2525 = vsel %vm381, %v2369, 0.0
      %2526 = vadd.xlane.f32.xlu0 %v2525
      %v2527 = vpop.xlane.xlu0 %2526
      %v2528 = vsel %vm381, %v2371, 0.0
      %2529 = vadd.xlane.f32.xlu0 %v2528
      %v2530 = vpop.xlane.xlu0 %2529
      %v2531 = vsel %vm381, %v2373, 0.0
      %2532 = vadd.xlane.f32.xlu0 %v2531
      %v2533 = vpop.xlane.xlu0 %2532
      %v2534 = vsel %vm381, %v2375, 0.0
      %2535 = vadd.xlane.f32.xlu0 %v2534
      %v2536 = vpop.xlane.xlu0 %2535
      %v2537 = vsel %vm381, %v2377, 0.0
      %2538 = vadd.xlane.f32.xlu0 %v2537
      %v2539 = vpop.xlane.xlu0 %2538
      %v2540 = vsel %vm381, %v2379, 0.0
      %2541 = vadd.xlane.f32.xlu0 %v2540
      %v2542 = vpop.xlane.xlu0 %2541
      %v2543 = vsel %vm381, %v2381, 0.0
      %2544 = vadd.xlane.f32.xlu0 %v2543
      %v2545 = vpop.xlane.xlu0 %2544
      %v2546 = vsel %vm381, %v2383, 0.0
      %2547 = vadd.xlane.f32.xlu0 %v2546
      %v2548 = vpop.xlane.xlu0 %2547
      %v2549 = vsel %vm381, %v2385, 0.0
      %2550 = vadd.xlane.f32.xlu0 %v2549
      %v2551 = vpop.xlane.xlu0 %2550
      %v2552 = vsel %vm381, %v2387, 0.0
      %2553 = vadd.xlane.f32.xlu0 %v2552
      %v2554 = vpop.xlane.xlu0 %2553
      %v2555 = vsel %vm381, %v2389, 0.0
      %2556 = vadd.xlane.f32.xlu0 %v2555
      %v2557 = vpop.xlane.xlu0 %2556
      %v2558 = vsel %vm381, %v2391, 0.0
      %2559 = vadd.xlane.f32.xlu0 %v2558
      %v2560 = vpop.xlane.xlu0 %2559
      %v2561 = vsel %vm381, %v2393, 0.0
      %2562 = vadd.xlane.f32.xlu0 %v2561
      %v2563 = vpop.xlane.xlu0 %2562
      %v2564 = vsel %vm381, %v2395, 0.0
      %2565 = vadd.xlane.f32.xlu0 %v2564
      %v2566 = vpop.xlane.xlu0 %2565
      %v2567 = vsel %vm381, %v2397, 0.0
      %2568 = vadd.xlane.f32.xlu0 %v2567
      %v2569 = vpop.xlane.xlu0 %2568
      %v2570 = vsel %vm381, %v2399, 0.0
      %2571 = vadd.xlane.f32.xlu0 %v2570
      %v2572 = vpop.xlane.xlu0 %2571
      %v2573 = vsel %vm381, %v2401, 0.0
      %2574 = vadd.xlane.f32.xlu0 %v2573
      %v2575 = vpop.xlane.xlu0 %2574
      %v2576 = vsel %vm381, %v2403, 0.0
      %2577 = vadd.xlane.f32.xlu0 %v2576
      %v2578 = vpop.xlane.xlu0 %2577
      %v2579 = vsel %vm381, %v2405, 0.0
      %2580 = vadd.xlane.f32.xlu0 %v2579
      %v2581 = vpop.xlane.xlu0 %2580
      %v2582 = vsel %vm381, %v2407, 0.0
      %2583 = vadd.xlane.f32.xlu0 %v2582
      %v2584 = vpop.xlane.xlu0 %2583
      %v2585 = vsel %vm381, %v2409, 0.0
      %2586 = vadd.xlane.f32.xlu0 %v2585
      %v2587 = vpop.xlane.xlu0 %2586
      %v2588 = vsel %vm381, %v2411, 0.0
      %2589 = vadd.xlane.f32.xlu0 %v2588
      %v2590 = vpop.xlane.xlu0 %2589
      %v2591 = vsel %vm381, %v2413, 0.0
      %2592 = vadd.xlane.f32.xlu0 %v2591
      %v2593 = vpop.xlane.xlu0 %2592
      %v2594 = vsel %vm381, %v2415, 0.0
      %2595 = vadd.xlane.f32.xlu0 %v2594
      %v2596 = vpop.xlane.xlu0 %2595
      %v2597 = vsel %vm381, %v2417, 0.0
      %2598 = vadd.xlane.f32.xlu0 %v2597
      %v2599 = vpop.xlane.xlu0 %2598
      %v2600 = vsel %vm381, %v2419, 0.0
      %2601 = vadd.xlane.f32.xlu0 %v2600
      %v2602 = vpop.xlane.xlu0 %2601
      %v2603 = vsel %vm381, %v2421, 0.0
      %2604 = vadd.xlane.f32.xlu0 %v2603
      %v2605 = vpop.xlane.xlu0 %2604
      %v2606 = vsel %vm381, %v2423, 0.0
      %2607 = vadd.xlane.f32.xlu0 %v2606
      %v2608 = vpop.xlane.xlu0 %2607
      %v2609 = vsel %vm381, %v2425, 0.0
      %2610 = vadd.xlane.f32.xlu0 %v2609
      %v2611 = vpop.xlane.xlu0 %2610
      %v2612 = vsel %vm381, %v2427, 0.0
      %2613 = vadd.xlane.f32.xlu0 %v2612
      %v2614 = vpop.xlane.xlu0 %2613
      %v2615 = vsel %vm381, %v2429, 0.0
      %2616 = vadd.xlane.f32.xlu0 %v2615
      %v2617 = vpop.xlane.xlu0 %2616
      %v2618 = vsel %vm381, %v2431, 0.0
      %2619 = vadd.xlane.f32.xlu0 %v2618
      %v2620 = vpop.xlane.xlu0 %2619
      %v2621 = vsel %vm381, %v2433, 0.0
      %2622 = vadd.xlane.f32.xlu0 %v2621
      %v2623 = vpop.xlane.xlu0 %2622
      %v2624 = vsel %vm381, %v2435, 0.0
      %2625 = vadd.xlane.f32.xlu0 %v2624
      %v2626 = vpop.xlane.xlu0 %2625
      %v2627 = vsel %vm381, %v2437, 0.0
      %2628 = vadd.xlane.f32.xlu0 %v2627
      %v2629 = vpop.xlane.xlu0 %2628
      %v2630 = vrcp.pop %v2440
      %v2631 = vrcp.pop %v2443
      %v2632 = vrcp.pop %v2446
      %v2633 = vrcp.pop %v2449
      %v2634 = vrcp.pop %v2452
      %v2635 = vrcp.pop %v2455
      %v2636 = vrcp.pop %v2458
      %v2637 = vrcp.pop %v2461
      %v2638 = vrcp.pop %v2464
      %v2639 = vrcp.pop %v2467
      %v2640 = vrcp.pop %v2470
      %v2641 = vrcp.pop %v2473
      %v2642 = vrcp.pop %v2476
      %v2643 = vrcp.pop %v2479
      %v2644 = vrcp.pop %v2482
      %v2645 = vrcp.pop %v2485
      %v2646 = vrcp.pop %v2488
      %v2647 = vrcp.pop %v2491
      %v2648 = vrcp.pop %v2494
      %v2649 = vrcp.pop %v2497
      %v2650 = vrcp.pop %v2500
      %v2651 = vrcp.pop %v2503
      %v2652 = vrcp.pop %v2506
      %v2653 = vrcp.pop %v2509
      %v2654 = vrcp.pop %v2512
      %v2655 = vrcp.pop %v2515
      %v2656 = vrcp.pop %v2518
      %v2657 = vrcp.pop %v2521
      %v2658 = vrcp.pop %v2524
      %v2659 = vrcp.pop %v2527
      %v2660 = vrcp.pop %v2530
      %v2661 = vrcp.pop %v2533
      %v2662 = vrcp.pop %v2536
      %v2663 = vrcp.pop %v2539
      %v2664 = vrcp.pop %v2542
      %v2665 = vrcp.pop %v2545
      %v2666 = vrcp.pop %v2548
      %v2667 = vrcp.pop %v2551
      %v2668 = vrcp.pop %v2554
      %v2669 = vrcp.pop %v2557
      %v2670 = vrcp.pop %v2560
      %v2671 = vrcp.pop %v2563
      %v2672 = vrcp.pop %v2566
      %v2673 = vrcp.pop %v2569
      %v2674 = vrcp.pop %v2572
      %v2675 = vrcp.pop %v2575
      %v2676 = vrcp.pop %v2578
      %v2677 = vrcp.pop %v2581
      %v2678 = vrcp.pop %v2584
      %v2679 = vrcp.pop %v2587
      %v2680 = vrcp.pop %v2590
      %v2681 = vrcp.pop %v2593
      %v2682 = vrcp.pop %v2596
      %v2683 = vrcp.pop %v2599
      %v2684 = vrcp.pop %v2602
      %v2685 = vrcp.pop %v2605
      %v2686 = vrcp.pop %v2608
      %v2687 = vrcp.pop %v2611
      %v2688 = vrcp.pop %v2614
      %v2689 = vrcp.pop %v2617
      %v2690 = vrcp.pop %v2620
      %v2691 = vrcp.pop %v2623
      %v2692 = vrcp.pop %v2626
      %v2693 = vrcp.pop %v2629
      %v2694 = vmul.f32 %v2311, %v2630
      %v2695 = vmul.f32 %v2313, %v2631
      %v2696 = vmul.f32 %v2315, %v2632
      %v2697 = vmul.f32 %v2317, %v2633
      %v2698 = vmul.f32 %v2319, %v2634
      %v2699 = vmul.f32 %v2321, %v2635
      %v2700 = vmul.f32 %v2323, %v2636
      %v2701 = vmul.f32 %v2325, %v2637
      %v2702 = vmul.f32 %v2327, %v2638
      %v2703 = vmul.f32 %v2329, %v2639
      %v2704 = vmul.f32 %v2331, %v2640
      %v2705 = vmul.f32 %v2333, %v2641
      %v2706 = vmul.f32 %v2335, %v2642
      %v2707 = vmul.f32 %v2337, %v2643
      %v2708 = vmul.f32 %v2339, %v2644
      %v2709 = vmul.f32 %v2341, %v2645
      %v2710 = vmul.f32 %v2343, %v2646
      %v2711 = vmul.f32 %v2345, %v2647
      %v2712 = vmul.f32 %v2347, %v2648
      %v2713 = vmul.f32 %v2349, %v2649
      %v2714 = vmul.f32 %v2351, %v2650
      %v2715 = vmul.f32 %v2353, %v2651
      %v2716 = vmul.f32 %v2355, %v2652
      %v2717 = vmul.f32 %v2357, %v2653
      %v2718 = vmul.f32 %v2359, %v2654
      %v2719 = vmul.f32 %v2361, %v2655
      %v2720 = vmul.f32 %v2363, %v2656
      %v2721 = vmul.f32 %v2365, %v2657
      %v2722 = vmul.f32 %v2367, %v2658
      %v2723 = vmul.f32 %v2369, %v2659
      %v2724 = vmul.f32 %v2371, %v2660
      %v2725 = vmul.f32 %v2373, %v2661
      %v2726 = vmul.f32 %v2375, %v2662
      %v2727 = vmul.f32 %v2377, %v2663
      %v2728 = vmul.f32 %v2379, %v2664
      %v2729 = vmul.f32 %v2381, %v2665
      %v2730 = vmul.f32 %v2383, %v2666
      %v2731 = vmul.f32 %v2385, %v2667
      %v2732 = vmul.f32 %v2387, %v2668
      %v2733 = vmul.f32 %v2389, %v2669
      %v2734 = vmul.f32 %v2391, %v2670
      %v2735 = vmul.f32 %v2393, %v2671
      %v2736 = vmul.f32 %v2395, %v2672
      %v2737 = vmul.f32 %v2397, %v2673
      %v2738 = vmul.f32 %v2399, %v2674
      %v2739 = vmul.f32 %v2401, %v2675
      %v2740 = vmul.f32 %v2403, %v2676
      %v2741 = vmul.f32 %v2405, %v2677
      %v2742 = vmul.f32 %v2407, %v2678
      %v2743 = vmul.f32 %v2409, %v2679
      %v2744 = vmul.f32 %v2411, %v2680
      %v2745 = vmul.f32 %v2413, %v2681
      %v2746 = vmul.f32 %v2415, %v2682
      %v2747 = vmul.f32 %v2417, %v2683
      %v2748 = vmul.f32 %v2419, %v2684
      %v2749 = vmul.f32 %v2421, %v2685
      %v2750 = vmul.f32 %v2423, %v2686
      %v2751 = vmul.f32 %v2425, %v2687
      %v2752 = vmul.f32 %v2427, %v2688
      %v2753 = vmul.f32 %v2429, %v2689
      %v2754 = vmul.f32 %v2431, %v2690
      %v2755 = vmul.f32 %v2433, %v2691
      %v2756 = vmul.f32 %v2435, %v2692
      %v2757 = vmul.f32 %v2437, %v2693
      %v2758 = vpack.c.bf16 %v2695, %v2694
      %v2759 = vpack.c.bf16 %v2697, %v2696
      %v2760 = vpack.c.bf16 %v2699, %v2698
      %v2761 = vpack.c.bf16 %v2701, %v2700
      %v2762 = vpack.c.bf16 %v2703, %v2702
      %v2763 = vpack.c.bf16 %v2705, %v2704
      %v2764 = vpack.c.bf16 %v2707, %v2706
      %v2765 = vpack.c.bf16 %v2709, %v2708
      %v2766 = vpack.c.bf16 %v2711, %v2710
      %v2767 = vpack.c.bf16 %v2713, %v2712
      %v2768 = vpack.c.bf16 %v2715, %v2714
      %v2769 = vpack.c.bf16 %v2717, %v2716
      %v2770 = vpack.c.bf16 %v2719, %v2718
      %v2771 = vpack.c.bf16 %v2721, %v2720
      %v2772 = vpack.c.bf16 %v2723, %v2722
      %v2773 = vpack.c.bf16 %v2725, %v2724
      %v2774 = vpack.c.bf16 %v2727, %v2726
      %v2775 = vpack.c.bf16 %v2729, %v2728
      %v2776 = vpack.c.bf16 %v2731, %v2730
      %v2777 = vpack.c.bf16 %v2733, %v2732
      %v2778 = vpack.c.bf16 %v2735, %v2734
      %v2779 = vpack.c.bf16 %v2737, %v2736
      %v2780 = vpack.c.bf16 %v2739, %v2738
      %v2781 = vpack.c.bf16 %v2741, %v2740
      %v2782 = vpack.c.bf16 %v2743, %v2742
      %v2783 = vpack.c.bf16 %v2745, %v2744
      %v2784 = vpack.c.bf16 %v2747, %v2746
      %v2785 = vpack.c.bf16 %v2749, %v2748
      %v2786 = vpack.c.bf16 %v2751, %v2750
      %v2787 = vpack.c.bf16 %v2753, %v2752
      %v2788 = vpack.c.bf16 %v2755, %v2754
      %v2789 = vpack.c.bf16 %v2757, %v2756
      %2790 = vrot.lane.b32.xlu0 %v789, 64
      %v2791 = vpop.permute.xlu0 %2790
      %2792 = vrot.lane.b32.xlu0 %v790, 64
      %v2793 = vpop.permute.xlu0 %2792
      %v2797 = vsel %vm381, %v2758, 0
      %v2800 = vsel %vm381, %v2759, 0
      %2802 = vmatprep.subr.bf16.mxu0 0
      %2803 = vmatpush1.bf16.msra.mxu0 %v2791
      %2804 = vmatprep.subr.bf16.mxu0 0
      %2805 = vmatpush1.bf16.msra.mxu0 %v2793
      %2806 = vmatprep.subr.bf16.mxu0 0
      %2807 = vmatpush1.bf16.msra.mxu0 0
      %2808 = vmatprep.subr.bf16.mxu0 0
      %2809 = vmatpush1.bf16.msra.mxu0 0
      %2810 = vmatprep.subr.bf16.mxu0 0
      %2811 = vmatpush1.bf16.msra.mxu0 0
      %2812 = vmatprep.subr.bf16.mxu0 0
      %2813 = vmatpush1.bf16.msra.mxu0 0
      %2814 = vmatprep.subr.bf16.mxu0 0
      %2815 = vmatpush1.bf16.msra.mxu0 0
      %2816 = vmatprep.subr.bf16.mxu0 0
      %2817 = vmatpush1.bf16.msra.mxu0 0
      %2818 = vmatprep.subr.bf16.mxu0 0
      %2819 = vmatpush1.bf16.msra.mxu0 0
      %2820 = vmatprep.subr.bf16.mxu0 0
      %2821 = vmatpush1.bf16.msra.mxu0 0
      %2822 = vmatprep.subr.bf16.mxu0 0
      %2823 = vmatpush1.bf16.msra.mxu0 0
      %2824 = vmatprep.subr.bf16.mxu0 0
      %2825 = vmatpush1.bf16.msra.mxu0 0
      %2826 = vmatprep.subr.bf16.mxu0 0
      %2827 = vmatpush1.bf16.msra.mxu0 0
      %2828 = vmatprep.subr.bf16.mxu0 0
      %2829 = vmatpush1.bf16.msra.mxu0 0
      %2830 = vmatprep.subr.bf16.mxu0 0
      %2831 = vmatpush1.bf16.msra.mxu0 0
      %2832 = vmatprep.subr.bf16.mxu0 0
      %2833 = vmatpush1.bf16.msra.mxu0 0
      %2834 = vmatprep.mubr.bf16.mxu0 0
      %2835 = vmatmul.mubr.bf16.gmra.mrb[0].mxu0 %v2797
      %v2836 = vpop.f32.mrb[0].mxu0
      %v2837 = vadd.f32 0.0, %v2836
      %v2838 = vpop.f32.mrb[0].mxu0
      %v2839 = vpop.f32.mrb[0].mxu0
      %v2840 = vadd.f32 0.0, %v2839
      %v2841 = vpop.f32.mrb[0].mxu0
      %2842 = vmatprep.mubr.bf16.mxu0 0
      %2843 = vmatmul.mubr.bf16.gmra.mrb[0].mxu0 %v2800
      %v2844 = vpop.f32.mrb[0].mxu0
      %v2845 = vadd.f32 0.0, %v2844
      %v2846 = vpop.f32.mrb[0].mxu0
      %v2847 = vpop.f32.mrb[0].mxu0
      %v2848 = vadd.f32 0.0, %v2847
      %v2849 = vpop.f32.mrb[0].mxu0
      %2850 = vdwg.mxu0
      %2851 = vrot.lane.b32.xlu0 %v791, 64
      %v2852 = vpop.permute.xlu0 %2851
      %2853 = vrot.lane.b32.xlu0 %v792, 64
      %v2854 = vpop.permute.xlu0 %2853
      %v2858 = vsel %vm381, %v2760, 0
      %v2861 = vsel %vm381, %v2761, 0
      %2863 = vmatprep.subr.bf16.mxu0 0
      %2864 = vmatpush1.bf16.msra.mxu0 %v2852
      %2865 = vmatprep.subr.bf16.mxu0 0
      %2866 = vmatpush1.bf16.msra.mxu0 %v2854
      %2867 = vmatprep.subr.bf16.mxu0 0
      %2868 = vmatpush1.bf16.msra.mxu0 0
      %2869 = vmatprep.subr.bf16.mxu0 0
      %2870 = vmatpush1.bf16.msra.mxu0 0
      %2871 = vmatprep.subr.bf16.mxu0 0
      %2872 = vmatpush1.bf16.msra.mxu0 0
      %2873 = vmatprep.subr.bf16.mxu0 0
      %2874 = vmatpush1.bf16.msra.mxu0 0
      %2875 = vmatprep.subr.bf16.mxu0 0
      %2876 = vmatpush1.bf16.msra.mxu0 0
      %2877 = vmatprep.subr.bf16.mxu0 0
      %2878 = vmatpush1.bf16.msra.mxu0 0
      %2879 = vmatprep.subr.bf16.mxu0 0
      %2880 = vmatpush1.bf16.msra.mxu0 0
      %2881 = vmatprep.subr.bf16.mxu0 0
      %2882 = vmatpush1.bf16.msra.mxu0 0
      %2883 = vmatprep.subr.bf16.mxu0 0
      %2884 = vmatpush1.bf16.msra.mxu0 0
      %2885 = vmatprep.subr.bf16.mxu0 0
      %2886 = vmatpush1.bf16.msra.mxu0 0
      %2887 = vmatprep.subr.bf16.mxu0 0
      %2888 = vmatpush1.bf16.msra.mxu0 0
      %2889 = vmatprep.subr.bf16.mxu0 0
      %2890 = vmatpush1.bf16.msra.mxu0 0
      %2891 = vmatprep.subr.bf16.mxu0 0
      %2892 = vmatpush1.bf16.msra.mxu0 0
      %2893 = vmatprep.subr.bf16.mxu0 0
      %2894 = vmatpush1.bf16.msra.mxu0 0
      %2895 = vmatprep.mubr.bf16.mxu0 0
      %2896 = vmatmul.mubr.bf16.gmra.mrb[0].mxu0 %v2858
      %v2897 = vpop.f32.mrb[0].mxu0
      %v2898 = vadd.f32 0.0, %v2897
      %v2899 = vpop.f32.mrb[0].mxu0
      %v2900 = vpop.f32.mrb[0].mxu0
      %v2901 = vadd.f32 0.0, %v2900
      %v2902 = vpop.f32.mrb[0].mxu0
      %2903 = vmatprep.mubr.bf16.mxu0 0
      %2904 = vmatmul.mubr.bf16.gmra.mrb[0].mxu0 %v2861
      %v2905 = vpop.f32.mrb[0].mxu0
      %v2906 = vadd.f32 0.0, %v2905
      %v2907 = vpop.f32.mrb[0].mxu0
      %v2908 = vpop.f32.mrb[0].mxu0
      %v2909 = vadd.f32 0.0, %v2908
      %v2910 = vpop.f32.mrb[0].mxu0
      %2911 = vdwg.mxu0
      %2912 = vrot.lane.b32.xlu0 %v793, 64
      %v2913 = vpop.permute.xlu0 %2912
      %2914 = vrot.lane.b32.xlu0 %v794, 64
      %v2915 = vpop.permute.xlu0 %2914
      %v2919 = vsel %vm381, %v2762, 0
      %v2922 = vsel %vm381, %v2763, 0
      %2924 = vmatprep.subr.bf16.mxu0 0
      %2925 = vmatpush1.bf16.msra.mxu0 %v2913
      %2926 = vmatprep.subr.bf16.mxu0 0
      %2927 = vmatpush1.bf16.msra.mxu0 %v2915
      %2928 = vmatprep.subr.bf16.mxu0 0
      %2929 = vmatpush1.bf16.msra.mxu0 0
      %2930 = vmatprep.subr.bf16.mxu0 0
      %2931 = vmatpush1.bf16.msra.mxu0 0
      %2932 = vmatprep.subr.bf16.mxu0 0
      %2933 = vmatpush1.bf16.msra.mxu0 0
      %2934 = vmatprep.subr.bf16.mxu0 0
      %2935 = vmatpush1.bf16.msra.mxu0 0
      %2936 = vmatprep.subr.bf16.mxu0 0
      %2937 = vmatpush1.bf16.msra.mxu0 0
      %2938 = vmatprep.subr.bf16.mxu0 0
      %2939 = vmatpush1.bf16.msra.mxu0 0
      %2940 = vmatprep.subr.bf16.mxu0 0
      %2941 = vmatpush1.bf16.msra.mxu0 0
      %2942 = vmatprep.subr.bf16.mxu0 0
      %2943 = vmatpush1.bf16.msra.mxu0 0
      %2944 = vmatprep.subr.bf16.mxu0 0
      %2945 = vmatpush1.bf16.msra.mxu0 0
      %2946 = vmatprep.subr.bf16.mxu0 0
      %2947 = vmatpush1.bf16.msra.mxu0 0
      %2948 = vmatprep.subr.bf16.mxu0 0
      %2949 = vmatpush1.bf16.msra.mxu0 0
      %2950 = vmatprep.subr.bf16.mxu0 0
      %2951 = vmatpush1.bf16.msra.mxu0 0
      %2952 = vmatprep.subr.bf16.mxu0 0
      %2953 = vmatpush1.bf16.msra.mxu0 0
      %2954 = vmatprep.subr.bf16.mxu0 0
      %2955 = vmatpush1.bf16.msra.mxu0 0
      %2956 = vmatprep.mubr.bf16.mxu0 0
      %2957 = vmatmul.mubr.bf16.gmra.mrb[0].mxu0 %v2919
      %v2958 = vpop.f32.mrb[0].mxu0
      %v2959 = vadd.f32 0.0, %v2958
      %v2960 = vpop.f32.mrb[0].mxu0
      %v2961 = vpop.f32.mrb[0].mxu0
      %v2962 = vadd.f32 0.0, %v2961
      %v2963 = vpop.f32.mrb[0].mxu0
      %2964 = vmatprep.mubr.bf16.mxu0 0
      %2965 = vmatmul.mubr.bf16.gmra.mrb[0].mxu0 %v2922
      %v2966 = vpop.f32.mrb[0].mxu0
      %v2967 = vadd.f32 0.0, %v2966
      %v2968 = vpop.f32.mrb[0].mxu0
      %v2969 = vpop.f32.mrb[0].mxu0
      %v2970 = vadd.f32 0.0, %v2969
      %v2971 = vpop.f32.mrb[0].mxu0
      %2972 = vdwg.mxu0
      %2973 = vrot.lane.b32.xlu0 %v795, 64
      %v2974 = vpop.permute.xlu0 %2973
      %2975 = vrot.lane.b32.xlu0 %v796, 64
      %v2976 = vpop.permute.xlu0 %2975
      %v2980 = vsel %vm381, %v2764, 0
      %v2983 = vsel %vm381, %v2765, 0
      %2985 = vmatprep.subr.bf16.mxu0 0
      %2986 = vmatpush1.bf16.msra.mxu0 %v2974
      %2987 = vmatprep.subr.bf16.mxu0 0
      %2988 = vmatpush1.bf16.msra.mxu0 %v2976
      %2989 = vmatprep.subr.bf16.mxu0 0
      %2990 = vmatpush1.bf16.msra.mxu0 0
      %2991 = vmatprep.subr.bf16.mxu0 0
      %2992 = vmatpush1.bf16.msra.mxu0 0
      %2993 = vmatprep.subr.bf16.mxu0 0
      %2994 = vmatpush1.bf16.msra.mxu0 0
      %2995 = vmatprep.subr.bf16.mxu0 0
      %2996 = vmatpush1.bf16.msra.mxu0 0
      %2997 = vmatprep.subr.bf16.mxu0 0
      %2998 = vmatpush1.bf16.msra.mxu0 0
      %2999 = vmatprep.subr.bf16.mxu0 0
      %3000 = vmatpush1.bf16.msra.mxu0 0
      %3001 = vmatprep.subr.bf16.mxu0 0
      %3002 = vmatpush1.bf16.msra.mxu0 0
      %3003 = vmatprep.subr.bf16.mxu0 0
      %3004 = vmatpush1.bf16.msra.mxu0 0
      %3005 = vmatprep.subr.bf16.mxu0 0
      %3006 = vmatpush1.bf16.msra.mxu0 0
      %3007 = vmatprep.subr.bf16.mxu0 0
      %3008 = vmatpush1.bf16.msra.mxu0 0
      %3009 = vmatprep.subr.bf16.mxu0 0
      %3010 = vmatpush1.bf16.msra.mxu0 0
      %3011 = vmatprep.subr.bf16.mxu0 0
      %3012 = vmatpush1.bf16.msra.mxu0 0
      %3013 = vmatprep.subr.bf16.mxu0 0
      %3014 = vmatpush1.bf16.msra.mxu0 0
      %3015 = vmatprep.subr.bf16.mxu0 0
      %3016 = vmatpush1.bf16.msra.mxu0 0
      %3017 = vmatprep.mubr.bf16.mxu0 0
      %3018 = vmatmul.mubr.bf16.gmra.mrb[0].mxu0 %v2980
      %v3019 = vpop.f32.mrb[0].mxu0
      %v3020 = vadd.f32 0.0, %v3019
      %v3021 = vpop.f32.mrb[0].mxu0
      %v3022 = vpop.f32.mrb[0].mxu0
      %v3023 = vadd.f32 0.0, %v3022
      %v3024 = vpop.f32.mrb[0].mxu0
      %3025 = vmatprep.mubr.bf16.mxu0 0
      %3026 = vmatmul.mubr.bf16.gmra.mrb[0].mxu0 %v2983
      %v3027 = vpop.f32.mrb[0].mxu0
      %v3028 = vadd.f32 0.0, %v3027
      %v3029 = vpop.f32.mrb[0].mxu0
      %v3030 = vpop.f32.mrb[0].mxu0
      %v3031 = vadd.f32 0.0, %v3030
      %v3032 = vpop.f32.mrb[0].mxu0
      %3033 = vdwg.mxu0
      %3034 = vrot.lane.b32.xlu0 %v806, 64
      %v3035 = vpop.permute.xlu0 %3034
      %3036 = vrot.lane.b32.xlu0 %v808, 64
      %v3037 = vpop.permute.xlu0 %3036
      %v3041 = vsel %vm381, %v2766, 0
      %v3044 = vsel %vm381, %v2767, 0
      %3046 = vmatprep.subr.bf16.mxu0 0
      %3047 = vmatpush1.bf16.msra.mxu0 %v3035
      %3048 = vmatprep.subr.bf16.mxu0 0
      %3049 = vmatpush1.bf16.msra.mxu0 %v3037
      %3050 = vmatprep.subr.bf16.mxu0 0
      %3051 = vmatpush1.bf16.msra.mxu0 0
      %3052 = vmatprep.subr.bf16.mxu0 0
      %3053 = vmatpush1.bf16.msra.mxu0 0
      %3054 = vmatprep.subr.bf16.mxu0 0
      %3055 = vmatpush1.bf16.msra.mxu0 0
      %3056 = vmatprep.subr.bf16.mxu0 0
      %3057 = vmatpush1.bf16.msra.mxu0 0
      %3058 = vmatprep.subr.bf16.mxu0 0
      %3059 = vmatpush1.bf16.msra.mxu0 0
      %3060 = vmatprep.subr.bf16.mxu0 0
      %3061 = vmatpush1.bf16.msra.mxu0 0
      %3062 = vmatprep.subr.bf16.mxu0 0
      %3063 = vmatpush1.bf16.msra.mxu0 0
      %3064 = vmatprep.subr.bf16.mxu0 0
      %3065 = vmatpush1.bf16.msra.mxu0 0
      %3066 = vmatprep.subr.bf16.mxu0 0
      %3067 = vmatpush1.bf16.msra.mxu0 0
      %3068 = vmatprep.subr.bf16.mxu0 0
      %3069 = vmatpush1.bf16.msra.mxu0 0
      %3070 = vmatprep.subr.bf16.mxu0 0
      %3071 = vmatpush1.bf16.msra.mxu0 0
      %3072 = vmatprep.subr.bf16.mxu0 0
      %3073 = vmatpush1.bf16.msra.mxu0 0
      %3074 = vmatprep.subr.bf16.mxu0 0
      %3075 = vmatpush1.bf16.msra.mxu0 0
      %3076 = vmatprep.subr.bf16.mxu0 0
      %3077 = vmatpush1.bf16.msra.mxu0 0
      %3078 = vmatprep.mubr.bf16.mxu0 0
      %3079 = vmatmul.mubr.bf16.gmra.mrb[0].mxu0 %v3041
      %v3080 = vpop.f32.mrb[0].mxu0
      %v3081 = vadd.f32 0.0, %v3080
      %v3082 = vpop.f32.mrb[0].mxu0
      %v3083 = vpop.f32.mrb[0].mxu0
      %v3084 = vadd.f32 0.0, %v3083
      %v3085 = vpop.f32.mrb[0].mxu0
      %3086 = vmatprep.mubr.bf16.mxu0 0
      %3087 = vmatmul.mubr.bf16.gmra.mrb[0].mxu0 %v3044
      %v3088 = vpop.f32.mrb[0].mxu0
      %v3089 = vadd.f32 0.0, %v3088
      %v3090 = vpop.f32.mrb[0].mxu0
      %v3091 = vpop.f32.mrb[0].mxu0
      %v3092 = vadd.f32 0.0, %v3091
      %v3093 = vpop.f32.mrb[0].mxu0
      %3094 = vdwg.mxu0
      %3095 = vrot.lane.b32.xlu0 %v810, 64
      %v3096 = vpop.permute.xlu0 %3095
      %3097 = vrot.lane.b32.xlu0 %v812, 64
      %v3098 = vpop.permute.xlu0 %3097
      %v3102 = vsel %vm381, %v2768, 0
      %v3105 = vsel %vm381, %v2769, 0
      %3107 = vmatprep.subr.bf16.mxu0 0
      %3108 = vmatpush1.bf16.msra.mxu0 %v3096
      %3109 = vmatprep.subr.bf16.mxu0 0
      %3110 = vmatpush1.bf16.msra.mxu0 %v3098
      %3111 = vmatprep.subr.bf16.mxu0 0
      %3112 = vmatpush1.bf16.msra.mxu0 0
      %3113 = vmatprep.subr.bf16.mxu0 0
      %3114 = vmatpush1.bf16.msra.mxu0 0
      %3115 = vmatprep.subr.bf16.mxu0 0
      %3116 = vmatpush1.bf16.msra.mxu0 0
      %3117 = vmatprep.subr.bf16.mxu0 0
      %3118 = vmatpush1.bf16.msra.mxu0 0
      %3119 = vmatprep.subr.bf16.mxu0 0
      %3120 = vmatpush1.bf16.msra.mxu0 0
      %3121 = vmatprep.subr.bf16.mxu0 0
      %3122 = vmatpush1.bf16.msra.mxu0 0
      %3123 = vmatprep.subr.bf16.mxu0 0
      %3124 = vmatpush1.bf16.msra.mxu0 0
      %3125 = vmatprep.subr.bf16.mxu0 0
      %3126 = vmatpush1.bf16.msra.mxu0 0
      %3127 = vmatprep.subr.bf16.mxu0 0
      %3128 = vmatpush1.bf16.msra.mxu0 0
      %3129 = vmatprep.subr.bf16.mxu0 0
      %3130 = vmatpush1.bf16.msra.mxu0 0
      %3131 = vmatprep.subr.bf16.mxu0 0
      %3132 = vmatpush1.bf16.msra.mxu0 0
      %3133 = vmatprep.subr.bf16.mxu0 0
      %3134 = vmatpush1.bf16.msra.mxu0 0
      %3135 = vmatprep.subr.bf16.mxu0 0
      %3136 = vmatpush1.bf16.msra.mxu0 0
      %3137 = vmatprep.subr.bf16.mxu0 0
      %3138 = vmatpush1.bf16.msra.mxu0 0
      %3139 = vmatprep.mubr.bf16.mxu0 0
      %3140 = vmatmul.mubr.bf16.gmra.mrb[0].mxu0 %v3102
      %v3141 = vpop.f32.mrb[0].mxu0
      %v3142 = vadd.f32 0.0, %v3141
      %v3143 = vpop.f32.mrb[0].mxu0
      %v3144 = vpop.f32.mrb[0].mxu0
      %v3145 = vadd.f32 0.0, %v3144
      %v3146 = vpop.f32.mrb[0].mxu0
      %3147 = vmatprep.mubr.bf16.mxu0 0
      %3148 = vmatmul.mubr.bf16.gmra.mrb[0].mxu0 %v3105
      %v3149 = vpop.f32.mrb[0].mxu0
      %v3150 = vadd.f32 0.0, %v3149
      %v3151 = vpop.f32.mrb[0].mxu0
      %v3152 = vpop.f32.mrb[0].mxu0
      %v3153 = vadd.f32 0.0, %v3152
      %v3154 = vpop.f32.mrb[0].mxu0
      %3155 = vdwg.mxu0
      %3156 = vrot.lane.b32.xlu0 %v814, 64
      %v3157 = vpop.permute.xlu0 %3156
      %3158 = vrot.lane.b32.xlu0 %v816, 64
      %v3159 = vpop.permute.xlu0 %3158
      %v3163 = vsel %vm381, %v2770, 0
      %v3166 = vsel %vm381, %v2771, 0
      %3168 = vmatprep.subr.bf16.mxu0 0
      %3169 = vmatpush1.bf16.msra.mxu0 %v3157
      %3170 = vmatprep.subr.bf16.mxu0 0
      %3171 = vmatpush1.bf16.msra.mxu0 %v3159
      %3172 = vmatprep.subr.bf16.mxu0 0
      %3173 = vmatpush1.bf16.msra.mxu0 0
      %3174 = vmatprep.subr.bf16.mxu0 0
      %3175 = vmatpush1.bf16.msra.mxu0 0
      %3176 = vmatprep.subr.bf16.mxu0 0
      %3177 = vmatpush1.bf16.msra.mxu0 0
      %3178 = vmatprep.subr.bf16.mxu0 0
      %3179 = vmatpush1.bf16.msra.mxu0 0
      %3180 = vmatprep.subr.bf16.mxu0 0
      %3181 = vmatpush1.bf16.msra.mxu0 0
      %3182 = vmatprep.subr.bf16.mxu0 0
      %3183 = vmatpush1.bf16.msra.mxu0 0
      %3184 = vmatprep.subr.bf16.mxu0 0
      %3185 = vmatpush1.bf16.msra.mxu0 0
      %3186 = vmatprep.subr.bf16.mxu0 0
      %3187 = vmatpush1.bf16.msra.mxu0 0
      %3188 = vmatprep.subr.bf16.mxu0 0
      %3189 = vmatpush1.bf16.msra.mxu0 0
      %3190 = vmatprep.subr.bf16.mxu0 0
      %3191 = vmatpush1.bf16.msra.mxu0 0
      %3192 = vmatprep.subr.bf16.mxu0 0
      %3193 = vmatpush1.bf16.msra.mxu0 0
      %3194 = vmatprep.subr.bf16.mxu0 0
      %3195 = vmatpush1.bf16.msra.mxu0 0
      %3196 = vmatprep.subr.bf16.mxu0 0
      %3197 = vmatpush1.bf16.msra.mxu0 0
      %3198 = vmatprep.subr.bf16.mxu0 0
      %3199 = vmatpush1.bf16.msra.mxu0 0
      %3200 = vmatprep.mubr.bf16.mxu0 0
      %3201 = vmatmul.mubr.bf16.gmra.mrb[0].mxu0 %v3163
      %v3202 = vpop.f32.mrb[0].mxu0
      %v3203 = vadd.f32 0.0, %v3202
      %v3204 = vpop.f32.mrb[0].mxu0
      %v3205 = vpop.f32.mrb[0].mxu0
      %v3206 = vadd.f32 0.0, %v3205
      %v3207 = vpop.f32.mrb[0].mxu0
      %3208 = vmatprep.mubr.bf16.mxu0 0
      %3209 = vmatmul.mubr.bf16.gmra.mrb[0].mxu0 %v3166
      %v3210 = vpop.f32.mrb[0].mxu0
      %v3211 = vadd.f32 0.0, %v3210
      %v3212 = vpop.f32.mrb[0].mxu0
      %v3213 = vpop.f32.mrb[0].mxu0
      %v3214 = vadd.f32 0.0, %v3213
      %v3215 = vpop.f32.mrb[0].mxu0
      %3216 = vdwg.mxu0
      %3217 = vrot.lane.b32.xlu0 %v818, 64
      %v3218 = vpop.permute.xlu0 %3217
      %3219 = vrot.lane.b32.xlu0 %v820, 64
      %v3220 = vpop.permute.xlu0 %3219
      %v3224 = vsel %vm381, %v2772, 0
      %v3227 = vsel %vm381, %v2773, 0
      %3229 = vmatprep.subr.bf16.mxu0 0
      %3230 = vmatpush1.bf16.msra.mxu0 %v3218
      %3231 = vmatprep.subr.bf16.mxu0 0
      %3232 = vmatpush1.bf16.msra.mxu0 %v3220
      %3233 = vmatprep.subr.bf16.mxu0 0
      %3234 = vmatpush1.bf16.msra.mxu0 0
      %3235 = vmatprep.subr.bf16.mxu0 0
      %3236 = vmatpush1.bf16.msra.mxu0 0
      %3237 = vmatprep.subr.bf16.mxu0 0
      %3238 = vmatpush1.bf16.msra.mxu0 0
      %3239 = vmatprep.subr.bf16.mxu0 0
      %3240 = vmatpush1.bf16.msra.mxu0 0
      %3241 = vmatprep.subr.bf16.mxu0 0
      %3242 = vmatpush1.bf16.msra.mxu0 0
      %3243 = vmatprep.subr.bf16.mxu0 0
      %3244 = vmatpush1.bf16.msra.mxu0 0
      %3245 = vmatprep.subr.bf16.mxu0 0
      %3246 = vmatpush1.bf16.msra.mxu0 0
      %3247 = vmatprep.subr.bf16.mxu0 0
      %3248 = vmatpush1.bf16.msra.mxu0 0
      %3249 = vmatprep.subr.bf16.mxu0 0
      %3250 = vmatpush1.bf16.msra.mxu0 0
      %3251 = vmatprep.subr.bf16.mxu0 0
      %3252 = vmatpush1.bf16.msra.mxu0 0
      %3253 = vmatprep.subr.bf16.mxu0 0
      %3254 = vmatpush1.bf16.msra.mxu0 0
      %3255 = vmatprep.subr.bf16.mxu0 0
      %3256 = vmatpush1.bf16.msra.mxu0 0
      %3257 = vmatprep.subr.bf16.mxu0 0
      %3258 = vmatpush1.bf16.msra.mxu0 0
      %3259 = vmatprep.subr.bf16.mxu0 0
      %3260 = vmatpush1.bf16.msra.mxu0 0
      %3261 = vmatprep.mubr.bf16.mxu0 0
      %3262 = vmatmul.mubr.bf16.gmra.mrb[0].mxu0 %v3224
      %v3263 = vpop.f32.mrb[0].mxu0
      %v3264 = vadd.f32 0.0, %v3263
      %v3265 = vpop.f32.mrb[0].mxu0
      %v3266 = vpop.f32.mrb[0].mxu0
      %v3267 = vadd.f32 0.0, %v3266
      %v3268 = vpop.f32.mrb[0].mxu0
      %3269 = vmatprep.mubr.bf16.mxu0 0
      %3270 = vmatmul.mubr.bf16.gmra.mrb[0].mxu0 %v3227
      %v3271 = vpop.f32.mrb[0].mxu0
      %v3272 = vadd.f32 0.0, %v3271
      %v3273 = vpop.f32.mrb[0].mxu0
      %v3274 = vpop.f32.mrb[0].mxu0
      %v3275 = vadd.f32 0.0, %v3274
      %v3276 = vpop.f32.mrb[0].mxu0
      %3277 = vdwg.mxu0
      %3278 = vrot.lane.b32.xlu0 %v822, 64
      %v3279 = vpop.permute.xlu0 %3278
      %3280 = vrot.lane.b32.xlu0 %v824, 64
      %v3281 = vpop.permute.xlu0 %3280
      %v3285 = vsel %vm381, %v2774, 0
      %v3288 = vsel %vm381, %v2775, 0
      %3290 = vmatprep.subr.bf16.mxu0 0
      %3291 = vmatpush1.bf16.msra.mxu0 %v3279
      %3292 = vmatprep.subr.bf16.mxu0 0
      %3293 = vmatpush1.bf16.msra.mxu0 %v3281
      %3294 = vmatprep.subr.bf16.mxu0 0
      %3295 = vmatpush1.bf16.msra.mxu0 0
      %3296 = vmatprep.subr.bf16.mxu0 0
      %3297 = vmatpush1.bf16.msra.mxu0 0
      %3298 = vmatprep.subr.bf16.mxu0 0
      %3299 = vmatpush1.bf16.msra.mxu0 0
      %3300 = vmatprep.subr.bf16.mxu0 0
      %3301 = vmatpush1.bf16.msra.mxu0 0
      %3302 = vmatprep.subr.bf16.mxu0 0
      %3303 = vmatpush1.bf16.msra.mxu0 0
      %3304 = vmatprep.subr.bf16.mxu0 0
      %3305 = vmatpush1.bf16.msra.mxu0 0
      %3306 = vmatprep.subr.bf16.mxu0 0
      %3307 = vmatpush1.bf16.msra.mxu0 0
      %3308 = vmatprep.subr.bf16.mxu0 0
      %3309 = vmatpush1.bf16.msra.mxu0 0
      %3310 = vmatprep.subr.bf16.mxu0 0
      %3311 = vmatpush1.bf16.msra.mxu0 0
      %3312 = vmatprep.subr.bf16.mxu0 0
      %3313 = vmatpush1.bf16.msra.mxu0 0
      %3314 = vmatprep.subr.bf16.mxu0 0
      %3315 = vmatpush1.bf16.msra.mxu0 0
      %3316 = vmatprep.subr.bf16.mxu0 0
      %3317 = vmatpush1.bf16.msra.mxu0 0
      %3318 = vmatprep.subr.bf16.mxu0 0
      %3319 = vmatpush1.bf16.msra.mxu0 0
      %3320 = vmatprep.subr.bf16.mxu0 0
      %3321 = vmatpush1.bf16.msra.mxu0 0
      %3322 = vmatprep.mubr.bf16.mxu0 0
      %3323 = vmatmul.mubr.bf16.gmra.mrb[0].mxu0 %v3285
      %v3324 = vpop.f32.mrb[0].mxu0
      %v3325 = vadd.f32 0.0, %v3324
      %v3326 = vpop.f32.mrb[0].mxu0
      %v3327 = vpop.f32.mrb[0].mxu0
      %v3328 = vadd.f32 0.0, %v3327
      %v3329 = vpop.f32.mrb[0].mxu0
      %3330 = vmatprep.mubr.bf16.mxu0 0
      %3331 = vmatmul.mubr.bf16.gmra.mrb[0].mxu0 %v3288
      %v3332 = vpop.f32.mrb[0].mxu0
      %v3333 = vadd.f32 0.0, %v3332
      %v3334 = vpop.f32.mrb[0].mxu0
      %v3335 = vpop.f32.mrb[0].mxu0
      %v3336 = vadd.f32 0.0, %v3335
      %v3337 = vpop.f32.mrb[0].mxu0
      %3338 = vdwg.mxu0
      %3339 = vrot.lane.b32.xlu0 %v826, 64
      %v3340 = vpop.permute.xlu0 %3339
      %3341 = vrot.lane.b32.xlu0 %v828, 64
      %v3342 = vpop.permute.xlu0 %3341
      %v3346 = vsel %vm381, %v2776, 0
      %v3349 = vsel %vm381, %v2777, 0
      %3351 = vmatprep.subr.bf16.mxu0 0
      %3352 = vmatpush1.bf16.msra.mxu0 %v3340
      %3353 = vmatprep.subr.bf16.mxu0 0
      %3354 = vmatpush1.bf16.msra.mxu0 %v3342
      %3355 = vmatprep.subr.bf16.mxu0 0
      %3356 = vmatpush1.bf16.msra.mxu0 0
      %3357 = vmatprep.subr.bf16.mxu0 0
      %3358 = vmatpush1.bf16.msra.mxu0 0
      %3359 = vmatprep.subr.bf16.mxu0 0
      %3360 = vmatpush1.bf16.msra.mxu0 0
      %3361 = vmatprep.subr.bf16.mxu0 0
      %3362 = vmatpush1.bf16.msra.mxu0 0
      %3363 = vmatprep.subr.bf16.mxu0 0
      %3364 = vmatpush1.bf16.msra.mxu0 0
      %3365 = vmatprep.subr.bf16.mxu0 0
      %3366 = vmatpush1.bf16.msra.mxu0 0
      %3367 = vmatprep.subr.bf16.mxu0 0
      %3368 = vmatpush1.bf16.msra.mxu0 0
      %3369 = vmatprep.subr.bf16.mxu0 0
      %3370 = vmatpush1.bf16.msra.mxu0 0
      %3371 = vmatprep.subr.bf16.mxu0 0
      %3372 = vmatpush1.bf16.msra.mxu0 0
      %3373 = vmatprep.subr.bf16.mxu0 0
      %3374 = vmatpush1.bf16.msra.mxu0 0
      %3375 = vmatprep.subr.bf16.mxu0 0
      %3376 = vmatpush1.bf16.msra.mxu0 0
      %3377 = vmatprep.subr.bf16.mxu0 0
      %3378 = vmatpush1.bf16.msra.mxu0 0
      %3379 = vmatprep.subr.bf16.mxu0 0
      %3380 = vmatpush1.bf16.msra.mxu0 0
      %3381 = vmatprep.subr.bf16.mxu0 0
      %3382 = vmatpush1.bf16.msra.mxu0 0
      %3383 = vmatprep.mubr.bf16.mxu0 0
      %3384 = vmatmul.mubr.bf16.gmra.mrb[0].mxu0 %v3346
      %v3385 = vpop.f32.mrb[0].mxu0
      %v3386 = vadd.f32 0.0, %v3385
      %v3387 = vpop.f32.mrb[0].mxu0
      %v3388 = vpop.f32.mrb[0].mxu0
      %v3389 = vadd.f32 0.0, %v3388
      %v3390 = vpop.f32.mrb[0].mxu0
      %3391 = vmatprep.mubr.bf16.mxu0 0
      %3392 = vmatmul.mubr.bf16.gmra.mrb[0].mxu0 %v3349
      %v3393 = vpop.f32.mrb[0].mxu0
      %v3394 = vadd.f32 0.0, %v3393
      %v3395 = vpop.f32.mrb[0].mxu0
      %v3396 = vpop.f32.mrb[0].mxu0
      %v3397 = vadd.f32 0.0, %v3396
      %v3398 = vpop.f32.mrb[0].mxu0
      %3399 = vdwg.mxu0
      %3400 = vrot.lane.b32.xlu0 %v830, 64
      %v3401 = vpop.permute.xlu0 %3400
      %3402 = vrot.lane.b32.xlu0 %v832, 64
      %v3403 = vpop.permute.xlu0 %3402
      %v3407 = vsel %vm381, %v2778, 0
      %v3410 = vsel %vm381, %v2779, 0
      %3412 = vmatprep.subr.bf16.mxu0 0
      %3413 = vmatpush1.bf16.msra.mxu0 %v3401
      %3414 = vmatprep.subr.bf16.mxu0 0
      %3415 = vmatpush1.bf16.msra.mxu0 %v3403
      %3416 = vmatprep.subr.bf16.mxu0 0
      %3417 = vmatpush1.bf16.msra.mxu0 0
      %3418 = vmatprep.subr.bf16.mxu0 0
      %3419 = vmatpush1.bf16.msra.mxu0 0
      %3420 = vmatprep.subr.bf16.mxu0 0
      %3421 = vmatpush1.bf16.msra.mxu0 0
      %3422 = vmatprep.subr.bf16.mxu0 0
      %3423 = vmatpush1.bf16.msra.mxu0 0
      %3424 = vmatprep.subr.bf16.mxu0 0
      %3425 = vmatpush1.bf16.msra.mxu0 0
      %3426 = vmatprep.subr.bf16.mxu0 0
      %3427 = vmatpush1.bf16.msra.mxu0 0
      %3428 = vmatprep.subr.bf16.mxu0 0
      %3429 = vmatpush1.bf16.msra.mxu0 0
      %3430 = vmatprep.subr.bf16.mxu0 0
      %3431 = vmatpush1.bf16.msra.mxu0 0
      %3432 = vmatprep.subr.bf16.mxu0 0
      %3433 = vmatpush1.bf16.msra.mxu0 0
      %3434 = vmatprep.subr.bf16.mxu0 0
      %3435 = vmatpush1.bf16.msra.mxu0 0
      %3436 = vmatprep.subr.bf16.mxu0 0
      %3437 = vmatpush1.bf16.msra.mxu0 0
      %3438 = vmatprep.subr.bf16.mxu0 0
      %3439 = vmatpush1.bf16.msra.mxu0 0
      %3440 = vmatprep.subr.bf16.mxu0 0
      %3441 = vmatpush1.bf16.msra.mxu0 0
      %3442 = vmatprep.subr.bf16.mxu0 0
      %3443 = vmatpush1.bf16.msra.mxu0 0
      %3444 = vmatprep.mubr.bf16.mxu0 0
      %3445 = vmatmul.mubr.bf16.gmra.mrb[0].mxu0 %v3407
      %v3446 = vpop.f32.mrb[0].mxu0
      %v3447 = vadd.f32 0.0, %v3446
      %v3448 = vpop.f32.mrb[0].mxu0
      %v3449 = vpop.f32.mrb[0].mxu0
      %v3450 = vadd.f32 0.0, %v3449
      %v3451 = vpop.f32.mrb[0].mxu0
      %3452 = vmatprep.mubr.bf16.mxu0 0
      %3453 = vmatmul.mubr.bf16.gmra.mrb[0].mxu0 %v3410
      %v3454 = vpop.f32.mrb[0].mxu0
      %v3455 = vadd.f32 0.0, %v3454
      %v3456 = vpop.f32.mrb[0].mxu0
      %v3457 = vpop.f32.mrb[0].mxu0
      %v3458 = vadd.f32 0.0, %v3457
      %v3459 = vpop.f32.mrb[0].mxu0
      %3460 = vdwg.mxu0
      %3461 = vrot.lane.b32.xlu0 %v834, 64
      %v3462 = vpop.permute.xlu0 %3461
      %3463 = vrot.lane.b32.xlu0 %v836, 64
      %v3464 = vpop.permute.xlu0 %3463
      %v3468 = vsel %vm381, %v2780, 0
      %v3471 = vsel %vm381, %v2781, 0
      %3473 = vmatprep.subr.bf16.mxu0 0
      %3474 = vmatpush1.bf16.msra.mxu0 %v3462
      %3475 = vmatprep.subr.bf16.mxu0 0
      %3476 = vmatpush1.bf16.msra.mxu0 %v3464
      %3477 = vmatprep.subr.bf16.mxu0 0
      %3478 = vmatpush1.bf16.msra.mxu0 0
      %3479 = vmatprep.subr.bf16.mxu0 0
      %3480 = vmatpush1.bf16.msra.mxu0 0
      %3481 = vmatprep.subr.bf16.mxu0 0
      %3482 = vmatpush1.bf16.msra.mxu0 0
      %3483 = vmatprep.subr.bf16.mxu0 0
      %3484 = vmatpush1.bf16.msra.mxu0 0
      %3485 = vmatprep.subr.bf16.mxu0 0
      %3486 = vmatpush1.bf16.msra.mxu0 0
      %3487 = vmatprep.subr.bf16.mxu0 0
      %3488 = vmatpush1.bf16.msra.mxu0 0
      %3489 = vmatprep.subr.bf16.mxu0 0
      %3490 = vmatpush1.bf16.msra.mxu0 0
      %3491 = vmatprep.subr.bf16.mxu0 0
      %3492 = vmatpush1.bf16.msra.mxu0 0
      %3493 = vmatprep.subr.bf16.mxu0 0
      %3494 = vmatpush1.bf16.msra.mxu0 0
      %3495 = vmatprep.subr.bf16.mxu0 0
      %3496 = vmatpush1.bf16.msra.mxu0 0
      %3497 = vmatprep.subr.bf16.mxu0 0
      %3498 = vmatpush1.bf16.msra.mxu0 0
      %3499 = vmatprep.subr.bf16.mxu0 0
      %3500 = vmatpush1.bf16.msra.mxu0 0
      %3501 = vmatprep.subr.bf16.mxu0 0
      %3502 = vmatpush1.bf16.msra.mxu0 0
      %3503 = vmatprep.subr.bf16.mxu0 0
      %3504 = vmatpush1.bf16.msra.mxu0 0
      %3505 = vmatprep.mubr.bf16.mxu0 0
      %3506 = vmatmul.mubr.bf16.gmra.mrb[0].mxu0 %v3468
      %v3507 = vpop.f32.mrb[0].mxu0
      %v3508 = vadd.f32 0.0, %v3507
      %v3509 = vpop.f32.mrb[0].mxu0
      %v3510 = vpop.f32.mrb[0].mxu0
      %v3511 = vadd.f32 0.0, %v3510
      %v3512 = vpop.f32.mrb[0].mxu0
      %3513 = vmatprep.mubr.bf16.mxu0 0
      %3514 = vmatmul.mubr.bf16.gmra.mrb[0].mxu0 %v3471
      %v3515 = vpop.f32.mrb[0].mxu0
      %v3516 = vadd.f32 0.0, %v3515
      %v3517 = vpop.f32.mrb[0].mxu0
      %v3518 = vpop.f32.mrb[0].mxu0
      %v3519 = vadd.f32 0.0, %v3518
      %v3520 = vpop.f32.mrb[0].mxu0
      %3521 = vdwg.mxu0
      %3522 = vrot.lane.b32.xlu0 %v838, 64
      %v3523 = vpop.permute.xlu0 %3522
      %3524 = vrot.lane.b32.xlu0 %v840, 64
      %v3525 = vpop.permute.xlu0 %3524
      %v3529 = vsel %vm381, %v2782, 0
      %v3532 = vsel %vm381, %v2783, 0
      %3534 = vmatprep.subr.bf16.mxu0 0
      %3535 = vmatpush1.bf16.msra.mxu0 %v3523
      %3536 = vmatprep.subr.bf16.mxu0 0
      %3537 = vmatpush1.bf16.msra.mxu0 %v3525
      %3538 = vmatprep.subr.bf16.mxu0 0
      %3539 = vmatpush1.bf16.msra.mxu0 0
      %3540 = vmatprep.subr.bf16.mxu0 0
      %3541 = vmatpush1.bf16.msra.mxu0 0
      %3542 = vmatprep.subr.bf16.mxu0 0
      %3543 = vmatpush1.bf16.msra.mxu0 0
      %3544 = vmatprep.subr.bf16.mxu0 0
      %3545 = vmatpush1.bf16.msra.mxu0 0
      %3546 = vmatprep.subr.bf16.mxu0 0
      %3547 = vmatpush1.bf16.msra.mxu0 0
      %3548 = vmatprep.subr.bf16.mxu0 0
      %3549 = vmatpush1.bf16.msra.mxu0 0
      %3550 = vmatprep.subr.bf16.mxu0 0
      %3551 = vmatpush1.bf16.msra.mxu0 0
      %3552 = vmatprep.subr.bf16.mxu0 0
      %3553 = vmatpush1.bf16.msra.mxu0 0
      %3554 = vmatprep.subr.bf16.mxu0 0
      %3555 = vmatpush1.bf16.msra.mxu0 0
      %3556 = vmatprep.subr.bf16.mxu0 0
      %3557 = vmatpush1.bf16.msra.mxu0 0
      %3558 = vmatprep.subr.bf16.mxu0 0
      %3559 = vmatpush1.bf16.msra.mxu0 0
      %3560 = vmatprep.subr.bf16.mxu0 0
      %3561 = vmatpush1.bf16.msra.mxu0 0
      %3562 = vmatprep.subr.bf16.mxu0 0
      %3563 = vmatpush1.bf16.msra.mxu0 0
      %3564 = vmatprep.subr.bf16.mxu0 0
      %3565 = vmatpush1.bf16.msra.mxu0 0
      %3566 = vmatprep.mubr.bf16.mxu0 0
      %3567 = vmatmul.mubr.bf16.gmra.mrb[0].mxu0 %v3529
      %v3568 = vpop.f32.mrb[0].mxu0
      %v3569 = vadd.f32 0.0, %v3568
      %v3570 = vpop.f32.mrb[0].mxu0
      %v3571 = vpop.f32.mrb[0].mxu0
      %v3572 = vadd.f32 0.0, %v3571
      %v3573 = vpop.f32.mrb[0].mxu0
      %3574 = vmatprep.mubr.bf16.mxu0 0
      %3575 = vmatmul.mubr.bf16.gmra.mrb[0].mxu0 %v3532
      %v3576 = vpop.f32.mrb[0].mxu0
      %v3577 = vadd.f32 0.0, %v3576
      %v3578 = vpop.f32.mrb[0].mxu0
      %v3579 = vpop.f32.mrb[0].mxu0
      %v3580 = vadd.f32 0.0, %v3579
      %v3581 = vpop.f32.mrb[0].mxu0
      %3582 = vdwg.mxu0
      %3583 = vrot.lane.b32.xlu0 %v842, 64
      %v3584 = vpop.permute.xlu0 %3583
      %3585 = vrot.lane.b32.xlu0 %v844, 64
      %v3586 = vpop.permute.xlu0 %3585
      %v3590 = vsel %vm381, %v2784, 0
      %v3593 = vsel %vm381, %v2785, 0
      %3595 = vmatprep.subr.bf16.mxu0 0
      %3596 = vmatpush1.bf16.msra.mxu0 %v3584
      %3597 = vmatprep.subr.bf16.mxu0 0
      %3598 = vmatpush1.bf16.msra.mxu0 %v3586
      %3599 = vmatprep.subr.bf16.mxu0 0
      %3600 = vmatpush1.bf16.msra.mxu0 0
      %3601 = vmatprep.subr.bf16.mxu0 0
      %3602 = vmatpush1.bf16.msra.mxu0 0
      %3603 = vmatprep.subr.bf16.mxu0 0
      %3604 = vmatpush1.bf16.msra.mxu0 0
      %3605 = vmatprep.subr.bf16.mxu0 0
      %3606 = vmatpush1.bf16.msra.mxu0 0
      %3607 = vmatprep.subr.bf16.mxu0 0
      %3608 = vmatpush1.bf16.msra.mxu0 0
      %3609 = vmatprep.subr.bf16.mxu0 0
      %3610 = vmatpush1.bf16.msra.mxu0 0
      %3611 = vmatprep.subr.bf16.mxu0 0
      %3612 = vmatpush1.bf16.msra.mxu0 0
      %3613 = vmatprep.subr.bf16.mxu0 0
      %3614 = vmatpush1.bf16.msra.mxu0 0
      %3615 = vmatprep.subr.bf16.mxu0 0
      %3616 = vmatpush1.bf16.msra.mxu0 0
      %3617 = vmatprep.subr.bf16.mxu0 0
      %3618 = vmatpush1.bf16.msra.mxu0 0
      %3619 = vmatprep.subr.bf16.mxu0 0
      %3620 = vmatpush1.bf16.msra.mxu0 0
      %3621 = vmatprep.subr.bf16.mxu0 0
      %3622 = vmatpush1.bf16.msra.mxu0 0
      %3623 = vmatprep.subr.bf16.mxu0 0
      %3624 = vmatpush1.bf16.msra.mxu0 0
      %3625 = vmatprep.subr.bf16.mxu0 0
      %3626 = vmatpush1.bf16.msra.mxu0 0
      %3627 = vmatprep.mubr.bf16.mxu0 0
      %3628 = vmatmul.mubr.bf16.gmra.mrb[0].mxu0 %v3590
      %v3629 = vpop.f32.mrb[0].mxu0
      %v3630 = vadd.f32 0.0, %v3629
      %v3631 = vpop.f32.mrb[0].mxu0
      %v3632 = vpop.f32.mrb[0].mxu0
      %v3633 = vadd.f32 0.0, %v3632
      %v3634 = vpop.f32.mrb[0].mxu0
      %3635 = vmatprep.mubr.bf16.mxu0 0
      %3636 = vmatmul.mubr.bf16.gmra.mrb[0].mxu0 %v3593
      %v3637 = vpop.f32.mrb[0].mxu0
      %v3638 = vadd.f32 0.0, %v3637
      %v3639 = vpop.f32.mrb[0].mxu0
      %v3640 = vpop.f32.mrb[0].mxu0
      %v3641 = vadd.f32 0.0, %v3640
      %v3642 = vpop.f32.mrb[0].mxu0
      %3643 = vdwg.mxu0
      %3644 = vrot.lane.b32.xlu0 %v846, 64
      %v3645 = vpop.permute.xlu0 %3644
      %3646 = vrot.lane.b32.xlu0 %v848, 64
      %v3647 = vpop.permute.xlu0 %3646
      %v3651 = vsel %vm381, %v2786, 0
      %v3654 = vsel %vm381, %v2787, 0
      %3656 = vmatprep.subr.bf16.mxu0 0
      %3657 = vmatpush1.bf16.msra.mxu0 %v3645
      %3658 = vmatprep.subr.bf16.mxu0 0
      %3659 = vmatpush1.bf16.msra.mxu0 %v3647
      %3660 = vmatprep.subr.bf16.mxu0 0
      %3661 = vmatpush1.bf16.msra.mxu0 0
      %3662 = vmatprep.subr.bf16.mxu0 0
      %3663 = vmatpush1.bf16.msra.mxu0 0
      %3664 = vmatprep.subr.bf16.mxu0 0
      %3665 = vmatpush1.bf16.msra.mxu0 0
      %3666 = vmatprep.subr.bf16.mxu0 0
      %3667 = vmatpush1.bf16.msra.mxu0 0
      %3668 = vmatprep.subr.bf16.mxu0 0
      %3669 = vmatpush1.bf16.msra.mxu0 0
      %3670 = vmatprep.subr.bf16.mxu0 0
      %3671 = vmatpush1.bf16.msra.mxu0 0
      %3672 = vmatprep.subr.bf16.mxu0 0
      %3673 = vmatpush1.bf16.msra.mxu0 0
      %3674 = vmatprep.subr.bf16.mxu0 0
      %3675 = vmatpush1.bf16.msra.mxu0 0
      %3676 = vmatprep.subr.bf16.mxu0 0
      %3677 = vmatpush1.bf16.msra.mxu0 0
      %3678 = vmatprep.subr.bf16.mxu0 0
      %3679 = vmatpush1.bf16.msra.mxu0 0
      %3680 = vmatprep.subr.bf16.mxu0 0
      %3681 = vmatpush1.bf16.msra.mxu0 0
      %3682 = vmatprep.subr.bf16.mxu0 0
      %3683 = vmatpush1.bf16.msra.mxu0 0
      %3684 = vmatprep.subr.bf16.mxu0 0
      %3685 = vmatpush1.bf16.msra.mxu0 0
      %3686 = vmatprep.subr.bf16.mxu0 0
      %3687 = vmatpush1.bf16.msra.mxu0 0
      %3688 = vmatprep.mubr.bf16.mxu0 0
      %3689 = vmatmul.mubr.bf16.gmra.mrb[0].mxu0 %v3651
      %v3690 = vpop.f32.mrb[0].mxu0
      %v3691 = vadd.f32 0.0, %v3690
      %v3692 = vpop.f32.mrb[0].mxu0
      %v3693 = vpop.f32.mrb[0].mxu0
      %v3694 = vadd.f32 0.0, %v3693
      %v3695 = vpop.f32.mrb[0].mxu0
      %3696 = vmatprep.mubr.bf16.mxu0 0
      %3697 = vmatmul.mubr.bf16.gmra.mrb[0].mxu0 %v3654
      %v3698 = vpop.f32.mrb[0].mxu0
      %v3699 = vadd.f32 0.0, %v3698
      %v3700 = vpop.f32.mrb[0].mxu0
      %v3701 = vpop.f32.mrb[0].mxu0
      %v3702 = vadd.f32 0.0, %v3701
      %v3703 = vpop.f32.mrb[0].mxu0
      %3704 = vdwg.mxu0
      %3705 = vrot.lane.b32.xlu0 %v850, 64
      %v3706 = vpop.permute.xlu0 %3705
      %3707 = vrot.lane.b32.xlu0 %v852, 64
      %v3708 = vpop.permute.xlu0 %3707
      %v3712 = vsel %vm381, %v2788, 0
      %v3715 = vsel %vm381, %v2789, 0
      %3717 = vmatprep.subr.bf16.mxu0 0
      %3718 = vmatpush1.bf16.msra.mxu0 %v3706
      %3719 = vmatprep.subr.bf16.mxu0 0
      %3720 = vmatpush1.bf16.msra.mxu0 %v3708
      %3721 = vmatprep.subr.bf16.mxu0 0
      %3722 = vmatpush1.bf16.msra.mxu0 0
      %3723 = vmatprep.subr.bf16.mxu0 0
      %3724 = vmatpush1.bf16.msra.mxu0 0
      %3725 = vmatprep.subr.bf16.mxu0 0
      %3726 = vmatpush1.bf16.msra.mxu0 0
      %3727 = vmatprep.subr.bf16.mxu0 0
      %3728 = vmatpush1.bf16.msra.mxu0 0
      %3729 = vmatprep.subr.bf16.mxu0 0
      %3730 = vmatpush1.bf16.msra.mxu0 0
      %3731 = vmatprep.subr.bf16.mxu0 0
      %3732 = vmatpush1.bf16.msra.mxu0 0
      %3733 = vmatprep.subr.bf16.mxu0 0
      %3734 = vmatpush1.bf16.msra.mxu0 0
      %3735 = vmatprep.subr.bf16.mxu0 0
      %3736 = vmatpush1.bf16.msra.mxu0 0
      %3737 = vmatprep.subr.bf16.mxu0 0
      %3738 = vmatpush1.bf16.msra.mxu0 0
      %3739 = vmatprep.subr.bf16.mxu0 0
      %3740 = vmatpush1.bf16.msra.mxu0 0
      %3741 = vmatprep.subr.bf16.mxu0 0
      %3742 = vmatpush1.bf16.msra.mxu0 0
      %3743 = vmatprep.subr.bf16.mxu0 0
      %3744 = vmatpush1.bf16.msra.mxu0 0
      %3745 = vmatprep.subr.bf16.mxu0 0
      %3746 = vmatpush1.bf16.msra.mxu0 0
      %3747 = vmatprep.subr.bf16.mxu0 0
      %3748 = vmatpush1.bf16.msra.mxu0 0
      %3749 = vmatprep.mubr.bf16.mxu0 0
      %3750 = vmatmul.mubr.bf16.gmra.mrb[0].mxu0 %v3712
      %v3751 = vpop.f32.mrb[0].mxu0
      %v3752 = vadd.f32 0.0, %v3751
      %v3753 = vpop.f32.mrb[0].mxu0
      %v3754 = vpop.f32.mrb[0].mxu0
      %v3755 = vadd.f32 0.0, %v3754
      %v3756 = vpop.f32.mrb[0].mxu0
      %3757 = vmatprep.mubr.bf16.mxu0 0
      %3758 = vmatmul.mubr.bf16.gmra.mrb[0].mxu0 %v3715
      %v3759 = vpop.f32.mrb[0].mxu0
      %v3760 = vadd.f32 0.0, %v3759
      %v3761 = vpop.f32.mrb[0].mxu0
      %v3762 = vpop.f32.mrb[0].mxu0
      %v3763 = vadd.f32 0.0, %v3762
      %v3764 = vpop.f32.mrb[0].mxu0
      %3765 = vdwg.mxu0
      %v3766 = vpack.c.bf16 %v2840, %v2837
      %v3767 = vpack.c.bf16 %v2848, %v2845
      %v3768 = vpack.c.bf16 %v2901, %v2898
      %v3769 = vpack.c.bf16 %v2909, %v2906
      %v3770 = vpack.c.bf16 %v2962, %v2959
      %v3771 = vpack.c.bf16 %v2970, %v2967
      %v3772 = vpack.c.bf16 %v3023, %v3020
      %v3773 = vpack.c.bf16 %v3031, %v3028
      %v3774 = vpack.c.bf16 %v3084, %v3081
      %v3775 = vpack.c.bf16 %v3092, %v3089
      %v3776 = vpack.c.bf16 %v3145, %v3142
      %v3777 = vpack.c.bf16 %v3153, %v3150
      %v3778 = vpack.c.bf16 %v3206, %v3203
      %v3779 = vpack.c.bf16 %v3214, %v3211
      %v3780 = vpack.c.bf16 %v3267, %v3264
      %v3781 = vpack.c.bf16 %v3275, %v3272
      %v3782 = vpack.c.bf16 %v3328, %v3325
      %v3783 = vpack.c.bf16 %v3336, %v3333
      %v3784 = vpack.c.bf16 %v3389, %v3386
      %v3785 = vpack.c.bf16 %v3397, %v3394
      %v3786 = vpack.c.bf16 %v3450, %v3447
      %v3787 = vpack.c.bf16 %v3458, %v3455
      %v3788 = vpack.c.bf16 %v3511, %v3508
      %v3789 = vpack.c.bf16 %v3519, %v3516
      %v3790 = vpack.c.bf16 %v3572, %v3569
      %v3791 = vpack.c.bf16 %v3580, %v3577
      %v3792 = vpack.c.bf16 %v3633, %v3630
      %v3793 = vpack.c.bf16 %v3641, %v3638
      %v3794 = vpack.c.bf16 %v3694, %v3691
      %v3795 = vpack.c.bf16 %v3702, %v3699
      %v3796 = vpack.c.bf16 %v3755, %v3752
      %v3797 = vpack.c.bf16 %v3763, %v3760
      %v3798 = vld [vmem:[%s7] sm:$0xf]
      %v3799 = vld [vmem:[%s7 + $0x4] sm:$0xf]
      %v3800 = vld [vmem:[%s7 + $0x8] sm:$0xf]
      %v3801 = vld [vmem:[%s7 + $0xc] sm:$0xf]
      %v3803 = vsel %vm857, %v3766, 0
      %v3806 = vsel %vm857, %v3767, 0
      %v3809 = vsel %vm857, %v3768, 0
      %v3812 = vsel %vm857, %v3769, 0
      %v3815 = vsel %vm857, %v3770, 0
      %v3818 = vsel %vm857, %v3771, 0
      %v3821 = vsel %vm857, %v3772, 0
      %v3824 = vsel %vm857, %v3773, 0
      %vm3826 = vcmask 1043456
      %v3828 = vsel %vm3826, %v3798, 0
      %3830 = vmatprep.subr.bf16.mxu0 0
      %3831 = vmatpush1.bf16.msra.mxu0 %v3828
      %3832 = vmatprep.subr.bf16.mxu0 0
      %3833 = vmatpush1.bf16.msra.mxu0 0
      %3834 = vmatprep.subr.bf16.mxu0 0
      %3835 = vmatpush1.bf16.msra.mxu0 0
      %3836 = vmatprep.subr.bf16.mxu0 0
      %3837 = vmatpush1.bf16.msra.mxu0 0
      %3838 = vmatprep.subr.bf16.mxu0 0
      %3839 = vmatpush1.bf16.msra.mxu0 0
      %3840 = vmatprep.subr.bf16.mxu0 0
      %3841 = vmatpush1.bf16.msra.mxu0 0
      %3842 = vmatprep.subr.bf16.mxu0 0
      %3843 = vmatpush1.bf16.msra.mxu0 0
      %3844 = vmatprep.subr.bf16.mxu0 0
      %3845 = vmatpush1.bf16.msra.mxu0 0
      %3846 = vmatprep.subr.bf16.mxu0 0
      %3847 = vmatpush1.bf16.msra.mxu0 0
      %3848 = vmatprep.subr.bf16.mxu0 0
      %3849 = vmatpush1.bf16.msra.mxu0 0
      %3850 = vmatprep.subr.bf16.mxu0 0
      %3851 = vmatpush1.bf16.msra.mxu0 0
      %3852 = vmatprep.subr.bf16.mxu0 0
      %3853 = vmatpush1.bf16.msra.mxu0 0
      %3854 = vmatprep.subr.bf16.mxu0 0
      %3855 = vmatpush1.bf16.msra.mxu0 0
      %3856 = vmatprep.subr.bf16.mxu0 0
      %3857 = vmatpush1.bf16.msra.mxu0 0
      %3858 = vmatprep.subr.bf16.mxu0 0
      %3859 = vmatpush1.bf16.msra.mxu0 0
      %3860 = vmatprep.subr.bf16.mxu0 0
      %3861 = vmatpush1.bf16.msra.mxu0 0
      %3862 = vmatprep.mubr.bf16.mxu0 0
      %3863 = vmatmul.mubr.bf16.gmra.mrb[0].mxu0 %v3803
      %v3864 = vpop.f32.mrb[0].mxu0
      %v3865 = vadd.f32 0.0, %v3864
      %v3866 = vpop.f32.mrb[0].mxu0
      %v3867 = vpop.f32.mrb[0].mxu0
      %v3868 = vadd.f32 0.0, %v3867
      %v3869 = vpop.f32.mrb[0].mxu0
      %3870 = vmatprep.mubr.bf16.mxu0 0
      %3871 = vmatmul.mubr.bf16.gmra.mrb[0].mxu0 %v3806
      %v3872 = vpop.f32.mrb[0].mxu0
      %v3873 = vadd.f32 0.0, %v3872
      %v3874 = vpop.f32.mrb[0].mxu0
      %v3875 = vpop.f32.mrb[0].mxu0
      %v3876 = vadd.f32 0.0, %v3875
      %v3877 = vpop.f32.mrb[0].mxu0
      %3878 = vmatprep.mubr.bf16.mxu0 0
      %3879 = vmatmul.mubr.bf16.gmra.mrb[0].mxu0 %v3809
      %v3880 = vpop.f32.mrb[0].mxu0
      %v3881 = vadd.f32 0.0, %v3880
      %v3882 = vpop.f32.mrb[0].mxu0
      %v3883 = vpop.f32.mrb[0].mxu0
      %v3884 = vadd.f32 0.0, %v3883
      %v3885 = vpop.f32.mrb[0].mxu0
      %3886 = vmatprep.mubr.bf16.mxu0 0
      %3887 = vmatmul.mubr.bf16.gmra.mrb[0].mxu0 %v3812
      %v3888 = vpop.f32.mrb[0].mxu0
      %v3889 = vadd.f32 0.0, %v3888
      %v3890 = vpop.f32.mrb[0].mxu0
      %v3891 = vpop.f32.mrb[0].mxu0
      %v3892 = vadd.f32 0.0, %v3891
      %v3893 = vpop.f32.mrb[0].mxu0
      %3894 = vmatprep.mubr.bf16.mxu0 0
      %3895 = vmatmul.mubr.bf16.gmra.mrb[0].mxu0 %v3815
      %v3896 = vpop.f32.mrb[0].mxu0
      %v3897 = vadd.f32 0.0, %v3896
      %v3898 = vpop.f32.mrb[0].mxu0
      %v3899 = vpop.f32.mrb[0].mxu0
      %v3900 = vadd.f32 0.0, %v3899
      %v3901 = vpop.f32.mrb[0].mxu0
      %3902 = vmatprep.mubr.bf16.mxu0 0
      %3903 = vmatmul.mubr.bf16.gmra.mrb[0].mxu0 %v3818
      %v3904 = vpop.f32.mrb[0].mxu0
      %v3905 = vadd.f32 0.0, %v3904
      %v3906 = vpop.f32.mrb[0].mxu0
      %v3907 = vpop.f32.mrb[0].mxu0
      %v3908 = vadd.f32 0.0, %v3907
      %v3909 = vpop.f32.mrb[0].mxu0
      %3910 = vmatprep.mubr.bf16.mxu0 0
      %3911 = vmatmul.mubr.bf16.gmra.mrb[0].mxu0 %v3821
      %v3912 = vpop.f32.mrb[0].mxu0
      %v3913 = vadd.f32 0.0, %v3912
      %v3914 = vpop.f32.mrb[0].mxu0
      %v3915 = vpop.f32.mrb[0].mxu0
      %v3916 = vadd.f32 0.0, %v3915
      %v3917 = vpop.f32.mrb[0].mxu0
      %3918 = vmatprep.mubr.bf16.mxu0 0
      %3919 = vmatmul.mubr.bf16.gmra.mrb[0].mxu0 %v3824
      %v3920 = vpop.f32.mrb[0].mxu0
      %v3921 = vadd.f32 0.0, %v3920
      %v3922 = vpop.f32.mrb[0].mxu0
      %v3923 = vpop.f32.mrb[0].mxu0
      %v3924 = vadd.f32 0.0, %v3923
      %v3925 = vpop.f32.mrb[0].mxu0
      %3926 = vdwg.mxu0
      %v3928 = vsel %vm857, %v3774, 0
      %v3931 = vsel %vm857, %v3775, 0
      %v3934 = vsel %vm857, %v3776, 0
      %v3937 = vsel %vm857, %v3777, 0
      %v3940 = vsel %vm857, %v3778, 0
      %v3943 = vsel %vm857, %v3779, 0
      %v3946 = vsel %vm857, %v3780, 0
      %v3949 = vsel %vm857, %v3781, 0
      %v3952 = vsel %vm3826, %v3799, 0
      %3954 = vmatprep.subr.bf16.mxu0 0
      %3955 = vmatpush1.bf16.msra.mxu0 %v3952
      %3956 = vmatprep.subr.bf16.mxu0 0
      %3957 = vmatpush1.bf16.msra.mxu0 0
      %3958 = vmatprep.subr.bf16.mxu0 0
      %3959 = vmatpush1.bf16.msra.mxu0 0
      %3960 = vmatprep.subr.bf16.mxu0 0
      %3961 = vmatpush1.bf16.msra.mxu0 0
      %3962 = vmatprep.subr.bf16.mxu0 0
      %3963 = vmatpush1.bf16.msra.mxu0 0
      %3964 = vmatprep.subr.bf16.mxu0 0
      %3965 = vmatpush1.bf16.msra.mxu0 0
      %3966 = vmatprep.subr.bf16.mxu0 0
      %3967 = vmatpush1.bf16.msra.mxu0 0
      %3968 = vmatprep.subr.bf16.mxu0 0
      %3969 = vmatpush1.bf16.msra.mxu0 0
      %3970 = vmatprep.subr.bf16.mxu0 0
      %3971 = vmatpush1.bf16.msra.mxu0 0
      %3972 = vmatprep.subr.bf16.mxu0 0
      %3973 = vmatpush1.bf16.msra.mxu0 0
      %3974 = vmatprep.subr.bf16.mxu0 0
      %3975 = vmatpush1.bf16.msra.mxu0 0
      %3976 = vmatprep.subr.bf16.mxu0 0
      %3977 = vmatpush1.bf16.msra.mxu0 0
      %3978 = vmatprep.subr.bf16.mxu0 0
      %3979 = vmatpush1.bf16.msra.mxu0 0
      %3980 = vmatprep.subr.bf16.mxu0 0
      %3981 = vmatpush1.bf16.msra.mxu0 0
      %3982 = vmatprep.subr.bf16.mxu0 0
      %3983 = vmatpush1.bf16.msra.mxu0 0
      %3984 = vmatprep.subr.bf16.mxu0 0
      %3985 = vmatpush1.bf16.msra.mxu0 0
      %3986 = vmatprep.mubr.bf16.mxu0 0
      %3987 = vmatmul.mubr.bf16.gmra.mrb[0].mxu0 %v3928
      %v3988 = vpop.f32.mrb[0].mxu0
      %v3989 = vadd.f32 0.0, %v3988
      %v3990 = vpop.f32.mrb[0].mxu0
      %v3991 = vpop.f32.mrb[0].mxu0
      %v3992 = vadd.f32 0.0, %v3991
      %v3993 = vpop.f32.mrb[0].mxu0
      %3994 = vmatprep.mubr.bf16.mxu0 0
      %3995 = vmatmul.mubr.bf16.gmra.mrb[0].mxu0 %v3931
      %v3996 = vpop.f32.mrb[0].mxu0
      %v3997 = vadd.f32 0.0, %v3996
      %v3998 = vpop.f32.mrb[0].mxu0
      %v3999 = vpop.f32.mrb[0].mxu0
      %v4000 = vadd.f32 0.0, %v3999
      %v4001 = vpop.f32.mrb[0].mxu0
      %4002 = vmatprep.mubr.bf16.mxu0 0
      %4003 = vmatmul.mubr.bf16.gmra.mrb[0].mxu0 %v3934
      %v4004 = vpop.f32.mrb[0].mxu0
      %v4005 = vadd.f32 0.0, %v4004
      %v4006 = vpop.f32.mrb[0].mxu0
      %v4007 = vpop.f32.mrb[0].mxu0
      %v4008 = vadd.f32 0.0, %v4007
      %v4009 = vpop.f32.mrb[0].mxu0
      %4010 = vmatprep.mubr.bf16.mxu0 0
      %4011 = vmatmul.mubr.bf16.gmra.mrb[0].mxu0 %v3937
      %v4012 = vpop.f32.mrb[0].mxu0
      %v4013 = vadd.f32 0.0, %v4012
      %v4014 = vpop.f32.mrb[0].mxu0
      %v4015 = vpop.f32.mrb[0].mxu0
      %v4016 = vadd.f32 0.0, %v4015
      %v4017 = vpop.f32.mrb[0].mxu0
      %4018 = vmatprep.mubr.bf16.mxu0 0
      %4019 = vmatmul.mubr.bf16.gmra.mrb[0].mxu0 %v3940
      %v4020 = vpop.f32.mrb[0].mxu0
      %v4021 = vadd.f32 0.0, %v4020
      %v4022 = vpop.f32.mrb[0].mxu0
      %v4023 = vpop.f32.mrb[0].mxu0
      %v4024 = vadd.f32 0.0, %v4023
      %v4025 = vpop.f32.mrb[0].mxu0
      %4026 = vmatprep.mubr.bf16.mxu0 0
      %4027 = vmatmul.mubr.bf16.gmra.mrb[0].mxu0 %v3943
      %v4028 = vpop.f32.mrb[0].mxu0
      %v4029 = vadd.f32 0.0, %v4028
      %v4030 = vpop.f32.mrb[0].mxu0
      %v4031 = vpop.f32.mrb[0].mxu0
      %v4032 = vadd.f32 0.0, %v4031
      %v4033 = vpop.f32.mrb[0].mxu0
      %4034 = vmatprep.mubr.bf16.mxu0 0
      %4035 = vmatmul.mubr.bf16.gmra.mrb[0].mxu0 %v3946
      %v4036 = vpop.f32.mrb[0].mxu0
      %v4037 = vadd.f32 0.0, %v4036
      %v4038 = vpop.f32.mrb[0].mxu0
      %v4039 = vpop.f32.mrb[0].mxu0
      %v4040 = vadd.f32 0.0, %v4039
      %v4041 = vpop.f32.mrb[0].mxu0
      %4042 = vmatprep.mubr.bf16.mxu0 0
      %4043 = vmatmul.mubr.bf16.gmra.mrb[0].mxu0 %v3949
      %v4044 = vpop.f32.mrb[0].mxu0
      %v4045 = vadd.f32 0.0, %v4044
      %v4046 = vpop.f32.mrb[0].mxu0
      %v4047 = vpop.f32.mrb[0].mxu0
      %v4048 = vadd.f32 0.0, %v4047
      %v4049 = vpop.f32.mrb[0].mxu0
      %4050 = vdwg.mxu0
      %v4052 = vsel %vm857, %v3782, 0
      %v4055 = vsel %vm857, %v3783, 0
      %v4058 = vsel %vm857, %v3784, 0
      %v4061 = vsel %vm857, %v3785, 0
      %v4064 = vsel %vm857, %v3786, 0
      %v4067 = vsel %vm857, %v3787, 0
      %v4070 = vsel %vm857, %v3788, 0
      %v4073 = vsel %vm857, %v3789, 0
      %v4076 = vsel %vm3826, %v3800, 0
      %4078 = vmatprep.subr.bf16.mxu0 0
      %4079 = vmatpush1.bf16.msra.mxu0 %v4076
      %4080 = vmatprep.subr.bf16.mxu0 0
      %4081 = vmatpush1.bf16.msra.mxu0 0
      %4082 = vmatprep.subr.bf16.mxu0 0
      %4083 = vmatpush1.bf16.msra.mxu0 0
      %4084 = vmatprep.subr.bf16.mxu0 0
      %4085 = vmatpush1.bf16.msra.mxu0 0
      %4086 = vmatprep.subr.bf16.mxu0 0
      %4087 = vmatpush1.bf16.msra.mxu0 0
      %4088 = vmatprep.subr.bf16.mxu0 0
      %4089 = vmatpush1.bf16.msra.mxu0 0
      %4090 = vmatprep.subr.bf16.mxu0 0
      %4091 = vmatpush1.bf16.msra.mxu0 0
      %4092 = vmatprep.subr.bf16.mxu0 0
      %4093 = vmatpush1.bf16.msra.mxu0 0
      %4094 = vmatprep.subr.bf16.mxu0 0
      %4095 = vmatpush1.bf16.msra.mxu0 0
      %4096 = vmatprep.subr.bf16.mxu0 0
      %4097 = vmatpush1.bf16.msra.mxu0 0
      %4098 = vmatprep.subr.bf16.mxu0 0
      %4099 = vmatpush1.bf16.msra.mxu0 0
      %4100 = vmatprep.subr.bf16.mxu0 0
      %4101 = vmatpush1.bf16.msra.mxu0 0
      %4102 = vmatprep.subr.bf16.mxu0 0
      %4103 = vmatpush1.bf16.msra.mxu0 0
      %4104 = vmatprep.subr.bf16.mxu0 0
      %4105 = vmatpush1.bf16.msra.mxu0 0
      %4106 = vmatprep.subr.bf16.mxu0 0
      %4107 = vmatpush1.bf16.msra.mxu0 0
      %4108 = vmatprep.subr.bf16.mxu0 0
      %4109 = vmatpush1.bf16.msra.mxu0 0
      %4110 = vmatprep.mubr.bf16.mxu0 0
      %4111 = vmatmul.mubr.bf16.gmra.mrb[0].mxu0 %v4052
      %v4112 = vpop.f32.mrb[0].mxu0
      %v4113 = vadd.f32 0.0, %v4112
      %v4114 = vpop.f32.mrb[0].mxu0
      %v4115 = vpop.f32.mrb[0].mxu0
      %v4116 = vadd.f32 0.0, %v4115
      %v4117 = vpop.f32.mrb[0].mxu0
      %4118 = vmatprep.mubr.bf16.mxu0 0
      %4119 = vmatmul.mubr.bf16.gmra.mrb[0].mxu0 %v4055
      %v4120 = vpop.f32.mrb[0].mxu0
      %v4121 = vadd.f32 0.0, %v4120
      %v4122 = vpop.f32.mrb[0].mxu0
      %v4123 = vpop.f32.mrb[0].mxu0
      %v4124 = vadd.f32 0.0, %v4123
      %v4125 = vpop.f32.mrb[0].mxu0
      %4126 = vmatprep.mubr.bf16.mxu0 0
      %4127 = vmatmul.mubr.bf16.gmra.mrb[0].mxu0 %v4058
      %v4128 = vpop.f32.mrb[0].mxu0
      %v4129 = vadd.f32 0.0, %v4128
      %v4130 = vpop.f32.mrb[0].mxu0
      %v4131 = vpop.f32.mrb[0].mxu0
      %v4132 = vadd.f32 0.0, %v4131
      %v4133 = vpop.f32.mrb[0].mxu0
      %4134 = vmatprep.mubr.bf16.mxu0 0
      %4135 = vmatmul.mubr.bf16.gmra.mrb[0].mxu0 %v4061
      %v4136 = vpop.f32.mrb[0].mxu0
      %v4137 = vadd.f32 0.0, %v4136
      %v4138 = vpop.f32.mrb[0].mxu0
      %v4139 = vpop.f32.mrb[0].mxu0
      %v4140 = vadd.f32 0.0, %v4139
      %v4141 = vpop.f32.mrb[0].mxu0
      %4142 = vmatprep.mubr.bf16.mxu0 0
      %4143 = vmatmul.mubr.bf16.gmra.mrb[0].mxu0 %v4064
      %v4144 = vpop.f32.mrb[0].mxu0
      %v4145 = vadd.f32 0.0, %v4144
      %v4146 = vpop.f32.mrb[0].mxu0
      %v4147 = vpop.f32.mrb[0].mxu0
      %v4148 = vadd.f32 0.0, %v4147
      %v4149 = vpop.f32.mrb[0].mxu0
      %4150 = vmatprep.mubr.bf16.mxu0 0
      %4151 = vmatmul.mubr.bf16.gmra.mrb[0].mxu0 %v4067
      %v4152 = vpop.f32.mrb[0].mxu0
      %v4153 = vadd.f32 0.0, %v4152
      %v4154 = vpop.f32.mrb[0].mxu0
      %v4155 = vpop.f32.mrb[0].mxu0
      %v4156 = vadd.f32 0.0, %v4155
      %v4157 = vpop.f32.mrb[0].mxu0
      %4158 = vmatprep.mubr.bf16.mxu0 0
      %4159 = vmatmul.mubr.bf16.gmra.mrb[0].mxu0 %v4070
      %v4160 = vpop.f32.mrb[0].mxu0
      %v4161 = vadd.f32 0.0, %v4160
      %v4162 = vpop.f32.mrb[0].mxu0
      %v4163 = vpop.f32.mrb[0].mxu0
      %v4164 = vadd.f32 0.0, %v4163
      %v4165 = vpop.f32.mrb[0].mxu0
      %4166 = vmatprep.mubr.bf16.mxu0 0
      %4167 = vmatmul.mubr.bf16.gmra.mrb[0].mxu0 %v4073
      %v4168 = vpop.f32.mrb[0].mxu0
      %v4169 = vadd.f32 0.0, %v4168
      %v4170 = vpop.f32.mrb[0].mxu0
      %v4171 = vpop.f32.mrb[0].mxu0
      %v4172 = vadd.f32 0.0, %v4171
      %v4173 = vpop.f32.mrb[0].mxu0
      %4174 = vdwg.mxu0
      %v4176 = vsel %vm857, %v3790, 0
      %v4179 = vsel %vm857, %v3791, 0
      %v4182 = vsel %vm857, %v3792, 0
      %v4185 = vsel %vm857, %v3793, 0
      %v4188 = vsel %vm857, %v3794, 0
      %v4191 = vsel %vm857, %v3795, 0
      %v4194 = vsel %vm857, %v3796, 0
      %v4197 = vsel %vm857, %v3797, 0
      %v4200 = vsel %vm3826, %v3801, 0
      %4202 = vmatprep.subr.bf16.mxu0 0
      %4203 = vmatpush1.bf16.msra.mxu0 %v4200
      %4204 = vmatprep.subr.bf16.mxu0 0
      %4205 = vmatpush1.bf16.msra.mxu0 0
      %4206 = vmatprep.subr.bf16.mxu0 0
      %4207 = vmatpush1.bf16.msra.mxu0 0
      %4208 = vmatprep.subr.bf16.mxu0 0
      %4209 = vmatpush1.bf16.msra.mxu0 0
      %4210 = vmatprep.subr.bf16.mxu0 0
      %4211 = vmatpush1.bf16.msra.mxu0 0
      %4212 = vmatprep.subr.bf16.mxu0 0
      %4213 = vmatpush1.bf16.msra.mxu0 0
      %4214 = vmatprep.subr.bf16.mxu0 0
      %4215 = vmatpush1.bf16.msra.mxu0 0
      %4216 = vmatprep.subr.bf16.mxu0 0
      %4217 = vmatpush1.bf16.msra.mxu0 0
      %4218 = vmatprep.subr.bf16.mxu0 0
      %4219 = vmatpush1.bf16.msra.mxu0 0
      %4220 = vmatprep.subr.bf16.mxu0 0
      %4221 = vmatpush1.bf16.msra.mxu0 0
      %4222 = vmatprep.subr.bf16.mxu0 0
      %4223 = vmatpush1.bf16.msra.mxu0 0
      %4224 = vmatprep.subr.bf16.mxu0 0
      %4225 = vmatpush1.bf16.msra.mxu0 0
      %4226 = vmatprep.subr.bf16.mxu0 0
      %4227 = vmatpush1.bf16.msra.mxu0 0
      %4228 = vmatprep.subr.bf16.mxu0 0
      %4229 = vmatpush1.bf16.msra.mxu0 0
      %4230 = vmatprep.subr.bf16.mxu0 0
      %4231 = vmatpush1.bf16.msra.mxu0 0
      %4232 = vmatprep.subr.bf16.mxu0 0
      %4233 = vmatpush1.bf16.msra.mxu0 0
      %4234 = vmatprep.mubr.bf16.mxu0 0
      %4235 = vmatmul.mubr.bf16.gmra.mrb[0].mxu0 %v4176
      %v4236 = vpop.f32.mrb[0].mxu0
      %v4237 = vadd.f32 0.0, %v4236
      %v4238 = vpop.f32.mrb[0].mxu0
      %v4239 = vpop.f32.mrb[0].mxu0
      %v4240 = vadd.f32 0.0, %v4239
      %v4241 = vpop.f32.mrb[0].mxu0
      %4242 = vmatprep.mubr.bf16.mxu0 0
      %4243 = vmatmul.mubr.bf16.gmra.mrb[0].mxu0 %v4179
      %v4244 = vpop.f32.mrb[0].mxu0
      %v4245 = vadd.f32 0.0, %v4244
      %v4246 = vpop.f32.mrb[0].mxu0
      %v4247 = vpop.f32.mrb[0].mxu0
      %v4248 = vadd.f32 0.0, %v4247
      %v4249 = vpop.f32.mrb[0].mxu0
      %4250 = vmatprep.mubr.bf16.mxu0 0
      %4251 = vmatmul.mubr.bf16.gmra.mrb[0].mxu0 %v4182
      %v4252 = vpop.f32.mrb[0].mxu0
      %v4253 = vadd.f32 0.0, %v4252
      %v4254 = vpop.f32.mrb[0].mxu0
      %v4255 = vpop.f32.mrb[0].mxu0
      %v4256 = vadd.f32 0.0, %v4255
      %v4257 = vpop.f32.mrb[0].mxu0
      %4258 = vmatprep.mubr.bf16.mxu0 0
      %4259 = vmatmul.mubr.bf16.gmra.mrb[0].mxu0 %v4185
      %v4260 = vpop.f32.mrb[0].mxu0
      %v4261 = vadd.f32 0.0, %v4260
      %v4262 = vpop.f32.mrb[0].mxu0
      %v4263 = vpop.f32.mrb[0].mxu0
      %v4264 = vadd.f32 0.0, %v4263
      %v4265 = vpop.f32.mrb[0].mxu0
      %4266 = vmatprep.mubr.bf16.mxu0 0
      %4267 = vmatmul.mubr.bf16.gmra.mrb[0].mxu0 %v4188
      %v4268 = vpop.f32.mrb[0].mxu0
      %v4269 = vadd.f32 0.0, %v4268
      %v4270 = vpop.f32.mrb[0].mxu0
      %v4271 = vpop.f32.mrb[0].mxu0
      %v4272 = vadd.f32 0.0, %v4271
      %v4273 = vpop.f32.mrb[0].mxu0
      %4274 = vmatprep.mubr.bf16.mxu0 0
      %4275 = vmatmul.mubr.bf16.gmra.mrb[0].mxu0 %v4191
      %v4276 = vpop.f32.mrb[0].mxu0
      %v4277 = vadd.f32 0.0, %v4276
      %v4278 = vpop.f32.mrb[0].mxu0
      %v4279 = vpop.f32.mrb[0].mxu0
      %v4280 = vadd.f32 0.0, %v4279
      %v4281 = vpop.f32.mrb[0].mxu0
      %4282 = vmatprep.mubr.bf16.mxu0 0
      %4283 = vmatmul.mubr.bf16.gmra.mrb[0].mxu0 %v4194
      %v4284 = vpop.f32.mrb[0].mxu0
      %v4285 = vadd.f32 0.0, %v4284
      %v4286 = vpop.f32.mrb[0].mxu0
      %v4287 = vpop.f32.mrb[0].mxu0
      %v4288 = vadd.f32 0.0, %v4287
      %v4289 = vpop.f32.mrb[0].mxu0
      %4290 = vmatprep.mubr.bf16.mxu0 0
      %4291 = vmatmul.mubr.bf16.gmra.mrb[0].mxu0 %v4197
      %v4292 = vpop.f32.mrb[0].mxu0
      %v4293 = vadd.f32 0.0, %v4292
      %v4294 = vpop.f32.mrb[0].mxu0
      %v4295 = vpop.f32.mrb[0].mxu0
      %v4296 = vadd.f32 0.0, %v4295
      %v4297 = vpop.f32.mrb[0].mxu0
      %4298 = vdwg.mxu0
      %v4299 = vsel %vm381, %v3865, 0.0
      %v4300 = vsel %vm381, %v3989, 0.0
      %v4301 = vadd.f32 %v4299, %v4300
      %v4302 = vsel %vm381, %v4113, 0.0
      %v4303 = vadd.f32 %v4301, %v4302
      %v4304 = vsel %vm381, %v4237, 0.0
      %v4305 = vadd.f32 %v4303, %v4304
      %v4306 = vsel %vm381, %v3868, 0.0
      %v4307 = vsel %vm381, %v3992, 0.0
      %v4308 = vadd.f32 %v4306, %v4307
      %v4309 = vsel %vm381, %v4116, 0.0
      %v4310 = vadd.f32 %v4308, %v4309
      %v4311 = vsel %vm381, %v4240, 0.0
      %v4312 = vadd.f32 %v4310, %v4311
      %v4313 = vsel %vm381, %v3873, 0.0
      %v4314 = vsel %vm381, %v3997, 0.0
      %v4315 = vadd.f32 %v4313, %v4314
      %v4316 = vsel %vm381, %v4121, 0.0
      %v4317 = vadd.f32 %v4315, %v4316
      %v4318 = vsel %vm381, %v4245, 0.0
      %v4319 = vadd.f32 %v4317, %v4318
      %v4320 = vsel %vm381, %v3876, 0.0
      %v4321 = vsel %vm381, %v4000, 0.0
      %v4322 = vadd.f32 %v4320, %v4321
      %v4323 = vsel %vm381, %v4124, 0.0
      %v4324 = vadd.f32 %v4322, %v4323
      %v4325 = vsel %vm381, %v4248, 0.0
      %v4326 = vadd.f32 %v4324, %v4325
      %v4327 = vsel %vm381, %v3881, 0.0
      %v4328 = vsel %vm381, %v4005, 0.0
      %v4329 = vadd.f32 %v4327, %v4328
      %v4330 = vsel %vm381, %v4129, 0.0
      %v4331 = vadd.f32 %v4329, %v4330
      %v4332 = vsel %vm381, %v4253, 0.0
      %v4333 = vadd.f32 %v4331, %v4332
      %v4334 = vsel %vm381, %v3884, 0.0
      %v4335 = vsel %vm381, %v4008, 0.0
      %v4336 = vadd.f32 %v4334, %v4335
      %v4337 = vsel %vm381, %v4132, 0.0
      %v4338 = vadd.f32 %v4336, %v4337
      %v4339 = vsel %vm381, %v4256, 0.0
      %v4340 = vadd.f32 %v4338, %v4339
      %v4341 = vsel %vm381, %v3889, 0.0
      %v4342 = vsel %vm381, %v4013, 0.0
      %v4343 = vadd.f32 %v4341, %v4342
      %v4344 = vsel %vm381, %v4137, 0.0
      %v4345 = vadd.f32 %v4343, %v4344
      %v4346 = vsel %vm381, %v4261, 0.0
      %v4347 = vadd.f32 %v4345, %v4346
      %v4348 = vsel %vm381, %v3892, 0.0
      %v4349 = vsel %vm381, %v4016, 0.0
      %v4350 = vadd.f32 %v4348, %v4349
      %v4351 = vsel %vm381, %v4140, 0.0
      %v4352 = vadd.f32 %v4350, %v4351
      %v4353 = vsel %vm381, %v4264, 0.0
      %v4354 = vadd.f32 %v4352, %v4353
      %v4355 = vsel %vm381, %v3897, 0.0
      %v4356 = vsel %vm381, %v4021, 0.0
      %v4357 = vadd.f32 %v4355, %v4356
      %v4358 = vsel %vm381, %v4145, 0.0
      %v4359 = vadd.f32 %v4357, %v4358
      %v4360 = vsel %vm381, %v4269, 0.0
      %v4361 = vadd.f32 %v4359, %v4360
      %v4362 = vsel %vm381, %v3900, 0.0
      %v4363 = vsel %vm381, %v4024, 0.0
      %v4364 = vadd.f32 %v4362, %v4363
      %v4365 = vsel %vm381, %v4148, 0.0
      %v4366 = vadd.f32 %v4364, %v4365
      %v4367 = vsel %vm381, %v4272, 0.0
      %v4368 = vadd.f32 %v4366, %v4367
      %v4369 = vsel %vm381, %v3905, 0.0
      %v4370 = vsel %vm381, %v4029, 0.0
      %v4371 = vadd.f32 %v4369, %v4370
      %v4372 = vsel %vm381, %v4153, 0.0
      %v4373 = vadd.f32 %v4371, %v4372
      %v4374 = vsel %vm381, %v4277, 0.0
      %v4375 = vadd.f32 %v4373, %v4374
      %v4376 = vsel %vm381, %v3908, 0.0
      %v4377 = vsel %vm381, %v4032, 0.0
      %v4378 = vadd.f32 %v4376, %v4377
      %v4379 = vsel %vm381, %v4156, 0.0
      %v4380 = vadd.f32 %v4378, %v4379
      %v4381 = vsel %vm381, %v4280, 0.0
      %v4382 = vadd.f32 %v4380, %v4381
      %v4383 = vsel %vm381, %v3913, 0.0
      %v4384 = vsel %vm381, %v4037, 0.0
      %v4385 = vadd.f32 %v4383, %v4384
      %v4386 = vsel %vm381, %v4161, 0.0
      %v4387 = vadd.f32 %v4385, %v4386
      %v4388 = vsel %vm381, %v4285, 0.0
      %v4389 = vadd.f32 %v4387, %v4388
      %v4390 = vsel %vm381, %v3916, 0.0
      %v4391 = vsel %vm381, %v4040, 0.0
      %v4392 = vadd.f32 %v4390, %v4391
      %v4393 = vsel %vm381, %v4164, 0.0
      %v4394 = vadd.f32 %v4392, %v4393
      %v4395 = vsel %vm381, %v4288, 0.0
      %v4396 = vadd.f32 %v4394, %v4395
      %v4397 = vsel %vm381, %v3921, 0.0
      %v4398 = vsel %vm381, %v4045, 0.0
      %v4399 = vadd.f32 %v4397, %v4398
      %v4400 = vsel %vm381, %v4169, 0.0
      %v4401 = vadd.f32 %v4399, %v4400
      %v4402 = vsel %vm381, %v4293, 0.0
      %v4403 = vadd.f32 %v4401, %v4402
      %v4404 = vsel %vm381, %v3924, 0.0
      %v4405 = vsel %vm381, %v4048, 0.0
      %v4406 = vadd.f32 %v4404, %v4405
      %v4407 = vsel %vm381, %v4172, 0.0
      %v4408 = vadd.f32 %v4406, %v4407
      %v4409 = vsel %vm381, %v4296, 0.0
      %v4410 = vadd.f32 %v4408, %v4409
      %v4411 = vld [vmem:[%s8] sm:$0x1]
      %v4413 = vlaneseq
      %v4414 = vshrl.u32 %v4413, 7
      %v4415 = vsub.s32 0, %v4414
      %v4416 = vrot.slane %v4411, %v4415
      %v4418 = vadd.f32 %v4305, %v4416
      %v4419 = vadd.f32 %v4312, %v4416
      %v4420 = vadd.f32 %v4319, %v4416
      %v4421 = vadd.f32 %v4326, %v4416
      %v4422 = vadd.f32 %v4333, %v4416
      %v4423 = vadd.f32 %v4340, %v4416
      %v4424 = vadd.f32 %v4347, %v4416
      %v4425 = vadd.f32 %v4354, %v4416
      %v4426 = vadd.f32 %v4361, %v4416
      %v4427 = vadd.f32 %v4368, %v4416
      %v4428 = vadd.f32 %v4375, %v4416
      %v4429 = vadd.f32 %v4382, %v4416
      %v4430 = vadd.f32 %v4389, %v4416
      %v4431 = vadd.f32 %v4396, %v4416
      %v4432 = vadd.f32 %v4403, %v4416
      %v4433 = vadd.f32 %v4410, %v4416
      %v4434 = vpack.c.bf16 %v4419, %v4418
      %v4435 = vpack.c.bf16 %v4421, %v4420
      %v4436 = vpack.c.bf16 %v4423, %v4422
      %v4437 = vpack.c.bf16 %v4425, %v4424
      %v4438 = vpack.c.bf16 %v4427, %v4426
      %v4439 = vpack.c.bf16 %v4429, %v4428
      %v4440 = vpack.c.bf16 %v4431, %v4430
      %v4441 = vpack.c.bf16 %v4433, %v4432
      %v4450 = vunpack.c.l.b16 %v4434
      %v4451 = vunpack.c.h.b16 %v4434
      %v4452 = vunpack.c.l.b16 %v4435
      %v4453 = vunpack.c.h.b16 %v4435
      %v4454 = vunpack.c.l.b16 %v4436
      %v4455 = vunpack.c.h.b16 %v4436
      %v4456 = vunpack.c.l.b16 %v4437
      %v4457 = vunpack.c.h.b16 %v4437
      %v4458 = vunpack.c.l.b16 %v4438
      %v4459 = vunpack.c.h.b16 %v4438
      %v4460 = vunpack.c.l.b16 %v4439
      %v4461 = vunpack.c.h.b16 %v4439
      %v4462 = vunpack.c.l.b16 %v4440
      %v4463 = vunpack.c.h.b16 %v4440
      %v4464 = vunpack.c.l.b16 %v4441
      %v4465 = vunpack.c.h.b16 %v4441
      %v4466 = vpack.c.b16 %v4450, %v4450
      %v4467 = vpack.c.b16 %v4451, %v4451
      %v4468 = vpack.c.b16 %v4452, %v4452
      %v4469 = vpack.c.b16 %v4453, %v4453
      %v4470 = vpack.c.b16 %v4454, %v4454
      %v4471 = vpack.c.b16 %v4455, %v4455
      %v4472 = vpack.c.b16 %v4456, %v4456
      %v4473 = vpack.c.b16 %v4457, %v4457
      %v4474 = vpack.c.b16 %v4458, %v4458
      %v4475 = vpack.c.b16 %v4459, %v4459
      %v4476 = vpack.c.b16 %v4460, %v4460
      %v4477 = vpack.c.b16 %v4461, %v4461
      %v4478 = vpack.c.b16 %v4462, %v4462
      %v4479 = vpack.c.b16 %v4463, %v4463
      %v4480 = vpack.c.b16 %v4464, %v4464
      %v4481 = vpack.c.b16 %v4465, %v4465
      %vm4498 = vcmask 257024
      %4499 = vst.msk [vmem:[%s346] sm:$0xf] %vm4498, %v4466
      %4500 = vst.msk [vmem:[%s346 + $0x4] sm:$0xf] %vm4498, %v4467
      %4501 = vst.msk [vmem:[%s346 + $0x8] sm:$0xf] %vm4498, %v4468
      %4502 = vst.msk [vmem:[%s346 + $0xc] sm:$0xf] %vm4498, %v4469
      %4503 = vst.msk [vmem:[%s346 + $0x10] sm:$0xf] %vm4498, %v4470
      %4504 = vst.msk [vmem:[%s346 + $0x14] sm:$0xf] %vm4498, %v4471
      %4505 = vst.msk [vmem:[%s346 + $0x18] sm:$0xf] %vm4498, %v4472
      %4506 = vst.msk [vmem:[%s346 + $0x1c] sm:$0xf] %vm4498, %v4473
      %4507 = vst.msk [vmem:[%s346 + $0x20] sm:$0xf] %vm4498, %v4474
      %4508 = vst.msk [vmem:[%s346 + $0x24] sm:$0xf] %vm4498, %v4475
      %4509 = vst.msk [vmem:[%s346 + $0x28] sm:$0xf] %vm4498, %v4476
      %4510 = vst.msk [vmem:[%s346 + $0x2c] sm:$0xf] %vm4498, %v4477
      %4511 = vst.msk [vmem:[%s346 + $0x30] sm:$0xf] %vm4498, %v4478
      %4512 = vst.msk [vmem:[%s346 + $0x34] sm:$0xf] %vm4498, %v4479
      %4513 = vst.msk [vmem:[%s346 + $0x38] sm:$0xf] %vm4498, %v4480
      %4514 = vst.msk [vmem:[%s346 + $0x3c] sm:$0xf] %vm4498, %v4481
      %s4515 = smul.u32 4, %s26
      %p4516 = scmp.lt.s32.totalorder %s4515, 15
      %s4517 = scalar_select %p4516, %s4515, 15
      %s4518 = smul.addr %s4517, 4
      %s4519 = smul.addr %s4518, 4
      %s4520 = scalar_lea.vmem %s9, %s4519
      // Predicated region
      $region53: #{earth_specific_layer.6} parent=51 // pred_check
        %p4521 = pneg %p224
      $region54: #{earth_specific_layer.6} parent=51 // pred_check_branch
        %4523 = sbr.rel (%p4521) target = $region56
      $region55: #{earth_specific_layer.6} parent=51 // pred_region
        %s4524 = smul.u32 4, %s26
      $region56: #{earth_specific_layer.6} parent=51 // pred_fallthru
        _
    $region52: #{earth_specific_layer.6} parent=5 // pred_fallthru
      _
    %p4525 = scmp.le.s32.totalorder 2, %s21
    // Predicated region
    $region57: #{earth_specific_layer.6} parent=5 // pred_check
      %p4526 = pneg %p4525
    $region58: #{earth_specific_layer.6} parent=5 // pred_check_branch
      %4528 = sbr.rel (%p4526) target = $region60
    $region59: #{earth_specific_layer.6} parent=5 // pred_region
      %s4529 = ssub.s32 %s21, 2
      // Predicated region
      $region61: #{earth_specific_layer.6} parent=59 // pred_check
        %p4530 = pneg %p230
      $region62: #{earth_specific_layer.6} parent=59 // pred_check_branch
        %4532 = sbr.rel (%p4530) target = $region64
      $region63: #{earth_specific_layer.6} parent=59 // pred_region
        %s4533 = smul.u32 4, %s27
        %p4534 = scmp.lt.s32.totalorder %s4533, 15
        %s4535 = scalar_select %p4534, %s4533, 15
        %s4536 = smul.addr %s4535, 4
        %s4537 = smul.addr %s4536, 4
        %s4538 = scalar_lea.vmem %s9, %s4537
      $region64: #{earth_specific_layer.6} parent=59 // pred_fallthru
        _
    $region60: #{earth_specific_layer.6} parent=5 // pred_fallthru
      _
  $region6: #{earth_specific_layer.6} parent=0 // loop_footer
    %s25 = sadd.s32 1, %s21
  $region7: #{earth_specific_layer.6} parent=0 // loop_footer_branch
    %20 = sbr.rel target = $region3
  $region8: #{earth_specific_layer.6} parent=0 // loop_exit
    _

</llo_original>
